<compile_context>
chip_gen: v6e
topology: v6e:2x2x1
jax: 0.10.0
libtpu: 0.0.40
codegen_flags: <defaults>
</compile_context>

<pallas_src>
import jax
import jax.numpy as jnp
from jax.experimental import pallas as pl
from jax.experimental.pallas import tpu as pltpu


# ---------------------------------------------------------------------------
# Channel layout of the shared padded activation buffer (128 lanes)
# ---------------------------------------------------------------------------
def _layout(Cin):
    return dict(
        OFF5=0,            # 0:16   branch5x5_1 output
        OFF3B=16,          # 16:40  branch3x3dbl_2 output
        OFF3A=40,          # 40:56  branch3x3dbl_1 output
        OFFX=56,           # 56:56+Cin  raw x (pool branch + branch1x1)
        C0=56,             # width of the stage-0 matmul output
    )


# ---------------------------------------------------------------------------
# Fused InceptionA kernel (per image; grid over batch)
# ---------------------------------------------------------------------------
def _make_kernel(H, W, Cin):
    HW = H * W
    L = _layout(Cin)
    OFF3B, OFFX, C0 = L["OFF3B"], L["OFFX"], L["C0"]
    T3 = [(1 + a, 1 + b) for a in range(3) for b in range(3)]   # 3x3 window taps
    T5 = [(a, b) for a in range(5) for b in range(5)]           # 5x5 window taps

    def kernel(x_ref, w0_ref, b0_ref, wa_ref, ba_ref, wb_ref, bb_ref,
               o_ref, pad_ref, col_ref):
        # 0) zero the shared padded buffer (halo + unused channel lanes).
        #    Small (~0.25 MiB) and guarantees every col lane is finite.
        pad_ref[...] = jnp.zeros_like(pad_ref)

        # 1) stage 0: one matmul produces [y5x5_1 | 0 | y3x3dbl_1]; one
        #    lane-offset-0 scatter drops it into the buffer interior.
        x3d = x_ref[0]                                   # (H, W, Cin)
        x2d = x3d.reshape(HW, Cin)
        y0 = jnp.dot(x2d, w0_ref[...],
                     preferred_element_type=jnp.float32) + b0_ref[...]
        pad_ref[2:H + 2, 2:W + 2, 0:C0] = y0.reshape(H, W, C0)
        # raw x (pool branch + branch1x1 passthrough) kept exact in f32
        pad_ref[2:H + 2, 2:W + 2, OFFX:OFFX + Cin] = x3d

        # 2) stage A: branch3x3dbl_2 (3x3, pad=1).  9 full-128-lane, lane-aligned
        #    window copies into col, one matmul, one interior scatter.
        for t, (kh, kw) in enumerate(T3):
            col_ref[:, t * 128:(t + 1) * 128] = (
                pad_ref[kh:kh + H, kw:kw + W, :].reshape(HW, 128))
        ya = jnp.dot(col_ref[:, 0:9 * 128], wa_ref[...],
                     preferred_element_type=jnp.float32) + ba_ref[...]
        pad_ref[2:H + 2, 2:W + 2, OFF3B:OFF3B + 24] = ya.reshape(H, W, 24)

        # 3) stage B: branch1x1 + 5x5-final + 3x3dbl-final + folded-pool conv
        #    + concat, all as ONE block-structured matmul -> one unmasked
        #    full-128-lane output store.
        for t, (kh, kw) in enumerate(T5):
            col_ref[:, t * 128:(t + 1) * 128] = (
                pad_ref[kh:kh + H, kw:kw + W, :].reshape(HW, 128))
        o_ref[...] = jnp.dot(col_ref[...], wb_ref[...],
                             preferred_element_type=jnp.float32) + bb_ref[...]

    return kernel


# ---------------------------------------------------------------------------
# Weight prep (pure XLA glue, constant w.r.t. activations)
# ---------------------------------------------------------------------------
def _prep_weights(P, Cin):
    L = _layout(Cin)
    OFF5, OFF3B, OFF3A, OFFX, C0 = (L["OFF5"], L["OFF3B"], L["OFF3A"],
                                    L["OFFX"], L["C0"])

    # stage 0: x -> [branch5x5_1 | zeros | branch3x3dbl_1]
    w0 = jnp.zeros((Cin, C0), jnp.float32)
    w0 = w0.at[:, OFF5:OFF5 + 16].set(P["w5_1"].reshape(Cin, 16))
    w0 = w0.at[:, OFF3A:OFF3A + 16].set(P["w3_1"].reshape(Cin, 16))
    b0 = jnp.zeros((1, C0), jnp.float32)
    b0 = b0.at[0, OFF5:OFF5 + 16].set(P["b5_1"])
    b0 = b0.at[0, OFF3A:OFF3A + 16].set(P["b3_1"])

    # stage A: branch3x3dbl_2 (reads channels OFF3A:OFF3A+16 of each 3x3 tap)
    wa = jnp.zeros((9 * 128, 24), jnp.float32)
    for t, (dh, dw) in enumerate([(a, b) for a in range(3) for b in range(3)]):
        r = t * 128
        wa = wa.at[r + OFF3A:r + OFF3A + 16, :].set(P["w3_2"][dh, dw])
    ba = P["b3_2"].reshape(1, 24)

    # stage B: fused final matmul -> concat slab [1x1 | 5x5 | 3x3dbl | pool | 0]
    wb = jnp.zeros((25 * 128, 128), jnp.float32)
    wp2d = P["wp"].reshape(Cin, 24) / 9.0            # avg_pool+1x1 fold (count_include_pad=True)
    for t, (kh, kw) in enumerate([(a, b) for a in range(5) for b in range(5)]):
        r = t * 128
        wb = wb.at[r + OFF5:r + OFF5 + 16, 16:40].set(P["w5_2"][kh, kw])
        if 1 <= kh <= 3 and 1 <= kw <= 3:
            wb = wb.at[r + OFF3B:r + OFF3B + 24, 40:64].set(P["w3_3"][kh - 1, kw - 1])
            wb = wb.at[r + OFFX:r + OFFX + Cin, 64:88].set(wp2d)
        if kh == 2 and kw == 2:                       # 1x1 branch = center tap of x
            wb = wb.at[r + OFFX:r + OFFX + Cin, 0:16].set(P["w1"].reshape(Cin, 16))
    bb = jnp.zeros((1, 128), jnp.float32)
    bb = bb.at[0, 0:16].set(P["b1"])
    bb = bb.at[0, 16:40].set(P["b5_2"])
    bb = bb.at[0, 40:64].set(P["b3_3"])
    bb = bb.at[0, 64:88].set(P["bp"])
    return w0, b0, wa, ba, wb, bb


def _full_spec(arr):
    nd = arr.ndim
    return pl.BlockSpec(arr.shape, lambda *_: (0,) * nd)


def inception_a(x_nchw, P):
    """InceptionA.forward — input/output NCHW like the PyTorch module."""
    x = jnp.transpose(x_nchw, (0, 2, 3, 1))                   # NCHW -> NHWC
    N, H, W, Cin = x.shape
    HW = H * W
    w0, b0, wa, ba, wb, bb = _prep_weights(P, Cin)

    out2d = pl.pallas_call(
        _make_kernel(H, W, Cin),
        out_shape=jax.ShapeDtypeStruct((N * HW, 128), jnp.float32),   # lane-dense slab
        grid=(N,),                                                    # 1 image / step
        in_specs=[pl.BlockSpec((1, H, W, Cin), lambda n: (n, 0, 0, 0)),
                  _full_spec(w0), _full_spec(b0),
                  _full_spec(wa), _full_spec(ba),
                  _full_spec(wb), _full_spec(bb)],
        out_specs=pl.BlockSpec((HW, 128), lambda n: (n, 0)),
        scratch_shapes=[
            pltpu.VMEM((H + 4, W + 4, 128), jnp.float32),   # shared padded activations
            pltpu.VMEM((HW, 25 * 128), jnp.float32),        # lane-aligned im2col buffer
        ],
        compiler_params=pltpu.CompilerParams(
            dimension_semantics=("parallel",),              # 2nd TC on v7x; no-op v5e/v6e
            vmem_limit_bytes=32 * 1024 * 1024),
    )(x, w0, b0, wa, ba, wb, bb)

    out = out2d[:, :88].reshape(N, H, W, 88)                  # drop lane padding
    return jnp.transpose(out, (0, 3, 1, 2))                   # NHWC -> NCHW


# ---------------------------------------------------------------------------
# Deterministic parameter init (shapes from InceptionA.__init__), HWIO layout.
# ---------------------------------------------------------------------------
def init_params(key, in_channels):
    specs = {
        "1":   (1, 1, in_channels, 16),
        "5_1": (1, 1, in_channels, 16),
        "5_2": (5, 5, 16, 24),
        "3_1": (1, 1, in_channels, 16),
        "3_2": (3, 3, 16, 24),
        "3_3": (3, 3, 24, 24),
        "p":   (1, 1, in_channels, 24),
    }
    P = {}
    for name, shape in specs.items():
        key, kw, kb = jax.random.split(key, 3)
        P["w" + name] = 0.1 * jax.random.normal(kw, shape, jnp.float32)
        P["b" + name] = 0.1 * jax.random.normal(kb, (shape[-1],), jnp.float32)
    return P


# ---------------------------------------------------------------------------
# Pure-JAX reference (for correctness check)
# ---------------------------------------------------------------------------
def ref_inception_a(x_nchw, P):
    x = jnp.transpose(x_nchw, (0, 2, 3, 1))

    def conv(x, w, b, pad):
        y = jax.lax.conv_general_dilated(
            x, w, (1, 1), ((pad, pad), (pad, pad)),
            dimension_numbers=("NHWC", "HWIO", "NHWC"))
        return y + b.reshape(1, 1, 1, -1)

    b1 = conv(x, P["w1"], P["b1"], 0)
    b5 = conv(conv(x, P["w5_1"], P["b5_1"], 0), P["w5_2"], P["b5_2"], 2)
    b3 = conv(conv(conv(x, P["w3_1"], P["b3_1"], 0),
                   P["w3_2"], P["b3_2"], 1), P["w3_3"], P["b3_3"], 1)
    pooled = jax.lax.reduce_window(
        x, 0.0, jax.lax.add, (1, 3, 3, 1), (1, 1, 1, 1),
        padding=((0, 0), (1, 1), (1, 1), (0, 0))) / 9.0
    bp = conv(pooled, P["wp"], P["bp"], 0)
    out = jnp.concatenate([b1, b5, b3, bp], axis=-1)
    return jnp.transpose(out, (0, 3, 1, 2))


if __name__ == "__main__":
    key = jax.random.PRNGKey(0)
    k_x, k_p = jax.random.split(key)

    N, C, H, W = 2, 4, 16, 16                       # small NCHW input
    x = jax.random.normal(k_x, (N, C, H, W), jnp.float32)
    params = init_params(k_p, C)

    out = jax.block_until_ready(inception_a(x, params))
    assert out.shape == (N, 16 + 24 + 24 + 24, H, W), out.shape

    ref = jax.block_until_ready(ref_inception_a(x, params))
    # 2e-3: MXU default-precision accumulation-order differences vs XLA convs.
    assert jnp.allclose(out, ref, atol=2e-3, rtol=2e-3), float(
        jnp.max(jnp.abs(out - ref)))

    print("KERNEL_OK")
</pallas_src>

<mosaic_0001>
module attributes {stable_mosaic.version = 11 : i64} {
  func.func @kernel(%arg0: i32, %arg1: memref<1x16x16x4xf32, #tpu.memory_space<vmem>>, %arg2: memref<4x56xf32, #tpu.memory_space<vmem>>, %arg3: memref<1x56xf32, #tpu.memory_space<vmem>>, %arg4: memref<1152x24xf32, #tpu.memory_space<vmem>>, %arg5: memref<1x24xf32, #tpu.memory_space<vmem>>, %arg6: memref<3200x128xf32, #tpu.memory_space<vmem>>, %arg7: memref<1x128xf32, #tpu.memory_space<vmem>>, %arg8: memref<256x128xf32, #tpu.memory_space<vmem>>, %arg9: memref<20x20x128xf32, #tpu.memory_space<vmem>>, %arg10: memref<256x3200xf32, #tpu.memory_space<vmem>>) attributes {dimension_semantics = [#tpu.dimension_semantics<parallel>], iteration_bounds = array<i64: 2>, scalar_prefetch = 0 : i64, scratch_operands = 2 : i64, tpu.core_type = #tpu.core_type<tc>, window_params = [{transform_indices = @transform_0, window_bounds = array<i64: 1, 16, 16, 4>}, {pipeline_mode = #tpu.pipeline_mode<synchronous>, transform_indices = @transform_1, window_bounds = array<i64: 4, 56>}, {pipeline_mode = #tpu.pipeline_mode<synchronous>, transform_indices = @transform_2, window_bounds = array<i64: 1, 56>}, {pipeline_mode = #tpu.pipeline_mode<synchronous>, transform_indices = @transform_3, window_bounds = array<i64: 1152, 24>}, {pipeline_mode = #tpu.pipeline_mode<synchronous>, transform_indices = @transform_4, window_bounds = array<i64: 1, 24>}, {pipeline_mode = #tpu.pipeline_mode<synchronous>, transform_indices = @transform_5, window_bounds = array<i64: 3200, 128>}, {pipeline_mode = #tpu.pipeline_mode<synchronous>, transform_indices = @transform_6, window_bounds = array<i64: 1, 128>}, {transform_indices = @transform_7, window_bounds = array<i64: 256, 128>}]} {
    %cst = arith.constant 0.000000e+00 : f32
    %0 = vector.broadcast %cst : f32 to vector<20x20x128xf32>
    %c0 = arith.constant 0 : index
    %c0_0 = arith.constant 0 : index
    %c0_1 = arith.constant 0 : index
    %1 = vector.load %arg9[%c0, %c0_0, %c0_1] : memref<20x20x128xf32, #tpu.memory_space<vmem>>, vector<20x20x128xf32>
    tpu.vector_store %arg9[%c0, %c0_0, %c0_1], %0 {strides = array<i32>} : memref<20x20x128xf32, #tpu.memory_space<vmem>>, vector<20x20x128xf32>,
    %c0_2 = arith.constant 0 : index
    %c0_3 = arith.constant 0 : index
    %c0_4 = arith.constant 0 : index
    %c0_5 = arith.constant 0 : index
    %2 = vector.load %arg1[%c0_2, %c0_3, %c0_4, %c0_5] : memref<1x16x16x4xf32, #tpu.memory_space<vmem>>, vector<1x16x16x4xf32>
    %3 = vector.shape_cast %2 : vector<1x16x16x4xf32> to vector<16x16x4xf32>
    %4 = vector.shape_cast %3 : vector<16x16x4xf32> to vector<256x4xf32>
    %c0_6 = arith.constant 0 : index
    %c0_7 = arith.constant 0 : index
    %5 = vector.load %arg2[%c0_6, %c0_7] : memref<4x56xf32, #tpu.memory_space<vmem>>, vector<4x56xf32>
    %cst_8 = arith.constant dense<0.000000e+00> : vector<256x56xf32>
    %6 = tpu.matmul %4, %5, %cst_8 {dimension_numbers = #tpu.dot_dimension_numbers<[1], [0], [0], [1], [0, 0, 1, 1], [], []>} : vector<256x4xf32>, vector<4x56xf32>, vector<256x56xf32> -> vector<256x56xf32>
    %c0_9 = arith.constant 0 : index
    %c0_10 = arith.constant 0 : index
    %7 = vector.load %arg3[%c0_9, %c0_10] : memref<1x56xf32, #tpu.memory_space<vmem>>, vector<1x56xf32>
    %8 = vector.broadcast %7 : vector<1x56xf32> to vector<256x56xf32>
    %9 = arith.addf %6, %8 : vector<256x56xf32>
    %10 = vector.shape_cast %9 : vector<256x56xf32> to vector<16x16x56xf32>
    %c2 = arith.constant 2 : index
    %c2_11 = arith.constant 2 : index
    %c0_12 = arith.constant 0 : index
    %11 = vector.load %arg9[%c2, %c2_11, %c0_12] : memref<20x20x128xf32, #tpu.memory_space<vmem>>, vector<16x16x56xf32>
    tpu.vector_store %arg9[%c2, %c2_11, %c0_12], %10 {strides = array<i32>} : memref<20x20x128xf32, #tpu.memory_space<vmem>>, vector<16x16x56xf32>,
    %c2_13 = arith.constant 2 : index
    %c2_14 = arith.constant 2 : index
    %c56 = arith.constant 56 : index
    %12 = vector.load %arg9[%c2_13, %c2_14, %c56] : memref<20x20x128xf32, #tpu.memory_space<vmem>>, vector<16x16x4xf32>
    tpu.vector_store %arg9[%c2_13, %c2_14, %c56], %3 {strides = array<i32>} : memref<20x20x128xf32, #tpu.memory_space<vmem>>, vector<16x16x4xf32>,
    %c1 = arith.constant 1 : index
    %c1_15 = arith.constant 1 : index
    %c0_16 = arith.constant 0 : index
    %13 = vector.load %arg9[%c1, %c1_15, %c0_16] : memref<20x20x128xf32, #tpu.memory_space<vmem>>, vector<16x16x128xf32>
    %14 = vector.shape_cast %13 : vector<16x16x128xf32> to vector<256x128xf32>
    %c0_17 = arith.constant 0 : index
    %c0_18 = arith.constant 0 : index
    %15 = vector.load %arg10[%c0_17, %c0_18] : memref<256x3200xf32, #tpu.memory_space<vmem>>, vector<256x128xf32>
    tpu.vector_store %arg10[%c0_17, %c0_18], %14 {strides = array<i32>} : memref<256x3200xf32, #tpu.memory_space<vmem>>, vector<256x128xf32>,
    %c1_19 = arith.constant 1 : index
    %c2_20 = arith.constant 2 : index
    %c0_21 = arith.constant 0 : index
    %16 = vector.load %arg9[%c1_19, %c2_20, %c0_21] : memref<20x20x128xf32, #tpu.memory_space<vmem>>, vector<16x16x128xf32>
    %17 = vector.shape_cast %16 : vector<16x16x128xf32> to vector<256x128xf32>
    %c0_22 = arith.constant 0 : index
    %c128 = arith.constant 128 : index
    %18 = vector.load %arg10[%c0_22, %c128] : memref<256x3200xf32, #tpu.memory_space<vmem>>, vector<256x128xf32>
    tpu.vector_store %arg10[%c0_22, %c128], %17 {strides = array<i32>} : memref<256x3200xf32, #tpu.memory_space<vmem>>, vector<256x128xf32>,
    %c1_23 = arith.constant 1 : index
    %c3 = arith.constant 3 : index
    %c0_24 = arith.constant 0 : index
    %19 = vector.load %arg9[%c1_23, %c3, %c0_24] : memref<20x20x128xf32, #tpu.memory_space<vmem>>, vector<16x16x128xf32>
    %20 = vector.shape_cast %19 : vector<16x16x128xf32> to vector<256x128xf32>
    %c0_25 = arith.constant 0 : index
    %c256 = arith.constant 256 : index
    %21 = vector.load %arg10[%c0_25, %c256] : memref<256x3200xf32, #tpu.memory_space<vmem>>, vector<256x128xf32>
    tpu.vector_store %arg10[%c0_25, %c256], %20 {strides = array<i32>} : memref<256x3200xf32, #tpu.memory_space<vmem>>, vector<256x128xf32>,
    %c2_26 = arith.constant 2 : index
    %c1_27 = arith.constant 1 : index
    %c0_28 = arith.constant 0 : index
    %22 = vector.load %arg9[%c2_26, %c1_27, %c0_28] : memref<20x20x128xf32, #tpu.memory_space<vmem>>, vector<16x16x128xf32>
    %23 = vector.shape_cast %22 : vector<16x16x128xf32> to vector<256x128xf32>
    %c0_29 = arith.constant 0 : index
    %c384 = arith.constant 384 : index
    %24 = vector.load %arg10[%c0_29, %c384] : memref<256x3200xf32, #tpu.memory_space<vmem>>, vector<256x128xf32>
    tpu.vector_store %arg10[%c0_29, %c384], %23 {strides = array<i32>} : memref<256x3200xf32, #tpu.memory_space<vmem>>, vector<256x128xf32>,
    %c2_30 = arith.constant 2 : index
    %c2_31 = arith.constant 2 : index
    %c0_32 = arith.constant 0 : index
    %25 = vector.load %arg9[%c2_30, %c2_31, %c0_32] : memref<20x20x128xf32, #tpu.memory_space<vmem>>, vector<16x16x128xf32>
    %26 = vector.shape_cast %25 : vector<16x16x128xf32> to vector<256x128xf32>
    %c0_33 = arith.constant 0 : index
    %c512 = arith.constant 512 : index
    %27 = vector.load %arg10[%c0_33, %c512] : memref<256x3200xf32, #tpu.memory_space<vmem>>, vector<256x128xf32>
    tpu.vector_store %arg10[%c0_33, %c512], %26 {strides = array<i32>} : memref<256x3200xf32, #tpu.memory_space<vmem>>, vector<256x128xf32>,
    %c2_34 = arith.constant 2 : index
    %c3_35 = arith.constant 3 : index
    %c0_36 = arith.constant 0 : index
    %28 = vector.load %arg9[%c2_34, %c3_35, %c0_36] : memref<20x20x128xf32, #tpu.memory_space<vmem>>, vector<16x16x128xf32>
    %29 = vector.shape_cast %28 : vector<16x16x128xf32> to vector<256x128xf32>
    %c0_37 = arith.constant 0 : index
    %c640 = arith.constant 640 : index
    %30 = vector.load %arg10[%c0_37, %c640] : memref<256x3200xf32, #tpu.memory_space<vmem>>, vector<256x128xf32>
    tpu.vector_store %arg10[%c0_37, %c640], %29 {strides = array<i32>} : memref<256x3200xf32, #tpu.memory_space<vmem>>, vector<256x128xf32>,
    %c3_38 = arith.constant 3 : index
    %c1_39 = arith.constant 1 : index
    %c0_40 = arith.constant 0 : index
    %31 = vector.load %arg9[%c3_38, %c1_39, %c0_40] : memref<20x20x128xf32, #tpu.memory_space<vmem>>, vector<16x16x128xf32>
    %32 = vector.shape_cast %31 : vector<16x16x128xf32> to vector<256x128xf32>
    %c0_41 = arith.constant 0 : index
    %c768 = arith.constant 768 : index
    %33 = vector.load %arg10[%c0_41, %c768] : memref<256x3200xf32, #tpu.memory_space<vmem>>, vector<256x128xf32>
    tpu.vector_store %arg10[%c0_41, %c768], %32 {strides = array<i32>} : memref<256x3200xf32, #tpu.memory_space<vmem>>, vector<256x128xf32>,
    %c3_42 = arith.constant 3 : index
    %c2_43 = arith.constant 2 : index
    %c0_44 = arith.constant 0 : index
    %34 = vector.load %arg9[%c3_42, %c2_43, %c0_44] : memref<20x20x128xf32, #tpu.memory_space<vmem>>, vector<16x16x128xf32>
    %35 = vector.shape_cast %34 : vector<16x16x128xf32> to vector<256x128xf32>
    %c0_45 = arith.constant 0 : index
    %c896 = arith.constant 896 : index
    %36 = vector.load %arg10[%c0_45, %c896] : memref<256x3200xf32, #tpu.memory_space<vmem>>, vector<256x128xf32>
    tpu.vector_store %arg10[%c0_45, %c896], %35 {strides = array<i32>} : memref<256x3200xf32, #tpu.memory_space<vmem>>, vector<256x128xf32>,
    %c3_46 = arith.constant 3 : index
    %c3_47 = arith.constant 3 : index
    %c0_48 = arith.constant 0 : index
    %37 = vector.load %arg9[%c3_46, %c3_47, %c0_48] : memref<20x20x128xf32, #tpu.memory_space<vmem>>, vector<16x16x128xf32>
    %38 = vector.shape_cast %37 : vector<16x16x128xf32> to vector<256x128xf32>
    %c0_49 = arith.constant 0 : index
    %c1024 = arith.constant 1024 : index
    %39 = vector.load %arg10[%c0_49, %c1024] : memref<256x3200xf32, #tpu.memory_space<vmem>>, vector<256x128xf32>
    tpu.vector_store %arg10[%c0_49, %c1024], %38 {strides = array<i32>} : memref<256x3200xf32, #tpu.memory_space<vmem>>, vector<256x128xf32>,
    %c0_50 = arith.constant 0 : index
    %c0_51 = arith.constant 0 : index
    %40 = vector.load %arg10[%c0_50, %c0_51] : memref<256x3200xf32, #tpu.memory_space<vmem>>, vector<256x1152xf32>
    %c0_52 = arith.constant 0 : index
    %c0_53 = arith.constant 0 : index
    %41 = vector.load %arg4[%c0_52, %c0_53] : memref<1152x24xf32, #tpu.memory_space<vmem>>, vector<1152x24xf32>
    %cst_54 = arith.constant dense<0.000000e+00> : vector<256x24xf32>
    %42 = tpu.matmul %40, %41, %cst_54 {dimension_numbers = #tpu.dot_dimension_numbers<[1], [0], [0], [1], [0, 0, 1, 1], [], []>} : vector<256x1152xf32>, vector<1152x24xf32>, vector<256x24xf32> -> vector<256x24xf32>
    %c0_55 = arith.constant 0 : index
    %c0_56 = arith.constant 0 : index
    %43 = vector.load %arg5[%c0_55, %c0_56] : memref<1x24xf32, #tpu.memory_space<vmem>>, vector<1x24xf32>
    %44 = vector.broadcast %43 : vector<1x24xf32> to vector<256x24xf32>
    %45 = arith.addf %42, %44 : vector<256x24xf32>
    %46 = vector.shape_cast %45 : vector<256x24xf32> to vector<16x16x24xf32>
    %c2_57 = arith.constant 2 : index
    %c2_58 = arith.constant 2 : index
    %c16 = arith.constant 16 : index
    %47 = vector.load %arg9[%c2_57, %c2_58, %c16] : memref<20x20x128xf32, #tpu.memory_space<vmem>>, vector<16x16x24xf32>
    tpu.vector_store %arg9[%c2_57, %c2_58, %c16], %46 {strides = array<i32>} : memref<20x20x128xf32, #tpu.memory_space<vmem>>, vector<16x16x24xf32>,
    %c0_59 = arith.constant 0 : index
    %c0_60 = arith.constant 0 : index
    %c0_61 = arith.constant 0 : index
    %48 = vector.load %arg9[%c0_59, %c0_60, %c0_61] : memref<20x20x128xf32, #tpu.memory_space<vmem>>, vector<16x16x128xf32>
    %49 = vector.shape_cast %48 : vector<16x16x128xf32> to vector<256x128xf32>
    %c0_62 = arith.constant 0 : index
    %c0_63 = arith.constant 0 : index
    %50 = vector.load %arg10[%c0_62, %c0_63] : memref<256x3200xf32, #tpu.memory_space<vmem>>, vector<256x128xf32>
    tpu.vector_store %arg10[%c0_62, %c0_63], %49 {strides = array<i32>} : memref<256x3200xf32, #tpu.memory_space<vmem>>, vector<256x128xf32>,
    %c0_64 = arith.constant 0 : index
    %c1_65 = arith.constant 1 : index
    %c0_66 = arith.constant 0 : index
    %51 = vector.load %arg9[%c0_64, %c1_65, %c0_66] : memref<20x20x128xf32, #tpu.memory_space<vmem>>, vector<16x16x128xf32>
    %52 = vector.shape_cast %51 : vector<16x16x128xf32> to vector<256x128xf32>
    %c0_67 = arith.constant 0 : index
    %c128_68 = arith.constant 128 : index
    %53 = vector.load %arg10[%c0_67, %c128_68] : memref<256x3200xf32, #tpu.memory_space<vmem>>, vector<256x128xf32>
    tpu.vector_store %arg10[%c0_67, %c128_68], %52 {strides = array<i32>} : memref<256x3200xf32, #tpu.memory_space<vmem>>, vector<256x128xf32>,
    %c0_69 = arith.constant 0 : index
    %c2_70 = arith.constant 2 : index
    %c0_71 = arith.constant 0 : index
    %54 = vector.load %arg9[%c0_69, %c2_70, %c0_71] : memref<20x20x128xf32, #tpu.memory_space<vmem>>, vector<16x16x128xf32>
    %55 = vector.shape_cast %54 : vector<16x16x128xf32> to vector<256x128xf32>
    %c0_72 = arith.constant 0 : index
    %c256_73 = arith.constant 256 : index
    %56 = vector.load %arg10[%c0_72, %c256_73] : memref<256x3200xf32, #tpu.memory_space<vmem>>, vector<256x128xf32>
    tpu.vector_store %arg10[%c0_72, %c256_73], %55 {strides = array<i32>} : memref<256x3200xf32, #tpu.memory_space<vmem>>, vector<256x128xf32>,
    %c0_74 = arith.constant 0 : index
    %c3_75 = arith.constant 3 : index
    %c0_76 = arith.constant 0 : index
    %57 = vector.load %arg9[%c0_74, %c3_75, %c0_76] : memref<20x20x128xf32, #tpu.memory_space<vmem>>, vector<16x16x128xf32>
    %58 = vector.shape_cast %57 : vector<16x16x128xf32> to vector<256x128xf32>
    %c0_77 = arith.constant 0 : index
    %c384_78 = arith.constant 384 : index
    %59 = vector.load %arg10[%c0_77, %c384_78] : memref<256x3200xf32, #tpu.memory_space<vmem>>, vector<256x128xf32>
    tpu.vector_store %arg10[%c0_77, %c384_78], %58 {strides = array<i32>} : memref<256x3200xf32, #tpu.memory_space<vmem>>, vector<256x128xf32>,
    %c0_79 = arith.constant 0 : index
    %c4 = arith.constant 4 : index
    %c0_80 = arith.constant 0 : index
    %60 = vector.load %arg9[%c0_79, %c4, %c0_80] : memref<20x20x128xf32, #tpu.memory_space<vmem>>, vector<16x16x128xf32>
    %61 = vector.shape_cast %60 : vector<16x16x128xf32> to vector<256x128xf32>
    %c0_81 = arith.constant 0 : index
    %c512_82 = arith.constant 512 : index
    %62 = vector.load %arg10[%c0_81, %c512_82] : memref<256x3200xf32, #tpu.memory_space<vmem>>, vector<256x128xf32>
    tpu.vector_store %arg10[%c0_81, %c512_82], %61 {strides = array<i32>} : memref<256x3200xf32, #tpu.memory_space<vmem>>, vector<256x128xf32>,
    %c1_83 = arith.constant 1 : index
    %c0_84 = arith.constant 0 : index
    %c0_85 = arith.constant 0 : index
    %63 = vector.load %arg9[%c1_83, %c0_84, %c0_85] : memref<20x20x128xf32, #tpu.memory_space<vmem>>, vector<16x16x128xf32>
    %64 = vector.shape_cast %63 : vector<16x16x128xf32> to vector<256x128xf32>
    %c0_86 = arith.constant 0 : index
    %c640_87 = arith.constant 640 : index
    %65 = vector.load %arg10[%c0_86, %c640_87] : memref<256x3200xf32, #tpu.memory_space<vmem>>, vector<256x128xf32>
    tpu.vector_store %arg10[%c0_86, %c640_87], %64 {strides = array<i32>} : memref<256x3200xf32, #tpu.memory_space<vmem>>, vector<256x128xf32>,
    %c1_88 = arith.constant 1 : index
    %c1_89 = arith.constant 1 : index
    %c0_90 = arith.constant 0 : index
    %66 = vector.load %arg9[%c1_88, %c1_89, %c0_90] : memref<20x20x128xf32, #tpu.memory_space<vmem>>, vector<16x16x128xf32>
    %67 = vector.shape_cast %66 : vector<16x16x128xf32> to vector<256x128xf32>
    %c0_91 = arith.constant 0 : index
    %c768_92 = arith.constant 768 : index
    %68 = vector.load %arg10[%c0_91, %c768_92] : memref<256x3200xf32, #tpu.memory_space<vmem>>, vector<256x128xf32>
    tpu.vector_store %arg10[%c0_91, %c768_92], %67 {strides = array<i32>} : memref<256x3200xf32, #tpu.memory_space<vmem>>, vector<256x128xf32>,
    %c1_93 = arith.constant 1 : index
    %c2_94 = arith.constant 2 : index
    %c0_95 = arith.constant 0 : index
    %69 = vector.load %arg9[%c1_93, %c2_94, %c0_95] : memref<20x20x128xf32, #tpu.memory_space<vmem>>, vector<16x16x128xf32>
    %70 = vector.shape_cast %69 : vector<16x16x128xf32> to vector<256x128xf32>
    %c0_96 = arith.constant 0 : index
    %c896_97 = arith.constant 896 : index
    %71 = vector.load %arg10[%c0_96, %c896_97] : memref<256x3200xf32, #tpu.memory_space<vmem>>, vector<256x128xf32>
    tpu.vector_store %arg10[%c0_96, %c896_97], %70 {strides = array<i32>} : memref<256x3200xf32, #tpu.memory_space<vmem>>, vector<256x128xf32>,
    %c1_98 = arith.constant 1 : index
    %c3_99 = arith.constant 3 : index
    %c0_100 = arith.constant 0 : index
    %72 = vector.load %arg9[%c1_98, %c3_99, %c0_100] : memref<20x20x128xf32, #tpu.memory_space<vmem>>, vector<16x16x128xf32>
    %73 = vector.shape_cast %72 : vector<16x16x128xf32> to vector<256x128xf32>
    %c0_101 = arith.constant 0 : index
    %c1024_102 = arith.constant 1024 : index
    %74 = vector.load %arg10[%c0_101, %c1024_102] : memref<256x3200xf32, #tpu.memory_space<vmem>>, vector<256x128xf32>
    tpu.vector_store %arg10[%c0_101, %c1024_102], %73 {strides = array<i32>} : memref<256x3200xf32, #tpu.memory_space<vmem>>, vector<256x128xf32>,
    %c1_103 = arith.constant 1 : index
    %c4_104 = arith.constant 4 : index
    %c0_105 = arith.constant 0 : index
    %75 = vector.load %arg9[%c1_103, %c4_104, %c0_105] : memref<20x20x128xf32, #tpu.memory_space<vmem>>, vector<16x16x128xf32>
    %76 = vector.shape_cast %75 : vector<16x16x128xf32> to vector<256x128xf32>
    %c0_106 = arith.constant 0 : index
    %c1152 = arith.constant 1152 : index
    %77 = vector.load %arg10[%c0_106, %c1152] : memref<256x3200xf32, #tpu.memory_space<vmem>>, vector<256x128xf32>
    tpu.vector_store %arg10[%c0_106, %c1152], %76 {strides = array<i32>} : memref<256x3200xf32, #tpu.memory_space<vmem>>, vector<256x128xf32>,
    %c2_107 = arith.constant 2 : index
    %c0_108 = arith.constant 0 : index
    %c0_109 = arith.constant 0 : index
    %78 = vector.load %arg9[%c2_107, %c0_108, %c0_109] : memref<20x20x128xf32, #tpu.memory_space<vmem>>, vector<16x16x128xf32>
    %79 = vector.shape_cast %78 : vector<16x16x128xf32> to vector<256x128xf32>
    %c0_110 = arith.constant 0 : index
    %c1280 = arith.constant 1280 : index
    %80 = vector.load %arg10[%c0_110, %c1280] : memref<256x3200xf32, #tpu.memory_space<vmem>>, vector<256x128xf32>
    tpu.vector_store %arg10[%c0_110, %c1280], %79 {strides = array<i32>} : memref<256x3200xf32, #tpu.memory_space<vmem>>, vector<256x128xf32>,
    %c2_111 = arith.constant 2 : index
    %c1_112 = arith.constant 1 : index
    %c0_113 = arith.constant 0 : index
    %81 = vector.load %arg9[%c2_111, %c1_112, %c0_113] : memref<20x20x128xf32, #tpu.memory_space<vmem>>, vector<16x16x128xf32>
    %82 = vector.shape_cast %81 : vector<16x16x128xf32> to vector<256x128xf32>
    %c0_114 = arith.constant 0 : index
    %c1408 = arith.constant 1408 : index
    %83 = vector.load %arg10[%c0_114, %c1408] : memref<256x3200xf32, #tpu.memory_space<vmem>>, vector<256x128xf32>
    tpu.vector_store %arg10[%c0_114, %c1408], %82 {strides = array<i32>} : memref<256x3200xf32, #tpu.memory_space<vmem>>, vector<256x128xf32>,
    %c2_115 = arith.constant 2 : index
    %c2_116 = arith.constant 2 : index
    %c0_117 = arith.constant 0 : index
    %84 = vector.load %arg9[%c2_115, %c2_116, %c0_117] : memref<20x20x128xf32, #tpu.memory_space<vmem>>, vector<16x16x128xf32>
    %85 = vector.shape_cast %84 : vector<16x16x128xf32> to vector<256x128xf32>
    %c0_118 = arith.constant 0 : index
    %c1536 = arith.constant 1536 : index
    %86 = vector.load %arg10[%c0_118, %c1536] : memref<256x3200xf32, #tpu.memory_space<vmem>>, vector<256x128xf32>
    tpu.vector_store %arg10[%c0_118, %c1536], %85 {strides = array<i32>} : memref<256x3200xf32, #tpu.memory_space<vmem>>, vector<256x128xf32>,
    %c2_119 = arith.constant 2 : index
    %c3_120 = arith.constant 3 : index
    %c0_121 = arith.constant 0 : index
    %87 = vector.load %arg9[%c2_119, %c3_120, %c0_121] : memref<20x20x128xf32, #tpu.memory_space<vmem>>, vector<16x16x128xf32>
    %88 = vector.shape_cast %87 : vector<16x16x128xf32> to vector<256x128xf32>
    %c0_122 = arith.constant 0 : index
    %c1664 = arith.constant 1664 : index
    %89 = vector.load %arg10[%c0_122, %c1664] : memref<256x3200xf32, #tpu.memory_space<vmem>>, vector<256x128xf32>
    tpu.vector_store %arg10[%c0_122, %c1664], %88 {strides = array<i32>} : memref<256x3200xf32, #tpu.memory_space<vmem>>, vector<256x128xf32>,
    %c2_123 = arith.constant 2 : index
    %c4_124 = arith.constant 4 : index
    %c0_125 = arith.constant 0 : index
    %90 = vector.load %arg9[%c2_123, %c4_124, %c0_125] : memref<20x20x128xf32, #tpu.memory_space<vmem>>, vector<16x16x128xf32>
    %91 = vector.shape_cast %90 : vector<16x16x128xf32> to vector<256x128xf32>
    %c0_126 = arith.constant 0 : index
    %c1792 = arith.constant 1792 : index
    %92 = vector.load %arg10[%c0_126, %c1792] : memref<256x3200xf32, #tpu.memory_space<vmem>>, vector<256x128xf32>
    tpu.vector_store %arg10[%c0_126, %c1792], %91 {strides = array<i32>} : memref<256x3200xf32, #tpu.memory_space<vmem>>, vector<256x128xf32>,
    %c3_127 = arith.constant 3 : index
    %c0_128 = arith.constant 0 : index
    %c0_129 = arith.constant 0 : index
    %93 = vector.load %arg9[%c3_127, %c0_128, %c0_129] : memref<20x20x128xf32, #tpu.memory_space<vmem>>, vector<16x16x128xf32>
    %94 = vector.shape_cast %93 : vector<16x16x128xf32> to vector<256x128xf32>
    %c0_130 = arith.constant 0 : index
    %c1920 = arith.constant 1920 : index
    %95 = vector.load %arg10[%c0_130, %c1920] : memref<256x3200xf32, #tpu.memory_space<vmem>>, vector<256x128xf32>
    tpu.vector_store %arg10[%c0_130, %c1920], %94 {strides = array<i32>} : memref<256x3200xf32, #tpu.memory_space<vmem>>, vector<256x128xf32>,
    %c3_131 = arith.constant 3 : index
    %c1_132 = arith.constant 1 : index
    %c0_133 = arith.constant 0 : index
    %96 = vector.load %arg9[%c3_131, %c1_132, %c0_133] : memref<20x20x128xf32, #tpu.memory_space<vmem>>, vector<16x16x128xf32>
    %97 = vector.shape_cast %96 : vector<16x16x128xf32> to vector<256x128xf32>
    %c0_134 = arith.constant 0 : index
    %c2048 = arith.constant 2048 : index
    %98 = vector.load %arg10[%c0_134, %c2048] : memref<256x3200xf32, #tpu.memory_space<vmem>>, vector<256x128xf32>
    tpu.vector_store %arg10[%c0_134, %c2048], %97 {strides = array<i32>} : memref<256x3200xf32, #tpu.memory_space<vmem>>, vector<256x128xf32>,
    %c3_135 = arith.constant 3 : index
    %c2_136 = arith.constant 2 : index
    %c0_137 = arith.constant 0 : index
    %99 = vector.load %arg9[%c3_135, %c2_136, %c0_137] : memref<20x20x128xf32, #tpu.memory_space<vmem>>, vector<16x16x128xf32>
    %100 = vector.shape_cast %99 : vector<16x16x128xf32> to vector<256x128xf32>
    %c0_138 = arith.constant 0 : index
    %c2176 = arith.constant 2176 : index
    %101 = vector.load %arg10[%c0_138, %c2176] : memref<256x3200xf32, #tpu.memory_space<vmem>>, vector<256x128xf32>
    tpu.vector_store %arg10[%c0_138, %c2176], %100 {strides = array<i32>} : memref<256x3200xf32, #tpu.memory_space<vmem>>, vector<256x128xf32>,
    %c3_139 = arith.constant 3 : index
    %c3_140 = arith.constant 3 : index
    %c0_141 = arith.constant 0 : index
    %102 = vector.load %arg9[%c3_139, %c3_140, %c0_141] : memref<20x20x128xf32, #tpu.memory_space<vmem>>, vector<16x16x128xf32>
    %103 = vector.shape_cast %102 : vector<16x16x128xf32> to vector<256x128xf32>
    %c0_142 = arith.constant 0 : index
    %c2304 = arith.constant 2304 : index
    %104 = vector.load %arg10[%c0_142, %c2304] : memref<256x3200xf32, #tpu.memory_space<vmem>>, vector<256x128xf32>
    tpu.vector_store %arg10[%c0_142, %c2304], %103 {strides = array<i32>} : memref<256x3200xf32, #tpu.memory_space<vmem>>, vector<256x128xf32>,
    %c3_143 = arith.constant 3 : index
    %c4_144 = arith.constant 4 : index
    %c0_145 = arith.constant 0 : index
    %105 = vector.load %arg9[%c3_143, %c4_144, %c0_145] : memref<20x20x128xf32, #tpu.memory_space<vmem>>, vector<16x16x128xf32>
    %106 = vector.shape_cast %105 : vector<16x16x128xf32> to vector<256x128xf32>
    %c0_146 = arith.constant 0 : index
    %c2432 = arith.constant 2432 : index
    %107 = vector.load %arg10[%c0_146, %c2432] : memref<256x3200xf32, #tpu.memory_space<vmem>>, vector<256x128xf32>
    tpu.vector_store %arg10[%c0_146, %c2432], %106 {strides = array<i32>} : memref<256x3200xf32, #tpu.memory_space<vmem>>, vector<256x128xf32>,
    %c4_147 = arith.constant 4 : index
    %c0_148 = arith.constant 0 : index
    %c0_149 = arith.constant 0 : index
    %108 = vector.load %arg9[%c4_147, %c0_148, %c0_149] : memref<20x20x128xf32, #tpu.memory_space<vmem>>, vector<16x16x128xf32>
    %109 = vector.shape_cast %108 : vector<16x16x128xf32> to vector<256x128xf32>
    %c0_150 = arith.constant 0 : index
    %c2560 = arith.constant 2560 : index
    %110 = vector.load %arg10[%c0_150, %c2560] : memref<256x3200xf32, #tpu.memory_space<vmem>>, vector<256x128xf32>
    tpu.vector_store %arg10[%c0_150, %c2560], %109 {strides = array<i32>} : memref<256x3200xf32, #tpu.memory_space<vmem>>, vector<256x128xf32>,
    %c4_151 = arith.constant 4 : index
    %c1_152 = arith.constant 1 : index
    %c0_153 = arith.constant 0 : index
    %111 = vector.load %arg9[%c4_151, %c1_152, %c0_153] : memref<20x20x128xf32, #tpu.memory_space<vmem>>, vector<16x16x128xf32>
    %112 = vector.shape_cast %111 : vector<16x16x128xf32> to vector<256x128xf32>
    %c0_154 = arith.constant 0 : index
    %c2688 = arith.constant 2688 : index
    %113 = vector.load %arg10[%c0_154, %c2688] : memref<256x3200xf32, #tpu.memory_space<vmem>>, vector<256x128xf32>
    tpu.vector_store %arg10[%c0_154, %c2688], %112 {strides = array<i32>} : memref<256x3200xf32, #tpu.memory_space<vmem>>, vector<256x128xf32>,
    %c4_155 = arith.constant 4 : index
    %c2_156 = arith.constant 2 : index
    %c0_157 = arith.constant 0 : index
    %114 = vector.load %arg9[%c4_155, %c2_156, %c0_157] : memref<20x20x128xf32, #tpu.memory_space<vmem>>, vector<16x16x128xf32>
    %115 = vector.shape_cast %114 : vector<16x16x128xf32> to vector<256x128xf32>
    %c0_158 = arith.constant 0 : index
    %c2816 = arith.constant 2816 : index
    %116 = vector.load %arg10[%c0_158, %c2816] : memref<256x3200xf32, #tpu.memory_space<vmem>>, vector<256x128xf32>
    tpu.vector_store %arg10[%c0_158, %c2816], %115 {strides = array<i32>} : memref<256x3200xf32, #tpu.memory_space<vmem>>, vector<256x128xf32>,
    %c4_159 = arith.constant 4 : index
    %c3_160 = arith.constant 3 : index
    %c0_161 = arith.constant 0 : index
    %117 = vector.load %arg9[%c4_159, %c3_160, %c0_161] : memref<20x20x128xf32, #tpu.memory_space<vmem>>, vector<16x16x128xf32>
    %118 = vector.shape_cast %117 : vector<16x16x128xf32> to vector<256x128xf32>
    %c0_162 = arith.constant 0 : index
    %c2944 = arith.constant 2944 : index
    %119 = vector.load %arg10[%c0_162, %c2944] : memref<256x3200xf32, #tpu.memory_space<vmem>>, vector<256x128xf32>
    tpu.vector_store %arg10[%c0_162, %c2944], %118 {strides = array<i32>} : memref<256x3200xf32, #tpu.memory_space<vmem>>, vector<256x128xf32>,
    %c4_163 = arith.constant 4 : index
    %c4_164 = arith.constant 4 : index
    %c0_165 = arith.constant 0 : index
    %120 = vector.load %arg9[%c4_163, %c4_164, %c0_165] : memref<20x20x128xf32, #tpu.memory_space<vmem>>, vector<16x16x128xf32>
    %121 = vector.shape_cast %120 : vector<16x16x128xf32> to vector<256x128xf32>
    %c0_166 = arith.constant 0 : index
    %c3072 = arith.constant 3072 : index
    %122 = vector.load %arg10[%c0_166, %c3072] : memref<256x3200xf32, #tpu.memory_space<vmem>>, vector<256x128xf32>
    tpu.vector_store %arg10[%c0_166, %c3072], %121 {strides = array<i32>} : memref<256x3200xf32, #tpu.memory_space<vmem>>, vector<256x128xf32>,
    %c0_167 = arith.constant 0 : index
    %c0_168 = arith.constant 0 : index
    %123 = vector.load %arg10[%c0_167, %c0_168] : memref<256x3200xf32, #tpu.memory_space<vmem>>, vector<256x3200xf32>
    %c0_169 = arith.constant 0 : index
    %c0_170 = arith.constant 0 : index
    %124 = vector.load %arg6[%c0_169, %c0_170] : memref<3200x128xf32, #tpu.memory_space<vmem>>, vector<3200x128xf32>
    %cst_171 = arith.constant dense<0.000000e+00> : vector<256x128xf32>
    %125 = tpu.matmul %123, %124, %cst_171 {dimension_numbers = #tpu.dot_dimension_numbers<[1], [0], [0], [1], [0, 0, 1, 1], [], []>} : vector<256x3200xf32>, vector<3200x128xf32>, vector<256x128xf32> -> vector<256x128xf32>
    %c0_172 = arith.constant 0 : index
    %c0_173 = arith.constant 0 : index
    %126 = vector.load %arg7[%c0_172, %c0_173] : memref<1x128xf32, #tpu.memory_space<vmem>>, vector<1x128xf32>
    %127 = vector.broadcast %126 : vector<1x128xf32> to vector<256x128xf32>
    %128 = arith.addf %125, %127 : vector<256x128xf32>
    %c0_174 = arith.constant 0 : index
    %c0_175 = arith.constant 0 : index
    %129 = vector.load %arg8[%c0_174, %c0_175] : memref<256x128xf32, #tpu.memory_space<vmem>>, vector<256x128xf32>
    tpu.vector_store %arg8[%c0_174, %c0_175], %128 {strides = array<i32>} : memref<256x128xf32, #tpu.memory_space<vmem>>, vector<256x128xf32>,
    return
  }
  func.func @transform_0(%arg0: i32) -> (i32, i32, i32, i32) {
    %c0_i32 = arith.constant 0 : i32
    %c0_i32_0 = arith.constant 0 : i32
    %c0_i32_1 = arith.constant 0 : i32
    %c0_i32_2 = arith.constant 0 : i32
    return %arg0, %c0_i32, %c0_i32_0, %c0_i32_1 : i32, i32, i32, i32
  }
  func.func @transform_1(%arg0: i32) -> (i32, i32) {
    %c0_i32 = arith.constant 0 : i32
    %c0_i32_0 = arith.constant 0 : i32
    %c0_i32_1 = arith.constant 0 : i32
    return %c0_i32, %c0_i32_0 : i32, i32
  }
  func.func @transform_2(%arg0: i32) -> (i32, i32) {
    %c0_i32 = arith.constant 0 : i32
    %c0_i32_0 = arith.constant 0 : i32
    %c0_i32_1 = arith.constant 0 : i32
    return %c0_i32, %c0_i32_0 : i32, i32
  }
  func.func @transform_3(%arg0: i32) -> (i32, i32) {
    %c0_i32 = arith.constant 0 : i32
    %c0_i32_0 = arith.constant 0 : i32
    %c0_i32_1 = arith.constant 0 : i32
    return %c0_i32, %c0_i32_0 : i32, i32
  }
  func.func @transform_4(%arg0: i32) -> (i32, i32) {
    %c0_i32 = arith.constant 0 : i32
    %c0_i32_0 = arith.constant 0 : i32
    %c0_i32_1 = arith.constant 0 : i32
    return %c0_i32, %c0_i32_0 : i32, i32
  }
  func.func @transform_5(%arg0: i32) -> (i32, i32) {
    %c0_i32 = arith.constant 0 : i32
    %c0_i32_0 = arith.constant 0 : i32
    %c0_i32_1 = arith.constant 0 : i32
    return %c0_i32, %c0_i32_0 : i32, i32
  }
  func.func @transform_6(%arg0: i32) -> (i32, i32) {
    %c0_i32 = arith.constant 0 : i32
    %c0_i32_0 = arith.constant 0 : i32
    %c0_i32_1 = arith.constant 0 : i32
    return %c0_i32, %c0_i32_0 : i32, i32
  }
  func.func @transform_7(%arg0: i32) -> (i32, i32) {
    %c0_i32 = arith.constant 0 : i32
    %c0_i32_0 = arith.constant 0 : i32
    return %arg0, %c0_i32 : i32, i32
  }
}

</mosaic_0001>

<llo_original>
// kernel: tpu_custom_call.1
$region0: #{tpu_custom_call.1}
  #allocation0 [shape = 'u32[]', space=smem, size = 0x4, offset = 0x4, fixed_abs, tag = 'smem constant byte address 0x4 - core index']
  #allocation1 [shape = 'u32[144,128]{1,0:T(1,128)}', space=vmem, size = 0x12000, scoped, tag = 'internal scratch']
  #allocation2 [shape = 'f32[20,20,128]{2,1,0:T(8,128)}', space=vmem, size = 0x3c000, scoped, tag = 'scratch operand']
  #allocation3 [shape = 'f32[256,3200]{1,0:T(8,128)}', space=vmem, size = 0x320000, scoped, tag = 'scratch operand']
  %s0 = inlined_call_operand.vmem [shape: f32[2,16,16,4], index: 0, kind: input, shape index: {}]
  %s1 = inlined_call_operand.hbm [shape: f32[4,56], index: 1, kind: input, shape index: {}]
  %s2 = inlined_call_operand.hbm [shape: f32[1,56], index: 2, kind: input, shape index: {}]
  %s3 = inlined_call_operand.vmem [shape: f32[1152,24], index: 3, kind: input, shape index: {}]
  %s4 = inlined_call_operand.hbm [shape: f32[1,24], index: 4, kind: input, shape index: {}]
  %s5 = inlined_call_operand.hbm [shape: f32[3200,128], index: 5, kind: input, shape index: {}]
  %s6 = inlined_call_operand.hbm [shape: f32[1,128], index: 6, kind: input, shape index: {}]
  %s7 = inlined_call_operand.hbm [shape: f32[512,128], index: 7, kind: output, shape index: {}]
  %s8 = sld [smem:[#allocation0]]
  $region81: #{tpu_custom_call.1} parent=0
    _
  %s10 = ssub.s32 1, %s8
  %s11 = scalar_select 0, %s10, %s8
  $region1: #{tpu_custom_call.1} parent=0
    #allocation4 [shape = 'u8[2048]{0}', space=vmem, size = 0x800, scoped, tag = 'input window, operand 1, single buffered']
    #allocation5 [shape = 's32[2]{0}', space=sflag, size = 0x8, scoped, tag = 'scoped memory for tpu_custom_call.1']
    #allocation6 [shape = 's32[2]{0}', space=sflag, size = 0x8, scoped, tag = 'scoped memory for tpu_custom_call.1']
    #allocation7 [shape = 'u8[512]{0}', space=vmem, size = 0x400, scoped, tag = 'input window, operand 2, single buffered']
    #allocation8 [shape = 's32[1]{0}', space=sflag, size = 0x4, scoped, tag = 'scoped memory for tpu_custom_call.1']
    #allocation9 [shape = 'u8[512]{0}', space=vmem, size = 0x400, scoped, tag = 'input window, operand 4, single buffered']
    #allocation10 [shape = 'u8[1638400]{0}', space=vmem, size = 0x190000, scoped, tag = 'input window, operand 5, single buffered']
    #allocation11 [shape = 's32[1]{0}', space=sflag, size = 0x4, scoped, tag = 'scoped memory for tpu_custom_call.1']
    #allocation12 [shape = 'u8[512]{0}', space=vmem, size = 0x400, scoped, tag = 'input window, operand 6, single buffered']
    #allocation13 [shape = 'u8[262144]{0}', space=vmem, size = 0x40000, scoped, tag = 'output window, operand 0']
    %12 = vsyncpa [#allocation5], 0
    %13 = vsyncpa [#allocation8], 0
    %14 = vsyncpa [#allocation11], 0
    %15 = vsyncpa [#allocation6], 0
    %s16 = scalar_lea.sflag [#allocation6], 1
    %17 = vsyncpa %s16, 0
    loop: start=0, step=1, limit=4
    $region2: #{tpu_custom_call.1} parent=1 // loop_pre_header
      _
    $region3: #{tpu_custom_call.1} parent=1 // loop_header
      %s19 = sphi 0, %s23
      %p20 = scmp.ge.s32.totalorder %s19, 4
      %s29 = sphi 0, %s31
      %s32 = sphi 0, %s29
      %s33 = sphi 0, %s32
      %s49 = sphi 0, %s33
      %s53 = sphi 0, %s53
      %s55 = sphi 0, %s53
      %s56 = sphi 0, %s55
      %s70 = sphi 0, %s56
      %s74 = sphi 0, %s74
      %s76 = sphi 0, %s74
      %s77 = sphi 0, %s76
      %s91 = sphi 0, %s77
      %s95 = sphi 0, %s95
      %s97 = sphi 0, %s95
      %s98 = sphi 0, %s97
      %s112 = sphi 0, %s98
      %s116 = sphi 0, %s116
      %s118 = sphi 0, %s116
      %s119 = sphi 0, %s118
      %s133 = sphi 0, %s119
      %s137 = sphi 0, %s137
      %s139 = sphi 0, %s137
      %s140 = sphi 0, %s139
      %s154 = sphi 0, %s140
      %s158 = sphi 0, %s158
      %s160 = sphi 0, %s158
      %s161 = sphi 0, %s160
      %s175 = sphi 0, %s161
      %s181 = sphi 0, %s183
      %s184 = sphi 0, %s181
      %s185 = sphi 0, %s184
      %s201 = sphi 0, %s185
    $region4: #{tpu_custom_call.1} parent=1 // loop_header_branch
      %22 = sbr.rel (%p20) target = $region8
    $region5: #{tpu_custom_call.1} parent=1 // loop_body
      %s24 = ssub.s32 %s19, 1
      %s25 = ssub.s32 %s19, 2
      %s26 = sadd.s32 %s19, 1
      %s27 = ssub.s32 %s19, %s26
      %p28 = scmp.eq.s32.totalorder %s27, 0
      %s30 = sadd.s32 %s29, 1
      %s31 = scalar_select %p28, %s29, %s30
      %p34 = pneg %p28
      %p35 = scmp.eq.s32.totalorder %s19, 1
      %p36 = por %p34, %p35
      %p37 = scmp.ne.s32.totalorder %s29, %s32
      %p38 = scmp.eq.s32.totalorder %s19, 0
      %p39 = por %p37, %p38
      %p40 = scmp.ne.s32.totalorder %s29, %s32
      %p41 = scmp.eq.s32.totalorder %s24, 1
      %p42 = por %p40, %p41
      %p43 = scmp.ne.s32.totalorder %s32, %s33
      %p44 = scmp.eq.s32.totalorder %s24, 0
      %p45 = por %p43, %p44
      %p46 = scmp.ne.s32.totalorder %s32, %s33
      %p47 = scmp.eq.s32.totalorder %s25, 1
      %p48 = por %p46, %p47
      %p50 = scmp.ne.s32.totalorder %s33, %s49
      %p51 = scmp.eq.s32.totalorder %s25, 0
      %p52 = por %p50, %p51
      %s54 = sadd.s32 %s53, 1
      %p57 = scmp.eq.s32.totalorder %s19, 1
      %p58 = scmp.ne.s32.totalorder %s53, %s55
      %p59 = scmp.eq.s32.totalorder %s19, 0
      %p60 = por %p58, %p59
      %p61 = scmp.ne.s32.totalorder %s53, %s55
      %p62 = scmp.eq.s32.totalorder %s24, 1
      %p63 = por %p61, %p62
      %p64 = scmp.ne.s32.totalorder %s55, %s56
      %p65 = scmp.eq.s32.totalorder %s24, 0
      %p66 = por %p64, %p65
      %p67 = scmp.ne.s32.totalorder %s55, %s56
      %p68 = scmp.eq.s32.totalorder %s25, 1
      %p69 = por %p67, %p68
      %p71 = scmp.ne.s32.totalorder %s56, %s70
      %p72 = scmp.eq.s32.totalorder %s25, 0
      %p73 = por %p71, %p72
      %s75 = sadd.s32 %s74, 1
      %p78 = scmp.eq.s32.totalorder %s19, 1
      %p79 = scmp.ne.s32.totalorder %s74, %s76
      %p80 = scmp.eq.s32.totalorder %s19, 0
      %p81 = por %p79, %p80
      %p82 = scmp.ne.s32.totalorder %s74, %s76
      %p83 = scmp.eq.s32.totalorder %s24, 1
      %p84 = por %p82, %p83
      %p85 = scmp.ne.s32.totalorder %s76, %s77
      %p86 = scmp.eq.s32.totalorder %s24, 0
      %p87 = por %p85, %p86
      %p88 = scmp.ne.s32.totalorder %s76, %s77
      %p89 = scmp.eq.s32.totalorder %s25, 1
      %p90 = por %p88, %p89
      %p92 = scmp.ne.s32.totalorder %s77, %s91
      %p93 = scmp.eq.s32.totalorder %s25, 0
      %p94 = por %p92, %p93
      %s96 = sadd.s32 %s95, 1
      %p99 = scmp.eq.s32.totalorder %s19, 1
      %p100 = scmp.ne.s32.totalorder %s95, %s97
      %p101 = scmp.eq.s32.totalorder %s19, 0
      %p102 = por %p100, %p101
      %p103 = scmp.ne.s32.totalorder %s95, %s97
      %p104 = scmp.eq.s32.totalorder %s24, 1
      %p105 = por %p103, %p104
      %p106 = scmp.ne.s32.totalorder %s97, %s98
      %p107 = scmp.eq.s32.totalorder %s24, 0
      %p108 = por %p106, %p107
      %p109 = scmp.ne.s32.totalorder %s97, %s98
      %p110 = scmp.eq.s32.totalorder %s25, 1
      %p111 = por %p109, %p110
      %p113 = scmp.ne.s32.totalorder %s98, %s112
      %p114 = scmp.eq.s32.totalorder %s25, 0
      %p115 = por %p113, %p114
      %s117 = sadd.s32 %s116, 1
      %p120 = scmp.eq.s32.totalorder %s19, 1
      %p121 = scmp.ne.s32.totalorder %s116, %s118
      %p122 = scmp.eq.s32.totalorder %s19, 0
      %p123 = por %p121, %p122
      %p124 = scmp.ne.s32.totalorder %s116, %s118
      %p125 = scmp.eq.s32.totalorder %s24, 1
      %p126 = por %p124, %p125
      %p127 = scmp.ne.s32.totalorder %s118, %s119
      %p128 = scmp.eq.s32.totalorder %s24, 0
      %p129 = por %p127, %p128
      %p130 = scmp.ne.s32.totalorder %s118, %s119
      %p131 = scmp.eq.s32.totalorder %s25, 1
      %p132 = por %p130, %p131
      %p134 = scmp.ne.s32.totalorder %s119, %s133
      %p135 = scmp.eq.s32.totalorder %s25, 0
      %p136 = por %p134, %p135
      %s138 = sadd.s32 %s137, 1
      %p141 = scmp.eq.s32.totalorder %s19, 1
      %p142 = scmp.ne.s32.totalorder %s137, %s139
      %p143 = scmp.eq.s32.totalorder %s19, 0
      %p144 = por %p142, %p143
      %p145 = scmp.ne.s32.totalorder %s137, %s139
      %p146 = scmp.eq.s32.totalorder %s24, 1
      %p147 = por %p145, %p146
      %p148 = scmp.ne.s32.totalorder %s139, %s140
      %p149 = scmp.eq.s32.totalorder %s24, 0
      %p150 = por %p148, %p149
      %p151 = scmp.ne.s32.totalorder %s139, %s140
      %p152 = scmp.eq.s32.totalorder %s25, 1
      %p153 = por %p151, %p152
      %p155 = scmp.ne.s32.totalorder %s140, %s154
      %p156 = scmp.eq.s32.totalorder %s25, 0
      %p157 = por %p155, %p156
      %s159 = sadd.s32 %s158, 1
      %p162 = scmp.eq.s32.totalorder %s19, 1
      %p163 = scmp.ne.s32.totalorder %s158, %s160
      %p164 = scmp.eq.s32.totalorder %s19, 0
      %p165 = por %p163, %p164
      %p166 = scmp.ne.s32.totalorder %s158, %s160
      %p167 = scmp.eq.s32.totalorder %s24, 1
      %p168 = por %p166, %p167
      %p169 = scmp.ne.s32.totalorder %s160, %s161
      %p170 = scmp.eq.s32.totalorder %s24, 0
      %p171 = por %p169, %p170
      %p172 = scmp.ne.s32.totalorder %s160, %s161
      %p173 = scmp.eq.s32.totalorder %s25, 1
      %p174 = por %p172, %p173
      %p176 = scmp.ne.s32.totalorder %s161, %s175
      %p177 = scmp.eq.s32.totalorder %s25, 0
      %p178 = por %p176, %p177
      %s179 = ssub.s32 %s19, %s26
      %p180 = scmp.eq.s32.totalorder %s179, 0
      %s182 = sadd.s32 %s181, 1
      %s183 = scalar_select %p180, %s181, %s182
      %p186 = pneg %p180
      %p187 = scmp.eq.s32.totalorder %s19, 1
      %p188 = por %p186, %p187
      %p189 = scmp.ne.s32.totalorder %s181, %s184
      %p190 = scmp.eq.s32.totalorder %s19, 0
      %p191 = por %p189, %p190
      %p192 = scmp.ne.s32.totalorder %s181, %s184
      %p193 = scmp.eq.s32.totalorder %s24, 1
      %p194 = por %p192, %p193
      %p195 = scmp.ne.s32.totalorder %s184, %s185
      %p196 = scmp.eq.s32.totalorder %s24, 0
      %p197 = por %p195, %p196
      %p198 = scmp.ne.s32.totalorder %s184, %s185
      %p199 = scmp.eq.s32.totalorder %s25, 1
      %p200 = por %p198, %p199
      %p202 = scmp.ne.s32.totalorder %s185, %s201
      %p203 = scmp.eq.s32.totalorder %s25, 0
      %p204 = por %p202, %p203
      %p205 = scmp.le.s32.totalorder 1, %s19
      %p206 = scmp.lt.s32.totalorder %s19, 3
      %p207 = pnand %p205, %p206
      %p208 = pneg %p207
      // Predicated region
      $region9: #{tpu_custom_call.1} parent=5 // pred_check
        _
      $region10: #{tpu_custom_call.1} parent=5 // pred_check_branch
        %210 = sbr.rel (%p207) target = $region12
      $region11: #{tpu_custom_call.1} parent=5 // pred_region
        %s211 = ssub.s32 %s19, 1
        // Predicated region
        $region13: #{tpu_custom_call.1} parent=11 // pred_check
          %p212 = pneg %p66
        $region14: #{tpu_custom_call.1} parent=11 // pred_check_branch
          %214 = sbr.rel (%p212) target = $region16
        $region15: #{tpu_custom_call.1} parent=11 // pred_region
          %s216 = ssub.s32 64, 64
          %217 = vsyncadd [#allocation5], %s216
          %s219 = sshll.u32 [#allocation4], 4
          %s220 = int_to_ptr.vmem [resolvable:$true] %s219
          %222 = dma.hbm_to_vmem [thread:$0]  %s1, 64, %s220, [#allocation5]
        $region16: #{tpu_custom_call.1} parent=11 // pred_fallthru
          _
        // Predicated region
        $region17: #{tpu_custom_call.1} parent=11 // pred_check
          %p223 = pneg %p87
        $region18: #{tpu_custom_call.1} parent=11 // pred_check_branch
          %225 = sbr.rel (%p223) target = $region20
        $region19: #{tpu_custom_call.1} parent=11 // pred_region
          %s227 = ssub.s32 16, 16
          %228 = vsyncadd [#allocation8], %s227
          %s230 = sshll.u32 [#allocation7], 4
          %s231 = int_to_ptr.vmem [resolvable:$true] %s230
          %233 = dma.hbm_to_vmem [thread:$0]  %s2, 16, %s231, [#allocation8]
        $region20: #{tpu_custom_call.1} parent=11 // pred_fallthru
          _
        // Predicated region
        $region21: #{tpu_custom_call.1} parent=11 // pred_check
          %p234 = pneg %p108
        $region22: #{tpu_custom_call.1} parent=11 // pred_check_branch
          %236 = sbr.rel (%p234) target = $region24
        $region23: #{tpu_custom_call.1} parent=11 // pred_region
          _
        $region24: #{tpu_custom_call.1} parent=11 // pred_fallthru
          _
        // Predicated region
        $region25: #{tpu_custom_call.1} parent=11 // pred_check
          %p237 = pneg %p129
        $region26: #{tpu_custom_call.1} parent=11 // pred_check_branch
          %239 = sbr.rel (%p237) target = $region28
        $region27: #{tpu_custom_call.1} parent=11 // pred_region
          %s241 = ssub.s32 16, 16
          %242 = vsyncadd [#allocation8], %s241
          %s244 = sshll.u32 [#allocation9], 4
          %s245 = int_to_ptr.vmem [resolvable:$true] %s244
          %247 = dma.hbm_to_vmem [thread:$0]  %s4, 16, %s245, [#allocation8]
        $region28: #{tpu_custom_call.1} parent=11 // pred_fallthru
          _
        // Predicated region
        $region29: #{tpu_custom_call.1} parent=11 // pred_check
          %p248 = pneg %p150
        $region30: #{tpu_custom_call.1} parent=11 // pred_check_branch
          %250 = sbr.rel (%p248) target = $region32
        $region31: #{tpu_custom_call.1} parent=11 // pred_region
          %s252 = ssub.s32 51200, 51200
          %253 = vsyncadd [#allocation11], %s252
          %s254 = sshll.u32 [#allocation10], 4
          %s255 = int_to_ptr.vmem [resolvable:$true] %s254
          %260 = dma.hbm_to_vmem [thread:$0]  %s5, 51200, %s255, [#allocation11], 128, 128, 8
        $region32: #{tpu_custom_call.1} parent=11 // pred_fallthru
          _
        // Predicated region
        $region33: #{tpu_custom_call.1} parent=11 // pred_check
          %p261 = pneg %p171
        $region34: #{tpu_custom_call.1} parent=11 // pred_check_branch
          %263 = sbr.rel (%p261) target = $region36
        $region35: #{tpu_custom_call.1} parent=11 // pred_region
          %s265 = ssub.s32 16, 16
          %266 = vsyncadd [#allocation11], %s265
          %s268 = sshll.u32 [#allocation12], 4
          %s269 = int_to_ptr.vmem [resolvable:$true] %s268
          %271 = dma.hbm_to_vmem [thread:$0]  %s6, 16, %s269, [#allocation11]
        $region36: #{tpu_custom_call.1} parent=11 // pred_fallthru
          _
      $region12: #{tpu_custom_call.1} parent=5 // pred_fallthru
        _
      %p272 = scmp.lt.s32.totalorder %s19, 2
      // Predicated region
      $region37: #{tpu_custom_call.1} parent=5 // pred_check
        %p273 = pneg %p272
      $region38: #{tpu_custom_call.1} parent=5 // pred_check_branch
        %275 = sbr.rel (%p273) target = $region40
      $region39: #{tpu_custom_call.1} parent=5 // pred_region
        // Predicated region
        $region41: #{tpu_custom_call.1} parent=39 // pred_check
          %p276 = pneg %p39
        $region42: #{tpu_custom_call.1} parent=39 // pred_check_branch
          %278 = sbr.rel (%p276) target = $region44
        $region43: #{tpu_custom_call.1} parent=39 // pred_region
          %p279 = scmp.lt.s32.totalorder %s19, 1
          %s280 = scalar_select %p279, %s19, 1
          %s281 = smul.addr %s280, 32
          %s282 = smul.addr %s281, 8
          %s283 = scalar_lea.vmem %s0, %s282
        $region44: #{tpu_custom_call.1} parent=39 // pred_fallthru
          _
      $region40: #{tpu_custom_call.1} parent=5 // pred_fallthru
        _
      %p284 = scmp.le.s32.totalorder 1, %s19
      %p285 = scmp.lt.s32.totalorder %s19, 3
      %p286 = pnand %p284, %p285
      %p287 = pneg %p286
      // Predicated region
      $region45: #{tpu_custom_call.1} parent=5 // pred_check
        _
      $region46: #{tpu_custom_call.1} parent=5 // pred_check_branch
        %289 = sbr.rel (%p286) target = $region48
      $region47: #{tpu_custom_call.1} parent=5 // pred_region
        %s290 = ssub.s32 %s19, 1
        // Predicated region
        $region49: #{tpu_custom_call.1} parent=47 // pred_check
          %p291 = pneg %p66
        $region50: #{tpu_custom_call.1} parent=47 // pred_check_branch
          %293 = sbr.rel (%p291) target = $region52
        $region51: #{tpu_custom_call.1} parent=47 // pred_region
          %294 = dma.done [#allocation5], 64
        $region52: #{tpu_custom_call.1} parent=47 // pred_fallthru
          _
        // Predicated region
        $region53: #{tpu_custom_call.1} parent=47 // pred_check
          %p295 = pneg %p87
        $region54: #{tpu_custom_call.1} parent=47 // pred_check_branch
          %297 = sbr.rel (%p295) target = $region56
        $region55: #{tpu_custom_call.1} parent=47 // pred_region
          %298 = dma.done [#allocation8], 16
        $region56: #{tpu_custom_call.1} parent=47 // pred_fallthru
          _
        // Predicated region
        $region57: #{tpu_custom_call.1} parent=47 // pred_check
          %p299 = pneg %p129
        $region58: #{tpu_custom_call.1} parent=47 // pred_check_branch
          %301 = sbr.rel (%p299) target = $region60
        $region59: #{tpu_custom_call.1} parent=47 // pred_region
          %302 = dma.done [#allocation8], 16
        $region60: #{tpu_custom_call.1} parent=47 // pred_fallthru
          _
        // Predicated region
        $region61: #{tpu_custom_call.1} parent=47 // pred_check
          %p303 = pneg %p150
        $region62: #{tpu_custom_call.1} parent=47 // pred_check_branch
          %305 = sbr.rel (%p303) target = $region64
        $region63: #{tpu_custom_call.1} parent=47 // pred_region
          %306 = dma.done [#allocation11], 51200
        $region64: #{tpu_custom_call.1} parent=47 // pred_fallthru
          _
        // Predicated region
        $region65: #{tpu_custom_call.1} parent=47 // pred_check
          %p307 = pneg %p171
        $region66: #{tpu_custom_call.1} parent=47 // pred_check_branch
          %309 = sbr.rel (%p307) target = $region68
        $region67: #{tpu_custom_call.1} parent=47 // pred_region
          %310 = dma.done [#allocation11], 16
        $region68: #{tpu_custom_call.1} parent=47 // pred_fallthru
          _
        %p311 = scmp.lt.s32.totalorder %s24, 1
        %s312 = scalar_select %p311, %s24, 1
        %s313 = smul.addr %s312, 32
        %s314 = smul.addr %s313, 8
        %s315 = scalar_lea.vmem %s0, %s314
        %p316 = pneg %p45
        %p317 = pneg %p42
        %p318 = pneg %p66
        %p319 = pneg %p63
        %p320 = pneg %p87
        %p321 = pneg %p84
        %p322 = pneg %p108
        %p323 = pneg %p105
        %p324 = pneg %p129
        %p325 = pneg %p126
        %p326 = pneg %p150
        %p327 = pneg %p147
        %p328 = pneg %p171
        %p329 = pneg %p168
        %p330 = pneg %p197
        %p331 = pneg %p194
        %s332 = sand.u32 %s184, 1
        %s333 = scalar_lea.sflag [#allocation6], %s332
        %s334 = sand.u32 %s184, 1
        %s335 = smul.addr %s334, 256
        %s336 = scalar_lea.vmem [#allocation13], %s335
        %p337 = scmp.lt.s32.totalorder %s24, 1
        %s338 = scalar_select %p337, %s24, 1
        %s339 = smul.addr %s338, 32
        %s340 = smul.addr %s339, 8
        %s341 = scalar_lea.vmem %s0, %s340
        %s342 = smul.u32 32, %s24
        %343 = vst [vmem:[#allocation2] sm:$0xff] 0.0
        %344 = vst [vmem:[#allocation2 + $0x8] sm:$0xff] 0.0
        %345 = vst [vmem:[#allocation2 + $0x10] sm:$0xf] 0.0
        %346 = vst [vmem:[#allocation2 + $0x18] sm:$0xff] 0.0
        %347 = vst [vmem:[#allocation2 + $0x20] sm:$0xff] 0.0
        %348 = vst [vmem:[#allocation2 + $0x28] sm:$0xf] 0.0
        %349 = vst [vmem:[#allocation2 + $0x30] sm:$0xff] 0.0
        %350 = vst [vmem:[#allocation2 + $0x38] sm:$0xff] 0.0
        %351 = vst [vmem:[#allocation2 + $0x40] sm:$0xf] 0.0
        %352 = vst [vmem:[#allocation2 + $0x48] sm:$0xff] 0.0
        %353 = vst [vmem:[#allocation2 + $0x50] sm:$0xff] 0.0
        %354 = vst [vmem:[#allocation2 + $0x58] sm:$0xf] 0.0
        %355 = vst [vmem:[#allocation2 + $0x60] sm:$0xff] 0.0
        %356 = vst [vmem:[#allocation2 + $0x68] sm:$0xff] 0.0
        %357 = vst [vmem:[#allocation2 + $0x70] sm:$0xf] 0.0
        %358 = vst [vmem:[#allocation2 + $0x78] sm:$0xff] 0.0
        %359 = vst [vmem:[#allocation2 + $0x80] sm:$0xff] 0.0
        %360 = vst [vmem:[#allocation2 + $0x88] sm:$0xf] 0.0
        %361 = vst [vmem:[#allocation2 + $0x90] sm:$0xff] 0.0
        %362 = vst [vmem:[#allocation2 + $0x98] sm:$0xff] 0.0
        %363 = vst [vmem:[#allocation2 + $0xa0] sm:$0xf] 0.0
        %364 = vst [vmem:[#allocation2 + $0xa8] sm:$0xff] 0.0
        %365 = vst [vmem:[#allocation2 + $0xb0] sm:$0xff] 0.0
        %366 = vst [vmem:[#allocation2 + $0xb8] sm:$0xf] 0.0
        %367 = vst [vmem:[#allocation2 + $0xc0] sm:$0xff] 0.0
        %368 = vst [vmem:[#allocation2 + $0xc8] sm:$0xff] 0.0
        %369 = vst [vmem:[#allocation2 + $0xd0] sm:$0xf] 0.0
        %370 = vst [vmem:[#allocation2 + $0xd8] sm:$0xff] 0.0
        %371 = vst [vmem:[#allocation2 + $0xe0] sm:$0xff] 0.0
        %372 = vst [vmem:[#allocation2 + $0xe8] sm:$0xf] 0.0
        %373 = vst [vmem:[#allocation2 + $0xf0] sm:$0xff] 0.0
        %374 = vst [vmem:[#allocation2 + $0xf8] sm:$0xff] 0.0
        %375 = vst [vmem:[#allocation2 + $0x100] sm:$0xf] 0.0
        %376 = vst [vmem:[#allocation2 + $0x108] sm:$0xff] 0.0
        %377 = vst [vmem:[#allocation2 + $0x110] sm:$0xff] 0.0
        %378 = vst [vmem:[#allocation2 + $0x118] sm:$0xf] 0.0
        %379 = vst [vmem:[#allocation2 + $0x120] sm:$0xff] 0.0
        %380 = vst [vmem:[#allocation2 + $0x128] sm:$0xff] 0.0
        %381 = vst [vmem:[#allocation2 + $0x130] sm:$0xf] 0.0
        %382 = vst [vmem:[#allocation2 + $0x138] sm:$0xff] 0.0
        %383 = vst [vmem:[#allocation2 + $0x140] sm:$0xff] 0.0
        %384 = vst [vmem:[#allocation2 + $0x148] sm:$0xf] 0.0
        %385 = vst [vmem:[#allocation2 + $0x150] sm:$0xff] 0.0
        %386 = vst [vmem:[#allocation2 + $0x158] sm:$0xff] 0.0
        %387 = vst [vmem:[#allocation2 + $0x160] sm:$0xf] 0.0
        %388 = vst [vmem:[#allocation2 + $0x168] sm:$0xff] 0.0
        %389 = vst [vmem:[#allocation2 + $0x170] sm:$0xff] 0.0
        %390 = vst [vmem:[#allocation2 + $0x178] sm:$0xf] 0.0
        %391 = vst [vmem:[#allocation2 + $0x180] sm:$0xff] 0.0
        %392 = vst [vmem:[#allocation2 + $0x188] sm:$0xff] 0.0
        %393 = vst [vmem:[#allocation2 + $0x190] sm:$0xf] 0.0
        %394 = vst [vmem:[#allocation2 + $0x198] sm:$0xff] 0.0
        %395 = vst [vmem:[#allocation2 + $0x1a0] sm:$0xff] 0.0
        %396 = vst [vmem:[#allocation2 + $0x1a8] sm:$0xf] 0.0
        %397 = vst [vmem:[#allocation2 + $0x1b0] sm:$0xff] 0.0
        %398 = vst [vmem:[#allocation2 + $0x1b8] sm:$0xff] 0.0
        %399 = vst [vmem:[#allocation2 + $0x1c0] sm:$0xf] 0.0
        %400 = vst [vmem:[#allocation2 + $0x1c8] sm:$0xff] 0.0
        %401 = vst [vmem:[#allocation2 + $0x1d0] sm:$0xff] 0.0
        %402 = vst [vmem:[#allocation2 + $0x1d8] sm:$0xf] 0.0
        %v403 = vld [vmem:[%s341] sm:$0xff]
        %v404 = vld [vmem:[%s341 + $0x8] sm:$0xff]
        %v405 = vld [vmem:[%s341 + $0x10] sm:$0xff]
        %v406 = vld [vmem:[%s341 + $0x18] sm:$0xff]
        %v407 = vld [vmem:[%s341 + $0x20] sm:$0xff]
        %v408 = vld [vmem:[%s341 + $0x28] sm:$0xff]
        %v409 = vld [vmem:[%s341 + $0x30] sm:$0xff]
        %v410 = vld [vmem:[%s341 + $0x38] sm:$0xff]
        %v411 = vld [vmem:[%s341 + $0x40] sm:$0xff]
        %v412 = vld [vmem:[%s341 + $0x48] sm:$0xff]
        %v413 = vld [vmem:[%s341 + $0x50] sm:$0xff]
        %v414 = vld [vmem:[%s341 + $0x58] sm:$0xff]
        %v415 = vld [vmem:[%s341 + $0x60] sm:$0xff]
        %v416 = vld [vmem:[%s341 + $0x68] sm:$0xff]
        %v417 = vld [vmem:[%s341 + $0x70] sm:$0xff]
        %v418 = vld [vmem:[%s341 + $0x78] sm:$0xff]
        %v419 = vld [vmem:[%s341 + $0x80] sm:$0xff]
        %v420 = vld [vmem:[%s341 + $0x88] sm:$0xff]
        %v421 = vld [vmem:[%s341 + $0x90] sm:$0xff]
        %v422 = vld [vmem:[%s341 + $0x98] sm:$0xff]
        %v423 = vld [vmem:[%s341 + $0xa0] sm:$0xff]
        %v424 = vld [vmem:[%s341 + $0xa8] sm:$0xff]
        %v425 = vld [vmem:[%s341 + $0xb0] sm:$0xff]
        %v426 = vld [vmem:[%s341 + $0xb8] sm:$0xff]
        %v427 = vld [vmem:[%s341 + $0xc0] sm:$0xff]
        %v428 = vld [vmem:[%s341 + $0xc8] sm:$0xff]
        %v429 = vld [vmem:[%s341 + $0xd0] sm:$0xff]
        %v430 = vld [vmem:[%s341 + $0xd8] sm:$0xff]
        %v431 = vld [vmem:[%s341 + $0xe0] sm:$0xff]
        %v432 = vld [vmem:[%s341 + $0xe8] sm:$0xff]
        %v433 = vld [vmem:[%s341 + $0xf0] sm:$0xff]
        %v434 = vld [vmem:[%s341 + $0xf8] sm:$0xff]
        %v435 = vld [vmem:[#allocation4] sm:$0xf]
        %v436 = vld [vmem:[#allocation7] sm:$0x1]
        %v438 = vlaneseq
        %v439 = vshrl.u32 %v438, 7
        %v440 = vsub.s32 0, %v439
        %v441 = vrot.slane %v436, %v440
        %vm443 = vcmask 31744
        %v445 = vsel %vm443, %v403, 0
        %v448 = vsel %vm443, %v404, 0
        %v451 = vsel %vm443, %v405, 0
        %v454 = vsel %vm443, %v406, 0
        %v457 = vsel %vm443, %v407, 0
        %v460 = vsel %vm443, %v408, 0
        %v463 = vsel %vm443, %v409, 0
        %v466 = vsel %vm443, %v410, 0
        %v469 = vsel %vm443, %v411, 0
        %v472 = vsel %vm443, %v412, 0
        %v475 = vsel %vm443, %v413, 0
        %v478 = vsel %vm443, %v414, 0
        %v481 = vsel %vm443, %v415, 0
        %v484 = vsel %vm443, %v416, 0
        %v487 = vsel %vm443, %v417, 0
        %v490 = vsel %vm443, %v418, 0
        %v493 = vsel %vm443, %v419, 0
        %v496 = vsel %vm443, %v420, 0
        %v499 = vsel %vm443, %v421, 0
        %v502 = vsel %vm443, %v422, 0
        %v505 = vsel %vm443, %v423, 0
        %v508 = vsel %vm443, %v424, 0
        %v511 = vsel %vm443, %v425, 0
        %v514 = vsel %vm443, %v426, 0
        %v517 = vsel %vm443, %v427, 0
        %v520 = vsel %vm443, %v428, 0
        %v523 = vsel %vm443, %v429, 0
        %v526 = vsel %vm443, %v430, 0
        %v529 = vsel %vm443, %v431, 0
        %v532 = vsel %vm443, %v432, 0
        %v535 = vsel %vm443, %v433, 0
        %v538 = vsel %vm443, %v434, 0
        %vm540 = vcmask 1043456
        %v542 = vsel %vm540, %v435, 0
        %544 = vmatprep.subr.mxu0 0.0
        %545 = vmatpush1.msra.mxu0 0.0
        %546 = vmatprep.subr.mxu0 0.0
        %547 = vmatpush1.msra.mxu0 0.0
        %548 = vmatprep.subr.mxu0 0.0
        %549 = vmatpush1.msra.mxu0 0.0
        %550 = vmatprep.subr.mxu0 0.0
        %551 = vmatpush1.msra.mxu0 0.0
        %552 = vmatprep.subr.mxu0 0.0
        %553 = vmatpush1.msra.mxu0 0.0
        %554 = vmatprep.subr.mxu0 0.0
        %555 = vmatpush1.msra.mxu0 0.0
        %556 = vmatprep.subr.mxu0 0.0
        %557 = vmatpush1.msra.mxu0 0.0
        %558 = vmatprep.subr.mxu0 0.0
        %559 = vmatpush1.msra.mxu0 0.0
        %560 = vmatprep.subr.mxu0 0.0
        %561 = vmatpush1.msra.mxu0 0.0
        %562 = vmatprep.subr.mxu0 0.0
        %563 = vmatpush1.msra.mxu0 0.0
        %564 = vmatprep.subr.mxu0 0.0
        %565 = vmatpush1.msra.mxu0 0.0
        %566 = vmatprep.subr.mxu0 0.0
        %567 = vmatpush1.msra.mxu0 0.0
        %568 = vmatprep.subr.mxu0 0.0
        %569 = vmatpush1.msra.mxu0 0.0
        %570 = vmatprep.subr.mxu0 0.0
        %571 = vmatpush1.msra.mxu0 0.0
        %572 = vmatprep.subr.mxu0 0.0
        %573 = vmatpush1.msra.mxu0 0.0
        %574 = vmatprep.subr.mxu0 0.0
        %575 = vmatpush1.msra.mxu0 %v542
        %576 = vmatprep.subr.mxu0 0.0
        %577 = vmatpush2.msra.mxu0 0.0
        %578 = vmatprep.subr.mxu0 0.0
        %579 = vmatpush2.msra.mxu0 0.0
        %580 = vmatprep.subr.mxu0 0.0
        %581 = vmatpush2.msra.mxu0 0.0
        %582 = vmatprep.subr.mxu0 0.0
        %583 = vmatpush2.msra.mxu0 0.0
        %584 = vmatprep.subr.mxu0 0.0
        %585 = vmatpush2.msra.mxu0 0.0
        %586 = vmatprep.subr.mxu0 0.0
        %587 = vmatpush2.msra.mxu0 0.0
        %588 = vmatprep.subr.mxu0 0.0
        %589 = vmatpush2.msra.mxu0 0.0
        %590 = vmatprep.subr.mxu0 0.0
        %591 = vmatpush2.msra.mxu0 0.0
        %592 = vmatprep.subr.mxu0 0.0
        %593 = vmatpush2.msra.mxu0 0.0
        %594 = vmatprep.subr.mxu0 0.0
        %595 = vmatpush2.msra.mxu0 0.0
        %596 = vmatprep.subr.mxu0 0.0
        %597 = vmatpush2.msra.mxu0 0.0
        %598 = vmatprep.subr.mxu0 0.0
        %599 = vmatpush2.msra.mxu0 0.0
        %600 = vmatprep.subr.mxu0 0.0
        %601 = vmatpush2.msra.mxu0 0.0
        %602 = vmatprep.subr.mxu0 0.0
        %603 = vmatpush2.msra.mxu0 0.0
        %604 = vmatprep.subr.mxu0 0.0
        %605 = vmatpush2.msra.mxu0 0.0
        %606 = vmatprep.subr.mxu0 0.0
        %607 = vmatpush2.msra.mxu0 0.0
        %608 = vmatprep.mubr.f32.mxu0 0.0
        %609 = vmatmul.mubr.f32.gmra.mxu0 %v445
        %v610 = vpop.f32.mrf.mxu0
        %v611 = vadd.f32 %v441, %v610
        %v612 = vpop.f32.mrf.mxu0
        %613 = vmatprep.mubr.f32.mxu0 0.0
        %614 = vmatmul.mubr.f32.gmra.mxu0 %v448
        %v615 = vpop.f32.mrf.mxu0
        %v616 = vadd.f32 %v441, %v615
        %v617 = vpop.f32.mrf.mxu0
        %618 = vmatprep.mubr.f32.mxu0 0.0
        %619 = vmatmul.mubr.f32.gmra.mxu0 %v451
        %v620 = vpop.f32.mrf.mxu0
        %v621 = vadd.f32 %v441, %v620
        %v622 = vpop.f32.mrf.mxu0
        %623 = vmatprep.mubr.f32.mxu0 0.0
        %624 = vmatmul.mubr.f32.gmra.mxu0 %v454
        %v625 = vpop.f32.mrf.mxu0
        %v626 = vadd.f32 %v441, %v625
        %v627 = vpop.f32.mrf.mxu0
        %628 = vmatprep.mubr.f32.mxu0 0.0
        %629 = vmatmul.mubr.f32.gmra.mxu0 %v457
        %v630 = vpop.f32.mrf.mxu0
        %v631 = vadd.f32 %v441, %v630
        %v632 = vpop.f32.mrf.mxu0
        %633 = vmatprep.mubr.f32.mxu0 0.0
        %634 = vmatmul.mubr.f32.gmra.mxu0 %v460
        %v635 = vpop.f32.mrf.mxu0
        %v636 = vadd.f32 %v441, %v635
        %v637 = vpop.f32.mrf.mxu0
        %638 = vmatprep.mubr.f32.mxu0 0.0
        %639 = vmatmul.mubr.f32.gmra.mxu0 %v463
        %v640 = vpop.f32.mrf.mxu0
        %v641 = vadd.f32 %v441, %v640
        %v642 = vpop.f32.mrf.mxu0
        %643 = vmatprep.mubr.f32.mxu0 0.0
        %644 = vmatmul.mubr.f32.gmra.mxu0 %v466
        %v645 = vpop.f32.mrf.mxu0
        %v646 = vadd.f32 %v441, %v645
        %v647 = vpop.f32.mrf.mxu0
        %648 = vmatprep.mubr.f32.mxu0 0.0
        %649 = vmatmul.mubr.f32.gmra.mxu0 %v469
        %v650 = vpop.f32.mrf.mxu0
        %v651 = vadd.f32 %v441, %v650
        %v652 = vpop.f32.mrf.mxu0
        %653 = vmatprep.mubr.f32.mxu0 0.0
        %654 = vmatmul.mubr.f32.gmra.mxu0 %v472
        %v655 = vpop.f32.mrf.mxu0
        %v656 = vadd.f32 %v441, %v655
        %v657 = vpop.f32.mrf.mxu0
        %658 = vmatprep.mubr.f32.mxu0 0.0
        %659 = vmatmul.mubr.f32.gmra.mxu0 %v475
        %v660 = vpop.f32.mrf.mxu0
        %v661 = vadd.f32 %v441, %v660
        %v662 = vpop.f32.mrf.mxu0
        %663 = vmatprep.mubr.f32.mxu0 0.0
        %664 = vmatmul.mubr.f32.gmra.mxu0 %v478
        %v665 = vpop.f32.mrf.mxu0
        %v666 = vadd.f32 %v441, %v665
        %v667 = vpop.f32.mrf.mxu0
        %668 = vmatprep.mubr.f32.mxu0 0.0
        %669 = vmatmul.mubr.f32.gmra.mxu0 %v481
        %v670 = vpop.f32.mrf.mxu0
        %v671 = vadd.f32 %v441, %v670
        %v672 = vpop.f32.mrf.mxu0
        %673 = vmatprep.mubr.f32.mxu0 0.0
        %674 = vmatmul.mubr.f32.gmra.mxu0 %v484
        %v675 = vpop.f32.mrf.mxu0
        %v676 = vadd.f32 %v441, %v675
        %v677 = vpop.f32.mrf.mxu0
        %678 = vmatprep.mubr.f32.mxu0 0.0
        %679 = vmatmul.mubr.f32.gmra.mxu0 %v487
        %v680 = vpop.f32.mrf.mxu0
        %v681 = vadd.f32 %v441, %v680
        %v682 = vpop.f32.mrf.mxu0
        %683 = vmatprep.mubr.f32.mxu0 0.0
        %684 = vmatmul.mubr.f32.gmra.mxu0 %v490
        %v685 = vpop.f32.mrf.mxu0
        %v686 = vadd.f32 %v441, %v685
        %v687 = vpop.f32.mrf.mxu0
        %688 = vmatprep.mubr.f32.mxu0 0.0
        %689 = vmatmul.mubr.f32.gmra.mxu0 %v493
        %v690 = vpop.f32.mrf.mxu0
        %v691 = vadd.f32 %v441, %v690
        %v692 = vpop.f32.mrf.mxu0
        %693 = vmatprep.mubr.f32.mxu0 0.0
        %694 = vmatmul.mubr.f32.gmra.mxu0 %v496
        %v695 = vpop.f32.mrf.mxu0
        %v696 = vadd.f32 %v441, %v695
        %v697 = vpop.f32.mrf.mxu0
        %698 = vmatprep.mubr.f32.mxu0 0.0
        %699 = vmatmul.mubr.f32.gmra.mxu0 %v499
        %v700 = vpop.f32.mrf.mxu0
        %v701 = vadd.f32 %v441, %v700
        %v702 = vpop.f32.mrf.mxu0
        %703 = vmatprep.mubr.f32.mxu0 0.0
        %704 = vmatmul.mubr.f32.gmra.mxu0 %v502
        %v705 = vpop.f32.mrf.mxu0
        %v706 = vadd.f32 %v441, %v705
        %v707 = vpop.f32.mrf.mxu0
        %708 = vmatprep.mubr.f32.mxu0 0.0
        %709 = vmatmul.mubr.f32.gmra.mxu0 %v505
        %v710 = vpop.f32.mrf.mxu0
        %v711 = vadd.f32 %v441, %v710
        %v712 = vpop.f32.mrf.mxu0
        %713 = vmatprep.mubr.f32.mxu0 0.0
        %714 = vmatmul.mubr.f32.gmra.mxu0 %v508
        %v715 = vpop.f32.mrf.mxu0
        %v716 = vadd.f32 %v441, %v715
        %v717 = vpop.f32.mrf.mxu0
        %718 = vmatprep.mubr.f32.mxu0 0.0
        %719 = vmatmul.mubr.f32.gmra.mxu0 %v511
        %v720 = vpop.f32.mrf.mxu0
        %v721 = vadd.f32 %v441, %v720
        %v722 = vpop.f32.mrf.mxu0
        %723 = vmatprep.mubr.f32.mxu0 0.0
        %724 = vmatmul.mubr.f32.gmra.mxu0 %v514
        %v725 = vpop.f32.mrf.mxu0
        %v726 = vadd.f32 %v441, %v725
        %v727 = vpop.f32.mrf.mxu0
        %728 = vmatprep.mubr.f32.mxu0 0.0
        %729 = vmatmul.mubr.f32.gmra.mxu0 %v517
        %v730 = vpop.f32.mrf.mxu0
        %v731 = vadd.f32 %v441, %v730
        %v732 = vpop.f32.mrf.mxu0
        %733 = vmatprep.mubr.f32.mxu0 0.0
        %734 = vmatmul.mubr.f32.gmra.mxu0 %v520
        %v735 = vpop.f32.mrf.mxu0
        %v736 = vadd.f32 %v441, %v735
        %v737 = vpop.f32.mrf.mxu0
        %738 = vmatprep.mubr.f32.mxu0 0.0
        %739 = vmatmul.mubr.f32.gmra.mxu0 %v523
        %v740 = vpop.f32.mrf.mxu0
        %v741 = vadd.f32 %v441, %v740
        %v742 = vpop.f32.mrf.mxu0
        %743 = vmatprep.mubr.f32.mxu0 0.0
        %744 = vmatmul.mubr.f32.gmra.mxu0 %v526
        %v745 = vpop.f32.mrf.mxu0
        %v746 = vadd.f32 %v441, %v745
        %v747 = vpop.f32.mrf.mxu0
        %748 = vmatprep.mubr.f32.mxu0 0.0
        %749 = vmatmul.mubr.f32.gmra.mxu0 %v529
        %v750 = vpop.f32.mrf.mxu0
        %v751 = vadd.f32 %v441, %v750
        %v752 = vpop.f32.mrf.mxu0
        %753 = vmatprep.mubr.f32.mxu0 0.0
        %754 = vmatmul.mubr.f32.gmra.mxu0 %v532
        %v755 = vpop.f32.mrf.mxu0
        %v756 = vadd.f32 %v441, %v755
        %v757 = vpop.f32.mrf.mxu0
        %758 = vmatprep.mubr.f32.mxu0 0.0
        %759 = vmatmul.mubr.f32.gmra.mxu0 %v535
        %v760 = vpop.f32.mrf.mxu0
        %v761 = vadd.f32 %v441, %v760
        %v762 = vpop.f32.mrf.mxu0
        %763 = vmatprep.mubr.f32.mxu0 0.0
        %764 = vmatmul.mubr.f32.gmra.mxu0 %v538
        %v765 = vpop.f32.mrf.mxu0
        %v766 = vadd.f32 %v441, %v765
        %v767 = vpop.f32.mrf.mxu0
        %768 = vdwg.mxu0
        %s769 = scalar_lea.vmem [#allocation2], 48
        %vm770 = vcmask 457728
        %771 = vst.msk [vmem:[%s769 + $0x2] sm:$0xff] %vm770, %v611
        %772 = vst.msk [vmem:[%s769 + $0xa] sm:$0xff] %vm770, %v616
        %773 = vst.msk [vmem:[%s769 + $0x1a] sm:$0xff] %vm770, %v621
        %774 = vst.msk [vmem:[%s769 + $0x22] sm:$0xff] %vm770, %v626
        %775 = vst.msk [vmem:[%s769 + $0x32] sm:$0xff] %vm770, %v631
        %776 = vst.msk [vmem:[%s769 + $0x3a] sm:$0xff] %vm770, %v636
        %777 = vst.msk [vmem:[%s769 + $0x4a] sm:$0xff] %vm770, %v641
        %778 = vst.msk [vmem:[%s769 + $0x52] sm:$0xff] %vm770, %v646
        %779 = vst.msk [vmem:[%s769 + $0x62] sm:$0xff] %vm770, %v651
        %780 = vst.msk [vmem:[%s769 + $0x6a] sm:$0xff] %vm770, %v656
        %781 = vst.msk [vmem:[%s769 + $0x7a] sm:$0xff] %vm770, %v661
        %782 = vst.msk [vmem:[%s769 + $0x82] sm:$0xff] %vm770, %v666
        %783 = vst.msk [vmem:[%s769 + $0x92] sm:$0xff] %vm770, %v671
        %784 = vst.msk [vmem:[%s769 + $0x9a] sm:$0xff] %vm770, %v676
        %785 = vst.msk [vmem:[%s769 + $0xaa] sm:$0xff] %vm770, %v681
        %786 = vst.msk [vmem:[%s769 + $0xb2] sm:$0xff] %vm770, %v686
        %787 = vst.msk [vmem:[%s769 + $0xc2] sm:$0xff] %vm770, %v691
        %788 = vst.msk [vmem:[%s769 + $0xca] sm:$0xff] %vm770, %v696
        %789 = vst.msk [vmem:[%s769 + $0xda] sm:$0xff] %vm770, %v701
        %790 = vst.msk [vmem:[%s769 + $0xe2] sm:$0xff] %vm770, %v706
        %791 = vst.msk [vmem:[%s769 + $0xf2] sm:$0xff] %vm770, %v711
        %792 = vst.msk [vmem:[%s769 + $0xfa] sm:$0xff] %vm770, %v716
        %793 = vst.msk [vmem:[%s769 + $0x10a] sm:$0xff] %vm770, %v721
        %794 = vst.msk [vmem:[%s769 + $0x112] sm:$0xff] %vm770, %v726
        %795 = vst.msk [vmem:[%s769 + $0x122] sm:$0xff] %vm770, %v731
        %796 = vst.msk [vmem:[%s769 + $0x12a] sm:$0xff] %vm770, %v736
        %797 = vst.msk [vmem:[%s769 + $0x13a] sm:$0xff] %vm770, %v741
        %798 = vst.msk [vmem:[%s769 + $0x142] sm:$0xff] %vm770, %v746
        %799 = vst.msk [vmem:[%s769 + $0x152] sm:$0xff] %vm770, %v751
        %800 = vst.msk [vmem:[%s769 + $0x15a] sm:$0xff] %vm770, %v756
        %801 = vst.msk [vmem:[%s769 + $0x16a] sm:$0xff] %vm770, %v761
        %802 = vst.msk [vmem:[%s769 + $0x172] sm:$0xff] %vm770, %v766
        %803 = vrot.lane.b32.xlu0 %v403, 56
        %v804 = vpop.permute.xlu0 %803
        %805 = vrot.lane.b32.xlu0 %v404, 56
        %v806 = vpop.permute.xlu0 %805
        %807 = vrot.lane.b32.xlu0 %v405, 56
        %v808 = vpop.permute.xlu0 %807
        %809 = vrot.lane.b32.xlu0 %v406, 56
        %v810 = vpop.permute.xlu0 %809
        %811 = vrot.lane.b32.xlu0 %v407, 56
        %v812 = vpop.permute.xlu0 %811
        %813 = vrot.lane.b32.xlu0 %v408, 56
        %v814 = vpop.permute.xlu0 %813
        %815 = vrot.lane.b32.xlu0 %v409, 56
        %v816 = vpop.permute.xlu0 %815
        %817 = vrot.lane.b32.xlu0 %v410, 56
        %v818 = vpop.permute.xlu0 %817
        %819 = vrot.lane.b32.xlu0 %v411, 56
        %v820 = vpop.permute.xlu0 %819
        %821 = vrot.lane.b32.xlu0 %v412, 56
        %v822 = vpop.permute.xlu0 %821
        %823 = vrot.lane.b32.xlu0 %v413, 56
        %v824 = vpop.permute.xlu0 %823
        %825 = vrot.lane.b32.xlu0 %v414, 56
        %v826 = vpop.permute.xlu0 %825
        %827 = vrot.lane.b32.xlu0 %v415, 56
        %v828 = vpop.permute.xlu0 %827
        %829 = vrot.lane.b32.xlu0 %v416, 56
        %v830 = vpop.permute.xlu0 %829
        %831 = vrot.lane.b32.xlu0 %v417, 56
        %v832 = vpop.permute.xlu0 %831
        %833 = vrot.lane.b32.xlu0 %v418, 56
        %v834 = vpop.permute.xlu0 %833
        %835 = vrot.lane.b32.xlu0 %v419, 56
        %v836 = vpop.permute.xlu0 %835
        %837 = vrot.lane.b32.xlu0 %v420, 56
        %v838 = vpop.permute.xlu0 %837
        %839 = vrot.lane.b32.xlu0 %v421, 56
        %v840 = vpop.permute.xlu0 %839
        %841 = vrot.lane.b32.xlu0 %v422, 56
        %v842 = vpop.permute.xlu0 %841
        %843 = vrot.lane.b32.xlu0 %v423, 56
        %v844 = vpop.permute.xlu0 %843
        %845 = vrot.lane.b32.xlu0 %v424, 56
        %v846 = vpop.permute.xlu0 %845
        %847 = vrot.lane.b32.xlu0 %v425, 56
        %v848 = vpop.permute.xlu0 %847
        %849 = vrot.lane.b32.xlu0 %v426, 56
        %v850 = vpop.permute.xlu0 %849
        %851 = vrot.lane.b32.xlu0 %v427, 56
        %v852 = vpop.permute.xlu0 %851
        %853 = vrot.lane.b32.xlu0 %v428, 56
        %v854 = vpop.permute.xlu0 %853
        %855 = vrot.lane.b32.xlu0 %v429, 56
        %v856 = vpop.permute.xlu0 %855
        %857 = vrot.lane.b32.xlu0 %v430, 56
        %v858 = vpop.permute.xlu0 %857
        %859 = vrot.lane.b32.xlu0 %v431, 56
        %v860 = vpop.permute.xlu0 %859
        %861 = vrot.lane.b32.xlu0 %v432, 56
        %v862 = vpop.permute.xlu0 %861
        %863 = vrot.lane.b32.xlu0 %v433, 56
        %v864 = vpop.permute.xlu0 %863
        %865 = vrot.lane.b32.xlu0 %v434, 56
        %v866 = vpop.permute.xlu0 %865
        %vm899 = vcmask 490944
        %900 = vst.msk [vmem:[%s769 + $0x2] sm:$0xff] %vm899, %v804
        %901 = vst.msk [vmem:[%s769 + $0xa] sm:$0xff] %vm899, %v806
        %902 = vst.msk [vmem:[%s769 + $0x1a] sm:$0xff] %vm899, %v808
        %903 = vst.msk [vmem:[%s769 + $0x22] sm:$0xff] %vm899, %v810
        %904 = vst.msk [vmem:[%s769 + $0x32] sm:$0xff] %vm899, %v812
        %905 = vst.msk [vmem:[%s769 + $0x3a] sm:$0xff] %vm899, %v814
        %906 = vst.msk [vmem:[%s769 + $0x4a] sm:$0xff] %vm899, %v816
        %907 = vst.msk [vmem:[%s769 + $0x52] sm:$0xff] %vm899, %v818
        %908 = vst.msk [vmem:[%s769 + $0x62] sm:$0xff] %vm899, %v820
        %909 = vst.msk [vmem:[%s769 + $0x6a] sm:$0xff] %vm899, %v822
        %910 = vst.msk [vmem:[%s769 + $0x7a] sm:$0xff] %vm899, %v824
        %911 = vst.msk [vmem:[%s769 + $0x82] sm:$0xff] %vm899, %v826
        %912 = vst.msk [vmem:[%s769 + $0x92] sm:$0xff] %vm899, %v828
        %913 = vst.msk [vmem:[%s769 + $0x9a] sm:$0xff] %vm899, %v830
        %914 = vst.msk [vmem:[%s769 + $0xaa] sm:$0xff] %vm899, %v832
        %915 = vst.msk [vmem:[%s769 + $0xb2] sm:$0xff] %vm899, %v834
        %916 = vst.msk [vmem:[%s769 + $0xc2] sm:$0xff] %vm899, %v836
        %917 = vst.msk [vmem:[%s769 + $0xca] sm:$0xff] %vm899, %v838
        %918 = vst.msk [vmem:[%s769 + $0xda] sm:$0xff] %vm899, %v840
        %919 = vst.msk [vmem:[%s769 + $0xe2] sm:$0xff] %vm899, %v842
        %920 = vst.msk [vmem:[%s769 + $0xf2] sm:$0xff] %vm899, %v844
        %921 = vst.msk [vmem:[%s769 + $0xfa] sm:$0xff] %vm899, %v846
        %922 = vst.msk [vmem:[%s769 + $0x10a] sm:$0xff] %vm899, %v848
        %923 = vst.msk [vmem:[%s769 + $0x112] sm:$0xff] %vm899, %v850
        %924 = vst.msk [vmem:[%s769 + $0x122] sm:$0xff] %vm899, %v852
        %925 = vst.msk [vmem:[%s769 + $0x12a] sm:$0xff] %vm899, %v854
        %926 = vst.msk [vmem:[%s769 + $0x13a] sm:$0xff] %vm899, %v856
        %927 = vst.msk [vmem:[%s769 + $0x142] sm:$0xff] %vm899, %v858
        %928 = vst.msk [vmem:[%s769 + $0x152] sm:$0xff] %vm899, %v860
        %929 = vst.msk [vmem:[%s769 + $0x15a] sm:$0xff] %vm899, %v862
        %930 = vst.msk [vmem:[%s769 + $0x16a] sm:$0xff] %vm899, %v864
        %931 = vst.msk [vmem:[%s769 + $0x172] sm:$0xff] %vm899, %v866
        %s932 = scalar_lea.vmem [#allocation2], 24
        %v933 = vld [vmem:[%s932 + $0x1] sm:$0xff]
        %v934 = vld [vmem:[%s932 + $0x9] sm:$0xff]
        %v935 = vld [vmem:[%s932 + $0x19] sm:$0xff]
        %v936 = vld [vmem:[%s932 + $0x21] sm:$0xff]
        %v937 = vld [vmem:[%s932 + $0x31] sm:$0xff]
        %v938 = vld [vmem:[%s932 + $0x39] sm:$0xff]
        %v939 = vld [vmem:[%s932 + $0x49] sm:$0xff]
        %v940 = vld [vmem:[%s932 + $0x51] sm:$0xff]
        %v941 = vld [vmem:[%s932 + $0x61] sm:$0xff]
        %v942 = vld [vmem:[%s932 + $0x69] sm:$0xff]
        %v943 = vld [vmem:[%s932 + $0x79] sm:$0xff]
        %v944 = vld [vmem:[%s932 + $0x81] sm:$0xff]
        %v945 = vld [vmem:[%s932 + $0x91] sm:$0xff]
        %v946 = vld [vmem:[%s932 + $0x99] sm:$0xff]
        %v947 = vld [vmem:[%s932 + $0xa9] sm:$0xff]
        %v948 = vld [vmem:[%s932 + $0xb1] sm:$0xff]
        %v949 = vld [vmem:[%s932 + $0xc1] sm:$0xff]
        %v950 = vld [vmem:[%s932 + $0xc9] sm:$0xff]
        %v951 = vld [vmem:[%s932 + $0xd9] sm:$0xff]
        %v952 = vld [vmem:[%s932 + $0xe1] sm:$0xff]
        %v953 = vld [vmem:[%s932 + $0xf1] sm:$0xff]
        %v954 = vld [vmem:[%s932 + $0xf9] sm:$0xff]
        %v955 = vld [vmem:[%s932 + $0x109] sm:$0xff]
        %v956 = vld [vmem:[%s932 + $0x111] sm:$0xff]
        %v957 = vld [vmem:[%s932 + $0x121] sm:$0xff]
        %v958 = vld [vmem:[%s932 + $0x129] sm:$0xff]
        %v959 = vld [vmem:[%s932 + $0x139] sm:$0xff]
        %v960 = vld [vmem:[%s932 + $0x141] sm:$0xff]
        %v961 = vld [vmem:[%s932 + $0x151] sm:$0xff]
        %v962 = vld [vmem:[%s932 + $0x159] sm:$0xff]
        %v963 = vld [vmem:[%s932 + $0x169] sm:$0xff]
        %v964 = vld [vmem:[%s932 + $0x171] sm:$0xff]
        %965 = vst [vmem:[#allocation3] sm:$0xff] %v933
        %966 = vst [vmem:[#allocation3 + $0xc8] sm:$0xff] %v934
        %967 = vst [vmem:[#allocation3 + $0x190] sm:$0xff] %v935
        %968 = vst [vmem:[#allocation3 + $0x258] sm:$0xff] %v936
        %969 = vst [vmem:[#allocation3 + $0x320] sm:$0xff] %v937
        %970 = vst [vmem:[#allocation3 + $0x3e8] sm:$0xff] %v938
        %971 = vst [vmem:[#allocation3 + $0x4b0] sm:$0xff] %v939
        %972 = vst [vmem:[#allocation3 + $0x578] sm:$0xff] %v940
        %973 = vst [vmem:[#allocation3 + $0x640] sm:$0xff] %v941
        %974 = vst [vmem:[#allocation3 + $0x708] sm:$0xff] %v942
        %975 = vst [vmem:[#allocation3 + $0x7d0] sm:$0xff] %v943
        %976 = vst [vmem:[#allocation3 + $0x898] sm:$0xff] %v944
        %977 = vst [vmem:[#allocation3 + $0x960] sm:$0xff] %v945
        %978 = vst [vmem:[#allocation3 + $0xa28] sm:$0xff] %v946
        %979 = vst [vmem:[#allocation3 + $0xaf0] sm:$0xff] %v947
        %980 = vst [vmem:[#allocation3 + $0xbb8] sm:$0xff] %v948
        %981 = vst [vmem:[#allocation3 + $0xc80] sm:$0xff] %v949
        %982 = vst [vmem:[#allocation3 + $0xd48] sm:$0xff] %v950
        %983 = vst [vmem:[#allocation3 + $0xe10] sm:$0xff] %v951
        %984 = vst [vmem:[#allocation3 + $0xed8] sm:$0xff] %v952
        %985 = vst [vmem:[#allocation3 + $0xfa0] sm:$0xff] %v953
        %986 = vst [vmem:[#allocation3 + $0x1068] sm:$0xff] %v954
        %987 = vst [vmem:[#allocation3 + $0x1130] sm:$0xff] %v955
        %988 = vst [vmem:[#allocation3 + $0x11f8] sm:$0xff] %v956
        %989 = vst [vmem:[#allocation3 + $0x12c0] sm:$0xff] %v957
        %990 = vst [vmem:[#allocation3 + $0x1388] sm:$0xff] %v958
        %991 = vst [vmem:[#allocation3 + $0x1450] sm:$0xff] %v959
        %992 = vst [vmem:[#allocation3 + $0x1518] sm:$0xff] %v960
        %993 = vst [vmem:[#allocation3 + $0x15e0] sm:$0xff] %v961
        %994 = vst [vmem:[#allocation3 + $0x16a8] sm:$0xff] %v962
        %995 = vst [vmem:[#allocation3 + $0x1770] sm:$0xff] %v963
        %996 = vst [vmem:[#allocation3 + $0x1838] sm:$0xff] %v964
        %v997 = vld [vmem:[%s932 + $0x2] sm:$0xff]
        %v998 = vld [vmem:[%s932 + $0xa] sm:$0xff]
        %v999 = vld [vmem:[%s932 + $0x1a] sm:$0xff]
        %v1000 = vld [vmem:[%s932 + $0x22] sm:$0xff]
        %v1001 = vld [vmem:[%s932 + $0x32] sm:$0xff]
        %v1002 = vld [vmem:[%s932 + $0x3a] sm:$0xff]
        %v1003 = vld [vmem:[%s932 + $0x4a] sm:$0xff]
        %v1004 = vld [vmem:[%s932 + $0x52] sm:$0xff]
        %v1005 = vld [vmem:[%s932 + $0x62] sm:$0xff]
        %v1006 = vld [vmem:[%s932 + $0x6a] sm:$0xff]
        %v1007 = vld [vmem:[%s932 + $0x7a] sm:$0xff]
        %v1008 = vld [vmem:[%s932 + $0x82] sm:$0xff]
        %v1009 = vld [vmem:[%s932 + $0x92] sm:$0xff]
        %v1010 = vld [vmem:[%s932 + $0x9a] sm:$0xff]
        %v1011 = vld [vmem:[%s932 + $0xaa] sm:$0xff]
        %v1012 = vld [vmem:[%s932 + $0xb2] sm:$0xff]
        %v1013 = vld [vmem:[%s932 + $0xc2] sm:$0xff]
        %v1014 = vld [vmem:[%s932 + $0xca] sm:$0xff]
        %v1015 = vld [vmem:[%s932 + $0xda] sm:$0xff]
        %v1016 = vld [vmem:[%s932 + $0xe2] sm:$0xff]
        %v1017 = vld [vmem:[%s932 + $0xf2] sm:$0xff]
        %v1018 = vld [vmem:[%s932 + $0xfa] sm:$0xff]
        %v1019 = vld [vmem:[%s932 + $0x10a] sm:$0xff]
        %v1020 = vld [vmem:[%s932 + $0x112] sm:$0xff]
        %v1021 = vld [vmem:[%s932 + $0x122] sm:$0xff]
        %v1022 = vld [vmem:[%s932 + $0x12a] sm:$0xff]
        %v1023 = vld [vmem:[%s932 + $0x13a] sm:$0xff]
        %v1024 = vld [vmem:[%s932 + $0x142] sm:$0xff]
        %v1025 = vld [vmem:[%s932 + $0x152] sm:$0xff]
        %v1026 = vld [vmem:[%s932 + $0x15a] sm:$0xff]
        %v1027 = vld [vmem:[%s932 + $0x16a] sm:$0xff]
        %v1028 = vld [vmem:[%s932 + $0x172] sm:$0xff]
        %1029 = vst [vmem:[#allocation3 + $0x8] sm:$0xff] %v997
        %1030 = vst [vmem:[#allocation3 + $0xd0] sm:$0xff] %v998
        %1031 = vst [vmem:[#allocation3 + $0x198] sm:$0xff] %v999
        %1032 = vst [vmem:[#allocation3 + $0x260] sm:$0xff] %v1000
        %1033 = vst [vmem:[#allocation3 + $0x328] sm:$0xff] %v1001
        %1034 = vst [vmem:[#allocation3 + $0x3f0] sm:$0xff] %v1002
        %1035 = vst [vmem:[#allocation3 + $0x4b8] sm:$0xff] %v1003
        %1036 = vst [vmem:[#allocation3 + $0x580] sm:$0xff] %v1004
        %1037 = vst [vmem:[#allocation3 + $0x648] sm:$0xff] %v1005
        %1038 = vst [vmem:[#allocation3 + $0x710] sm:$0xff] %v1006
        %1039 = vst [vmem:[#allocation3 + $0x7d8] sm:$0xff] %v1007
        %1040 = vst [vmem:[#allocation3 + $0x8a0] sm:$0xff] %v1008
        %1041 = vst [vmem:[#allocation3 + $0x968] sm:$0xff] %v1009
        %1042 = vst [vmem:[#allocation3 + $0xa30] sm:$0xff] %v1010
        %1043 = vst [vmem:[#allocation3 + $0xaf8] sm:$0xff] %v1011
        %1044 = vst [vmem:[#allocation3 + $0xbc0] sm:$0xff] %v1012
        %1045 = vst [vmem:[#allocation3 + $0xc88] sm:$0xff] %v1013
        %1046 = vst [vmem:[#allocation3 + $0xd50] sm:$0xff] %v1014
        %1047 = vst [vmem:[#allocation3 + $0xe18] sm:$0xff] %v1015
        %1048 = vst [vmem:[#allocation3 + $0xee0] sm:$0xff] %v1016
        %1049 = vst [vmem:[#allocation3 + $0xfa8] sm:$0xff] %v1017
        %1050 = vst [vmem:[#allocation3 + $0x1070] sm:$0xff] %v1018
        %1051 = vst [vmem:[#allocation3 + $0x1138] sm:$0xff] %v1019
        %1052 = vst [vmem:[#allocation3 + $0x1200] sm:$0xff] %v1020
        %1053 = vst [vmem:[#allocation3 + $0x12c8] sm:$0xff] %v1021
        %1054 = vst [vmem:[#allocation3 + $0x1390] sm:$0xff] %v1022
        %1055 = vst [vmem:[#allocation3 + $0x1458] sm:$0xff] %v1023
        %1056 = vst [vmem:[#allocation3 + $0x1520] sm:$0xff] %v1024
        %1057 = vst [vmem:[#allocation3 + $0x15e8] sm:$0xff] %v1025
        %1058 = vst [vmem:[#allocation3 + $0x16b0] sm:$0xff] %v1026
        %1059 = vst [vmem:[#allocation3 + $0x1778] sm:$0xff] %v1027
        %1060 = vst [vmem:[#allocation3 + $0x1840] sm:$0xff] %v1028
        %v1061 = vld [vmem:[%s932 + $0x3] sm:$0xff]
        %v1062 = vld [vmem:[%s932 + $0xb] sm:$0xff]
        %v1063 = vld [vmem:[%s932 + $0x1b] sm:$0xff]
        %v1064 = vld [vmem:[%s932 + $0x23] sm:$0xff]
        %v1065 = vld [vmem:[%s932 + $0x33] sm:$0xff]
        %v1066 = vld [vmem:[%s932 + $0x3b] sm:$0xff]
        %v1067 = vld [vmem:[%s932 + $0x4b] sm:$0xff]
        %v1068 = vld [vmem:[%s932 + $0x53] sm:$0xff]
        %v1069 = vld [vmem:[%s932 + $0x63] sm:$0xff]
        %v1070 = vld [vmem:[%s932 + $0x6b] sm:$0xff]
        %v1071 = vld [vmem:[%s932 + $0x7b] sm:$0xff]
        %v1072 = vld [vmem:[%s932 + $0x83] sm:$0xff]
        %v1073 = vld [vmem:[%s932 + $0x93] sm:$0xff]
        %v1074 = vld [vmem:[%s932 + $0x9b] sm:$0xff]
        %v1075 = vld [vmem:[%s932 + $0xab] sm:$0xff]
        %v1076 = vld [vmem:[%s932 + $0xb3] sm:$0xff]
        %v1077 = vld [vmem:[%s932 + $0xc3] sm:$0xff]
        %v1078 = vld [vmem:[%s932 + $0xcb] sm:$0xff]
        %v1079 = vld [vmem:[%s932 + $0xdb] sm:$0xff]
        %v1080 = vld [vmem:[%s932 + $0xe3] sm:$0xff]
        %v1081 = vld [vmem:[%s932 + $0xf3] sm:$0xff]
        %v1082 = vld [vmem:[%s932 + $0xfb] sm:$0xff]
        %v1083 = vld [vmem:[%s932 + $0x10b] sm:$0xff]
        %v1084 = vld [vmem:[%s932 + $0x113] sm:$0xff]
        %v1085 = vld [vmem:[%s932 + $0x123] sm:$0xff]
        %v1086 = vld [vmem:[%s932 + $0x12b] sm:$0xff]
        %v1087 = vld [vmem:[%s932 + $0x13b] sm:$0xff]
        %v1088 = vld [vmem:[%s932 + $0x143] sm:$0xff]
        %v1089 = vld [vmem:[%s932 + $0x153] sm:$0xff]
        %v1090 = vld [vmem:[%s932 + $0x15b] sm:$0xff]
        %v1091 = vld [vmem:[%s932 + $0x16b] sm:$0xff]
        %v1092 = vld [vmem:[%s932 + $0x173] sm:$0xff]
        %1093 = vst [vmem:[#allocation3 + $0x10] sm:$0xff] %v1061
        %1094 = vst [vmem:[#allocation3 + $0xd8] sm:$0xff] %v1062
        %1095 = vst [vmem:[#allocation3 + $0x1a0] sm:$0xff] %v1063
        %1096 = vst [vmem:[#allocation3 + $0x268] sm:$0xff] %v1064
        %1097 = vst [vmem:[#allocation3 + $0x330] sm:$0xff] %v1065
        %1098 = vst [vmem:[#allocation3 + $0x3f8] sm:$0xff] %v1066
        %1099 = vst [vmem:[#allocation3 + $0x4c0] sm:$0xff] %v1067
        %1100 = vst [vmem:[#allocation3 + $0x588] sm:$0xff] %v1068
        %1101 = vst [vmem:[#allocation3 + $0x650] sm:$0xff] %v1069
        %1102 = vst [vmem:[#allocation3 + $0x718] sm:$0xff] %v1070
        %1103 = vst [vmem:[#allocation3 + $0x7e0] sm:$0xff] %v1071
        %1104 = vst [vmem:[#allocation3 + $0x8a8] sm:$0xff] %v1072
        %1105 = vst [vmem:[#allocation3 + $0x970] sm:$0xff] %v1073
        %1106 = vst [vmem:[#allocation3 + $0xa38] sm:$0xff] %v1074
        %1107 = vst [vmem:[#allocation3 + $0xb00] sm:$0xff] %v1075
        %1108 = vst [vmem:[#allocation3 + $0xbc8] sm:$0xff] %v1076
        %1109 = vst [vmem:[#allocation3 + $0xc90] sm:$0xff] %v1077
        %1110 = vst [vmem:[#allocation3 + $0xd58] sm:$0xff] %v1078
        %1111 = vst [vmem:[#allocation3 + $0xe20] sm:$0xff] %v1079
        %1112 = vst [vmem:[#allocation3 + $0xee8] sm:$0xff] %v1080
        %1113 = vst [vmem:[#allocation3 + $0xfb0] sm:$0xff] %v1081
        %1114 = vst [vmem:[#allocation3 + $0x1078] sm:$0xff] %v1082
        %1115 = vst [vmem:[#allocation3 + $0x1140] sm:$0xff] %v1083
        %1116 = vst [vmem:[#allocation3 + $0x1208] sm:$0xff] %v1084
        %1117 = vst [vmem:[#allocation3 + $0x12d0] sm:$0xff] %v1085
        %1118 = vst [vmem:[#allocation3 + $0x1398] sm:$0xff] %v1086
        %1119 = vst [vmem:[#allocation3 + $0x1460] sm:$0xff] %v1087
        %1120 = vst [vmem:[#allocation3 + $0x1528] sm:$0xff] %v1088
        %1121 = vst [vmem:[#allocation3 + $0x15f0] sm:$0xff] %v1089
        %1122 = vst [vmem:[#allocation3 + $0x16b8] sm:$0xff] %v1090
        %1123 = vst [vmem:[#allocation3 + $0x1780] sm:$0xff] %v1091
        %1124 = vst [vmem:[#allocation3 + $0x1848] sm:$0xff] %v1092
        %v1125 = vld [vmem:[%s769 + $0x1] sm:$0xff]
        %v1126 = vld [vmem:[%s769 + $0x9] sm:$0xff]
        %v1127 = vld [vmem:[%s769 + $0x19] sm:$0xff]
        %v1128 = vld [vmem:[%s769 + $0x21] sm:$0xff]
        %v1129 = vld [vmem:[%s769 + $0x31] sm:$0xff]
        %v1130 = vld [vmem:[%s769 + $0x39] sm:$0xff]
        %v1131 = vld [vmem:[%s769 + $0x49] sm:$0xff]
        %v1132 = vld [vmem:[%s769 + $0x51] sm:$0xff]
        %v1133 = vld [vmem:[%s769 + $0x61] sm:$0xff]
        %v1134 = vld [vmem:[%s769 + $0x69] sm:$0xff]
        %v1135 = vld [vmem:[%s769 + $0x79] sm:$0xff]
        %v1136 = vld [vmem:[%s769 + $0x81] sm:$0xff]
        %v1137 = vld [vmem:[%s769 + $0x91] sm:$0xff]
        %v1138 = vld [vmem:[%s769 + $0x99] sm:$0xff]
        %v1139 = vld [vmem:[%s769 + $0xa9] sm:$0xff]
        %v1140 = vld [vmem:[%s769 + $0xb1] sm:$0xff]
        %v1141 = vld [vmem:[%s769 + $0xc1] sm:$0xff]
        %v1142 = vld [vmem:[%s769 + $0xc9] sm:$0xff]
        %v1143 = vld [vmem:[%s769 + $0xd9] sm:$0xff]
        %v1144 = vld [vmem:[%s769 + $0xe1] sm:$0xff]
        %v1145 = vld [vmem:[%s769 + $0xf1] sm:$0xff]
        %v1146 = vld [vmem:[%s769 + $0xf9] sm:$0xff]
        %v1147 = vld [vmem:[%s769 + $0x109] sm:$0xff]
        %v1148 = vld [vmem:[%s769 + $0x111] sm:$0xff]
        %v1149 = vld [vmem:[%s769 + $0x121] sm:$0xff]
        %v1150 = vld [vmem:[%s769 + $0x129] sm:$0xff]
        %v1151 = vld [vmem:[%s769 + $0x139] sm:$0xff]
        %v1152 = vld [vmem:[%s769 + $0x141] sm:$0xff]
        %v1153 = vld [vmem:[%s769 + $0x151] sm:$0xff]
        %v1154 = vld [vmem:[%s769 + $0x159] sm:$0xff]
        %v1155 = vld [vmem:[%s769 + $0x169] sm:$0xff]
        %v1156 = vld [vmem:[%s769 + $0x171] sm:$0xff]
        %1157 = vst [vmem:[#allocation3 + $0x18] sm:$0xff] %v1125
        %1158 = vst [vmem:[#allocation3 + $0xe0] sm:$0xff] %v1126
        %1159 = vst [vmem:[#allocation3 + $0x1a8] sm:$0xff] %v1127
        %1160 = vst [vmem:[#allocation3 + $0x270] sm:$0xff] %v1128
        %1161 = vst [vmem:[#allocation3 + $0x338] sm:$0xff] %v1129
        %1162 = vst [vmem:[#allocation3 + $0x400] sm:$0xff] %v1130
        %1163 = vst [vmem:[#allocation3 + $0x4c8] sm:$0xff] %v1131
        %1164 = vst [vmem:[#allocation3 + $0x590] sm:$0xff] %v1132
        %1165 = vst [vmem:[#allocation3 + $0x658] sm:$0xff] %v1133
        %1166 = vst [vmem:[#allocation3 + $0x720] sm:$0xff] %v1134
        %1167 = vst [vmem:[#allocation3 + $0x7e8] sm:$0xff] %v1135
        %1168 = vst [vmem:[#allocation3 + $0x8b0] sm:$0xff] %v1136
        %1169 = vst [vmem:[#allocation3 + $0x978] sm:$0xff] %v1137
        %1170 = vst [vmem:[#allocation3 + $0xa40] sm:$0xff] %v1138
        %1171 = vst [vmem:[#allocation3 + $0xb08] sm:$0xff] %v1139
        %1172 = vst [vmem:[#allocation3 + $0xbd0] sm:$0xff] %v1140
        %1173 = vst [vmem:[#allocation3 + $0xc98] sm:$0xff] %v1141
        %1174 = vst [vmem:[#allocation3 + $0xd60] sm:$0xff] %v1142
        %1175 = vst [vmem:[#allocation3 + $0xe28] sm:$0xff] %v1143
        %1176 = vst [vmem:[#allocation3 + $0xef0] sm:$0xff] %v1144
        %1177 = vst [vmem:[#allocation3 + $0xfb8] sm:$0xff] %v1145
        %1178 = vst [vmem:[#allocation3 + $0x1080] sm:$0xff] %v1146
        %1179 = vst [vmem:[#allocation3 + $0x1148] sm:$0xff] %v1147
        %1180 = vst [vmem:[#allocation3 + $0x1210] sm:$0xff] %v1148
        %1181 = vst [vmem:[#allocation3 + $0x12d8] sm:$0xff] %v1149
        %1182 = vst [vmem:[#allocation3 + $0x13a0] sm:$0xff] %v1150
        %1183 = vst [vmem:[#allocation3 + $0x1468] sm:$0xff] %v1151
        %1184 = vst [vmem:[#allocation3 + $0x1530] sm:$0xff] %v1152
        %1185 = vst [vmem:[#allocation3 + $0x15f8] sm:$0xff] %v1153
        %1186 = vst [vmem:[#allocation3 + $0x16c0] sm:$0xff] %v1154
        %1187 = vst [vmem:[#allocation3 + $0x1788] sm:$0xff] %v1155
        %1188 = vst [vmem:[#allocation3 + $0x1850] sm:$0xff] %v1156
        %v1189 = vld [vmem:[%s769 + $0x2] sm:$0xff]
        %v1190 = vld [vmem:[%s769 + $0xa] sm:$0xff]
        %v1191 = vld [vmem:[%s769 + $0x1a] sm:$0xff]
        %v1192 = vld [vmem:[%s769 + $0x22] sm:$0xff]
        %v1193 = vld [vmem:[%s769 + $0x32] sm:$0xff]
        %v1194 = vld [vmem:[%s769 + $0x3a] sm:$0xff]
        %v1195 = vld [vmem:[%s769 + $0x4a] sm:$0xff]
        %v1196 = vld [vmem:[%s769 + $0x52] sm:$0xff]
        %v1197 = vld [vmem:[%s769 + $0x62] sm:$0xff]
        %v1198 = vld [vmem:[%s769 + $0x6a] sm:$0xff]
        %v1199 = vld [vmem:[%s769 + $0x7a] sm:$0xff]
        %v1200 = vld [vmem:[%s769 + $0x82] sm:$0xff]
        %v1201 = vld [vmem:[%s769 + $0x92] sm:$0xff]
        %v1202 = vld [vmem:[%s769 + $0x9a] sm:$0xff]
        %v1203 = vld [vmem:[%s769 + $0xaa] sm:$0xff]
        %v1204 = vld [vmem:[%s769 + $0xb2] sm:$0xff]
        %v1205 = vld [vmem:[%s769 + $0xc2] sm:$0xff]
        %v1206 = vld [vmem:[%s769 + $0xca] sm:$0xff]
        %v1207 = vld [vmem:[%s769 + $0xda] sm:$0xff]
        %v1208 = vld [vmem:[%s769 + $0xe2] sm:$0xff]
        %v1209 = vld [vmem:[%s769 + $0xf2] sm:$0xff]
        %v1210 = vld [vmem:[%s769 + $0xfa] sm:$0xff]
        %v1211 = vld [vmem:[%s769 + $0x10a] sm:$0xff]
        %v1212 = vld [vmem:[%s769 + $0x112] sm:$0xff]
        %v1213 = vld [vmem:[%s769 + $0x122] sm:$0xff]
        %v1214 = vld [vmem:[%s769 + $0x12a] sm:$0xff]
        %v1215 = vld [vmem:[%s769 + $0x13a] sm:$0xff]
        %v1216 = vld [vmem:[%s769 + $0x142] sm:$0xff]
        %v1217 = vld [vmem:[%s769 + $0x152] sm:$0xff]
        %v1218 = vld [vmem:[%s769 + $0x15a] sm:$0xff]
        %v1219 = vld [vmem:[%s769 + $0x16a] sm:$0xff]
        %v1220 = vld [vmem:[%s769 + $0x172] sm:$0xff]
        %1221 = vst [vmem:[#allocation3 + $0x20] sm:$0xff] %v1189
        %1222 = vst [vmem:[#allocation3 + $0xe8] sm:$0xff] %v1190
        %1223 = vst [vmem:[#allocation3 + $0x1b0] sm:$0xff] %v1191
        %1224 = vst [vmem:[#allocation3 + $0x278] sm:$0xff] %v1192
        %1225 = vst [vmem:[#allocation3 + $0x340] sm:$0xff] %v1193
        %1226 = vst [vmem:[#allocation3 + $0x408] sm:$0xff] %v1194
        %1227 = vst [vmem:[#allocation3 + $0x4d0] sm:$0xff] %v1195
        %1228 = vst [vmem:[#allocation3 + $0x598] sm:$0xff] %v1196
        %1229 = vst [vmem:[#allocation3 + $0x660] sm:$0xff] %v1197
        %1230 = vst [vmem:[#allocation3 + $0x728] sm:$0xff] %v1198
        %1231 = vst [vmem:[#allocation3 + $0x7f0] sm:$0xff] %v1199
        %1232 = vst [vmem:[#allocation3 + $0x8b8] sm:$0xff] %v1200
        %1233 = vst [vmem:[#allocation3 + $0x980] sm:$0xff] %v1201
        %1234 = vst [vmem:[#allocation3 + $0xa48] sm:$0xff] %v1202
        %1235 = vst [vmem:[#allocation3 + $0xb10] sm:$0xff] %v1203
        %1236 = vst [vmem:[#allocation3 + $0xbd8] sm:$0xff] %v1204
        %1237 = vst [vmem:[#allocation3 + $0xca0] sm:$0xff] %v1205
        %1238 = vst [vmem:[#allocation3 + $0xd68] sm:$0xff] %v1206
        %1239 = vst [vmem:[#allocation3 + $0xe30] sm:$0xff] %v1207
        %1240 = vst [vmem:[#allocation3 + $0xef8] sm:$0xff] %v1208
        %1241 = vst [vmem:[#allocation3 + $0xfc0] sm:$0xff] %v1209
        %1242 = vst [vmem:[#allocation3 + $0x1088] sm:$0xff] %v1210
        %1243 = vst [vmem:[#allocation3 + $0x1150] sm:$0xff] %v1211
        %1244 = vst [vmem:[#allocation3 + $0x1218] sm:$0xff] %v1212
        %1245 = vst [vmem:[#allocation3 + $0x12e0] sm:$0xff] %v1213
        %1246 = vst [vmem:[#allocation3 + $0x13a8] sm:$0xff] %v1214
        %1247 = vst [vmem:[#allocation3 + $0x1470] sm:$0xff] %v1215
        %1248 = vst [vmem:[#allocation3 + $0x1538] sm:$0xff] %v1216
        %1249 = vst [vmem:[#allocation3 + $0x1600] sm:$0xff] %v1217
        %1250 = vst [vmem:[#allocation3 + $0x16c8] sm:$0xff] %v1218
        %1251 = vst [vmem:[#allocation3 + $0x1790] sm:$0xff] %v1219
        %1252 = vst [vmem:[#allocation3 + $0x1858] sm:$0xff] %v1220
        %v1253 = vld [vmem:[%s769 + $0x3] sm:$0xff]
        %v1254 = vld [vmem:[%s769 + $0xb] sm:$0xff]
        %v1255 = vld [vmem:[%s769 + $0x1b] sm:$0xff]
        %v1256 = vld [vmem:[%s769 + $0x23] sm:$0xff]
        %v1257 = vld [vmem:[%s769 + $0x33] sm:$0xff]
        %v1258 = vld [vmem:[%s769 + $0x3b] sm:$0xff]
        %v1259 = vld [vmem:[%s769 + $0x4b] sm:$0xff]
        %v1260 = vld [vmem:[%s769 + $0x53] sm:$0xff]
        %v1261 = vld [vmem:[%s769 + $0x63] sm:$0xff]
        %v1262 = vld [vmem:[%s769 + $0x6b] sm:$0xff]
        %v1263 = vld [vmem:[%s769 + $0x7b] sm:$0xff]
        %v1264 = vld [vmem:[%s769 + $0x83] sm:$0xff]
        %v1265 = vld [vmem:[%s769 + $0x93] sm:$0xff]
        %v1266 = vld [vmem:[%s769 + $0x9b] sm:$0xff]
        %v1267 = vld [vmem:[%s769 + $0xab] sm:$0xff]
        %v1268 = vld [vmem:[%s769 + $0xb3] sm:$0xff]
        %v1269 = vld [vmem:[%s769 + $0xc3] sm:$0xff]
        %v1270 = vld [vmem:[%s769 + $0xcb] sm:$0xff]
        %v1271 = vld [vmem:[%s769 + $0xdb] sm:$0xff]
        %v1272 = vld [vmem:[%s769 + $0xe3] sm:$0xff]
        %v1273 = vld [vmem:[%s769 + $0xf3] sm:$0xff]
        %v1274 = vld [vmem:[%s769 + $0xfb] sm:$0xff]
        %v1275 = vld [vmem:[%s769 + $0x10b] sm:$0xff]
        %v1276 = vld [vmem:[%s769 + $0x113] sm:$0xff]
        %v1277 = vld [vmem:[%s769 + $0x123] sm:$0xff]
        %v1278 = vld [vmem:[%s769 + $0x12b] sm:$0xff]
        %v1279 = vld [vmem:[%s769 + $0x13b] sm:$0xff]
        %v1280 = vld [vmem:[%s769 + $0x143] sm:$0xff]
        %v1281 = vld [vmem:[%s769 + $0x153] sm:$0xff]
        %v1282 = vld [vmem:[%s769 + $0x15b] sm:$0xff]
        %v1283 = vld [vmem:[%s769 + $0x16b] sm:$0xff]
        %v1284 = vld [vmem:[%s769 + $0x173] sm:$0xff]
        %1285 = vst [vmem:[#allocation3 + $0x28] sm:$0xff] %v1253
        %1286 = vst [vmem:[#allocation3 + $0xf0] sm:$0xff] %v1254
        %1287 = vst [vmem:[#allocation3 + $0x1b8] sm:$0xff] %v1255
        %1288 = vst [vmem:[#allocation3 + $0x280] sm:$0xff] %v1256
        %1289 = vst [vmem:[#allocation3 + $0x348] sm:$0xff] %v1257
        %1290 = vst [vmem:[#allocation3 + $0x410] sm:$0xff] %v1258
        %1291 = vst [vmem:[#allocation3 + $0x4d8] sm:$0xff] %v1259
        %1292 = vst [vmem:[#allocation3 + $0x5a0] sm:$0xff] %v1260
        %1293 = vst [vmem:[#allocation3 + $0x668] sm:$0xff] %v1261
        %1294 = vst [vmem:[#allocation3 + $0x730] sm:$0xff] %v1262
        %1295 = vst [vmem:[#allocation3 + $0x7f8] sm:$0xff] %v1263
        %1296 = vst [vmem:[#allocation3 + $0x8c0] sm:$0xff] %v1264
        %1297 = vst [vmem:[#allocation3 + $0x988] sm:$0xff] %v1265
        %1298 = vst [vmem:[#allocation3 + $0xa50] sm:$0xff] %v1266
        %1299 = vst [vmem:[#allocation3 + $0xb18] sm:$0xff] %v1267
        %1300 = vst [vmem:[#allocation3 + $0xbe0] sm:$0xff] %v1268
        %1301 = vst [vmem:[#allocation3 + $0xca8] sm:$0xff] %v1269
        %1302 = vst [vmem:[#allocation3 + $0xd70] sm:$0xff] %v1270
        %1303 = vst [vmem:[#allocation3 + $0xe38] sm:$0xff] %v1271
        %1304 = vst [vmem:[#allocation3 + $0xf00] sm:$0xff] %v1272
        %1305 = vst [vmem:[#allocation3 + $0xfc8] sm:$0xff] %v1273
        %1306 = vst [vmem:[#allocation3 + $0x1090] sm:$0xff] %v1274
        %1307 = vst [vmem:[#allocation3 + $0x1158] sm:$0xff] %v1275
        %1308 = vst [vmem:[#allocation3 + $0x1220] sm:$0xff] %v1276
        %1309 = vst [vmem:[#allocation3 + $0x12e8] sm:$0xff] %v1277
        %1310 = vst [vmem:[#allocation3 + $0x13b0] sm:$0xff] %v1278
        %1311 = vst [vmem:[#allocation3 + $0x1478] sm:$0xff] %v1279
        %1312 = vst [vmem:[#allocation3 + $0x1540] sm:$0xff] %v1280
        %1313 = vst [vmem:[#allocation3 + $0x1608] sm:$0xff] %v1281
        %1314 = vst [vmem:[#allocation3 + $0x16d0] sm:$0xff] %v1282
        %1315 = vst [vmem:[#allocation3 + $0x1798] sm:$0xff] %v1283
        %1316 = vst [vmem:[#allocation3 + $0x1860] sm:$0xff] %v1284
        %s1317 = scalar_lea.vmem [#allocation2], 72
        %v1318 = vld [vmem:[%s1317 + $0x1] sm:$0xff]
        %v1319 = vld [vmem:[%s1317 + $0x9] sm:$0xff]
        %v1320 = vld [vmem:[%s1317 + $0x19] sm:$0xff]
        %v1321 = vld [vmem:[%s1317 + $0x21] sm:$0xff]
        %v1322 = vld [vmem:[%s1317 + $0x31] sm:$0xff]
        %v1323 = vld [vmem:[%s1317 + $0x39] sm:$0xff]
        %v1324 = vld [vmem:[%s1317 + $0x49] sm:$0xff]
        %v1325 = vld [vmem:[%s1317 + $0x51] sm:$0xff]
        %v1326 = vld [vmem:[%s1317 + $0x61] sm:$0xff]
        %v1327 = vld [vmem:[%s1317 + $0x69] sm:$0xff]
        %v1328 = vld [vmem:[%s1317 + $0x79] sm:$0xff]
        %v1329 = vld [vmem:[%s1317 + $0x81] sm:$0xff]
        %v1330 = vld [vmem:[%s1317 + $0x91] sm:$0xff]
        %v1331 = vld [vmem:[%s1317 + $0x99] sm:$0xff]
        %v1332 = vld [vmem:[%s1317 + $0xa9] sm:$0xff]
        %v1333 = vld [vmem:[%s1317 + $0xb1] sm:$0xff]
        %v1334 = vld [vmem:[%s1317 + $0xc1] sm:$0xff]
        %v1335 = vld [vmem:[%s1317 + $0xc9] sm:$0xff]
        %v1336 = vld [vmem:[%s1317 + $0xd9] sm:$0xff]
        %v1337 = vld [vmem:[%s1317 + $0xe1] sm:$0xff]
        %v1338 = vld [vmem:[%s1317 + $0xf1] sm:$0xff]
        %v1339 = vld [vmem:[%s1317 + $0xf9] sm:$0xff]
        %v1340 = vld [vmem:[%s1317 + $0x109] sm:$0xff]
        %v1341 = vld [vmem:[%s1317 + $0x111] sm:$0xff]
        %v1342 = vld [vmem:[%s1317 + $0x121] sm:$0xff]
        %v1343 = vld [vmem:[%s1317 + $0x129] sm:$0xff]
        %v1344 = vld [vmem:[%s1317 + $0x139] sm:$0xff]
        %v1345 = vld [vmem:[%s1317 + $0x141] sm:$0xff]
        %v1346 = vld [vmem:[%s1317 + $0x151] sm:$0xff]
        %v1347 = vld [vmem:[%s1317 + $0x159] sm:$0xff]
        %v1348 = vld [vmem:[%s1317 + $0x169] sm:$0xff]
        %v1349 = vld [vmem:[%s1317 + $0x171] sm:$0xff]
        %1350 = vst [vmem:[#allocation3 + $0x30] sm:$0xff] %v1318
        %1351 = vst [vmem:[#allocation3 + $0xf8] sm:$0xff] %v1319
        %1352 = vst [vmem:[#allocation3 + $0x1c0] sm:$0xff] %v1320
        %1353 = vst [vmem:[#allocation3 + $0x288] sm:$0xff] %v1321
        %1354 = vst [vmem:[#allocation3 + $0x350] sm:$0xff] %v1322
        %1355 = vst [vmem:[#allocation3 + $0x418] sm:$0xff] %v1323
        %1356 = vst [vmem:[#allocation3 + $0x4e0] sm:$0xff] %v1324
        %1357 = vst [vmem:[#allocation3 + $0x5a8] sm:$0xff] %v1325
        %1358 = vst [vmem:[#allocation3 + $0x670] sm:$0xff] %v1326
        %1359 = vst [vmem:[#allocation3 + $0x738] sm:$0xff] %v1327
        %1360 = vst [vmem:[#allocation3 + $0x800] sm:$0xff] %v1328
        %1361 = vst [vmem:[#allocation3 + $0x8c8] sm:$0xff] %v1329
        %1362 = vst [vmem:[#allocation3 + $0x990] sm:$0xff] %v1330
        %1363 = vst [vmem:[#allocation3 + $0xa58] sm:$0xff] %v1331
        %1364 = vst [vmem:[#allocation3 + $0xb20] sm:$0xff] %v1332
        %1365 = vst [vmem:[#allocation3 + $0xbe8] sm:$0xff] %v1333
        %1366 = vst [vmem:[#allocation3 + $0xcb0] sm:$0xff] %v1334
        %1367 = vst [vmem:[#allocation3 + $0xd78] sm:$0xff] %v1335
        %1368 = vst [vmem:[#allocation3 + $0xe40] sm:$0xff] %v1336
        %1369 = vst [vmem:[#allocation3 + $0xf08] sm:$0xff] %v1337
        %1370 = vst [vmem:[#allocation3 + $0xfd0] sm:$0xff] %v1338
        %1371 = vst [vmem:[#allocation3 + $0x1098] sm:$0xff] %v1339
        %1372 = vst [vmem:[#allocation3 + $0x1160] sm:$0xff] %v1340
        %1373 = vst [vmem:[#allocation3 + $0x1228] sm:$0xff] %v1341
        %1374 = vst [vmem:[#allocation3 + $0x12f0] sm:$0xff] %v1342
        %1375 = vst [vmem:[#allocation3 + $0x13b8] sm:$0xff] %v1343
        %1376 = vst [vmem:[#allocation3 + $0x1480] sm:$0xff] %v1344
        %1377 = vst [vmem:[#allocation3 + $0x1548] sm:$0xff] %v1345
        %1378 = vst [vmem:[#allocation3 + $0x1610] sm:$0xff] %v1346
        %1379 = vst [vmem:[#allocation3 + $0x16d8] sm:$0xff] %v1347
        %1380 = vst [vmem:[#allocation3 + $0x17a0] sm:$0xff] %v1348
        %1381 = vst [vmem:[#allocation3 + $0x1868] sm:$0xff] %v1349
        %v1382 = vld [vmem:[%s1317 + $0x2] sm:$0xff]
        %v1383 = vld [vmem:[%s1317 + $0xa] sm:$0xff]
        %v1384 = vld [vmem:[%s1317 + $0x1a] sm:$0xff]
        %v1385 = vld [vmem:[%s1317 + $0x22] sm:$0xff]
        %v1386 = vld [vmem:[%s1317 + $0x32] sm:$0xff]
        %v1387 = vld [vmem:[%s1317 + $0x3a] sm:$0xff]
        %v1388 = vld [vmem:[%s1317 + $0x4a] sm:$0xff]
        %v1389 = vld [vmem:[%s1317 + $0x52] sm:$0xff]
        %v1390 = vld [vmem:[%s1317 + $0x62] sm:$0xff]
        %v1391 = vld [vmem:[%s1317 + $0x6a] sm:$0xff]
        %v1392 = vld [vmem:[%s1317 + $0x7a] sm:$0xff]
        %v1393 = vld [vmem:[%s1317 + $0x82] sm:$0xff]
        %v1394 = vld [vmem:[%s1317 + $0x92] sm:$0xff]
        %v1395 = vld [vmem:[%s1317 + $0x9a] sm:$0xff]
        %v1396 = vld [vmem:[%s1317 + $0xaa] sm:$0xff]
        %v1397 = vld [vmem:[%s1317 + $0xb2] sm:$0xff]
        %v1398 = vld [vmem:[%s1317 + $0xc2] sm:$0xff]
        %v1399 = vld [vmem:[%s1317 + $0xca] sm:$0xff]
        %v1400 = vld [vmem:[%s1317 + $0xda] sm:$0xff]
        %v1401 = vld [vmem:[%s1317 + $0xe2] sm:$0xff]
        %v1402 = vld [vmem:[%s1317 + $0xf2] sm:$0xff]
        %v1403 = vld [vmem:[%s1317 + $0xfa] sm:$0xff]
        %v1404 = vld [vmem:[%s1317 + $0x10a] sm:$0xff]
        %v1405 = vld [vmem:[%s1317 + $0x112] sm:$0xff]
        %v1406 = vld [vmem:[%s1317 + $0x122] sm:$0xff]
        %v1407 = vld [vmem:[%s1317 + $0x12a] sm:$0xff]
        %v1408 = vld [vmem:[%s1317 + $0x13a] sm:$0xff]
        %v1409 = vld [vmem:[%s1317 + $0x142] sm:$0xff]
        %v1410 = vld [vmem:[%s1317 + $0x152] sm:$0xff]
        %v1411 = vld [vmem:[%s1317 + $0x15a] sm:$0xff]
        %v1412 = vld [vmem:[%s1317 + $0x16a] sm:$0xff]
        %v1413 = vld [vmem:[%s1317 + $0x172] sm:$0xff]
        %1414 = vst [vmem:[#allocation3 + $0x38] sm:$0xff] %v1382
        %1415 = vst [vmem:[#allocation3 + $0x100] sm:$0xff] %v1383
        %1416 = vst [vmem:[#allocation3 + $0x1c8] sm:$0xff] %v1384
        %1417 = vst [vmem:[#allocation3 + $0x290] sm:$0xff] %v1385
        %1418 = vst [vmem:[#allocation3 + $0x358] sm:$0xff] %v1386
        %1419 = vst [vmem:[#allocation3 + $0x420] sm:$0xff] %v1387
        %1420 = vst [vmem:[#allocation3 + $0x4e8] sm:$0xff] %v1388
        %1421 = vst [vmem:[#allocation3 + $0x5b0] sm:$0xff] %v1389
        %1422 = vst [vmem:[#allocation3 + $0x678] sm:$0xff] %v1390
        %1423 = vst [vmem:[#allocation3 + $0x740] sm:$0xff] %v1391
        %1424 = vst [vmem:[#allocation3 + $0x808] sm:$0xff] %v1392
        %1425 = vst [vmem:[#allocation3 + $0x8d0] sm:$0xff] %v1393
        %1426 = vst [vmem:[#allocation3 + $0x998] sm:$0xff] %v1394
        %1427 = vst [vmem:[#allocation3 + $0xa60] sm:$0xff] %v1395
        %1428 = vst [vmem:[#allocation3 + $0xb28] sm:$0xff] %v1396
        %1429 = vst [vmem:[#allocation3 + $0xbf0] sm:$0xff] %v1397
        %1430 = vst [vmem:[#allocation3 + $0xcb8] sm:$0xff] %v1398
        %1431 = vst [vmem:[#allocation3 + $0xd80] sm:$0xff] %v1399
        %1432 = vst [vmem:[#allocation3 + $0xe48] sm:$0xff] %v1400
        %1433 = vst [vmem:[#allocation3 + $0xf10] sm:$0xff] %v1401
        %1434 = vst [vmem:[#allocation3 + $0xfd8] sm:$0xff] %v1402
        %1435 = vst [vmem:[#allocation3 + $0x10a0] sm:$0xff] %v1403
        %1436 = vst [vmem:[#allocation3 + $0x1168] sm:$0xff] %v1404
        %1437 = vst [vmem:[#allocation3 + $0x1230] sm:$0xff] %v1405
        %1438 = vst [vmem:[#allocation3 + $0x12f8] sm:$0xff] %v1406
        %1439 = vst [vmem:[#allocation3 + $0x13c0] sm:$0xff] %v1407
        %1440 = vst [vmem:[#allocation3 + $0x1488] sm:$0xff] %v1408
        %1441 = vst [vmem:[#allocation3 + $0x1550] sm:$0xff] %v1409
        %1442 = vst [vmem:[#allocation3 + $0x1618] sm:$0xff] %v1410
        %1443 = vst [vmem:[#allocation3 + $0x16e0] sm:$0xff] %v1411
        %1444 = vst [vmem:[#allocation3 + $0x17a8] sm:$0xff] %v1412
        %1445 = vst [vmem:[#allocation3 + $0x1870] sm:$0xff] %v1413
        %v1446 = vld [vmem:[%s1317 + $0x3] sm:$0xff]
        %v1447 = vld [vmem:[%s1317 + $0xb] sm:$0xff]
        %v1448 = vld [vmem:[%s1317 + $0x1b] sm:$0xff]
        %v1449 = vld [vmem:[%s1317 + $0x23] sm:$0xff]
        %v1450 = vld [vmem:[%s1317 + $0x33] sm:$0xff]
        %v1451 = vld [vmem:[%s1317 + $0x3b] sm:$0xff]
        %v1452 = vld [vmem:[%s1317 + $0x4b] sm:$0xff]
        %v1453 = vld [vmem:[%s1317 + $0x53] sm:$0xff]
        %v1454 = vld [vmem:[%s1317 + $0x63] sm:$0xff]
        %v1455 = vld [vmem:[%s1317 + $0x6b] sm:$0xff]
        %v1456 = vld [vmem:[%s1317 + $0x7b] sm:$0xff]
        %v1457 = vld [vmem:[%s1317 + $0x83] sm:$0xff]
        %v1458 = vld [vmem:[%s1317 + $0x93] sm:$0xff]
        %v1459 = vld [vmem:[%s1317 + $0x9b] sm:$0xff]
        %v1460 = vld [vmem:[%s1317 + $0xab] sm:$0xff]
        %v1461 = vld [vmem:[%s1317 + $0xb3] sm:$0xff]
        %v1462 = vld [vmem:[%s1317 + $0xc3] sm:$0xff]
        %v1463 = vld [vmem:[%s1317 + $0xcb] sm:$0xff]
        %v1464 = vld [vmem:[%s1317 + $0xdb] sm:$0xff]
        %v1465 = vld [vmem:[%s1317 + $0xe3] sm:$0xff]
        %v1466 = vld [vmem:[%s1317 + $0xf3] sm:$0xff]
        %v1467 = vld [vmem:[%s1317 + $0xfb] sm:$0xff]
        %v1468 = vld [vmem:[%s1317 + $0x10b] sm:$0xff]
        %v1469 = vld [vmem:[%s1317 + $0x113] sm:$0xff]
        %v1470 = vld [vmem:[%s1317 + $0x123] sm:$0xff]
        %v1471 = vld [vmem:[%s1317 + $0x12b] sm:$0xff]
        %v1472 = vld [vmem:[%s1317 + $0x13b] sm:$0xff]
        %v1473 = vld [vmem:[%s1317 + $0x143] sm:$0xff]
        %v1474 = vld [vmem:[%s1317 + $0x153] sm:$0xff]
        %v1475 = vld [vmem:[%s1317 + $0x15b] sm:$0xff]
        %v1476 = vld [vmem:[%s1317 + $0x16b] sm:$0xff]
        %v1477 = vld [vmem:[%s1317 + $0x173] sm:$0xff]
        %1478 = vst [vmem:[#allocation3 + $0x40] sm:$0xff] %v1446
        %1479 = vst [vmem:[#allocation3 + $0x108] sm:$0xff] %v1447
        %1480 = vst [vmem:[#allocation3 + $0x1d0] sm:$0xff] %v1448
        %1481 = vst [vmem:[#allocation3 + $0x298] sm:$0xff] %v1449
        %1482 = vst [vmem:[#allocation3 + $0x360] sm:$0xff] %v1450
        %1483 = vst [vmem:[#allocation3 + $0x428] sm:$0xff] %v1451
        %1484 = vst [vmem:[#allocation3 + $0x4f0] sm:$0xff] %v1452
        %1485 = vst [vmem:[#allocation3 + $0x5b8] sm:$0xff] %v1453
        %1486 = vst [vmem:[#allocation3 + $0x680] sm:$0xff] %v1454
        %1487 = vst [vmem:[#allocation3 + $0x748] sm:$0xff] %v1455
        %1488 = vst [vmem:[#allocation3 + $0x810] sm:$0xff] %v1456
        %1489 = vst [vmem:[#allocation3 + $0x8d8] sm:$0xff] %v1457
        %1490 = vst [vmem:[#allocation3 + $0x9a0] sm:$0xff] %v1458
        %1491 = vst [vmem:[#allocation3 + $0xa68] sm:$0xff] %v1459
        %1492 = vst [vmem:[#allocation3 + $0xb30] sm:$0xff] %v1460
        %1493 = vst [vmem:[#allocation3 + $0xbf8] sm:$0xff] %v1461
        %1494 = vst [vmem:[#allocation3 + $0xcc0] sm:$0xff] %v1462
        %1495 = vst [vmem:[#allocation3 + $0xd88] sm:$0xff] %v1463
        %1496 = vst [vmem:[#allocation3 + $0xe50] sm:$0xff] %v1464
        %1497 = vst [vmem:[#allocation3 + $0xf18] sm:$0xff] %v1465
        %1498 = vst [vmem:[#allocation3 + $0xfe0] sm:$0xff] %v1466
        %1499 = vst [vmem:[#allocation3 + $0x10a8] sm:$0xff] %v1467
        %1500 = vst [vmem:[#allocation3 + $0x1170] sm:$0xff] %v1468
        %1501 = vst [vmem:[#allocation3 + $0x1238] sm:$0xff] %v1469
        %1502 = vst [vmem:[#allocation3 + $0x1300] sm:$0xff] %v1470
        %1503 = vst [vmem:[#allocation3 + $0x13c8] sm:$0xff] %v1471
        %1504 = vst [vmem:[#allocation3 + $0x1490] sm:$0xff] %v1472
        %1505 = vst [vmem:[#allocation3 + $0x1558] sm:$0xff] %v1473
        %1506 = vst [vmem:[#allocation3 + $0x1620] sm:$0xff] %v1474
        %1507 = vst [vmem:[#allocation3 + $0x16e8] sm:$0xff] %v1475
        %1508 = vst [vmem:[#allocation3 + $0x17b0] sm:$0xff] %v1476
        %1509 = vst [vmem:[#allocation3 + $0x1878] sm:$0xff] %v1477
        %v1510 = vld [vmem:[#allocation3] sm:$0xff]
        %v1511 = vld [vmem:[#allocation3 + $0x8] sm:$0xff]
        %v1512 = vld [vmem:[#allocation3 + $0x10] sm:$0xff]
        %v1513 = vld [vmem:[#allocation3 + $0x18] sm:$0xff]
        %v1514 = vld [vmem:[#allocation3 + $0x20] sm:$0xff]
        %v1515 = vld [vmem:[#allocation3 + $0x28] sm:$0xff]
        %v1516 = vld [vmem:[#allocation3 + $0x30] sm:$0xff]
        %v1517 = vld [vmem:[#allocation3 + $0x38] sm:$0xff]
        %v1518 = vld [vmem:[#allocation3 + $0x40] sm:$0xff]
        %v1519 = vld [vmem:[#allocation3 + $0xc8] sm:$0xff]
        %v1520 = vld [vmem:[#allocation3 + $0xd0] sm:$0xff]
        %v1521 = vld [vmem:[#allocation3 + $0xd8] sm:$0xff]
        %v1522 = vld [vmem:[#allocation3 + $0xe0] sm:$0xff]
        %v1523 = vld [vmem:[#allocation3 + $0xe8] sm:$0xff]
        %v1524 = vld [vmem:[#allocation3 + $0xf0] sm:$0xff]
        %v1525 = vld [vmem:[#allocation3 + $0xf8] sm:$0xff]
        %v1526 = vld [vmem:[#allocation3 + $0x100] sm:$0xff]
        %v1527 = vld [vmem:[#allocation3 + $0x108] sm:$0xff]
        %v1528 = vld [vmem:[#allocation3 + $0x190] sm:$0xff]
        %v1529 = vld [vmem:[#allocation3 + $0x198] sm:$0xff]
        %v1530 = vld [vmem:[#allocation3 + $0x1a0] sm:$0xff]
        %v1531 = vld [vmem:[#allocation3 + $0x1a8] sm:$0xff]
        %v1532 = vld [vmem:[#allocation3 + $0x1b0] sm:$0xff]
        %v1533 = vld [vmem:[#allocation3 + $0x1b8] sm:$0xff]
        %v1534 = vld [vmem:[#allocation3 + $0x1c0] sm:$0xff]
        %v1535 = vld [vmem:[#allocation3 + $0x1c8] sm:$0xff]
        %v1536 = vld [vmem:[#allocation3 + $0x1d0] sm:$0xff]
        %v1537 = vld [vmem:[#allocation3 + $0x258] sm:$0xff]
        %v1538 = vld [vmem:[#allocation3 + $0x260] sm:$0xff]
        %v1539 = vld [vmem:[#allocation3 + $0x268] sm:$0xff]
        %v1540 = vld [vmem:[#allocation3 + $0x270] sm:$0xff]
        %v1541 = vld [vmem:[#allocation3 + $0x278] sm:$0xff]
        %v1542 = vld [vmem:[#allocation3 + $0x280] sm:$0xff]
        %v1543 = vld [vmem:[#allocation3 + $0x288] sm:$0xff]
        %v1544 = vld [vmem:[#allocation3 + $0x290] sm:$0xff]
        %v1545 = vld [vmem:[#allocation3 + $0x298] sm:$0xff]
        %v1546 = vld [vmem:[#allocation3 + $0x320] sm:$0xff]
        %v1547 = vld [vmem:[#allocation3 + $0x328] sm:$0xff]
        %v1548 = vld [vmem:[#allocation3 + $0x330] sm:$0xff]
        %v1549 = vld [vmem:[#allocation3 + $0x338] sm:$0xff]
        %v1550 = vld [vmem:[#allocation3 + $0x340] sm:$0xff]
        %v1551 = vld [vmem:[#allocation3 + $0x348] sm:$0xff]
        %v1552 = vld [vmem:[#allocation3 + $0x350] sm:$0xff]
        %v1553 = vld [vmem:[#allocation3 + $0x358] sm:$0xff]
        %v1554 = vld [vmem:[#allocation3 + $0x360] sm:$0xff]
        %v1555 = vld [vmem:[#allocation3 + $0x3e8] sm:$0xff]
        %v1556 = vld [vmem:[#allocation3 + $0x3f0] sm:$0xff]
        %v1557 = vld [vmem:[#allocation3 + $0x3f8] sm:$0xff]
        %v1558 = vld [vmem:[#allocation3 + $0x400] sm:$0xff]
        %v1559 = vld [vmem:[#allocation3 + $0x408] sm:$0xff]
        %v1560 = vld [vmem:[#allocation3 + $0x410] sm:$0xff]
        %v1561 = vld [vmem:[#allocation3 + $0x418] sm:$0xff]
        %v1562 = vld [vmem:[#allocation3 + $0x420] sm:$0xff]
        %v1563 = vld [vmem:[#allocation3 + $0x428] sm:$0xff]
        %v1564 = vld [vmem:[#allocation3 + $0x4b0] sm:$0xff]
        %v1565 = vld [vmem:[#allocation3 + $0x4b8] sm:$0xff]
        %v1566 = vld [vmem:[#allocation3 + $0x4c0] sm:$0xff]
        %v1567 = vld [vmem:[#allocation3 + $0x4c8] sm:$0xff]
        %v1568 = vld [vmem:[#allocation3 + $0x4d0] sm:$0xff]
        %v1569 = vld [vmem:[#allocation3 + $0x4d8] sm:$0xff]
        %v1570 = vld [vmem:[#allocation3 + $0x4e0] sm:$0xff]
        %v1571 = vld [vmem:[#allocation3 + $0x4e8] sm:$0xff]
        %v1572 = vld [vmem:[#allocation3 + $0x4f0] sm:$0xff]
        %v1573 = vld [vmem:[#allocation3 + $0x578] sm:$0xff]
        %v1574 = vld [vmem:[#allocation3 + $0x580] sm:$0xff]
        %v1575 = vld [vmem:[#allocation3 + $0x588] sm:$0xff]
        %v1576 = vld [vmem:[#allocation3 + $0x590] sm:$0xff]
        %v1577 = vld [vmem:[#allocation3 + $0x598] sm:$0xff]
        %v1578 = vld [vmem:[#allocation3 + $0x5a0] sm:$0xff]
        %v1579 = vld [vmem:[#allocation3 + $0x5a8] sm:$0xff]
        %v1580 = vld [vmem:[#allocation3 + $0x5b0] sm:$0xff]
        %v1581 = vld [vmem:[#allocation3 + $0x5b8] sm:$0xff]
        %v1582 = vld [vmem:[#allocation3 + $0x640] sm:$0xff]
        %v1583 = vld [vmem:[#allocation3 + $0x648] sm:$0xff]
        %v1584 = vld [vmem:[#allocation3 + $0x650] sm:$0xff]
        %v1585 = vld [vmem:[#allocation3 + $0x658] sm:$0xff]
        %v1586 = vld [vmem:[#allocation3 + $0x660] sm:$0xff]
        %v1587 = vld [vmem:[#allocation3 + $0x668] sm:$0xff]
        %v1588 = vld [vmem:[#allocation3 + $0x670] sm:$0xff]
        %v1589 = vld [vmem:[#allocation3 + $0x678] sm:$0xff]
        %v1590 = vld [vmem:[#allocation3 + $0x680] sm:$0xff]
        %v1591 = vld [vmem:[#allocation3 + $0x708] sm:$0xff]
        %v1592 = vld [vmem:[#allocation3 + $0x710] sm:$0xff]
        %v1593 = vld [vmem:[#allocation3 + $0x718] sm:$0xff]
        %v1594 = vld [vmem:[#allocation3 + $0x720] sm:$0xff]
        %v1595 = vld [vmem:[#allocation3 + $0x728] sm:$0xff]
        %v1596 = vld [vmem:[#allocation3 + $0x730] sm:$0xff]
        %v1597 = vld [vmem:[#allocation3 + $0x738] sm:$0xff]
        %v1598 = vld [vmem:[#allocation3 + $0x740] sm:$0xff]
        %v1599 = vld [vmem:[#allocation3 + $0x748] sm:$0xff]
        %v1600 = vld [vmem:[#allocation3 + $0x7d0] sm:$0xff]
        %v1601 = vld [vmem:[#allocation3 + $0x7d8] sm:$0xff]
        %v1602 = vld [vmem:[#allocation3 + $0x7e0] sm:$0xff]
        %v1603 = vld [vmem:[#allocation3 + $0x7e8] sm:$0xff]
        %v1604 = vld [vmem:[#allocation3 + $0x7f0] sm:$0xff]
        %v1605 = vld [vmem:[#allocation3 + $0x7f8] sm:$0xff]
        %v1606 = vld [vmem:[#allocation3 + $0x800] sm:$0xff]
        %v1607 = vld [vmem:[#allocation3 + $0x808] sm:$0xff]
        %v1608 = vld [vmem:[#allocation3 + $0x810] sm:$0xff]
        %v1609 = vld [vmem:[#allocation3 + $0x898] sm:$0xff]
        %v1610 = vld [vmem:[#allocation3 + $0x8a0] sm:$0xff]
        %v1611 = vld [vmem:[#allocation3 + $0x8a8] sm:$0xff]
        %v1612 = vld [vmem:[#allocation3 + $0x8b0] sm:$0xff]
        %v1613 = vld [vmem:[#allocation3 + $0x8b8] sm:$0xff]
        %v1614 = vld [vmem:[#allocation3 + $0x8c0] sm:$0xff]
        %v1615 = vld [vmem:[#allocation3 + $0x8c8] sm:$0xff]
        %v1616 = vld [vmem:[#allocation3 + $0x8d0] sm:$0xff]
        %v1617 = vld [vmem:[#allocation3 + $0x8d8] sm:$0xff]
        %v1618 = vld [vmem:[#allocation3 + $0x960] sm:$0xff]
        %v1619 = vld [vmem:[#allocation3 + $0x968] sm:$0xff]
        %v1620 = vld [vmem:[#allocation3 + $0x970] sm:$0xff]
        %v1621 = vld [vmem:[#allocation3 + $0x978] sm:$0xff]
        %v1622 = vld [vmem:[#allocation3 + $0x980] sm:$0xff]
        %v1623 = vld [vmem:[#allocation3 + $0x988] sm:$0xff]
        %v1624 = vld [vmem:[#allocation3 + $0x990] sm:$0xff]
        %v1625 = vld [vmem:[#allocation3 + $0x998] sm:$0xff]
        %v1626 = vld [vmem:[#allocation3 + $0x9a0] sm:$0xff]
        %v1627 = vld [vmem:[#allocation3 + $0xa28] sm:$0xff]
        %v1628 = vld [vmem:[#allocation3 + $0xa30] sm:$0xff]
        %v1629 = vld [vmem:[#allocation3 + $0xa38] sm:$0xff]
        %v1630 = vld [vmem:[#allocation3 + $0xa40] sm:$0xff]
        %v1631 = vld [vmem:[#allocation3 + $0xa48] sm:$0xff]
        %v1632 = vld [vmem:[#allocation3 + $0xa50] sm:$0xff]
        %v1633 = vld [vmem:[#allocation3 + $0xa58] sm:$0xff]
        %v1634 = vld [vmem:[#allocation3 + $0xa60] sm:$0xff]
        %v1635 = vld [vmem:[#allocation3 + $0xa68] sm:$0xff]
        %v1636 = vld [vmem:[#allocation3 + $0xaf0] sm:$0xff]
        %v1637 = vld [vmem:[#allocation3 + $0xaf8] sm:$0xff]
        %v1638 = vld [vmem:[#allocation3 + $0xb00] sm:$0xff]
        %v1639 = vld [vmem:[#allocation3 + $0xb08] sm:$0xff]
        %v1640 = vld [vmem:[#allocation3 + $0xb10] sm:$0xff]
        %v1641 = vld [vmem:[#allocation3 + $0xb18] sm:$0xff]
        %v1642 = vld [vmem:[#allocation3 + $0xb20] sm:$0xff]
        %v1643 = vld [vmem:[#allocation3 + $0xb28] sm:$0xff]
        %v1644 = vld [vmem:[#allocation3 + $0xb30] sm:$0xff]
        %v1645 = vld [vmem:[#allocation3 + $0xbb8] sm:$0xff]
        %v1646 = vld [vmem:[#allocation3 + $0xbc0] sm:$0xff]
        %v1647 = vld [vmem:[#allocation3 + $0xbc8] sm:$0xff]
        %v1648 = vld [vmem:[#allocation3 + $0xbd0] sm:$0xff]
        %v1649 = vld [vmem:[#allocation3 + $0xbd8] sm:$0xff]
        %v1650 = vld [vmem:[#allocation3 + $0xbe0] sm:$0xff]
        %v1651 = vld [vmem:[#allocation3 + $0xbe8] sm:$0xff]
        %v1652 = vld [vmem:[#allocation3 + $0xbf0] sm:$0xff]
        %v1653 = vld [vmem:[#allocation3 + $0xbf8] sm:$0xff]
        %v1654 = vld [vmem:[#allocation3 + $0xc80] sm:$0xff]
        %v1655 = vld [vmem:[#allocation3 + $0xc88] sm:$0xff]
        %v1656 = vld [vmem:[#allocation3 + $0xc90] sm:$0xff]
        %v1657 = vld [vmem:[#allocation3 + $0xc98] sm:$0xff]
        %v1658 = vld [vmem:[#allocation3 + $0xca0] sm:$0xff]
        %v1659 = vld [vmem:[#allocation3 + $0xca8] sm:$0xff]
        %v1660 = vld [vmem:[#allocation3 + $0xcb0] sm:$0xff]
        %v1661 = vld [vmem:[#allocation3 + $0xcb8] sm:$0xff]
        %v1662 = vld [vmem:[#allocation3 + $0xcc0] sm:$0xff]
        %v1663 = vld [vmem:[#allocation3 + $0xd48] sm:$0xff]
        %v1664 = vld [vmem:[#allocation3 + $0xd50] sm:$0xff]
        %v1665 = vld [vmem:[#allocation3 + $0xd58] sm:$0xff]
        %v1666 = vld [vmem:[#allocation3 + $0xd60] sm:$0xff]
        %v1667 = vld [vmem:[#allocation3 + $0xd68] sm:$0xff]
        %v1668 = vld [vmem:[#allocation3 + $0xd70] sm:$0xff]
        %v1669 = vld [vmem:[#allocation3 + $0xd78] sm:$0xff]
        %v1670 = vld [vmem:[#allocation3 + $0xd80] sm:$0xff]
        %v1671 = vld [vmem:[#allocation3 + $0xd88] sm:$0xff]
        %v1672 = vld [vmem:[#allocation3 + $0xe10] sm:$0xff]
        %v1673 = vld [vmem:[#allocation3 + $0xe18] sm:$0xff]
        %v1674 = vld [vmem:[#allocation3 + $0xe20] sm:$0xff]
        %v1675 = vld [vmem:[#allocation3 + $0xe28] sm:$0xff]
        %v1676 = vld [vmem:[#allocation3 + $0xe30] sm:$0xff]
        %v1677 = vld [vmem:[#allocation3 + $0xe38] sm:$0xff]
        %v1678 = vld [vmem:[#allocation3 + $0xe40] sm:$0xff]
        %v1679 = vld [vmem:[#allocation3 + $0xe48] sm:$0xff]
        %v1680 = vld [vmem:[#allocation3 + $0xe50] sm:$0xff]
        %v1681 = vld [vmem:[#allocation3 + $0xed8] sm:$0xff]
        %v1682 = vld [vmem:[#allocation3 + $0xee0] sm:$0xff]
        %v1683 = vld [vmem:[#allocation3 + $0xee8] sm:$0xff]
        %v1684 = vld [vmem:[#allocation3 + $0xef0] sm:$0xff]
        %v1685 = vld [vmem:[#allocation3 + $0xef8] sm:$0xff]
        %v1686 = vld [vmem:[#allocation3 + $0xf00] sm:$0xff]
        %v1687 = vld [vmem:[#allocation3 + $0xf08] sm:$0xff]
        %v1688 = vld [vmem:[#allocation3 + $0xf10] sm:$0xff]
        %v1689 = vld [vmem:[#allocation3 + $0xf18] sm:$0xff]
        %v1690 = vld [vmem:[#allocation3 + $0xfa0] sm:$0xff]
        %v1691 = vld [vmem:[#allocation3 + $0xfa8] sm:$0xff]
        %v1692 = vld [vmem:[#allocation3 + $0xfb0] sm:$0xff]
        %v1693 = vld [vmem:[#allocation3 + $0xfb8] sm:$0xff]
        %v1694 = vld [vmem:[#allocation3 + $0xfc0] sm:$0xff]
        %v1695 = vld [vmem:[#allocation3 + $0xfc8] sm:$0xff]
        %v1696 = vld [vmem:[#allocation3 + $0xfd0] sm:$0xff]
        %v1697 = vld [vmem:[#allocation3 + $0xfd8] sm:$0xff]
        %v1698 = vld [vmem:[#allocation3 + $0xfe0] sm:$0xff]
        %v1699 = vld [vmem:[#allocation3 + $0x1068] sm:$0xff]
        %v1700 = vld [vmem:[#allocation3 + $0x1070] sm:$0xff]
        %v1701 = vld [vmem:[#allocation3 + $0x1078] sm:$0xff]
        %v1702 = vld [vmem:[#allocation3 + $0x1080] sm:$0xff]
        %v1703 = vld [vmem:[#allocation3 + $0x1088] sm:$0xff]
        %v1704 = vld [vmem:[#allocation3 + $0x1090] sm:$0xff]
        %v1705 = vld [vmem:[#allocation3 + $0x1098] sm:$0xff]
        %v1706 = vld [vmem:[#allocation3 + $0x10a0] sm:$0xff]
        %v1707 = vld [vmem:[#allocation3 + $0x10a8] sm:$0xff]
        %v1708 = vld [vmem:[#allocation3 + $0x1130] sm:$0xff]
        %v1709 = vld [vmem:[#allocation3 + $0x1138] sm:$0xff]
        %v1710 = vld [vmem:[#allocation3 + $0x1140] sm:$0xff]
        %v1711 = vld [vmem:[#allocation3 + $0x1148] sm:$0xff]
        %v1712 = vld [vmem:[#allocation3 + $0x1150] sm:$0xff]
        %v1713 = vld [vmem:[#allocation3 + $0x1158] sm:$0xff]
        %v1714 = vld [vmem:[#allocation3 + $0x1160] sm:$0xff]
        %v1715 = vld [vmem:[#allocation3 + $0x1168] sm:$0xff]
        %v1716 = vld [vmem:[#allocation3 + $0x1170] sm:$0xff]
        %v1717 = vld [vmem:[#allocation3 + $0x11f8] sm:$0xff]
        %v1718 = vld [vmem:[#allocation3 + $0x1200] sm:$0xff]
        %v1719 = vld [vmem:[#allocation3 + $0x1208] sm:$0xff]
        %v1720 = vld [vmem:[#allocation3 + $0x1210] sm:$0xff]
        %v1721 = vld [vmem:[#allocation3 + $0x1218] sm:$0xff]
        %v1722 = vld [vmem:[#allocation3 + $0x1220] sm:$0xff]
        %v1723 = vld [vmem:[#allocation3 + $0x1228] sm:$0xff]
        %v1724 = vld [vmem:[#allocation3 + $0x1230] sm:$0xff]
        %v1725 = vld [vmem:[#allocation3 + $0x1238] sm:$0xff]
        %v1726 = vld [vmem:[#allocation3 + $0x12c0] sm:$0xff]
        %v1727 = vld [vmem:[#allocation3 + $0x12c8] sm:$0xff]
        %v1728 = vld [vmem:[#allocation3 + $0x12d0] sm:$0xff]
        %v1729 = vld [vmem:[#allocation3 + $0x12d8] sm:$0xff]
        %v1730 = vld [vmem:[#allocation3 + $0x12e0] sm:$0xff]
        %v1731 = vld [vmem:[#allocation3 + $0x12e8] sm:$0xff]
        %v1732 = vld [vmem:[#allocation3 + $0x12f0] sm:$0xff]
        %v1733 = vld [vmem:[#allocation3 + $0x12f8] sm:$0xff]
        %v1734 = vld [vmem:[#allocation3 + $0x1300] sm:$0xff]
        %v1735 = vld [vmem:[#allocation3 + $0x1388] sm:$0xff]
        %v1736 = vld [vmem:[#allocation3 + $0x1390] sm:$0xff]
        %v1737 = vld [vmem:[#allocation3 + $0x1398] sm:$0xff]
        %v1738 = vld [vmem:[#allocation3 + $0x13a0] sm:$0xff]
        %v1739 = vld [vmem:[#allocation3 + $0x13a8] sm:$0xff]
        %v1740 = vld [vmem:[#allocation3 + $0x13b0] sm:$0xff]
        %v1741 = vld [vmem:[#allocation3 + $0x13b8] sm:$0xff]
        %v1742 = vld [vmem:[#allocation3 + $0x13c0] sm:$0xff]
        %v1743 = vld [vmem:[#allocation3 + $0x13c8] sm:$0xff]
        %v1744 = vld [vmem:[#allocation3 + $0x1450] sm:$0xff]
        %v1745 = vld [vmem:[#allocation3 + $0x1458] sm:$0xff]
        %v1746 = vld [vmem:[#allocation3 + $0x1460] sm:$0xff]
        %v1747 = vld [vmem:[#allocation3 + $0x1468] sm:$0xff]
        %v1748 = vld [vmem:[#allocation3 + $0x1470] sm:$0xff]
        %v1749 = vld [vmem:[#allocation3 + $0x1478] sm:$0xff]
        %v1750 = vld [vmem:[#allocation3 + $0x1480] sm:$0xff]
        %v1751 = vld [vmem:[#allocation3 + $0x1488] sm:$0xff]
        %v1752 = vld [vmem:[#allocation3 + $0x1490] sm:$0xff]
        %v1753 = vld [vmem:[#allocation3 + $0x1518] sm:$0xff]
        %v1754 = vld [vmem:[#allocation3 + $0x1520] sm:$0xff]
        %v1755 = vld [vmem:[#allocation3 + $0x1528] sm:$0xff]
        %v1756 = vld [vmem:[#allocation3 + $0x1530] sm:$0xff]
        %v1757 = vld [vmem:[#allocation3 + $0x1538] sm:$0xff]
        %v1758 = vld [vmem:[#allocation3 + $0x1540] sm:$0xff]
        %v1759 = vld [vmem:[#allocation3 + $0x1548] sm:$0xff]
        %v1760 = vld [vmem:[#allocation3 + $0x1550] sm:$0xff]
        %v1761 = vld [vmem:[#allocation3 + $0x1558] sm:$0xff]
        %v1762 = vld [vmem:[#allocation3 + $0x15e0] sm:$0xff]
        %v1763 = vld [vmem:[#allocation3 + $0x15e8] sm:$0xff]
        %v1764 = vld [vmem:[#allocation3 + $0x15f0] sm:$0xff]
        %v1765 = vld [vmem:[#allocation3 + $0x15f8] sm:$0xff]
        %v1766 = vld [vmem:[#allocation3 + $0x1600] sm:$0xff]
        %v1767 = vld [vmem:[#allocation3 + $0x1608] sm:$0xff]
        %v1768 = vld [vmem:[#allocation3 + $0x1610] sm:$0xff]
        %v1769 = vld [vmem:[#allocation3 + $0x1618] sm:$0xff]
        %v1770 = vld [vmem:[#allocation3 + $0x1620] sm:$0xff]
        %v1771 = vld [vmem:[#allocation3 + $0x16a8] sm:$0xff]
        %v1772 = vld [vmem:[#allocation3 + $0x16b0] sm:$0xff]
        %v1773 = vld [vmem:[#allocation3 + $0x16b8] sm:$0xff]
        %v1774 = vld [vmem:[#allocation3 + $0x16c0] sm:$0xff]
        %v1775 = vld [vmem:[#allocation3 + $0x16c8] sm:$0xff]
        %v1776 = vld [vmem:[#allocation3 + $0x16d0] sm:$0xff]
        %v1777 = vld [vmem:[#allocation3 + $0x16d8] sm:$0xff]
        %v1778 = vld [vmem:[#allocation3 + $0x16e0] sm:$0xff]
        %v1779 = vld [vmem:[#allocation3 + $0x16e8] sm:$0xff]
        %v1780 = vld [vmem:[#allocation3 + $0x1770] sm:$0xff]
        %v1781 = vld [vmem:[#allocation3 + $0x1778] sm:$0xff]
        %v1782 = vld [vmem:[#allocation3 + $0x1780] sm:$0xff]
        %v1783 = vld [vmem:[#allocation3 + $0x1788] sm:$0xff]
        %v1784 = vld [vmem:[#allocation3 + $0x1790] sm:$0xff]
        %v1785 = vld [vmem:[#allocation3 + $0x1798] sm:$0xff]
        %v1786 = vld [vmem:[#allocation3 + $0x17a0] sm:$0xff]
        %v1787 = vld [vmem:[#allocation3 + $0x17a8] sm:$0xff]
        %v1788 = vld [vmem:[#allocation3 + $0x17b0] sm:$0xff]
        %v1789 = vld [vmem:[#allocation3 + $0x1838] sm:$0xff]
        %v1790 = vld [vmem:[#allocation3 + $0x1840] sm:$0xff]
        %v1791 = vld [vmem:[#allocation3 + $0x1848] sm:$0xff]
        %v1792 = vld [vmem:[#allocation3 + $0x1850] sm:$0xff]
        %v1793 = vld [vmem:[#allocation3 + $0x1858] sm:$0xff]
        %v1794 = vld [vmem:[#allocation3 + $0x1860] sm:$0xff]
        %v1795 = vld [vmem:[#allocation3 + $0x1868] sm:$0xff]
        %v1796 = vld [vmem:[#allocation3 + $0x1870] sm:$0xff]
        %v1797 = vld [vmem:[#allocation3 + $0x1878] sm:$0xff]
        %v1798 = vld [vmem:[%s3] sm:$0xff]
        %v1799 = vld [vmem:[%s3 + $0x8] sm:$0xff]
        %v1800 = vld [vmem:[%s3 + $0x10] sm:$0xff]
        %v1801 = vld [vmem:[%s3 + $0x18] sm:$0xff]
        %v1802 = vld [vmem:[%s3 + $0x20] sm:$0xff]
        %v1803 = vld [vmem:[%s3 + $0x28] sm:$0xff]
        %v1804 = vld [vmem:[%s3 + $0x30] sm:$0xff]
        %v1805 = vld [vmem:[%s3 + $0x38] sm:$0xff]
        %v1806 = vld [vmem:[%s3 + $0x40] sm:$0xff]
        %v1807 = vld [vmem:[%s3 + $0x48] sm:$0xff]
        %v1808 = vld [vmem:[%s3 + $0x50] sm:$0xff]
        %v1809 = vld [vmem:[%s3 + $0x58] sm:$0xff]
        %v1810 = vld [vmem:[%s3 + $0x60] sm:$0xff]
        %v1811 = vld [vmem:[%s3 + $0x68] sm:$0xff]
        %v1812 = vld [vmem:[%s3 + $0x70] sm:$0xff]
        %v1813 = vld [vmem:[%s3 + $0x78] sm:$0xff]
        %v1814 = vld [vmem:[%s3 + $0x80] sm:$0xff]
        %v1815 = vld [vmem:[%s3 + $0x88] sm:$0xff]
        %v1816 = vld [vmem:[%s3 + $0x90] sm:$0xff]
        %v1817 = vld [vmem:[%s3 + $0x98] sm:$0xff]
        %v1818 = vld [vmem:[%s3 + $0xa0] sm:$0xff]
        %v1819 = vld [vmem:[%s3 + $0xa8] sm:$0xff]
        %v1820 = vld [vmem:[%s3 + $0xb0] sm:$0xff]
        %v1821 = vld [vmem:[%s3 + $0xb8] sm:$0xff]
        %v1822 = vld [vmem:[%s3 + $0xc0] sm:$0xff]
        %v1823 = vld [vmem:[%s3 + $0xc8] sm:$0xff]
        %v1824 = vld [vmem:[%s3 + $0xd0] sm:$0xff]
        %v1825 = vld [vmem:[%s3 + $0xd8] sm:$0xff]
        %v1826 = vld [vmem:[%s3 + $0xe0] sm:$0xff]
        %v1827 = vld [vmem:[%s3 + $0xe8] sm:$0xff]
        %v1828 = vld [vmem:[%s3 + $0xf0] sm:$0xff]
        %v1829 = vld [vmem:[%s3 + $0xf8] sm:$0xff]
        %v1830 = vld [vmem:[%s3 + $0x100] sm:$0xff]
        %v1831 = vld [vmem:[%s3 + $0x108] sm:$0xff]
        %v1832 = vld [vmem:[%s3 + $0x110] sm:$0xff]
        %v1833 = vld [vmem:[%s3 + $0x118] sm:$0xff]
        %v1834 = vld [vmem:[%s3 + $0x120] sm:$0xff]
        %v1835 = vld [vmem:[%s3 + $0x128] sm:$0xff]
        %v1836 = vld [vmem:[%s3 + $0x130] sm:$0xff]
        %v1837 = vld [vmem:[%s3 + $0x138] sm:$0xff]
        %v1838 = vld [vmem:[%s3 + $0x140] sm:$0xff]
        %v1839 = vld [vmem:[%s3 + $0x148] sm:$0xff]
        %v1840 = vld [vmem:[%s3 + $0x150] sm:$0xff]
        %v1841 = vld [vmem:[%s3 + $0x158] sm:$0xff]
        %v1842 = vld [vmem:[%s3 + $0x160] sm:$0xff]
        %v1843 = vld [vmem:[%s3 + $0x168] sm:$0xff]
        %v1844 = vld [vmem:[%s3 + $0x170] sm:$0xff]
        %v1845 = vld [vmem:[%s3 + $0x178] sm:$0xff]
        %v1846 = vld [vmem:[%s3 + $0x180] sm:$0xff]
        %v1847 = vld [vmem:[%s3 + $0x188] sm:$0xff]
        %v1848 = vld [vmem:[%s3 + $0x190] sm:$0xff]
        %v1849 = vld [vmem:[%s3 + $0x198] sm:$0xff]
        %v1850 = vld [vmem:[%s3 + $0x1a0] sm:$0xff]
        %v1851 = vld [vmem:[%s3 + $0x1a8] sm:$0xff]
        %v1852 = vld [vmem:[%s3 + $0x1b0] sm:$0xff]
        %v1853 = vld [vmem:[%s3 + $0x1b8] sm:$0xff]
        %v1854 = vld [vmem:[%s3 + $0x1c0] sm:$0xff]
        %v1855 = vld [vmem:[%s3 + $0x1c8] sm:$0xff]
        %v1856 = vld [vmem:[%s3 + $0x1d0] sm:$0xff]
        %v1857 = vld [vmem:[%s3 + $0x1d8] sm:$0xff]
        %v1858 = vld [vmem:[%s3 + $0x1e0] sm:$0xff]
        %v1859 = vld [vmem:[%s3 + $0x1e8] sm:$0xff]
        %v1860 = vld [vmem:[%s3 + $0x1f0] sm:$0xff]
        %v1861 = vld [vmem:[%s3 + $0x1f8] sm:$0xff]
        %v1862 = vld [vmem:[%s3 + $0x200] sm:$0xff]
        %v1863 = vld [vmem:[%s3 + $0x208] sm:$0xff]
        %v1864 = vld [vmem:[%s3 + $0x210] sm:$0xff]
        %v1865 = vld [vmem:[%s3 + $0x218] sm:$0xff]
        %v1866 = vld [vmem:[%s3 + $0x220] sm:$0xff]
        %v1867 = vld [vmem:[%s3 + $0x228] sm:$0xff]
        %v1868 = vld [vmem:[%s3 + $0x230] sm:$0xff]
        %v1869 = vld [vmem:[%s3 + $0x238] sm:$0xff]
        %v1870 = vld [vmem:[%s3 + $0x240] sm:$0xff]
        %v1871 = vld [vmem:[%s3 + $0x248] sm:$0xff]
        %v1872 = vld [vmem:[%s3 + $0x250] sm:$0xff]
        %v1873 = vld [vmem:[%s3 + $0x258] sm:$0xff]
        %v1874 = vld [vmem:[%s3 + $0x260] sm:$0xff]
        %v1875 = vld [vmem:[%s3 + $0x268] sm:$0xff]
        %v1876 = vld [vmem:[%s3 + $0x270] sm:$0xff]
        %v1877 = vld [vmem:[%s3 + $0x278] sm:$0xff]
        %v1878 = vld [vmem:[%s3 + $0x280] sm:$0xff]
        %v1879 = vld [vmem:[%s3 + $0x288] sm:$0xff]
        %v1880 = vld [vmem:[%s3 + $0x290] sm:$0xff]
        %v1881 = vld [vmem:[%s3 + $0x298] sm:$0xff]
        %v1882 = vld [vmem:[%s3 + $0x2a0] sm:$0xff]
        %v1883 = vld [vmem:[%s3 + $0x2a8] sm:$0xff]
        %v1884 = vld [vmem:[%s3 + $0x2b0] sm:$0xff]
        %v1885 = vld [vmem:[%s3 + $0x2b8] sm:$0xff]
        %v1886 = vld [vmem:[%s3 + $0x2c0] sm:$0xff]
        %v1887 = vld [vmem:[%s3 + $0x2c8] sm:$0xff]
        %v1888 = vld [vmem:[%s3 + $0x2d0] sm:$0xff]
        %v1889 = vld [vmem:[%s3 + $0x2d8] sm:$0xff]
        %v1890 = vld [vmem:[%s3 + $0x2e0] sm:$0xff]
        %v1891 = vld [vmem:[%s3 + $0x2e8] sm:$0xff]
        %v1892 = vld [vmem:[%s3 + $0x2f0] sm:$0xff]
        %v1893 = vld [vmem:[%s3 + $0x2f8] sm:$0xff]
        %v1894 = vld [vmem:[%s3 + $0x300] sm:$0xff]
        %v1895 = vld [vmem:[%s3 + $0x308] sm:$0xff]
        %v1896 = vld [vmem:[%s3 + $0x310] sm:$0xff]
        %v1897 = vld [vmem:[%s3 + $0x318] sm:$0xff]
        %v1898 = vld [vmem:[%s3 + $0x320] sm:$0xff]
        %v1899 = vld [vmem:[%s3 + $0x328] sm:$0xff]
        %v1900 = vld [vmem:[%s3 + $0x330] sm:$0xff]
        %v1901 = vld [vmem:[%s3 + $0x338] sm:$0xff]
        %v1902 = vld [vmem:[%s3 + $0x340] sm:$0xff]
        %v1903 = vld [vmem:[%s3 + $0x348] sm:$0xff]
        %v1904 = vld [vmem:[%s3 + $0x350] sm:$0xff]
        %v1905 = vld [vmem:[%s3 + $0x358] sm:$0xff]
        %v1906 = vld [vmem:[%s3 + $0x360] sm:$0xff]
        %v1907 = vld [vmem:[%s3 + $0x368] sm:$0xff]
        %v1908 = vld [vmem:[%s3 + $0x370] sm:$0xff]
        %v1909 = vld [vmem:[%s3 + $0x378] sm:$0xff]
        %v1910 = vld [vmem:[%s3 + $0x380] sm:$0xff]
        %v1911 = vld [vmem:[%s3 + $0x388] sm:$0xff]
        %v1912 = vld [vmem:[%s3 + $0x390] sm:$0xff]
        %v1913 = vld [vmem:[%s3 + $0x398] sm:$0xff]
        %v1914 = vld [vmem:[%s3 + $0x3a0] sm:$0xff]
        %v1915 = vld [vmem:[%s3 + $0x3a8] sm:$0xff]
        %v1916 = vld [vmem:[%s3 + $0x3b0] sm:$0xff]
        %v1917 = vld [vmem:[%s3 + $0x3b8] sm:$0xff]
        %v1918 = vld [vmem:[%s3 + $0x3c0] sm:$0xff]
        %v1919 = vld [vmem:[%s3 + $0x3c8] sm:$0xff]
        %v1920 = vld [vmem:[%s3 + $0x3d0] sm:$0xff]
        %v1921 = vld [vmem:[%s3 + $0x3d8] sm:$0xff]
        %v1922 = vld [vmem:[%s3 + $0x3e0] sm:$0xff]
        %v1923 = vld [vmem:[%s3 + $0x3e8] sm:$0xff]
        %v1924 = vld [vmem:[%s3 + $0x3f0] sm:$0xff]
        %v1925 = vld [vmem:[%s3 + $0x3f8] sm:$0xff]
        %v1926 = vld [vmem:[%s3 + $0x400] sm:$0xff]
        %v1927 = vld [vmem:[%s3 + $0x408] sm:$0xff]
        %v1928 = vld [vmem:[%s3 + $0x410] sm:$0xff]
        %v1929 = vld [vmem:[%s3 + $0x418] sm:$0xff]
        %v1930 = vld [vmem:[%s3 + $0x420] sm:$0xff]
        %v1931 = vld [vmem:[%s3 + $0x428] sm:$0xff]
        %v1932 = vld [vmem:[%s3 + $0x430] sm:$0xff]
        %v1933 = vld [vmem:[%s3 + $0x438] sm:$0xff]
        %v1934 = vld [vmem:[%s3 + $0x440] sm:$0xff]
        %v1935 = vld [vmem:[%s3 + $0x448] sm:$0xff]
        %v1936 = vld [vmem:[%s3 + $0x450] sm:$0xff]
        %v1937 = vld [vmem:[%s3 + $0x458] sm:$0xff]
        %v1938 = vld [vmem:[%s3 + $0x460] sm:$0xff]
        %v1939 = vld [vmem:[%s3 + $0x468] sm:$0xff]
        %v1940 = vld [vmem:[%s3 + $0x470] sm:$0xff]
        %v1941 = vld [vmem:[%s3 + $0x478] sm:$0xff]
        %v1942 = vld [vmem:[#allocation9] sm:$0x1]
        %v1944 = vlaneseq
        %v1945 = vshrl.u32 %v1944, 7
        %v1946 = vsub.s32 0, %v1945
        %v1947 = vrot.slane %v1942, %v1946
        %1949 = vmatprep.subr.mxu0 0.0
        %1950 = vmatpush1.msra.mxu0 %v1813
        %1951 = vmatprep.subr.mxu0 0.0
        %1952 = vmatpush1.msra.mxu0 %v1812
        %1953 = vmatprep.subr.mxu0 0.0
        %1954 = vmatpush1.msra.mxu0 %v1811
        %1955 = vmatprep.subr.mxu0 0.0
        %1956 = vmatpush1.msra.mxu0 %v1810
        %1957 = vmatprep.subr.mxu0 0.0
        %1958 = vmatpush1.msra.mxu0 %v1809
        %1959 = vmatprep.subr.mxu0 0.0
        %1960 = vmatpush1.msra.mxu0 %v1808
        %1961 = vmatprep.subr.mxu0 0.0
        %1962 = vmatpush1.msra.mxu0 %v1807
        %1963 = vmatprep.subr.mxu0 0.0
        %1964 = vmatpush1.msra.mxu0 %v1806
        %1965 = vmatprep.subr.mxu0 0.0
        %1966 = vmatpush1.msra.mxu0 %v1805
        %1967 = vmatprep.subr.mxu0 0.0
        %1968 = vmatpush1.msra.mxu0 %v1804
        %1969 = vmatprep.subr.mxu0 0.0
        %1970 = vmatpush1.msra.mxu0 %v1803
        %1971 = vmatprep.subr.mxu0 0.0
        %1972 = vmatpush1.msra.mxu0 %v1802
        %1973 = vmatprep.subr.mxu0 0.0
        %1974 = vmatpush1.msra.mxu0 %v1801
        %1975 = vmatprep.subr.mxu0 0.0
        %1976 = vmatpush1.msra.mxu0 %v1800
        %1977 = vmatprep.subr.mxu0 0.0
        %1978 = vmatpush1.msra.mxu0 %v1799
        %1979 = vmatprep.subr.mxu0 0.0
        %1980 = vmatpush1.msra.mxu0 %v1798
        %1981 = vmatprep.subr.mxu0 0.0
        %1982 = vmatpush2.msra.mxu0 %v1829
        %1983 = vmatprep.subr.mxu0 0.0
        %1984 = vmatpush2.msra.mxu0 %v1828
        %1985 = vmatprep.subr.mxu0 0.0
        %1986 = vmatpush2.msra.mxu0 %v1827
        %1987 = vmatprep.subr.mxu0 0.0
        %1988 = vmatpush2.msra.mxu0 %v1826
        %1989 = vmatprep.subr.mxu0 0.0
        %1990 = vmatpush2.msra.mxu0 %v1825
        %1991 = vmatprep.subr.mxu0 0.0
        %1992 = vmatpush2.msra.mxu0 %v1824
        %1993 = vmatprep.subr.mxu0 0.0
        %1994 = vmatpush2.msra.mxu0 %v1823
        %1995 = vmatprep.subr.mxu0 0.0
        %1996 = vmatpush2.msra.mxu0 %v1822
        %1997 = vmatprep.subr.mxu0 0.0
        %1998 = vmatpush2.msra.mxu0 %v1821
        %1999 = vmatprep.subr.mxu0 0.0
        %2000 = vmatpush2.msra.mxu0 %v1820
        %2001 = vmatprep.subr.mxu0 0.0
        %2002 = vmatpush2.msra.mxu0 %v1819
        %2003 = vmatprep.subr.mxu0 0.0
        %2004 = vmatpush2.msra.mxu0 %v1818
        %2005 = vmatprep.subr.mxu0 0.0
        %2006 = vmatpush2.msra.mxu0 %v1817
        %2007 = vmatprep.subr.mxu0 0.0
        %2008 = vmatpush2.msra.mxu0 %v1816
        %2009 = vmatprep.subr.mxu0 0.0
        %2010 = vmatpush2.msra.mxu0 %v1815
        %2011 = vmatprep.subr.mxu0 0.0
        %2012 = vmatpush2.msra.mxu0 %v1814
        %2013 = vmatprep.mubr.f32.mxu0 %v1511
        %2014 = vmatmul.mubr.f32.gmra.mxu0 %v1510
        %v2015 = vpop.f32.mrf.mxu0
        %v2016 = vadd.f32 %v1947, %v2015
        %v2017 = vpop.f32.mrf.mxu0
        %2018 = vmatprep.mubr.f32.mxu0 %v1520
        %2019 = vmatmul.mubr.f32.gmra.mxu0 %v1519
        %v2020 = vpop.f32.mrf.mxu0
        %v2021 = vadd.f32 %v1947, %v2020
        %v2022 = vpop.f32.mrf.mxu0
        %2023 = vmatprep.mubr.f32.mxu0 %v1529
        %2024 = vmatmul.mubr.f32.gmra.mxu0 %v1528
        %v2025 = vpop.f32.mrf.mxu0
        %v2026 = vadd.f32 %v1947, %v2025
        %v2027 = vpop.f32.mrf.mxu0
        %2028 = vmatprep.mubr.f32.mxu0 %v1538
        %2029 = vmatmul.mubr.f32.gmra.mxu0 %v1537
        %v2030 = vpop.f32.mrf.mxu0
        %v2031 = vadd.f32 %v1947, %v2030
        %v2032 = vpop.f32.mrf.mxu0
        %2033 = vmatprep.mubr.f32.mxu0 %v1547
        %2034 = vmatmul.mubr.f32.gmra.mxu0 %v1546
        %v2035 = vpop.f32.mrf.mxu0
        %v2036 = vadd.f32 %v1947, %v2035
        %v2037 = vpop.f32.mrf.mxu0
        %2038 = vmatprep.mubr.f32.mxu0 %v1556
        %2039 = vmatmul.mubr.f32.gmra.mxu0 %v1555
        %v2040 = vpop.f32.mrf.mxu0
        %v2041 = vadd.f32 %v1947, %v2040
        %v2042 = vpop.f32.mrf.mxu0
        %2043 = vmatprep.mubr.f32.mxu0 %v1565
        %2044 = vmatmul.mubr.f32.gmra.mxu0 %v1564
        %v2045 = vpop.f32.mrf.mxu0
        %v2046 = vadd.f32 %v1947, %v2045
        %v2047 = vpop.f32.mrf.mxu0
        %2048 = vmatprep.mubr.f32.mxu0 %v1574
        %2049 = vmatmul.mubr.f32.gmra.mxu0 %v1573
        %v2050 = vpop.f32.mrf.mxu0
        %v2051 = vadd.f32 %v1947, %v2050
        %v2052 = vpop.f32.mrf.mxu0
        %2053 = vmatprep.mubr.f32.mxu0 %v1583
        %2054 = vmatmul.mubr.f32.gmra.mxu0 %v1582
        %v2055 = vpop.f32.mrf.mxu0
        %v2056 = vadd.f32 %v1947, %v2055
        %v2057 = vpop.f32.mrf.mxu0
        %2058 = vmatprep.mubr.f32.mxu0 %v1592
        %2059 = vmatmul.mubr.f32.gmra.mxu0 %v1591
        %v2060 = vpop.f32.mrf.mxu0
        %v2061 = vadd.f32 %v1947, %v2060
        %v2062 = vpop.f32.mrf.mxu0
        %2063 = vmatprep.mubr.f32.mxu0 %v1601
        %2064 = vmatmul.mubr.f32.gmra.mxu0 %v1600
        %v2065 = vpop.f32.mrf.mxu0
        %v2066 = vadd.f32 %v1947, %v2065
        %v2067 = vpop.f32.mrf.mxu0
        %2068 = vmatprep.mubr.f32.mxu0 %v1610
        %2069 = vmatmul.mubr.f32.gmra.mxu0 %v1609
        %v2070 = vpop.f32.mrf.mxu0
        %v2071 = vadd.f32 %v1947, %v2070
        %v2072 = vpop.f32.mrf.mxu0
        %2073 = vmatprep.mubr.f32.mxu0 %v1619
        %2074 = vmatmul.mubr.f32.gmra.mxu0 %v1618
        %v2075 = vpop.f32.mrf.mxu0
        %v2076 = vadd.f32 %v1947, %v2075
        %v2077 = vpop.f32.mrf.mxu0
        %2078 = vmatprep.mubr.f32.mxu0 %v1628
        %2079 = vmatmul.mubr.f32.gmra.mxu0 %v1627
        %v2080 = vpop.f32.mrf.mxu0
        %v2081 = vadd.f32 %v1947, %v2080
        %v2082 = vpop.f32.mrf.mxu0
        %2083 = vmatprep.mubr.f32.mxu0 %v1637
        %2084 = vmatmul.mubr.f32.gmra.mxu0 %v1636
        %v2085 = vpop.f32.mrf.mxu0
        %v2086 = vadd.f32 %v1947, %v2085
        %v2087 = vpop.f32.mrf.mxu0
        %2088 = vmatprep.mubr.f32.mxu0 %v1646
        %2089 = vmatmul.mubr.f32.gmra.mxu0 %v1645
        %v2090 = vpop.f32.mrf.mxu0
        %v2091 = vadd.f32 %v1947, %v2090
        %v2092 = vpop.f32.mrf.mxu0
        %2093 = vmatprep.mubr.f32.mxu0 %v1655
        %2094 = vmatmul.mubr.f32.gmra.mxu0 %v1654
        %v2095 = vpop.f32.mrf.mxu0
        %v2096 = vadd.f32 %v1947, %v2095
        %v2097 = vpop.f32.mrf.mxu0
        %2098 = vmatprep.mubr.f32.mxu0 %v1664
        %2099 = vmatmul.mubr.f32.gmra.mxu0 %v1663
        %v2100 = vpop.f32.mrf.mxu0
        %v2101 = vadd.f32 %v1947, %v2100
        %v2102 = vpop.f32.mrf.mxu0
        %2103 = vmatprep.mubr.f32.mxu0 %v1673
        %2104 = vmatmul.mubr.f32.gmra.mxu0 %v1672
        %v2105 = vpop.f32.mrf.mxu0
        %v2106 = vadd.f32 %v1947, %v2105
        %v2107 = vpop.f32.mrf.mxu0
        %2108 = vmatprep.mubr.f32.mxu0 %v1682
        %2109 = vmatmul.mubr.f32.gmra.mxu0 %v1681
        %v2110 = vpop.f32.mrf.mxu0
        %v2111 = vadd.f32 %v1947, %v2110
        %v2112 = vpop.f32.mrf.mxu0
        %2113 = vmatprep.mubr.f32.mxu0 %v1691
        %2114 = vmatmul.mubr.f32.gmra.mxu0 %v1690
        %v2115 = vpop.f32.mrf.mxu0
        %v2116 = vadd.f32 %v1947, %v2115
        %v2117 = vpop.f32.mrf.mxu0
        %2118 = vmatprep.mubr.f32.mxu0 %v1700
        %2119 = vmatmul.mubr.f32.gmra.mxu0 %v1699
        %v2120 = vpop.f32.mrf.mxu0
        %v2121 = vadd.f32 %v1947, %v2120
        %v2122 = vpop.f32.mrf.mxu0
        %2123 = vmatprep.mubr.f32.mxu0 %v1709
        %2124 = vmatmul.mubr.f32.gmra.mxu0 %v1708
        %v2125 = vpop.f32.mrf.mxu0
        %v2126 = vadd.f32 %v1947, %v2125
        %v2127 = vpop.f32.mrf.mxu0
        %2128 = vmatprep.mubr.f32.mxu0 %v1718
        %2129 = vmatmul.mubr.f32.gmra.mxu0 %v1717
        %v2130 = vpop.f32.mrf.mxu0
        %v2131 = vadd.f32 %v1947, %v2130
        %v2132 = vpop.f32.mrf.mxu0
        %2133 = vmatprep.mubr.f32.mxu0 %v1727
        %2134 = vmatmul.mubr.f32.gmra.mxu0 %v1726
        %v2135 = vpop.f32.mrf.mxu0
        %v2136 = vadd.f32 %v1947, %v2135
        %v2137 = vpop.f32.mrf.mxu0
        %2138 = vmatprep.mubr.f32.mxu0 %v1736
        %2139 = vmatmul.mubr.f32.gmra.mxu0 %v1735
        %v2140 = vpop.f32.mrf.mxu0
        %v2141 = vadd.f32 %v1947, %v2140
        %v2142 = vpop.f32.mrf.mxu0
        %2143 = vmatprep.mubr.f32.mxu0 %v1745
        %2144 = vmatmul.mubr.f32.gmra.mxu0 %v1744
        %v2145 = vpop.f32.mrf.mxu0
        %v2146 = vadd.f32 %v1947, %v2145
        %v2147 = vpop.f32.mrf.mxu0
        %2148 = vmatprep.mubr.f32.mxu0 %v1754
        %2149 = vmatmul.mubr.f32.gmra.mxu0 %v1753
        %v2150 = vpop.f32.mrf.mxu0
        %v2151 = vadd.f32 %v1947, %v2150
        %v2152 = vpop.f32.mrf.mxu0
        %2153 = vmatprep.mubr.f32.mxu0 %v1763
        %2154 = vmatmul.mubr.f32.gmra.mxu0 %v1762
        %v2155 = vpop.f32.mrf.mxu0
        %v2156 = vadd.f32 %v1947, %v2155
        %v2157 = vpop.f32.mrf.mxu0
        %2158 = vmatprep.mubr.f32.mxu0 %v1772
        %2159 = vmatmul.mubr.f32.gmra.mxu0 %v1771
        %v2160 = vpop.f32.mrf.mxu0
        %v2161 = vadd.f32 %v1947, %v2160
        %v2162 = vpop.f32.mrf.mxu0
        %2163 = vmatprep.mubr.f32.mxu0 %v1781
        %2164 = vmatmul.mubr.f32.gmra.mxu0 %v1780
        %v2165 = vpop.f32.mrf.mxu0
        %v2166 = vadd.f32 %v1947, %v2165
        %v2167 = vpop.f32.mrf.mxu0
        %2168 = vmatprep.mubr.f32.mxu0 %v1790
        %2169 = vmatmul.mubr.f32.gmra.mxu0 %v1789
        %v2170 = vpop.f32.mrf.mxu0
        %v2171 = vadd.f32 %v1947, %v2170
        %v2172 = vpop.f32.mrf.mxu0
        %2173 = vdwg.mxu0
        %2174 = vmatprep.subr.mxu0 0.0
        %2175 = vmatpush1.msra.mxu0 %v1845
        %2176 = vmatprep.subr.mxu0 0.0
        %2177 = vmatpush1.msra.mxu0 %v1844
        %2178 = vmatprep.subr.mxu0 0.0
        %2179 = vmatpush1.msra.mxu0 %v1843
        %2180 = vmatprep.subr.mxu0 0.0
        %2181 = vmatpush1.msra.mxu0 %v1842
        %2182 = vmatprep.subr.mxu0 0.0
        %2183 = vmatpush1.msra.mxu0 %v1841
        %2184 = vmatprep.subr.mxu0 0.0
        %2185 = vmatpush1.msra.mxu0 %v1840
        %2186 = vmatprep.subr.mxu0 0.0
        %2187 = vmatpush1.msra.mxu0 %v1839
        %2188 = vmatprep.subr.mxu0 0.0
        %2189 = vmatpush1.msra.mxu0 %v1838
        %2190 = vmatprep.subr.mxu0 0.0
        %2191 = vmatpush1.msra.mxu0 %v1837
        %2192 = vmatprep.subr.mxu0 0.0
        %2193 = vmatpush1.msra.mxu0 %v1836
        %2194 = vmatprep.subr.mxu0 0.0
        %2195 = vmatpush1.msra.mxu0 %v1835
        %2196 = vmatprep.subr.mxu0 0.0
        %2197 = vmatpush1.msra.mxu0 %v1834
        %2198 = vmatprep.subr.mxu0 0.0
        %2199 = vmatpush1.msra.mxu0 %v1833
        %2200 = vmatprep.subr.mxu0 0.0
        %2201 = vmatpush1.msra.mxu0 %v1832
        %2202 = vmatprep.subr.mxu0 0.0
        %2203 = vmatpush1.msra.mxu0 %v1831
        %2204 = vmatprep.subr.mxu0 0.0
        %2205 = vmatpush1.msra.mxu0 %v1830
        %2206 = vmatprep.subr.mxu0 0.0
        %2207 = vmatpush2.msra.mxu0 %v1861
        %2208 = vmatprep.subr.mxu0 0.0
        %2209 = vmatpush2.msra.mxu0 %v1860
        %2210 = vmatprep.subr.mxu0 0.0
        %2211 = vmatpush2.msra.mxu0 %v1859
        %2212 = vmatprep.subr.mxu0 0.0
        %2213 = vmatpush2.msra.mxu0 %v1858
        %2214 = vmatprep.subr.mxu0 0.0
        %2215 = vmatpush2.msra.mxu0 %v1857
        %2216 = vmatprep.subr.mxu0 0.0
        %2217 = vmatpush2.msra.mxu0 %v1856
        %2218 = vmatprep.subr.mxu0 0.0
        %2219 = vmatpush2.msra.mxu0 %v1855
        %2220 = vmatprep.subr.mxu0 0.0
        %2221 = vmatpush2.msra.mxu0 %v1854
        %2222 = vmatprep.subr.mxu0 0.0
        %2223 = vmatpush2.msra.mxu0 %v1853
        %2224 = vmatprep.subr.mxu0 0.0
        %2225 = vmatpush2.msra.mxu0 %v1852
        %2226 = vmatprep.subr.mxu0 0.0
        %2227 = vmatpush2.msra.mxu0 %v1851
        %2228 = vmatprep.subr.mxu0 0.0
        %2229 = vmatpush2.msra.mxu0 %v1850
        %2230 = vmatprep.subr.mxu0 0.0
        %2231 = vmatpush2.msra.mxu0 %v1849
        %2232 = vmatprep.subr.mxu0 0.0
        %2233 = vmatpush2.msra.mxu0 %v1848
        %2234 = vmatprep.subr.mxu0 0.0
        %2235 = vmatpush2.msra.mxu0 %v1847
        %2236 = vmatprep.subr.mxu0 0.0
        %2237 = vmatpush2.msra.mxu0 %v1846
        %2238 = vmatprep.mubr.f32.mxu0 %v1513
        %2239 = vmatmul.mubr.f32.gmra.mxu0 %v1512
        %v2240 = vpop.f32.mrf.mxu0
        %v2241 = vadd.f32 %v2016, %v2240
        %v2242 = vpop.f32.mrf.mxu0
        %2243 = vmatprep.mubr.f32.mxu0 %v1522
        %2244 = vmatmul.mubr.f32.gmra.mxu0 %v1521
        %v2245 = vpop.f32.mrf.mxu0
        %v2246 = vadd.f32 %v2021, %v2245
        %v2247 = vpop.f32.mrf.mxu0
        %2248 = vmatprep.mubr.f32.mxu0 %v1531
        %2249 = vmatmul.mubr.f32.gmra.mxu0 %v1530
        %v2250 = vpop.f32.mrf.mxu0
        %v2251 = vadd.f32 %v2026, %v2250
        %v2252 = vpop.f32.mrf.mxu0
        %2253 = vmatprep.mubr.f32.mxu0 %v1540
        %2254 = vmatmul.mubr.f32.gmra.mxu0 %v1539
        %v2255 = vpop.f32.mrf.mxu0
        %v2256 = vadd.f32 %v2031, %v2255
        %v2257 = vpop.f32.mrf.mxu0
        %2258 = vmatprep.mubr.f32.mxu0 %v1549
        %2259 = vmatmul.mubr.f32.gmra.mxu0 %v1548
        %v2260 = vpop.f32.mrf.mxu0
        %v2261 = vadd.f32 %v2036, %v2260
        %v2262 = vpop.f32.mrf.mxu0
        %2263 = vmatprep.mubr.f32.mxu0 %v1558
        %2264 = vmatmul.mubr.f32.gmra.mxu0 %v1557
        %v2265 = vpop.f32.mrf.mxu0
        %v2266 = vadd.f32 %v2041, %v2265
        %v2267 = vpop.f32.mrf.mxu0
        %2268 = vmatprep.mubr.f32.mxu0 %v1567
        %2269 = vmatmul.mubr.f32.gmra.mxu0 %v1566
        %v2270 = vpop.f32.mrf.mxu0
        %v2271 = vadd.f32 %v2046, %v2270
        %v2272 = vpop.f32.mrf.mxu0
        %2273 = vmatprep.mubr.f32.mxu0 %v1576
        %2274 = vmatmul.mubr.f32.gmra.mxu0 %v1575
        %v2275 = vpop.f32.mrf.mxu0
        %v2276 = vadd.f32 %v2051, %v2275
        %v2277 = vpop.f32.mrf.mxu0
        %2278 = vmatprep.mubr.f32.mxu0 %v1585
        %2279 = vmatmul.mubr.f32.gmra.mxu0 %v1584
        %v2280 = vpop.f32.mrf.mxu0
        %v2281 = vadd.f32 %v2056, %v2280
        %v2282 = vpop.f32.mrf.mxu0
        %2283 = vmatprep.mubr.f32.mxu0 %v1594
        %2284 = vmatmul.mubr.f32.gmra.mxu0 %v1593
        %v2285 = vpop.f32.mrf.mxu0
        %v2286 = vadd.f32 %v2061, %v2285
        %v2287 = vpop.f32.mrf.mxu0
        %2288 = vmatprep.mubr.f32.mxu0 %v1603
        %2289 = vmatmul.mubr.f32.gmra.mxu0 %v1602
        %v2290 = vpop.f32.mrf.mxu0
        %v2291 = vadd.f32 %v2066, %v2290
        %v2292 = vpop.f32.mrf.mxu0
        %2293 = vmatprep.mubr.f32.mxu0 %v1612
        %2294 = vmatmul.mubr.f32.gmra.mxu0 %v1611
        %v2295 = vpop.f32.mrf.mxu0
        %v2296 = vadd.f32 %v2071, %v2295
        %v2297 = vpop.f32.mrf.mxu0
        %2298 = vmatprep.mubr.f32.mxu0 %v1621
        %2299 = vmatmul.mubr.f32.gmra.mxu0 %v1620
        %v2300 = vpop.f32.mrf.mxu0
        %v2301 = vadd.f32 %v2076, %v2300
        %v2302 = vpop.f32.mrf.mxu0
        %2303 = vmatprep.mubr.f32.mxu0 %v1630
        %2304 = vmatmul.mubr.f32.gmra.mxu0 %v1629
        %v2305 = vpop.f32.mrf.mxu0
        %v2306 = vadd.f32 %v2081, %v2305
        %v2307 = vpop.f32.mrf.mxu0
        %2308 = vmatprep.mubr.f32.mxu0 %v1639
        %2309 = vmatmul.mubr.f32.gmra.mxu0 %v1638
        %v2310 = vpop.f32.mrf.mxu0
        %v2311 = vadd.f32 %v2086, %v2310
        %v2312 = vpop.f32.mrf.mxu0
        %2313 = vmatprep.mubr.f32.mxu0 %v1648
        %2314 = vmatmul.mubr.f32.gmra.mxu0 %v1647
        %v2315 = vpop.f32.mrf.mxu0
        %v2316 = vadd.f32 %v2091, %v2315
        %v2317 = vpop.f32.mrf.mxu0
        %2318 = vmatprep.mubr.f32.mxu0 %v1657
        %2319 = vmatmul.mubr.f32.gmra.mxu0 %v1656
        %v2320 = vpop.f32.mrf.mxu0
        %v2321 = vadd.f32 %v2096, %v2320
        %v2322 = vpop.f32.mrf.mxu0
        %2323 = vmatprep.mubr.f32.mxu0 %v1666
        %2324 = vmatmul.mubr.f32.gmra.mxu0 %v1665
        %v2325 = vpop.f32.mrf.mxu0
        %v2326 = vadd.f32 %v2101, %v2325
        %v2327 = vpop.f32.mrf.mxu0
        %2328 = vmatprep.mubr.f32.mxu0 %v1675
        %2329 = vmatmul.mubr.f32.gmra.mxu0 %v1674
        %v2330 = vpop.f32.mrf.mxu0
        %v2331 = vadd.f32 %v2106, %v2330
        %v2332 = vpop.f32.mrf.mxu0
        %2333 = vmatprep.mubr.f32.mxu0 %v1684
        %2334 = vmatmul.mubr.f32.gmra.mxu0 %v1683
        %v2335 = vpop.f32.mrf.mxu0
        %v2336 = vadd.f32 %v2111, %v2335
        %v2337 = vpop.f32.mrf.mxu0
        %2338 = vmatprep.mubr.f32.mxu0 %v1693
        %2339 = vmatmul.mubr.f32.gmra.mxu0 %v1692
        %v2340 = vpop.f32.mrf.mxu0
        %v2341 = vadd.f32 %v2116, %v2340
        %v2342 = vpop.f32.mrf.mxu0
        %2343 = vmatprep.mubr.f32.mxu0 %v1702
        %2344 = vmatmul.mubr.f32.gmra.mxu0 %v1701
        %v2345 = vpop.f32.mrf.mxu0
        %v2346 = vadd.f32 %v2121, %v2345
        %v2347 = vpop.f32.mrf.mxu0
        %2348 = vmatprep.mubr.f32.mxu0 %v1711
        %2349 = vmatmul.mubr.f32.gmra.mxu0 %v1710
        %v2350 = vpop.f32.mrf.mxu0
        %v2351 = vadd.f32 %v2126, %v2350
        %v2352 = vpop.f32.mrf.mxu0
        %2353 = vmatprep.mubr.f32.mxu0 %v1720
        %2354 = vmatmul.mubr.f32.gmra.mxu0 %v1719
        %v2355 = vpop.f32.mrf.mxu0
        %v2356 = vadd.f32 %v2131, %v2355
        %v2357 = vpop.f32.mrf.mxu0
        %2358 = vmatprep.mubr.f32.mxu0 %v1729
        %2359 = vmatmul.mubr.f32.gmra.mxu0 %v1728
        %v2360 = vpop.f32.mrf.mxu0
        %v2361 = vadd.f32 %v2136, %v2360
        %v2362 = vpop.f32.mrf.mxu0
        %2363 = vmatprep.mubr.f32.mxu0 %v1738
        %2364 = vmatmul.mubr.f32.gmra.mxu0 %v1737
        %v2365 = vpop.f32.mrf.mxu0
        %v2366 = vadd.f32 %v2141, %v2365
        %v2367 = vpop.f32.mrf.mxu0
        %2368 = vmatprep.mubr.f32.mxu0 %v1747
        %2369 = vmatmul.mubr.f32.gmra.mxu0 %v1746
        %v2370 = vpop.f32.mrf.mxu0
        %v2371 = vadd.f32 %v2146, %v2370
        %v2372 = vpop.f32.mrf.mxu0
        %2373 = vmatprep.mubr.f32.mxu0 %v1756
        %2374 = vmatmul.mubr.f32.gmra.mxu0 %v1755
        %v2375 = vpop.f32.mrf.mxu0
        %v2376 = vadd.f32 %v2151, %v2375
        %v2377 = vpop.f32.mrf.mxu0
        %2378 = vmatprep.mubr.f32.mxu0 %v1765
        %2379 = vmatmul.mubr.f32.gmra.mxu0 %v1764
        %v2380 = vpop.f32.mrf.mxu0
        %v2381 = vadd.f32 %v2156, %v2380
        %v2382 = vpop.f32.mrf.mxu0
        %2383 = vmatprep.mubr.f32.mxu0 %v1774
        %2384 = vmatmul.mubr.f32.gmra.mxu0 %v1773
        %v2385 = vpop.f32.mrf.mxu0
        %v2386 = vadd.f32 %v2161, %v2385
        %v2387 = vpop.f32.mrf.mxu0
        %2388 = vmatprep.mubr.f32.mxu0 %v1783
        %2389 = vmatmul.mubr.f32.gmra.mxu0 %v1782
        %v2390 = vpop.f32.mrf.mxu0
        %v2391 = vadd.f32 %v2166, %v2390
        %v2392 = vpop.f32.mrf.mxu0
        %2393 = vmatprep.mubr.f32.mxu0 %v1792
        %2394 = vmatmul.mubr.f32.gmra.mxu0 %v1791
        %v2395 = vpop.f32.mrf.mxu0
        %v2396 = vadd.f32 %v2171, %v2395
        %v2397 = vpop.f32.mrf.mxu0
        %2398 = vdwg.mxu0
        %2399 = vmatprep.subr.mxu0 0.0
        %2400 = vmatpush1.msra.mxu0 %v1877
        %2401 = vmatprep.subr.mxu0 0.0
        %2402 = vmatpush1.msra.mxu0 %v1876
        %2403 = vmatprep.subr.mxu0 0.0
        %2404 = vmatpush1.msra.mxu0 %v1875
        %2405 = vmatprep.subr.mxu0 0.0
        %2406 = vmatpush1.msra.mxu0 %v1874
        %2407 = vmatprep.subr.mxu0 0.0
        %2408 = vmatpush1.msra.mxu0 %v1873
        %2409 = vmatprep.subr.mxu0 0.0
        %2410 = vmatpush1.msra.mxu0 %v1872
        %2411 = vmatprep.subr.mxu0 0.0
        %2412 = vmatpush1.msra.mxu0 %v1871
        %2413 = vmatprep.subr.mxu0 0.0
        %2414 = vmatpush1.msra.mxu0 %v1870
        %2415 = vmatprep.subr.mxu0 0.0
        %2416 = vmatpush1.msra.mxu0 %v1869
        %2417 = vmatprep.subr.mxu0 0.0
        %2418 = vmatpush1.msra.mxu0 %v1868
        %2419 = vmatprep.subr.mxu0 0.0
        %2420 = vmatpush1.msra.mxu0 %v1867
        %2421 = vmatprep.subr.mxu0 0.0
        %2422 = vmatpush1.msra.mxu0 %v1866
        %2423 = vmatprep.subr.mxu0 0.0
        %2424 = vmatpush1.msra.mxu0 %v1865
        %2425 = vmatprep.subr.mxu0 0.0
        %2426 = vmatpush1.msra.mxu0 %v1864
        %2427 = vmatprep.subr.mxu0 0.0
        %2428 = vmatpush1.msra.mxu0 %v1863
        %2429 = vmatprep.subr.mxu0 0.0
        %2430 = vmatpush1.msra.mxu0 %v1862
        %2431 = vmatprep.subr.mxu0 0.0
        %2432 = vmatpush2.msra.mxu0 %v1893
        %2433 = vmatprep.subr.mxu0 0.0
        %2434 = vmatpush2.msra.mxu0 %v1892
        %2435 = vmatprep.subr.mxu0 0.0
        %2436 = vmatpush2.msra.mxu0 %v1891
        %2437 = vmatprep.subr.mxu0 0.0
        %2438 = vmatpush2.msra.mxu0 %v1890
        %2439 = vmatprep.subr.mxu0 0.0
        %2440 = vmatpush2.msra.mxu0 %v1889
        %2441 = vmatprep.subr.mxu0 0.0
        %2442 = vmatpush2.msra.mxu0 %v1888
        %2443 = vmatprep.subr.mxu0 0.0
        %2444 = vmatpush2.msra.mxu0 %v1887
        %2445 = vmatprep.subr.mxu0 0.0
        %2446 = vmatpush2.msra.mxu0 %v1886
        %2447 = vmatprep.subr.mxu0 0.0
        %2448 = vmatpush2.msra.mxu0 %v1885
        %2449 = vmatprep.subr.mxu0 0.0
        %2450 = vmatpush2.msra.mxu0 %v1884
        %2451 = vmatprep.subr.mxu0 0.0
        %2452 = vmatpush2.msra.mxu0 %v1883
        %2453 = vmatprep.subr.mxu0 0.0
        %2454 = vmatpush2.msra.mxu0 %v1882
        %2455 = vmatprep.subr.mxu0 0.0
        %2456 = vmatpush2.msra.mxu0 %v1881
        %2457 = vmatprep.subr.mxu0 0.0
        %2458 = vmatpush2.msra.mxu0 %v1880
        %2459 = vmatprep.subr.mxu0 0.0
        %2460 = vmatpush2.msra.mxu0 %v1879
        %2461 = vmatprep.subr.mxu0 0.0
        %2462 = vmatpush2.msra.mxu0 %v1878
        %2463 = vmatprep.mubr.f32.mxu0 %v1515
        %2464 = vmatmul.mubr.f32.gmra.mxu0 %v1514
        %v2465 = vpop.f32.mrf.mxu0
        %v2466 = vadd.f32 %v2241, %v2465
        %v2467 = vpop.f32.mrf.mxu0
        %2468 = vmatprep.mubr.f32.mxu0 %v1524
        %2469 = vmatmul.mubr.f32.gmra.mxu0 %v1523
        %v2470 = vpop.f32.mrf.mxu0
        %v2471 = vadd.f32 %v2246, %v2470
        %v2472 = vpop.f32.mrf.mxu0
        %2473 = vmatprep.mubr.f32.mxu0 %v1533
        %2474 = vmatmul.mubr.f32.gmra.mxu0 %v1532
        %v2475 = vpop.f32.mrf.mxu0
        %v2476 = vadd.f32 %v2251, %v2475
        %v2477 = vpop.f32.mrf.mxu0
        %2478 = vmatprep.mubr.f32.mxu0 %v1542
        %2479 = vmatmul.mubr.f32.gmra.mxu0 %v1541
        %v2480 = vpop.f32.mrf.mxu0
        %v2481 = vadd.f32 %v2256, %v2480
        %v2482 = vpop.f32.mrf.mxu0
        %2483 = vmatprep.mubr.f32.mxu0 %v1551
        %2484 = vmatmul.mubr.f32.gmra.mxu0 %v1550
        %v2485 = vpop.f32.mrf.mxu0
        %v2486 = vadd.f32 %v2261, %v2485
        %v2487 = vpop.f32.mrf.mxu0
        %2488 = vmatprep.mubr.f32.mxu0 %v1560
        %2489 = vmatmul.mubr.f32.gmra.mxu0 %v1559
        %v2490 = vpop.f32.mrf.mxu0
        %v2491 = vadd.f32 %v2266, %v2490
        %v2492 = vpop.f32.mrf.mxu0
        %2493 = vmatprep.mubr.f32.mxu0 %v1569
        %2494 = vmatmul.mubr.f32.gmra.mxu0 %v1568
        %v2495 = vpop.f32.mrf.mxu0
        %v2496 = vadd.f32 %v2271, %v2495
        %v2497 = vpop.f32.mrf.mxu0
        %2498 = vmatprep.mubr.f32.mxu0 %v1578
        %2499 = vmatmul.mubr.f32.gmra.mxu0 %v1577
        %v2500 = vpop.f32.mrf.mxu0
        %v2501 = vadd.f32 %v2276, %v2500
        %v2502 = vpop.f32.mrf.mxu0
        %2503 = vmatprep.mubr.f32.mxu0 %v1587
        %2504 = vmatmul.mubr.f32.gmra.mxu0 %v1586
        %v2505 = vpop.f32.mrf.mxu0
        %v2506 = vadd.f32 %v2281, %v2505
        %v2507 = vpop.f32.mrf.mxu0
        %2508 = vmatprep.mubr.f32.mxu0 %v1596
        %2509 = vmatmul.mubr.f32.gmra.mxu0 %v1595
        %v2510 = vpop.f32.mrf.mxu0
        %v2511 = vadd.f32 %v2286, %v2510
        %v2512 = vpop.f32.mrf.mxu0
        %2513 = vmatprep.mubr.f32.mxu0 %v1605
        %2514 = vmatmul.mubr.f32.gmra.mxu0 %v1604
        %v2515 = vpop.f32.mrf.mxu0
        %v2516 = vadd.f32 %v2291, %v2515
        %v2517 = vpop.f32.mrf.mxu0
        %2518 = vmatprep.mubr.f32.mxu0 %v1614
        %2519 = vmatmul.mubr.f32.gmra.mxu0 %v1613
        %v2520 = vpop.f32.mrf.mxu0
        %v2521 = vadd.f32 %v2296, %v2520
        %v2522 = vpop.f32.mrf.mxu0
        %2523 = vmatprep.mubr.f32.mxu0 %v1623
        %2524 = vmatmul.mubr.f32.gmra.mxu0 %v1622
        %v2525 = vpop.f32.mrf.mxu0
        %v2526 = vadd.f32 %v2301, %v2525
        %v2527 = vpop.f32.mrf.mxu0
        %2528 = vmatprep.mubr.f32.mxu0 %v1632
        %2529 = vmatmul.mubr.f32.gmra.mxu0 %v1631
        %v2530 = vpop.f32.mrf.mxu0
        %v2531 = vadd.f32 %v2306, %v2530
        %v2532 = vpop.f32.mrf.mxu0
        %2533 = vmatprep.mubr.f32.mxu0 %v1641
        %2534 = vmatmul.mubr.f32.gmra.mxu0 %v1640
        %v2535 = vpop.f32.mrf.mxu0
        %v2536 = vadd.f32 %v2311, %v2535
        %v2537 = vpop.f32.mrf.mxu0
        %2538 = vmatprep.mubr.f32.mxu0 %v1650
        %2539 = vmatmul.mubr.f32.gmra.mxu0 %v1649
        %v2540 = vpop.f32.mrf.mxu0
        %v2541 = vadd.f32 %v2316, %v2540
        %v2542 = vpop.f32.mrf.mxu0
        %2543 = vmatprep.mubr.f32.mxu0 %v1659
        %2544 = vmatmul.mubr.f32.gmra.mxu0 %v1658
        %v2545 = vpop.f32.mrf.mxu0
        %v2546 = vadd.f32 %v2321, %v2545
        %v2547 = vpop.f32.mrf.mxu0
        %2548 = vmatprep.mubr.f32.mxu0 %v1668
        %2549 = vmatmul.mubr.f32.gmra.mxu0 %v1667
        %v2550 = vpop.f32.mrf.mxu0
        %v2551 = vadd.f32 %v2326, %v2550
        %v2552 = vpop.f32.mrf.mxu0
        %2553 = vmatprep.mubr.f32.mxu0 %v1677
        %2554 = vmatmul.mubr.f32.gmra.mxu0 %v1676
        %v2555 = vpop.f32.mrf.mxu0
        %v2556 = vadd.f32 %v2331, %v2555
        %v2557 = vpop.f32.mrf.mxu0
        %2558 = vmatprep.mubr.f32.mxu0 %v1686
        %2559 = vmatmul.mubr.f32.gmra.mxu0 %v1685
        %v2560 = vpop.f32.mrf.mxu0
        %v2561 = vadd.f32 %v2336, %v2560
        %v2562 = vpop.f32.mrf.mxu0
        %2563 = vmatprep.mubr.f32.mxu0 %v1695
        %2564 = vmatmul.mubr.f32.gmra.mxu0 %v1694
        %v2565 = vpop.f32.mrf.mxu0
        %v2566 = vadd.f32 %v2341, %v2565
        %v2567 = vpop.f32.mrf.mxu0
        %2568 = vmatprep.mubr.f32.mxu0 %v1704
        %2569 = vmatmul.mubr.f32.gmra.mxu0 %v1703
        %v2570 = vpop.f32.mrf.mxu0
        %v2571 = vadd.f32 %v2346, %v2570
        %v2572 = vpop.f32.mrf.mxu0
        %2573 = vmatprep.mubr.f32.mxu0 %v1713
        %2574 = vmatmul.mubr.f32.gmra.mxu0 %v1712
        %v2575 = vpop.f32.mrf.mxu0
        %v2576 = vadd.f32 %v2351, %v2575
        %v2577 = vpop.f32.mrf.mxu0
        %2578 = vmatprep.mubr.f32.mxu0 %v1722
        %2579 = vmatmul.mubr.f32.gmra.mxu0 %v1721
        %v2580 = vpop.f32.mrf.mxu0
        %v2581 = vadd.f32 %v2356, %v2580
        %v2582 = vpop.f32.mrf.mxu0
        %2583 = vmatprep.mubr.f32.mxu0 %v1731
        %2584 = vmatmul.mubr.f32.gmra.mxu0 %v1730
        %v2585 = vpop.f32.mrf.mxu0
        %v2586 = vadd.f32 %v2361, %v2585
        %v2587 = vpop.f32.mrf.mxu0
        %2588 = vmatprep.mubr.f32.mxu0 %v1740
        %2589 = vmatmul.mubr.f32.gmra.mxu0 %v1739
        %v2590 = vpop.f32.mrf.mxu0
        %v2591 = vadd.f32 %v2366, %v2590
        %v2592 = vpop.f32.mrf.mxu0
        %2593 = vmatprep.mubr.f32.mxu0 %v1749
        %2594 = vmatmul.mubr.f32.gmra.mxu0 %v1748
        %v2595 = vpop.f32.mrf.mxu0
        %v2596 = vadd.f32 %v2371, %v2595
        %v2597 = vpop.f32.mrf.mxu0
        %2598 = vmatprep.mubr.f32.mxu0 %v1758
        %2599 = vmatmul.mubr.f32.gmra.mxu0 %v1757
        %v2600 = vpop.f32.mrf.mxu0
        %v2601 = vadd.f32 %v2376, %v2600
        %v2602 = vpop.f32.mrf.mxu0
        %2603 = vmatprep.mubr.f32.mxu0 %v1767
        %2604 = vmatmul.mubr.f32.gmra.mxu0 %v1766
        %v2605 = vpop.f32.mrf.mxu0
        %v2606 = vadd.f32 %v2381, %v2605
        %v2607 = vpop.f32.mrf.mxu0
        %2608 = vmatprep.mubr.f32.mxu0 %v1776
        %2609 = vmatmul.mubr.f32.gmra.mxu0 %v1775
        %v2610 = vpop.f32.mrf.mxu0
        %v2611 = vadd.f32 %v2386, %v2610
        %v2612 = vpop.f32.mrf.mxu0
        %2613 = vmatprep.mubr.f32.mxu0 %v1785
        %2614 = vmatmul.mubr.f32.gmra.mxu0 %v1784
        %v2615 = vpop.f32.mrf.mxu0
        %v2616 = vadd.f32 %v2391, %v2615
        %v2617 = vpop.f32.mrf.mxu0
        %2618 = vmatprep.mubr.f32.mxu0 %v1794
        %2619 = vmatmul.mubr.f32.gmra.mxu0 %v1793
        %v2620 = vpop.f32.mrf.mxu0
        %v2621 = vadd.f32 %v2396, %v2620
        %v2622 = vpop.f32.mrf.mxu0
        %2623 = vdwg.mxu0
        %2624 = vmatprep.subr.mxu0 0.0
        %2625 = vmatpush1.msra.mxu0 %v1909
        %2626 = vmatprep.subr.mxu0 0.0
        %2627 = vmatpush1.msra.mxu0 %v1908
        %2628 = vmatprep.subr.mxu0 0.0
        %2629 = vmatpush1.msra.mxu0 %v1907
        %2630 = vmatprep.subr.mxu0 0.0
        %2631 = vmatpush1.msra.mxu0 %v1906
        %2632 = vmatprep.subr.mxu0 0.0
        %2633 = vmatpush1.msra.mxu0 %v1905
        %2634 = vmatprep.subr.mxu0 0.0
        %2635 = vmatpush1.msra.mxu0 %v1904
        %2636 = vmatprep.subr.mxu0 0.0
        %2637 = vmatpush1.msra.mxu0 %v1903
        %2638 = vmatprep.subr.mxu0 0.0
        %2639 = vmatpush1.msra.mxu0 %v1902
        %2640 = vmatprep.subr.mxu0 0.0
        %2641 = vmatpush1.msra.mxu0 %v1901
        %2642 = vmatprep.subr.mxu0 0.0
        %2643 = vmatpush1.msra.mxu0 %v1900
        %2644 = vmatprep.subr.mxu0 0.0
        %2645 = vmatpush1.msra.mxu0 %v1899
        %2646 = vmatprep.subr.mxu0 0.0
        %2647 = vmatpush1.msra.mxu0 %v1898
        %2648 = vmatprep.subr.mxu0 0.0
        %2649 = vmatpush1.msra.mxu0 %v1897
        %2650 = vmatprep.subr.mxu0 0.0
        %2651 = vmatpush1.msra.mxu0 %v1896
        %2652 = vmatprep.subr.mxu0 0.0
        %2653 = vmatpush1.msra.mxu0 %v1895
        %2654 = vmatprep.subr.mxu0 0.0
        %2655 = vmatpush1.msra.mxu0 %v1894
        %2656 = vmatprep.subr.mxu0 0.0
        %2657 = vmatpush2.msra.mxu0 %v1925
        %2658 = vmatprep.subr.mxu0 0.0
        %2659 = vmatpush2.msra.mxu0 %v1924
        %2660 = vmatprep.subr.mxu0 0.0
        %2661 = vmatpush2.msra.mxu0 %v1923
        %2662 = vmatprep.subr.mxu0 0.0
        %2663 = vmatpush2.msra.mxu0 %v1922
        %2664 = vmatprep.subr.mxu0 0.0
        %2665 = vmatpush2.msra.mxu0 %v1921
        %2666 = vmatprep.subr.mxu0 0.0
        %2667 = vmatpush2.msra.mxu0 %v1920
        %2668 = vmatprep.subr.mxu0 0.0
        %2669 = vmatpush2.msra.mxu0 %v1919
        %2670 = vmatprep.subr.mxu0 0.0
        %2671 = vmatpush2.msra.mxu0 %v1918
        %2672 = vmatprep.subr.mxu0 0.0
        %2673 = vmatpush2.msra.mxu0 %v1917
        %2674 = vmatprep.subr.mxu0 0.0
        %2675 = vmatpush2.msra.mxu0 %v1916
        %2676 = vmatprep.subr.mxu0 0.0
        %2677 = vmatpush2.msra.mxu0 %v1915
        %2678 = vmatprep.subr.mxu0 0.0
        %2679 = vmatpush2.msra.mxu0 %v1914
        %2680 = vmatprep.subr.mxu0 0.0
        %2681 = vmatpush2.msra.mxu0 %v1913
        %2682 = vmatprep.subr.mxu0 0.0
        %2683 = vmatpush2.msra.mxu0 %v1912
        %2684 = vmatprep.subr.mxu0 0.0
        %2685 = vmatpush2.msra.mxu0 %v1911
        %2686 = vmatprep.subr.mxu0 0.0
        %2687 = vmatpush2.msra.mxu0 %v1910
        %2688 = vmatprep.mubr.f32.mxu0 %v1517
        %2689 = vmatmul.mubr.f32.gmra.mxu0 %v1516
        %v2690 = vpop.f32.mrf.mxu0
        %v2691 = vadd.f32 %v2466, %v2690
        %v2692 = vpop.f32.mrf.mxu0
        %2693 = vmatprep.mubr.f32.mxu0 %v1526
        %2694 = vmatmul.mubr.f32.gmra.mxu0 %v1525
        %v2695 = vpop.f32.mrf.mxu0
        %v2696 = vadd.f32 %v2471, %v2695
        %v2697 = vpop.f32.mrf.mxu0
        %2698 = vmatprep.mubr.f32.mxu0 %v1535
        %2699 = vmatmul.mubr.f32.gmra.mxu0 %v1534
        %v2700 = vpop.f32.mrf.mxu0
        %v2701 = vadd.f32 %v2476, %v2700
        %v2702 = vpop.f32.mrf.mxu0
        %2703 = vmatprep.mubr.f32.mxu0 %v1544
        %2704 = vmatmul.mubr.f32.gmra.mxu0 %v1543
        %v2705 = vpop.f32.mrf.mxu0
        %v2706 = vadd.f32 %v2481, %v2705
        %v2707 = vpop.f32.mrf.mxu0
        %2708 = vmatprep.mubr.f32.mxu0 %v1553
        %2709 = vmatmul.mubr.f32.gmra.mxu0 %v1552
        %v2710 = vpop.f32.mrf.mxu0
        %v2711 = vadd.f32 %v2486, %v2710
        %v2712 = vpop.f32.mrf.mxu0
        %2713 = vmatprep.mubr.f32.mxu0 %v1562
        %2714 = vmatmul.mubr.f32.gmra.mxu0 %v1561
        %v2715 = vpop.f32.mrf.mxu0
        %v2716 = vadd.f32 %v2491, %v2715
        %v2717 = vpop.f32.mrf.mxu0
        %2718 = vmatprep.mubr.f32.mxu0 %v1571
        %2719 = vmatmul.mubr.f32.gmra.mxu0 %v1570
        %v2720 = vpop.f32.mrf.mxu0
        %v2721 = vadd.f32 %v2496, %v2720
        %v2722 = vpop.f32.mrf.mxu0
        %2723 = vmatprep.mubr.f32.mxu0 %v1580
        %2724 = vmatmul.mubr.f32.gmra.mxu0 %v1579
        %v2725 = vpop.f32.mrf.mxu0
        %v2726 = vadd.f32 %v2501, %v2725
        %v2727 = vpop.f32.mrf.mxu0
        %2728 = vmatprep.mubr.f32.mxu0 %v1589
        %2729 = vmatmul.mubr.f32.gmra.mxu0 %v1588
        %v2730 = vpop.f32.mrf.mxu0
        %v2731 = vadd.f32 %v2506, %v2730
        %v2732 = vpop.f32.mrf.mxu0
        %2733 = vmatprep.mubr.f32.mxu0 %v1598
        %2734 = vmatmul.mubr.f32.gmra.mxu0 %v1597
        %v2735 = vpop.f32.mrf.mxu0
        %v2736 = vadd.f32 %v2511, %v2735
        %v2737 = vpop.f32.mrf.mxu0
        %2738 = vmatprep.mubr.f32.mxu0 %v1607
        %2739 = vmatmul.mubr.f32.gmra.mxu0 %v1606
        %v2740 = vpop.f32.mrf.mxu0
        %v2741 = vadd.f32 %v2516, %v2740
        %v2742 = vpop.f32.mrf.mxu0
        %2743 = vmatprep.mubr.f32.mxu0 %v1616
        %2744 = vmatmul.mubr.f32.gmra.mxu0 %v1615
        %v2745 = vpop.f32.mrf.mxu0
        %v2746 = vadd.f32 %v2521, %v2745
        %v2747 = vpop.f32.mrf.mxu0
        %2748 = vmatprep.mubr.f32.mxu0 %v1625
        %2749 = vmatmul.mubr.f32.gmra.mxu0 %v1624
        %v2750 = vpop.f32.mrf.mxu0
        %v2751 = vadd.f32 %v2526, %v2750
        %v2752 = vpop.f32.mrf.mxu0
        %2753 = vmatprep.mubr.f32.mxu0 %v1634
        %2754 = vmatmul.mubr.f32.gmra.mxu0 %v1633
        %v2755 = vpop.f32.mrf.mxu0
        %v2756 = vadd.f32 %v2531, %v2755
        %v2757 = vpop.f32.mrf.mxu0
        %2758 = vmatprep.mubr.f32.mxu0 %v1643
        %2759 = vmatmul.mubr.f32.gmra.mxu0 %v1642
        %v2760 = vpop.f32.mrf.mxu0
        %v2761 = vadd.f32 %v2536, %v2760
        %v2762 = vpop.f32.mrf.mxu0
        %2763 = vmatprep.mubr.f32.mxu0 %v1652
        %2764 = vmatmul.mubr.f32.gmra.mxu0 %v1651
        %v2765 = vpop.f32.mrf.mxu0
        %v2766 = vadd.f32 %v2541, %v2765
        %v2767 = vpop.f32.mrf.mxu0
        %2768 = vmatprep.mubr.f32.mxu0 %v1661
        %2769 = vmatmul.mubr.f32.gmra.mxu0 %v1660
        %v2770 = vpop.f32.mrf.mxu0
        %v2771 = vadd.f32 %v2546, %v2770
        %v2772 = vpop.f32.mrf.mxu0
        %2773 = vmatprep.mubr.f32.mxu0 %v1670
        %2774 = vmatmul.mubr.f32.gmra.mxu0 %v1669
        %v2775 = vpop.f32.mrf.mxu0
        %v2776 = vadd.f32 %v2551, %v2775
        %v2777 = vpop.f32.mrf.mxu0
        %2778 = vmatprep.mubr.f32.mxu0 %v1679
        %2779 = vmatmul.mubr.f32.gmra.mxu0 %v1678
        %v2780 = vpop.f32.mrf.mxu0
        %v2781 = vadd.f32 %v2556, %v2780
        %v2782 = vpop.f32.mrf.mxu0
        %2783 = vmatprep.mubr.f32.mxu0 %v1688
        %2784 = vmatmul.mubr.f32.gmra.mxu0 %v1687
        %v2785 = vpop.f32.mrf.mxu0
        %v2786 = vadd.f32 %v2561, %v2785
        %v2787 = vpop.f32.mrf.mxu0
        %2788 = vmatprep.mubr.f32.mxu0 %v1697
        %2789 = vmatmul.mubr.f32.gmra.mxu0 %v1696
        %v2790 = vpop.f32.mrf.mxu0
        %v2791 = vadd.f32 %v2566, %v2790
        %v2792 = vpop.f32.mrf.mxu0
        %2793 = vmatprep.mubr.f32.mxu0 %v1706
        %2794 = vmatmul.mubr.f32.gmra.mxu0 %v1705
        %v2795 = vpop.f32.mrf.mxu0
        %v2796 = vadd.f32 %v2571, %v2795
        %v2797 = vpop.f32.mrf.mxu0
        %2798 = vmatprep.mubr.f32.mxu0 %v1715
        %2799 = vmatmul.mubr.f32.gmra.mxu0 %v1714
        %v2800 = vpop.f32.mrf.mxu0
        %v2801 = vadd.f32 %v2576, %v2800
        %v2802 = vpop.f32.mrf.mxu0
        %2803 = vmatprep.mubr.f32.mxu0 %v1724
        %2804 = vmatmul.mubr.f32.gmra.mxu0 %v1723
        %v2805 = vpop.f32.mrf.mxu0
        %v2806 = vadd.f32 %v2581, %v2805
        %v2807 = vpop.f32.mrf.mxu0
        %2808 = vmatprep.mubr.f32.mxu0 %v1733
        %2809 = vmatmul.mubr.f32.gmra.mxu0 %v1732
        %v2810 = vpop.f32.mrf.mxu0
        %v2811 = vadd.f32 %v2586, %v2810
        %v2812 = vpop.f32.mrf.mxu0
        %2813 = vmatprep.mubr.f32.mxu0 %v1742
        %2814 = vmatmul.mubr.f32.gmra.mxu0 %v1741
        %v2815 = vpop.f32.mrf.mxu0
        %v2816 = vadd.f32 %v2591, %v2815
        %v2817 = vpop.f32.mrf.mxu0
        %2818 = vmatprep.mubr.f32.mxu0 %v1751
        %2819 = vmatmul.mubr.f32.gmra.mxu0 %v1750
        %v2820 = vpop.f32.mrf.mxu0
        %v2821 = vadd.f32 %v2596, %v2820
        %v2822 = vpop.f32.mrf.mxu0
        %2823 = vmatprep.mubr.f32.mxu0 %v1760
        %2824 = vmatmul.mubr.f32.gmra.mxu0 %v1759
        %v2825 = vpop.f32.mrf.mxu0
        %v2826 = vadd.f32 %v2601, %v2825
        %v2827 = vpop.f32.mrf.mxu0
        %2828 = vmatprep.mubr.f32.mxu0 %v1769
        %2829 = vmatmul.mubr.f32.gmra.mxu0 %v1768
        %v2830 = vpop.f32.mrf.mxu0
        %v2831 = vadd.f32 %v2606, %v2830
        %v2832 = vpop.f32.mrf.mxu0
        %2833 = vmatprep.mubr.f32.mxu0 %v1778
        %2834 = vmatmul.mubr.f32.gmra.mxu0 %v1777
        %v2835 = vpop.f32.mrf.mxu0
        %v2836 = vadd.f32 %v2611, %v2835
        %v2837 = vpop.f32.mrf.mxu0
        %2838 = vmatprep.mubr.f32.mxu0 %v1787
        %2839 = vmatmul.mubr.f32.gmra.mxu0 %v1786
        %v2840 = vpop.f32.mrf.mxu0
        %v2841 = vadd.f32 %v2616, %v2840
        %v2842 = vpop.f32.mrf.mxu0
        %2843 = vmatprep.mubr.f32.mxu0 %v1796
        %2844 = vmatmul.mubr.f32.gmra.mxu0 %v1795
        %v2845 = vpop.f32.mrf.mxu0
        %v2846 = vadd.f32 %v2621, %v2845
        %v2847 = vpop.f32.mrf.mxu0
        %2848 = vdwg.mxu0
        %2849 = vmatprep.subr.mxu0 0.0
        %2850 = vmatpush1.msra.mxu0 %v1941
        %2851 = vmatprep.subr.mxu0 0.0
        %2852 = vmatpush1.msra.mxu0 %v1940
        %2853 = vmatprep.subr.mxu0 0.0
        %2854 = vmatpush1.msra.mxu0 %v1939
        %2855 = vmatprep.subr.mxu0 0.0
        %2856 = vmatpush1.msra.mxu0 %v1938
        %2857 = vmatprep.subr.mxu0 0.0
        %2858 = vmatpush1.msra.mxu0 %v1937
        %2859 = vmatprep.subr.mxu0 0.0
        %2860 = vmatpush1.msra.mxu0 %v1936
        %2861 = vmatprep.subr.mxu0 0.0
        %2862 = vmatpush1.msra.mxu0 %v1935
        %2863 = vmatprep.subr.mxu0 0.0
        %2864 = vmatpush1.msra.mxu0 %v1934
        %2865 = vmatprep.subr.mxu0 0.0
        %2866 = vmatpush1.msra.mxu0 %v1933
        %2867 = vmatprep.subr.mxu0 0.0
        %2868 = vmatpush1.msra.mxu0 %v1932
        %2869 = vmatprep.subr.mxu0 0.0
        %2870 = vmatpush1.msra.mxu0 %v1931
        %2871 = vmatprep.subr.mxu0 0.0
        %2872 = vmatpush1.msra.mxu0 %v1930
        %2873 = vmatprep.subr.mxu0 0.0
        %2874 = vmatpush1.msra.mxu0 %v1929
        %2875 = vmatprep.subr.mxu0 0.0
        %2876 = vmatpush1.msra.mxu0 %v1928
        %2877 = vmatprep.subr.mxu0 0.0
        %2878 = vmatpush1.msra.mxu0 %v1927
        %2879 = vmatprep.subr.mxu0 0.0
        %2880 = vmatpush1.msra.mxu0 %v1926
        %2881 = vmatprep.subr.mxu0 0.0
        %2882 = vmatpush2.msra.mxu0 0.0
        %2883 = vmatprep.subr.mxu0 0.0
        %2884 = vmatpush2.msra.mxu0 0.0
        %2885 = vmatprep.subr.mxu0 0.0
        %2886 = vmatpush2.msra.mxu0 0.0
        %2887 = vmatprep.subr.mxu0 0.0
        %2888 = vmatpush2.msra.mxu0 0.0
        %2889 = vmatprep.subr.mxu0 0.0
        %2890 = vmatpush2.msra.mxu0 0.0
        %2891 = vmatprep.subr.mxu0 0.0
        %2892 = vmatpush2.msra.mxu0 0.0
        %2893 = vmatprep.subr.mxu0 0.0
        %2894 = vmatpush2.msra.mxu0 0.0
        %2895 = vmatprep.subr.mxu0 0.0
        %2896 = vmatpush2.msra.mxu0 0.0
        %2897 = vmatprep.subr.mxu0 0.0
        %2898 = vmatpush2.msra.mxu0 0.0
        %2899 = vmatprep.subr.mxu0 0.0
        %2900 = vmatpush2.msra.mxu0 0.0
        %2901 = vmatprep.subr.mxu0 0.0
        %2902 = vmatpush2.msra.mxu0 0.0
        %2903 = vmatprep.subr.mxu0 0.0
        %2904 = vmatpush2.msra.mxu0 0.0
        %2905 = vmatprep.subr.mxu0 0.0
        %2906 = vmatpush2.msra.mxu0 0.0
        %2907 = vmatprep.subr.mxu0 0.0
        %2908 = vmatpush2.msra.mxu0 0.0
        %2909 = vmatprep.subr.mxu0 0.0
        %2910 = vmatpush2.msra.mxu0 0.0
        %2911 = vmatprep.subr.mxu0 0.0
        %2912 = vmatpush2.msra.mxu0 0.0
        %2913 = vmatprep.mubr.f32.mxu0 0.0
        %2914 = vmatmul.mubr.f32.gmra.mxu0 %v1518
        %v2915 = vpop.f32.mrf.mxu0
        %v2916 = vadd.f32 %v2691, %v2915
        %v2917 = vpop.f32.mrf.mxu0
        %2918 = vmatprep.mubr.f32.mxu0 0.0
        %2919 = vmatmul.mubr.f32.gmra.mxu0 %v1527
        %v2920 = vpop.f32.mrf.mxu0
        %v2921 = vadd.f32 %v2696, %v2920
        %v2922 = vpop.f32.mrf.mxu0
        %2923 = vmatprep.mubr.f32.mxu0 0.0
        %2924 = vmatmul.mubr.f32.gmra.mxu0 %v1536
        %v2925 = vpop.f32.mrf.mxu0
        %v2926 = vadd.f32 %v2701, %v2925
        %v2927 = vpop.f32.mrf.mxu0
        %2928 = vmatprep.mubr.f32.mxu0 0.0
        %2929 = vmatmul.mubr.f32.gmra.mxu0 %v1545
        %v2930 = vpop.f32.mrf.mxu0
        %v2931 = vadd.f32 %v2706, %v2930
        %v2932 = vpop.f32.mrf.mxu0
        %2933 = vmatprep.mubr.f32.mxu0 0.0
        %2934 = vmatmul.mubr.f32.gmra.mxu0 %v1554
        %v2935 = vpop.f32.mrf.mxu0
        %v2936 = vadd.f32 %v2711, %v2935
        %v2937 = vpop.f32.mrf.mxu0
        %2938 = vmatprep.mubr.f32.mxu0 0.0
        %2939 = vmatmul.mubr.f32.gmra.mxu0 %v1563
        %v2940 = vpop.f32.mrf.mxu0
        %v2941 = vadd.f32 %v2716, %v2940
        %v2942 = vpop.f32.mrf.mxu0
        %2943 = vmatprep.mubr.f32.mxu0 0.0
        %2944 = vmatmul.mubr.f32.gmra.mxu0 %v1572
        %v2945 = vpop.f32.mrf.mxu0
        %v2946 = vadd.f32 %v2721, %v2945
        %v2947 = vpop.f32.mrf.mxu0
        %2948 = vmatprep.mubr.f32.mxu0 0.0
        %2949 = vmatmul.mubr.f32.gmra.mxu0 %v1581
        %v2950 = vpop.f32.mrf.mxu0
        %v2951 = vadd.f32 %v2726, %v2950
        %v2952 = vpop.f32.mrf.mxu0
        %2953 = vmatprep.mubr.f32.mxu0 0.0
        %2954 = vmatmul.mubr.f32.gmra.mxu0 %v1590
        %v2955 = vpop.f32.mrf.mxu0
        %v2956 = vadd.f32 %v2731, %v2955
        %v2957 = vpop.f32.mrf.mxu0
        %2958 = vmatprep.mubr.f32.mxu0 0.0
        %2959 = vmatmul.mubr.f32.gmra.mxu0 %v1599
        %v2960 = vpop.f32.mrf.mxu0
        %v2961 = vadd.f32 %v2736, %v2960
        %v2962 = vpop.f32.mrf.mxu0
        %2963 = vmatprep.mubr.f32.mxu0 0.0
        %2964 = vmatmul.mubr.f32.gmra.mxu0 %v1608
        %v2965 = vpop.f32.mrf.mxu0
        %v2966 = vadd.f32 %v2741, %v2965
        %v2967 = vpop.f32.mrf.mxu0
        %2968 = vmatprep.mubr.f32.mxu0 0.0
        %2969 = vmatmul.mubr.f32.gmra.mxu0 %v1617
        %v2970 = vpop.f32.mrf.mxu0
        %v2971 = vadd.f32 %v2746, %v2970
        %v2972 = vpop.f32.mrf.mxu0
        %2973 = vmatprep.mubr.f32.mxu0 0.0
        %2974 = vmatmul.mubr.f32.gmra.mxu0 %v1626
        %v2975 = vpop.f32.mrf.mxu0
        %v2976 = vadd.f32 %v2751, %v2975
        %v2977 = vpop.f32.mrf.mxu0
        %2978 = vmatprep.mubr.f32.mxu0 0.0
        %2979 = vmatmul.mubr.f32.gmra.mxu0 %v1635
        %v2980 = vpop.f32.mrf.mxu0
        %v2981 = vadd.f32 %v2756, %v2980
        %v2982 = vpop.f32.mrf.mxu0
        %2983 = vmatprep.mubr.f32.mxu0 0.0
        %2984 = vmatmul.mubr.f32.gmra.mxu0 %v1644
        %v2985 = vpop.f32.mrf.mxu0
        %v2986 = vadd.f32 %v2761, %v2985
        %v2987 = vpop.f32.mrf.mxu0
        %2988 = vmatprep.mubr.f32.mxu0 0.0
        %2989 = vmatmul.mubr.f32.gmra.mxu0 %v1653
        %v2990 = vpop.f32.mrf.mxu0
        %v2991 = vadd.f32 %v2766, %v2990
        %v2992 = vpop.f32.mrf.mxu0
        %2993 = vmatprep.mubr.f32.mxu0 0.0
        %2994 = vmatmul.mubr.f32.gmra.mxu0 %v1662
        %v2995 = vpop.f32.mrf.mxu0
        %v2996 = vadd.f32 %v2771, %v2995
        %v2997 = vpop.f32.mrf.mxu0
        %2998 = vmatprep.mubr.f32.mxu0 0.0
        %2999 = vmatmul.mubr.f32.gmra.mxu0 %v1671
        %v3000 = vpop.f32.mrf.mxu0
        %v3001 = vadd.f32 %v2776, %v3000
        %v3002 = vpop.f32.mrf.mxu0
        %3003 = vmatprep.mubr.f32.mxu0 0.0
        %3004 = vmatmul.mubr.f32.gmra.mxu0 %v1680
        %v3005 = vpop.f32.mrf.mxu0
        %v3006 = vadd.f32 %v2781, %v3005
        %v3007 = vpop.f32.mrf.mxu0
        %3008 = vmatprep.mubr.f32.mxu0 0.0
        %3009 = vmatmul.mubr.f32.gmra.mxu0 %v1689
        %v3010 = vpop.f32.mrf.mxu0
        %v3011 = vadd.f32 %v2786, %v3010
        %v3012 = vpop.f32.mrf.mxu0
        %3013 = vmatprep.mubr.f32.mxu0 0.0
        %3014 = vmatmul.mubr.f32.gmra.mxu0 %v1698
        %v3015 = vpop.f32.mrf.mxu0
        %v3016 = vadd.f32 %v2791, %v3015
        %v3017 = vpop.f32.mrf.mxu0
        %3018 = vmatprep.mubr.f32.mxu0 0.0
        %3019 = vmatmul.mubr.f32.gmra.mxu0 %v1707
        %v3020 = vpop.f32.mrf.mxu0
        %v3021 = vadd.f32 %v2796, %v3020
        %v3022 = vpop.f32.mrf.mxu0
        %3023 = vmatprep.mubr.f32.mxu0 0.0
        %3024 = vmatmul.mubr.f32.gmra.mxu0 %v1716
        %v3025 = vpop.f32.mrf.mxu0
        %v3026 = vadd.f32 %v2801, %v3025
        %v3027 = vpop.f32.mrf.mxu0
        %3028 = vmatprep.mubr.f32.mxu0 0.0
        %3029 = vmatmul.mubr.f32.gmra.mxu0 %v1725
        %v3030 = vpop.f32.mrf.mxu0
        %v3031 = vadd.f32 %v2806, %v3030
        %v3032 = vpop.f32.mrf.mxu0
        %3033 = vmatprep.mubr.f32.mxu0 0.0
        %3034 = vmatmul.mubr.f32.gmra.mxu0 %v1734
        %v3035 = vpop.f32.mrf.mxu0
        %v3036 = vadd.f32 %v2811, %v3035
        %v3037 = vpop.f32.mrf.mxu0
        %3038 = vmatprep.mubr.f32.mxu0 0.0
        %3039 = vmatmul.mubr.f32.gmra.mxu0 %v1743
        %v3040 = vpop.f32.mrf.mxu0
        %v3041 = vadd.f32 %v2816, %v3040
        %v3042 = vpop.f32.mrf.mxu0
        %3043 = vmatprep.mubr.f32.mxu0 0.0
        %3044 = vmatmul.mubr.f32.gmra.mxu0 %v1752
        %v3045 = vpop.f32.mrf.mxu0
        %v3046 = vadd.f32 %v2821, %v3045
        %v3047 = vpop.f32.mrf.mxu0
        %3048 = vmatprep.mubr.f32.mxu0 0.0
        %3049 = vmatmul.mubr.f32.gmra.mxu0 %v1761
        %v3050 = vpop.f32.mrf.mxu0
        %v3051 = vadd.f32 %v2826, %v3050
        %v3052 = vpop.f32.mrf.mxu0
        %3053 = vmatprep.mubr.f32.mxu0 0.0
        %3054 = vmatmul.mubr.f32.gmra.mxu0 %v1770
        %v3055 = vpop.f32.mrf.mxu0
        %v3056 = vadd.f32 %v2831, %v3055
        %v3057 = vpop.f32.mrf.mxu0
        %3058 = vmatprep.mubr.f32.mxu0 0.0
        %3059 = vmatmul.mubr.f32.gmra.mxu0 %v1779
        %v3060 = vpop.f32.mrf.mxu0
        %v3061 = vadd.f32 %v2836, %v3060
        %v3062 = vpop.f32.mrf.mxu0
        %3063 = vmatprep.mubr.f32.mxu0 0.0
        %3064 = vmatmul.mubr.f32.gmra.mxu0 %v1788
        %v3065 = vpop.f32.mrf.mxu0
        %v3066 = vadd.f32 %v2841, %v3065
        %v3067 = vpop.f32.mrf.mxu0
        %3068 = vmatprep.mubr.f32.mxu0 0.0
        %3069 = vmatmul.mubr.f32.gmra.mxu0 %v1797
        %v3070 = vpop.f32.mrf.mxu0
        %v3071 = vadd.f32 %v2846, %v3070
        %v3072 = vpop.f32.mrf.mxu0
        %3073 = vdwg.mxu0
        %3106 = vrot.lane.b32.xlu0 %v2916, 16
        %v3107 = vpop.permute.xlu0 %3106
        %3108 = vrot.lane.b32.xlu0 %v2921, 16
        %v3109 = vpop.permute.xlu0 %3108
        %3110 = vrot.lane.b32.xlu0 %v2926, 16
        %v3111 = vpop.permute.xlu0 %3110
        %3112 = vrot.lane.b32.xlu0 %v2931, 16
        %v3113 = vpop.permute.xlu0 %3112
        %3114 = vrot.lane.b32.xlu0 %v2936, 16
        %v3115 = vpop.permute.xlu0 %3114
        %3116 = vrot.lane.b32.xlu0 %v2941, 16
        %v3117 = vpop.permute.xlu0 %3116
        %3118 = vrot.lane.b32.xlu0 %v2946, 16
        %v3119 = vpop.permute.xlu0 %3118
        %3120 = vrot.lane.b32.xlu0 %v2951, 16
        %v3121 = vpop.permute.xlu0 %3120
        %3122 = vrot.lane.b32.xlu0 %v2956, 16
        %v3123 = vpop.permute.xlu0 %3122
        %3124 = vrot.lane.b32.xlu0 %v2961, 16
        %v3125 = vpop.permute.xlu0 %3124
        %3126 = vrot.lane.b32.xlu0 %v2966, 16
        %v3127 = vpop.permute.xlu0 %3126
        %3128 = vrot.lane.b32.xlu0 %v2971, 16
        %v3129 = vpop.permute.xlu0 %3128
        %3130 = vrot.lane.b32.xlu0 %v2976, 16
        %v3131 = vpop.permute.xlu0 %3130
        %3132 = vrot.lane.b32.xlu0 %v2981, 16
        %v3133 = vpop.permute.xlu0 %3132
        %3134 = vrot.lane.b32.xlu0 %v2986, 16
        %v3135 = vpop.permute.xlu0 %3134
        %3136 = vrot.lane.b32.xlu0 %v2991, 16
        %v3137 = vpop.permute.xlu0 %3136
        %3138 = vrot.lane.b32.xlu0 %v2996, 16
        %v3139 = vpop.permute.xlu0 %3138
        %3140 = vrot.lane.b32.xlu0 %v3001, 16
        %v3141 = vpop.permute.xlu0 %3140
        %3142 = vrot.lane.b32.xlu0 %v3006, 16
        %v3143 = vpop.permute.xlu0 %3142
        %3144 = vrot.lane.b32.xlu0 %v3011, 16
        %v3145 = vpop.permute.xlu0 %3144
        %3146 = vrot.lane.b32.xlu0 %v3016, 16
        %v3147 = vpop.permute.xlu0 %3146
        %3148 = vrot.lane.b32.xlu0 %v3021, 16
        %v3149 = vpop.permute.xlu0 %3148
        %3150 = vrot.lane.b32.xlu0 %v3026, 16
        %v3151 = vpop.permute.xlu0 %3150
        %3152 = vrot.lane.b32.xlu0 %v3031, 16
        %v3153 = vpop.permute.xlu0 %3152
        %3154 = vrot.lane.b32.xlu0 %v3036, 16
        %v3155 = vpop.permute.xlu0 %3154
        %3156 = vrot.lane.b32.xlu0 %v3041, 16
        %v3157 = vpop.permute.xlu0 %3156
        %3158 = vrot.lane.b32.xlu0 %v3046, 16
        %v3159 = vpop.permute.xlu0 %3158
        %3160 = vrot.lane.b32.xlu0 %v3051, 16
        %v3161 = vpop.permute.xlu0 %3160
        %3162 = vrot.lane.b32.xlu0 %v3056, 16
        %v3163 = vpop.permute.xlu0 %3162
        %3164 = vrot.lane.b32.xlu0 %v3061, 16
        %v3165 = vpop.permute.xlu0 %3164
        %3166 = vrot.lane.b32.xlu0 %v3066, 16
        %v3167 = vpop.permute.xlu0 %3166
        %3168 = vrot.lane.b32.xlu0 %v3071, 16
        %v3169 = vpop.permute.xlu0 %3168
        %vm3202 = vcmask 326784
        %3203 = vst.msk [vmem:[%s769 + $0x2] sm:$0xff] %vm3202, %v3107
        %3204 = vst.msk [vmem:[%s769 + $0xa] sm:$0xff] %vm3202, %v3109
        %3205 = vst.msk [vmem:[%s769 + $0x1a] sm:$0xff] %vm3202, %v3111
        %3206 = vst.msk [vmem:[%s769 + $0x22] sm:$0xff] %vm3202, %v3113
        %3207 = vst.msk [vmem:[%s769 + $0x32] sm:$0xff] %vm3202, %v3115
        %3208 = vst.msk [vmem:[%s769 + $0x3a] sm:$0xff] %vm3202, %v3117
        %3209 = vst.msk [vmem:[%s769 + $0x4a] sm:$0xff] %vm3202, %v3119
        %3210 = vst.msk [vmem:[%s769 + $0x52] sm:$0xff] %vm3202, %v3121
        %3211 = vst.msk [vmem:[%s769 + $0x62] sm:$0xff] %vm3202, %v3123
        %3212 = vst.msk [vmem:[%s769 + $0x6a] sm:$0xff] %vm3202, %v3125
        %3213 = vst.msk [vmem:[%s769 + $0x7a] sm:$0xff] %vm3202, %v3127
        %3214 = vst.msk [vmem:[%s769 + $0x82] sm:$0xff] %vm3202, %v3129
        %3215 = vst.msk [vmem:[%s769 + $0x92] sm:$0xff] %vm3202, %v3131
        %3216 = vst.msk [vmem:[%s769 + $0x9a] sm:$0xff] %vm3202, %v3133
        %3217 = vst.msk [vmem:[%s769 + $0xaa] sm:$0xff] %vm3202, %v3135
        %3218 = vst.msk [vmem:[%s769 + $0xb2] sm:$0xff] %vm3202, %v3137
        %3219 = vst.msk [vmem:[%s769 + $0xc2] sm:$0xff] %vm3202, %v3139
        %3220 = vst.msk [vmem:[%s769 + $0xca] sm:$0xff] %vm3202, %v3141
        %3221 = vst.msk [vmem:[%s769 + $0xda] sm:$0xff] %vm3202, %v3143
        %3222 = vst.msk [vmem:[%s769 + $0xe2] sm:$0xff] %vm3202, %v3145
        %3223 = vst.msk [vmem:[%s769 + $0xf2] sm:$0xff] %vm3202, %v3147
        %3224 = vst.msk [vmem:[%s769 + $0xfa] sm:$0xff] %vm3202, %v3149
        %3225 = vst.msk [vmem:[%s769 + $0x10a] sm:$0xff] %vm3202, %v3151
        %3226 = vst.msk [vmem:[%s769 + $0x112] sm:$0xff] %vm3202, %v3153
        %3227 = vst.msk [vmem:[%s769 + $0x122] sm:$0xff] %vm3202, %v3155
        %3228 = vst.msk [vmem:[%s769 + $0x12a] sm:$0xff] %vm3202, %v3157
        %3229 = vst.msk [vmem:[%s769 + $0x13a] sm:$0xff] %vm3202, %v3159
        %3230 = vst.msk [vmem:[%s769 + $0x142] sm:$0xff] %vm3202, %v3161
        %3231 = vst.msk [vmem:[%s769 + $0x152] sm:$0xff] %vm3202, %v3163
        %3232 = vst.msk [vmem:[%s769 + $0x15a] sm:$0xff] %vm3202, %v3165
        %3233 = vst.msk [vmem:[%s769 + $0x16a] sm:$0xff] %vm3202, %v3167
        %3234 = vst.msk [vmem:[%s769 + $0x172] sm:$0xff] %vm3202, %v3169
        %v3235 = vld [vmem:[#allocation2] sm:$0xff]
        %v3236 = vld [vmem:[#allocation2 + $0x8] sm:$0xff]
        %v3237 = vld [vmem:[#allocation2 + $0x18] sm:$0xff]
        %v3238 = vld [vmem:[#allocation2 + $0x20] sm:$0xff]
        %v3239 = vld [vmem:[#allocation2 + $0x30] sm:$0xff]
        %v3240 = vld [vmem:[#allocation2 + $0x38] sm:$0xff]
        %v3241 = vld [vmem:[#allocation2 + $0x48] sm:$0xff]
        %v3242 = vld [vmem:[#allocation2 + $0x50] sm:$0xff]
        %v3243 = vld [vmem:[#allocation2 + $0x60] sm:$0xff]
        %v3244 = vld [vmem:[#allocation2 + $0x68] sm:$0xff]
        %v3245 = vld [vmem:[#allocation2 + $0x78] sm:$0xff]
        %v3246 = vld [vmem:[#allocation2 + $0x80] sm:$0xff]
        %v3247 = vld [vmem:[#allocation2 + $0x90] sm:$0xff]
        %v3248 = vld [vmem:[#allocation2 + $0x98] sm:$0xff]
        %v3249 = vld [vmem:[#allocation2 + $0xa8] sm:$0xff]
        %v3250 = vld [vmem:[#allocation2 + $0xb0] sm:$0xff]
        %v3251 = vld [vmem:[#allocation2 + $0xc0] sm:$0xff]
        %v3252 = vld [vmem:[#allocation2 + $0xc8] sm:$0xff]
        %v3253 = vld [vmem:[#allocation2 + $0xd8] sm:$0xff]
        %v3254 = vld [vmem:[#allocation2 + $0xe0] sm:$0xff]
        %v3255 = vld [vmem:[#allocation2 + $0xf0] sm:$0xff]
        %v3256 = vld [vmem:[#allocation2 + $0xf8] sm:$0xff]
        %v3257 = vld [vmem:[#allocation2 + $0x108] sm:$0xff]
        %v3258 = vld [vmem:[#allocation2 + $0x110] sm:$0xff]
        %v3259 = vld [vmem:[#allocation2 + $0x120] sm:$0xff]
        %v3260 = vld [vmem:[#allocation2 + $0x128] sm:$0xff]
        %v3261 = vld [vmem:[#allocation2 + $0x138] sm:$0xff]
        %v3262 = vld [vmem:[#allocation2 + $0x140] sm:$0xff]
        %v3263 = vld [vmem:[#allocation2 + $0x150] sm:$0xff]
        %v3264 = vld [vmem:[#allocation2 + $0x158] sm:$0xff]
        %v3265 = vld [vmem:[#allocation2 + $0x168] sm:$0xff]
        %v3266 = vld [vmem:[#allocation2 + $0x170] sm:$0xff]
        %3267 = vst [vmem:[#allocation3] sm:$0xff] %v3235
        %3268 = vst [vmem:[#allocation3 + $0xc8] sm:$0xff] %v3236
        %3269 = vst [vmem:[#allocation3 + $0x190] sm:$0xff] %v3237
        %3270 = vst [vmem:[#allocation3 + $0x258] sm:$0xff] %v3238
        %3271 = vst [vmem:[#allocation3 + $0x320] sm:$0xff] %v3239
        %3272 = vst [vmem:[#allocation3 + $0x3e8] sm:$0xff] %v3240
        %3273 = vst [vmem:[#allocation3 + $0x4b0] sm:$0xff] %v3241
        %3274 = vst [vmem:[#allocation3 + $0x578] sm:$0xff] %v3242
        %3275 = vst [vmem:[#allocation3 + $0x640] sm:$0xff] %v3243
        %3276 = vst [vmem:[#allocation3 + $0x708] sm:$0xff] %v3244
        %3277 = vst [vmem:[#allocation3 + $0x7d0] sm:$0xff] %v3245
        %3278 = vst [vmem:[#allocation3 + $0x898] sm:$0xff] %v3246
        %3279 = vst [vmem:[#allocation3 + $0x960] sm:$0xff] %v3247
        %3280 = vst [vmem:[#allocation3 + $0xa28] sm:$0xff] %v3248
        %3281 = vst [vmem:[#allocation3 + $0xaf0] sm:$0xff] %v3249
        %3282 = vst [vmem:[#allocation3 + $0xbb8] sm:$0xff] %v3250
        %3283 = vst [vmem:[#allocation3 + $0xc80] sm:$0xff] %v3251
        %3284 = vst [vmem:[#allocation3 + $0xd48] sm:$0xff] %v3252
        %3285 = vst [vmem:[#allocation3 + $0xe10] sm:$0xff] %v3253
        %3286 = vst [vmem:[#allocation3 + $0xed8] sm:$0xff] %v3254
        %3287 = vst [vmem:[#allocation3 + $0xfa0] sm:$0xff] %v3255
        %3288 = vst [vmem:[#allocation3 + $0x1068] sm:$0xff] %v3256
        %3289 = vst [vmem:[#allocation3 + $0x1130] sm:$0xff] %v3257
        %3290 = vst [vmem:[#allocation3 + $0x11f8] sm:$0xff] %v3258
        %3291 = vst [vmem:[#allocation3 + $0x12c0] sm:$0xff] %v3259
        %3292 = vst [vmem:[#allocation3 + $0x1388] sm:$0xff] %v3260
        %3293 = vst [vmem:[#allocation3 + $0x1450] sm:$0xff] %v3261
        %3294 = vst [vmem:[#allocation3 + $0x1518] sm:$0xff] %v3262
        %3295 = vst [vmem:[#allocation3 + $0x15e0] sm:$0xff] %v3263
        %3296 = vst [vmem:[#allocation3 + $0x16a8] sm:$0xff] %v3264
        %3297 = vst [vmem:[#allocation3 + $0x1770] sm:$0xff] %v3265
        %3298 = vst [vmem:[#allocation3 + $0x1838] sm:$0xff] %v3266
        %v3299 = vld [vmem:[#allocation2 + $0x1] sm:$0xff]
        %v3300 = vld [vmem:[#allocation2 + $0x9] sm:$0xff]
        %v3301 = vld [vmem:[#allocation2 + $0x19] sm:$0xff]
        %v3302 = vld [vmem:[#allocation2 + $0x21] sm:$0xff]
        %v3303 = vld [vmem:[#allocation2 + $0x31] sm:$0xff]
        %v3304 = vld [vmem:[#allocation2 + $0x39] sm:$0xff]
        %v3305 = vld [vmem:[#allocation2 + $0x49] sm:$0xff]
        %v3306 = vld [vmem:[#allocation2 + $0x51] sm:$0xff]
        %v3307 = vld [vmem:[#allocation2 + $0x61] sm:$0xff]
        %v3308 = vld [vmem:[#allocation2 + $0x69] sm:$0xff]
        %v3309 = vld [vmem:[#allocation2 + $0x79] sm:$0xff]
        %v3310 = vld [vmem:[#allocation2 + $0x81] sm:$0xff]
        %v3311 = vld [vmem:[#allocation2 + $0x91] sm:$0xff]
        %v3312 = vld [vmem:[#allocation2 + $0x99] sm:$0xff]
        %v3313 = vld [vmem:[#allocation2 + $0xa9] sm:$0xff]
        %v3314 = vld [vmem:[#allocation2 + $0xb1] sm:$0xff]
        %v3315 = vld [vmem:[#allocation2 + $0xc1] sm:$0xff]
        %v3316 = vld [vmem:[#allocation2 + $0xc9] sm:$0xff]
        %v3317 = vld [vmem:[#allocation2 + $0xd9] sm:$0xff]
        %v3318 = vld [vmem:[#allocation2 + $0xe1] sm:$0xff]
        %v3319 = vld [vmem:[#allocation2 + $0xf1] sm:$0xff]
        %v3320 = vld [vmem:[#allocation2 + $0xf9] sm:$0xff]
        %v3321 = vld [vmem:[#allocation2 + $0x109] sm:$0xff]
        %v3322 = vld [vmem:[#allocation2 + $0x111] sm:$0xff]
        %v3323 = vld [vmem:[#allocation2 + $0x121] sm:$0xff]
        %v3324 = vld [vmem:[#allocation2 + $0x129] sm:$0xff]
        %v3325 = vld [vmem:[#allocation2 + $0x139] sm:$0xff]
        %v3326 = vld [vmem:[#allocation2 + $0x141] sm:$0xff]
        %v3327 = vld [vmem:[#allocation2 + $0x151] sm:$0xff]
        %v3328 = vld [vmem:[#allocation2 + $0x159] sm:$0xff]
        %v3329 = vld [vmem:[#allocation2 + $0x169] sm:$0xff]
        %v3330 = vld [vmem:[#allocation2 + $0x171] sm:$0xff]
        %3331 = vst [vmem:[#allocation3 + $0x8] sm:$0xff] %v3299
        %3332 = vst [vmem:[#allocation3 + $0xd0] sm:$0xff] %v3300
        %3333 = vst [vmem:[#allocation3 + $0x198] sm:$0xff] %v3301
        %3334 = vst [vmem:[#allocation3 + $0x260] sm:$0xff] %v3302
        %3335 = vst [vmem:[#allocation3 + $0x328] sm:$0xff] %v3303
        %3336 = vst [vmem:[#allocation3 + $0x3f0] sm:$0xff] %v3304
        %3337 = vst [vmem:[#allocation3 + $0x4b8] sm:$0xff] %v3305
        %3338 = vst [vmem:[#allocation3 + $0x580] sm:$0xff] %v3306
        %3339 = vst [vmem:[#allocation3 + $0x648] sm:$0xff] %v3307
        %3340 = vst [vmem:[#allocation3 + $0x710] sm:$0xff] %v3308
        %3341 = vst [vmem:[#allocation3 + $0x7d8] sm:$0xff] %v3309
        %3342 = vst [vmem:[#allocation3 + $0x8a0] sm:$0xff] %v3310
        %3343 = vst [vmem:[#allocation3 + $0x968] sm:$0xff] %v3311
        %3344 = vst [vmem:[#allocation3 + $0xa30] sm:$0xff] %v3312
        %3345 = vst [vmem:[#allocation3 + $0xaf8] sm:$0xff] %v3313
        %3346 = vst [vmem:[#allocation3 + $0xbc0] sm:$0xff] %v3314
        %3347 = vst [vmem:[#allocation3 + $0xc88] sm:$0xff] %v3315
        %3348 = vst [vmem:[#allocation3 + $0xd50] sm:$0xff] %v3316
        %3349 = vst [vmem:[#allocation3 + $0xe18] sm:$0xff] %v3317
        %3350 = vst [vmem:[#allocation3 + $0xee0] sm:$0xff] %v3318
        %3351 = vst [vmem:[#allocation3 + $0xfa8] sm:$0xff] %v3319
        %3352 = vst [vmem:[#allocation3 + $0x1070] sm:$0xff] %v3320
        %3353 = vst [vmem:[#allocation3 + $0x1138] sm:$0xff] %v3321
        %3354 = vst [vmem:[#allocation3 + $0x1200] sm:$0xff] %v3322
        %3355 = vst [vmem:[#allocation3 + $0x12c8] sm:$0xff] %v3323
        %3356 = vst [vmem:[#allocation3 + $0x1390] sm:$0xff] %v3324
        %3357 = vst [vmem:[#allocation3 + $0x1458] sm:$0xff] %v3325
        %3358 = vst [vmem:[#allocation3 + $0x1520] sm:$0xff] %v3326
        %3359 = vst [vmem:[#allocation3 + $0x15e8] sm:$0xff] %v3327
        %3360 = vst [vmem:[#allocation3 + $0x16b0] sm:$0xff] %v3328
        %3361 = vst [vmem:[#allocation3 + $0x1778] sm:$0xff] %v3329
        %3362 = vst [vmem:[#allocation3 + $0x1840] sm:$0xff] %v3330
        %v3363 = vld [vmem:[#allocation2 + $0x2] sm:$0xff]
        %v3364 = vld [vmem:[#allocation2 + $0xa] sm:$0xff]
        %v3365 = vld [vmem:[#allocation2 + $0x1a] sm:$0xff]
        %v3366 = vld [vmem:[#allocation2 + $0x22] sm:$0xff]
        %v3367 = vld [vmem:[#allocation2 + $0x32] sm:$0xff]
        %v3368 = vld [vmem:[#allocation2 + $0x3a] sm:$0xff]
        %v3369 = vld [vmem:[#allocation2 + $0x4a] sm:$0xff]
        %v3370 = vld [vmem:[#allocation2 + $0x52] sm:$0xff]
        %v3371 = vld [vmem:[#allocation2 + $0x62] sm:$0xff]
        %v3372 = vld [vmem:[#allocation2 + $0x6a] sm:$0xff]
        %v3373 = vld [vmem:[#allocation2 + $0x7a] sm:$0xff]
        %v3374 = vld [vmem:[#allocation2 + $0x82] sm:$0xff]
        %v3375 = vld [vmem:[#allocation2 + $0x92] sm:$0xff]
        %v3376 = vld [vmem:[#allocation2 + $0x9a] sm:$0xff]
        %v3377 = vld [vmem:[#allocation2 + $0xaa] sm:$0xff]
        %v3378 = vld [vmem:[#allocation2 + $0xb2] sm:$0xff]
        %v3379 = vld [vmem:[#allocation2 + $0xc2] sm:$0xff]
        %v3380 = vld [vmem:[#allocation2 + $0xca] sm:$0xff]
        %v3381 = vld [vmem:[#allocation2 + $0xda] sm:$0xff]
        %v3382 = vld [vmem:[#allocation2 + $0xe2] sm:$0xff]
        %v3383 = vld [vmem:[#allocation2 + $0xf2] sm:$0xff]
        %v3384 = vld [vmem:[#allocation2 + $0xfa] sm:$0xff]
        %v3385 = vld [vmem:[#allocation2 + $0x10a] sm:$0xff]
        %v3386 = vld [vmem:[#allocation2 + $0x112] sm:$0xff]
        %v3387 = vld [vmem:[#allocation2 + $0x122] sm:$0xff]
        %v3388 = vld [vmem:[#allocation2 + $0x12a] sm:$0xff]
        %v3389 = vld [vmem:[#allocation2 + $0x13a] sm:$0xff]
        %v3390 = vld [vmem:[#allocation2 + $0x142] sm:$0xff]
        %v3391 = vld [vmem:[#allocation2 + $0x152] sm:$0xff]
        %v3392 = vld [vmem:[#allocation2 + $0x15a] sm:$0xff]
        %v3393 = vld [vmem:[#allocation2 + $0x16a] sm:$0xff]
        %v3394 = vld [vmem:[#allocation2 + $0x172] sm:$0xff]
        %3395 = vst [vmem:[#allocation3 + $0x10] sm:$0xff] %v3363
        %3396 = vst [vmem:[#allocation3 + $0xd8] sm:$0xff] %v3364
        %3397 = vst [vmem:[#allocation3 + $0x1a0] sm:$0xff] %v3365
        %3398 = vst [vmem:[#allocation3 + $0x268] sm:$0xff] %v3366
        %3399 = vst [vmem:[#allocation3 + $0x330] sm:$0xff] %v3367
        %3400 = vst [vmem:[#allocation3 + $0x3f8] sm:$0xff] %v3368
        %3401 = vst [vmem:[#allocation3 + $0x4c0] sm:$0xff] %v3369
        %3402 = vst [vmem:[#allocation3 + $0x588] sm:$0xff] %v3370
        %3403 = vst [vmem:[#allocation3 + $0x650] sm:$0xff] %v3371
        %3404 = vst [vmem:[#allocation3 + $0x718] sm:$0xff] %v3372
        %3405 = vst [vmem:[#allocation3 + $0x7e0] sm:$0xff] %v3373
        %3406 = vst [vmem:[#allocation3 + $0x8a8] sm:$0xff] %v3374
        %3407 = vst [vmem:[#allocation3 + $0x970] sm:$0xff] %v3375
        %3408 = vst [vmem:[#allocation3 + $0xa38] sm:$0xff] %v3376
        %3409 = vst [vmem:[#allocation3 + $0xb00] sm:$0xff] %v3377
        %3410 = vst [vmem:[#allocation3 + $0xbc8] sm:$0xff] %v3378
        %3411 = vst [vmem:[#allocation3 + $0xc90] sm:$0xff] %v3379
        %3412 = vst [vmem:[#allocation3 + $0xd58] sm:$0xff] %v3380
        %3413 = vst [vmem:[#allocation3 + $0xe20] sm:$0xff] %v3381
        %3414 = vst [vmem:[#allocation3 + $0xee8] sm:$0xff] %v3382
        %3415 = vst [vmem:[#allocation3 + $0xfb0] sm:$0xff] %v3383
        %3416 = vst [vmem:[#allocation3 + $0x1078] sm:$0xff] %v3384
        %3417 = vst [vmem:[#allocation3 + $0x1140] sm:$0xff] %v3385
        %3418 = vst [vmem:[#allocation3 + $0x1208] sm:$0xff] %v3386
        %3419 = vst [vmem:[#allocation3 + $0x12d0] sm:$0xff] %v3387
        %3420 = vst [vmem:[#allocation3 + $0x1398] sm:$0xff] %v3388
        %3421 = vst [vmem:[#allocation3 + $0x1460] sm:$0xff] %v3389
        %3422 = vst [vmem:[#allocation3 + $0x1528] sm:$0xff] %v3390
        %3423 = vst [vmem:[#allocation3 + $0x15f0] sm:$0xff] %v3391
        %3424 = vst [vmem:[#allocation3 + $0x16b8] sm:$0xff] %v3392
        %3425 = vst [vmem:[#allocation3 + $0x1780] sm:$0xff] %v3393
        %3426 = vst [vmem:[#allocation3 + $0x1848] sm:$0xff] %v3394
        %v3427 = vld [vmem:[#allocation2 + $0x3] sm:$0xff]
        %v3428 = vld [vmem:[#allocation2 + $0xb] sm:$0xff]
        %v3429 = vld [vmem:[#allocation2 + $0x1b] sm:$0xff]
        %v3430 = vld [vmem:[#allocation2 + $0x23] sm:$0xff]
        %v3431 = vld [vmem:[#allocation2 + $0x33] sm:$0xff]
        %v3432 = vld [vmem:[#allocation2 + $0x3b] sm:$0xff]
        %v3433 = vld [vmem:[#allocation2 + $0x4b] sm:$0xff]
        %v3434 = vld [vmem:[#allocation2 + $0x53] sm:$0xff]
        %v3435 = vld [vmem:[#allocation2 + $0x63] sm:$0xff]
        %v3436 = vld [vmem:[#allocation2 + $0x6b] sm:$0xff]
        %v3437 = vld [vmem:[#allocation2 + $0x7b] sm:$0xff]
        %v3438 = vld [vmem:[#allocation2 + $0x83] sm:$0xff]
        %v3439 = vld [vmem:[#allocation2 + $0x93] sm:$0xff]
        %v3440 = vld [vmem:[#allocation2 + $0x9b] sm:$0xff]
        %v3441 = vld [vmem:[#allocation2 + $0xab] sm:$0xff]
        %v3442 = vld [vmem:[#allocation2 + $0xb3] sm:$0xff]
        %v3443 = vld [vmem:[#allocation2 + $0xc3] sm:$0xff]
        %v3444 = vld [vmem:[#allocation2 + $0xcb] sm:$0xff]
        %v3445 = vld [vmem:[#allocation2 + $0xdb] sm:$0xff]
        %v3446 = vld [vmem:[#allocation2 + $0xe3] sm:$0xff]
        %v3447 = vld [vmem:[#allocation2 + $0xf3] sm:$0xff]
        %v3448 = vld [vmem:[#allocation2 + $0xfb] sm:$0xff]
        %v3449 = vld [vmem:[#allocation2 + $0x10b] sm:$0xff]
        %v3450 = vld [vmem:[#allocation2 + $0x113] sm:$0xff]
        %v3451 = vld [vmem:[#allocation2 + $0x123] sm:$0xff]
        %v3452 = vld [vmem:[#allocation2 + $0x12b] sm:$0xff]
        %v3453 = vld [vmem:[#allocation2 + $0x13b] sm:$0xff]
        %v3454 = vld [vmem:[#allocation2 + $0x143] sm:$0xff]
        %v3455 = vld [vmem:[#allocation2 + $0x153] sm:$0xff]
        %v3456 = vld [vmem:[#allocation2 + $0x15b] sm:$0xff]
        %v3457 = vld [vmem:[#allocation2 + $0x16b] sm:$0xff]
        %v3458 = vld [vmem:[#allocation2 + $0x173] sm:$0xff]
        %3459 = vst [vmem:[#allocation3 + $0x18] sm:$0xff] %v3427
        %3460 = vst [vmem:[#allocation3 + $0xe0] sm:$0xff] %v3428
        %3461 = vst [vmem:[#allocation3 + $0x1a8] sm:$0xff] %v3429
        %3462 = vst [vmem:[#allocation3 + $0x270] sm:$0xff] %v3430
        %3463 = vst [vmem:[#allocation3 + $0x338] sm:$0xff] %v3431
        %3464 = vst [vmem:[#allocation3 + $0x400] sm:$0xff] %v3432
        %3465 = vst [vmem:[#allocation3 + $0x4c8] sm:$0xff] %v3433
        %3466 = vst [vmem:[#allocation3 + $0x590] sm:$0xff] %v3434
        %3467 = vst [vmem:[#allocation3 + $0x658] sm:$0xff] %v3435
        %3468 = vst [vmem:[#allocation3 + $0x720] sm:$0xff] %v3436
        %3469 = vst [vmem:[#allocation3 + $0x7e8] sm:$0xff] %v3437
        %3470 = vst [vmem:[#allocation3 + $0x8b0] sm:$0xff] %v3438
        %3471 = vst [vmem:[#allocation3 + $0x978] sm:$0xff] %v3439
        %3472 = vst [vmem:[#allocation3 + $0xa40] sm:$0xff] %v3440
        %3473 = vst [vmem:[#allocation3 + $0xb08] sm:$0xff] %v3441
        %3474 = vst [vmem:[#allocation3 + $0xbd0] sm:$0xff] %v3442
        %3475 = vst [vmem:[#allocation3 + $0xc98] sm:$0xff] %v3443
        %3476 = vst [vmem:[#allocation3 + $0xd60] sm:$0xff] %v3444
        %3477 = vst [vmem:[#allocation3 + $0xe28] sm:$0xff] %v3445
        %3478 = vst [vmem:[#allocation3 + $0xef0] sm:$0xff] %v3446
        %3479 = vst [vmem:[#allocation3 + $0xfb8] sm:$0xff] %v3447
        %3480 = vst [vmem:[#allocation3 + $0x1080] sm:$0xff] %v3448
        %3481 = vst [vmem:[#allocation3 + $0x1148] sm:$0xff] %v3449
        %3482 = vst [vmem:[#allocation3 + $0x1210] sm:$0xff] %v3450
        %3483 = vst [vmem:[#allocation3 + $0x12d8] sm:$0xff] %v3451
        %3484 = vst [vmem:[#allocation3 + $0x13a0] sm:$0xff] %v3452
        %3485 = vst [vmem:[#allocation3 + $0x1468] sm:$0xff] %v3453
        %3486 = vst [vmem:[#allocation3 + $0x1530] sm:$0xff] %v3454
        %3487 = vst [vmem:[#allocation3 + $0x15f8] sm:$0xff] %v3455
        %3488 = vst [vmem:[#allocation3 + $0x16c0] sm:$0xff] %v3456
        %3489 = vst [vmem:[#allocation3 + $0x1788] sm:$0xff] %v3457
        %3490 = vst [vmem:[#allocation3 + $0x1850] sm:$0xff] %v3458
        %v3491 = vld [vmem:[#allocation2 + $0x4] sm:$0xff]
        %v3492 = vld [vmem:[#allocation2 + $0xc] sm:$0xff]
        %v3493 = vld [vmem:[#allocation2 + $0x1c] sm:$0xff]
        %v3494 = vld [vmem:[#allocation2 + $0x24] sm:$0xff]
        %v3495 = vld [vmem:[#allocation2 + $0x34] sm:$0xff]
        %v3496 = vld [vmem:[#allocation2 + $0x3c] sm:$0xff]
        %v3497 = vld [vmem:[#allocation2 + $0x4c] sm:$0xff]
        %v3498 = vld [vmem:[#allocation2 + $0x54] sm:$0xff]
        %v3499 = vld [vmem:[#allocation2 + $0x64] sm:$0xff]
        %v3500 = vld [vmem:[#allocation2 + $0x6c] sm:$0xff]
        %v3501 = vld [vmem:[#allocation2 + $0x7c] sm:$0xff]
        %v3502 = vld [vmem:[#allocation2 + $0x84] sm:$0xff]
        %v3503 = vld [vmem:[#allocation2 + $0x94] sm:$0xff]
        %v3504 = vld [vmem:[#allocation2 + $0x9c] sm:$0xff]
        %v3505 = vld [vmem:[#allocation2 + $0xac] sm:$0xff]
        %v3506 = vld [vmem:[#allocation2 + $0xb4] sm:$0xff]
        %v3507 = vld [vmem:[#allocation2 + $0xc4] sm:$0xff]
        %v3508 = vld [vmem:[#allocation2 + $0xcc] sm:$0xff]
        %v3509 = vld [vmem:[#allocation2 + $0xdc] sm:$0xff]
        %v3510 = vld [vmem:[#allocation2 + $0xe4] sm:$0xff]
        %v3511 = vld [vmem:[#allocation2 + $0xf4] sm:$0xff]
        %v3512 = vld [vmem:[#allocation2 + $0xfc] sm:$0xff]
        %v3513 = vld [vmem:[#allocation2 + $0x10c] sm:$0xff]
        %v3514 = vld [vmem:[#allocation2 + $0x114] sm:$0xff]
        %v3515 = vld [vmem:[#allocation2 + $0x124] sm:$0xff]
        %v3516 = vld [vmem:[#allocation2 + $0x12c] sm:$0xff]
        %v3517 = vld [vmem:[#allocation2 + $0x13c] sm:$0xff]
        %v3518 = vld [vmem:[#allocation2 + $0x144] sm:$0xff]
        %v3519 = vld [vmem:[#allocation2 + $0x154] sm:$0xff]
        %v3520 = vld [vmem:[#allocation2 + $0x15c] sm:$0xff]
        %v3521 = vld [vmem:[#allocation2 + $0x16c] sm:$0xff]
        %v3522 = vld [vmem:[#allocation2 + $0x174] sm:$0xff]
        %3523 = vst [vmem:[#allocation3 + $0x20] sm:$0xff] %v3491
        %3524 = vst [vmem:[#allocation3 + $0xe8] sm:$0xff] %v3492
        %3525 = vst [vmem:[#allocation3 + $0x1b0] sm:$0xff] %v3493
        %3526 = vst [vmem:[#allocation3 + $0x278] sm:$0xff] %v3494
        %3527 = vst [vmem:[#allocation3 + $0x340] sm:$0xff] %v3495
        %3528 = vst [vmem:[#allocation3 + $0x408] sm:$0xff] %v3496
        %3529 = vst [vmem:[#allocation3 + $0x4d0] sm:$0xff] %v3497
        %3530 = vst [vmem:[#allocation3 + $0x598] sm:$0xff] %v3498
        %3531 = vst [vmem:[#allocation3 + $0x660] sm:$0xff] %v3499
        %3532 = vst [vmem:[#allocation3 + $0x728] sm:$0xff] %v3500
        %3533 = vst [vmem:[#allocation3 + $0x7f0] sm:$0xff] %v3501
        %3534 = vst [vmem:[#allocation3 + $0x8b8] sm:$0xff] %v3502
        %3535 = vst [vmem:[#allocation3 + $0x980] sm:$0xff] %v3503
        %3536 = vst [vmem:[#allocation3 + $0xa48] sm:$0xff] %v3504
        %3537 = vst [vmem:[#allocation3 + $0xb10] sm:$0xff] %v3505
        %3538 = vst [vmem:[#allocation3 + $0xbd8] sm:$0xff] %v3506
        %3539 = vst [vmem:[#allocation3 + $0xca0] sm:$0xff] %v3507
        %3540 = vst [vmem:[#allocation3 + $0xd68] sm:$0xff] %v3508
        %3541 = vst [vmem:[#allocation3 + $0xe30] sm:$0xff] %v3509
        %3542 = vst [vmem:[#allocation3 + $0xef8] sm:$0xff] %v3510
        %3543 = vst [vmem:[#allocation3 + $0xfc0] sm:$0xff] %v3511
        %3544 = vst [vmem:[#allocation3 + $0x1088] sm:$0xff] %v3512
        %3545 = vst [vmem:[#allocation3 + $0x1150] sm:$0xff] %v3513
        %3546 = vst [vmem:[#allocation3 + $0x1218] sm:$0xff] %v3514
        %3547 = vst [vmem:[#allocation3 + $0x12e0] sm:$0xff] %v3515
        %3548 = vst [vmem:[#allocation3 + $0x13a8] sm:$0xff] %v3516
        %3549 = vst [vmem:[#allocation3 + $0x1470] sm:$0xff] %v3517
        %3550 = vst [vmem:[#allocation3 + $0x1538] sm:$0xff] %v3518
        %3551 = vst [vmem:[#allocation3 + $0x1600] sm:$0xff] %v3519
        %3552 = vst [vmem:[#allocation3 + $0x16c8] sm:$0xff] %v3520
        %3553 = vst [vmem:[#allocation3 + $0x1790] sm:$0xff] %v3521
        %3554 = vst [vmem:[#allocation3 + $0x1858] sm:$0xff] %v3522
        %v3555 = vld [vmem:[%s932] sm:$0xff]
        %v3556 = vld [vmem:[%s932 + $0x8] sm:$0xff]
        %v3557 = vld [vmem:[%s932 + $0x18] sm:$0xff]
        %v3558 = vld [vmem:[%s932 + $0x20] sm:$0xff]
        %v3559 = vld [vmem:[%s932 + $0x30] sm:$0xff]
        %v3560 = vld [vmem:[%s932 + $0x38] sm:$0xff]
        %v3561 = vld [vmem:[%s932 + $0x48] sm:$0xff]
        %v3562 = vld [vmem:[%s932 + $0x50] sm:$0xff]
        %v3563 = vld [vmem:[%s932 + $0x60] sm:$0xff]
        %v3564 = vld [vmem:[%s932 + $0x68] sm:$0xff]
        %v3565 = vld [vmem:[%s932 + $0x78] sm:$0xff]
        %v3566 = vld [vmem:[%s932 + $0x80] sm:$0xff]
        %v3567 = vld [vmem:[%s932 + $0x90] sm:$0xff]
        %v3568 = vld [vmem:[%s932 + $0x98] sm:$0xff]
        %v3569 = vld [vmem:[%s932 + $0xa8] sm:$0xff]
        %v3570 = vld [vmem:[%s932 + $0xb0] sm:$0xff]
        %v3571 = vld [vmem:[%s932 + $0xc0] sm:$0xff]
        %v3572 = vld [vmem:[%s932 + $0xc8] sm:$0xff]
        %v3573 = vld [vmem:[%s932 + $0xd8] sm:$0xff]
        %v3574 = vld [vmem:[%s932 + $0xe0] sm:$0xff]
        %v3575 = vld [vmem:[%s932 + $0xf0] sm:$0xff]
        %v3576 = vld [vmem:[%s932 + $0xf8] sm:$0xff]
        %v3577 = vld [vmem:[%s932 + $0x108] sm:$0xff]
        %v3578 = vld [vmem:[%s932 + $0x110] sm:$0xff]
        %v3579 = vld [vmem:[%s932 + $0x120] sm:$0xff]
        %v3580 = vld [vmem:[%s932 + $0x128] sm:$0xff]
        %v3581 = vld [vmem:[%s932 + $0x138] sm:$0xff]
        %v3582 = vld [vmem:[%s932 + $0x140] sm:$0xff]
        %v3583 = vld [vmem:[%s932 + $0x150] sm:$0xff]
        %v3584 = vld [vmem:[%s932 + $0x158] sm:$0xff]
        %v3585 = vld [vmem:[%s932 + $0x168] sm:$0xff]
        %v3586 = vld [vmem:[%s932 + $0x170] sm:$0xff]
        %3587 = vst [vmem:[#allocation3 + $0x28] sm:$0xff] %v3555
        %3588 = vst [vmem:[#allocation3 + $0xf0] sm:$0xff] %v3556
        %3589 = vst [vmem:[#allocation3 + $0x1b8] sm:$0xff] %v3557
        %3590 = vst [vmem:[#allocation3 + $0x280] sm:$0xff] %v3558
        %3591 = vst [vmem:[#allocation3 + $0x348] sm:$0xff] %v3559
        %3592 = vst [vmem:[#allocation3 + $0x410] sm:$0xff] %v3560
        %3593 = vst [vmem:[#allocation3 + $0x4d8] sm:$0xff] %v3561
        %3594 = vst [vmem:[#allocation3 + $0x5a0] sm:$0xff] %v3562
        %3595 = vst [vmem:[#allocation3 + $0x668] sm:$0xff] %v3563
        %3596 = vst [vmem:[#allocation3 + $0x730] sm:$0xff] %v3564
        %3597 = vst [vmem:[#allocation3 + $0x7f8] sm:$0xff] %v3565
        %3598 = vst [vmem:[#allocation3 + $0x8c0] sm:$0xff] %v3566
        %3599 = vst [vmem:[#allocation3 + $0x988] sm:$0xff] %v3567
        %3600 = vst [vmem:[#allocation3 + $0xa50] sm:$0xff] %v3568
        %3601 = vst [vmem:[#allocation3 + $0xb18] sm:$0xff] %v3569
        %3602 = vst [vmem:[#allocation3 + $0xbe0] sm:$0xff] %v3570
        %3603 = vst [vmem:[#allocation3 + $0xca8] sm:$0xff] %v3571
        %3604 = vst [vmem:[#allocation3 + $0xd70] sm:$0xff] %v3572
        %3605 = vst [vmem:[#allocation3 + $0xe38] sm:$0xff] %v3573
        %3606 = vst [vmem:[#allocation3 + $0xf00] sm:$0xff] %v3574
        %3607 = vst [vmem:[#allocation3 + $0xfc8] sm:$0xff] %v3575
        %3608 = vst [vmem:[#allocation3 + $0x1090] sm:$0xff] %v3576
        %3609 = vst [vmem:[#allocation3 + $0x1158] sm:$0xff] %v3577
        %3610 = vst [vmem:[#allocation3 + $0x1220] sm:$0xff] %v3578
        %3611 = vst [vmem:[#allocation3 + $0x12e8] sm:$0xff] %v3579
        %3612 = vst [vmem:[#allocation3 + $0x13b0] sm:$0xff] %v3580
        %3613 = vst [vmem:[#allocation3 + $0x1478] sm:$0xff] %v3581
        %3614 = vst [vmem:[#allocation3 + $0x1540] sm:$0xff] %v3582
        %3615 = vst [vmem:[#allocation3 + $0x1608] sm:$0xff] %v3583
        %3616 = vst [vmem:[#allocation3 + $0x16d0] sm:$0xff] %v3584
        %3617 = vst [vmem:[#allocation3 + $0x1798] sm:$0xff] %v3585
        %3618 = vst [vmem:[#allocation3 + $0x1860] sm:$0xff] %v3586
        %v3619 = vld [vmem:[%s932 + $0x1] sm:$0xff]
        %v3620 = vld [vmem:[%s932 + $0x9] sm:$0xff]
        %v3621 = vld [vmem:[%s932 + $0x19] sm:$0xff]
        %v3622 = vld [vmem:[%s932 + $0x21] sm:$0xff]
        %v3623 = vld [vmem:[%s932 + $0x31] sm:$0xff]
        %v3624 = vld [vmem:[%s932 + $0x39] sm:$0xff]
        %v3625 = vld [vmem:[%s932 + $0x49] sm:$0xff]
        %v3626 = vld [vmem:[%s932 + $0x51] sm:$0xff]
        %v3627 = vld [vmem:[%s932 + $0x61] sm:$0xff]
        %v3628 = vld [vmem:[%s932 + $0x69] sm:$0xff]
        %v3629 = vld [vmem:[%s932 + $0x79] sm:$0xff]
        %v3630 = vld [vmem:[%s932 + $0x81] sm:$0xff]
        %v3631 = vld [vmem:[%s932 + $0x91] sm:$0xff]
        %v3632 = vld [vmem:[%s932 + $0x99] sm:$0xff]
        %v3633 = vld [vmem:[%s932 + $0xa9] sm:$0xff]
        %v3634 = vld [vmem:[%s932 + $0xb1] sm:$0xff]
        %v3635 = vld [vmem:[%s932 + $0xc1] sm:$0xff]
        %v3636 = vld [vmem:[%s932 + $0xc9] sm:$0xff]
        %v3637 = vld [vmem:[%s932 + $0xd9] sm:$0xff]
        %v3638 = vld [vmem:[%s932 + $0xe1] sm:$0xff]
        %v3639 = vld [vmem:[%s932 + $0xf1] sm:$0xff]
        %v3640 = vld [vmem:[%s932 + $0xf9] sm:$0xff]
        %v3641 = vld [vmem:[%s932 + $0x109] sm:$0xff]
        %v3642 = vld [vmem:[%s932 + $0x111] sm:$0xff]
        %v3643 = vld [vmem:[%s932 + $0x121] sm:$0xff]
        %v3644 = vld [vmem:[%s932 + $0x129] sm:$0xff]
        %v3645 = vld [vmem:[%s932 + $0x139] sm:$0xff]
        %v3646 = vld [vmem:[%s932 + $0x141] sm:$0xff]
        %v3647 = vld [vmem:[%s932 + $0x151] sm:$0xff]
        %v3648 = vld [vmem:[%s932 + $0x159] sm:$0xff]
        %v3649 = vld [vmem:[%s932 + $0x169] sm:$0xff]
        %v3650 = vld [vmem:[%s932 + $0x171] sm:$0xff]
        %3651 = vst [vmem:[#allocation3 + $0x30] sm:$0xff] %v3619
        %3652 = vst [vmem:[#allocation3 + $0xf8] sm:$0xff] %v3620
        %3653 = vst [vmem:[#allocation3 + $0x1c0] sm:$0xff] %v3621
        %3654 = vst [vmem:[#allocation3 + $0x288] sm:$0xff] %v3622
        %3655 = vst [vmem:[#allocation3 + $0x350] sm:$0xff] %v3623
        %3656 = vst [vmem:[#allocation3 + $0x418] sm:$0xff] %v3624
        %3657 = vst [vmem:[#allocation3 + $0x4e0] sm:$0xff] %v3625
        %3658 = vst [vmem:[#allocation3 + $0x5a8] sm:$0xff] %v3626
        %3659 = vst [vmem:[#allocation3 + $0x670] sm:$0xff] %v3627
        %3660 = vst [vmem:[#allocation3 + $0x738] sm:$0xff] %v3628
        %3661 = vst [vmem:[#allocation3 + $0x800] sm:$0xff] %v3629
        %3662 = vst [vmem:[#allocation3 + $0x8c8] sm:$0xff] %v3630
        %3663 = vst [vmem:[#allocation3 + $0x990] sm:$0xff] %v3631
        %3664 = vst [vmem:[#allocation3 + $0xa58] sm:$0xff] %v3632
        %3665 = vst [vmem:[#allocation3 + $0xb20] sm:$0xff] %v3633
        %3666 = vst [vmem:[#allocation3 + $0xbe8] sm:$0xff] %v3634
        %3667 = vst [vmem:[#allocation3 + $0xcb0] sm:$0xff] %v3635
        %3668 = vst [vmem:[#allocation3 + $0xd78] sm:$0xff] %v3636
        %3669 = vst [vmem:[#allocation3 + $0xe40] sm:$0xff] %v3637
        %3670 = vst [vmem:[#allocation3 + $0xf08] sm:$0xff] %v3638
        %3671 = vst [vmem:[#allocation3 + $0xfd0] sm:$0xff] %v3639
        %3672 = vst [vmem:[#allocation3 + $0x1098] sm:$0xff] %v3640
        %3673 = vst [vmem:[#allocation3 + $0x1160] sm:$0xff] %v3641
        %3674 = vst [vmem:[#allocation3 + $0x1228] sm:$0xff] %v3642
        %3675 = vst [vmem:[#allocation3 + $0x12f0] sm:$0xff] %v3643
        %3676 = vst [vmem:[#allocation3 + $0x13b8] sm:$0xff] %v3644
        %3677 = vst [vmem:[#allocation3 + $0x1480] sm:$0xff] %v3645
        %3678 = vst [vmem:[#allocation3 + $0x1548] sm:$0xff] %v3646
        %3679 = vst [vmem:[#allocation3 + $0x1610] sm:$0xff] %v3647
        %3680 = vst [vmem:[#allocation3 + $0x16d8] sm:$0xff] %v3648
        %3681 = vst [vmem:[#allocation3 + $0x17a0] sm:$0xff] %v3649
        %3682 = vst [vmem:[#allocation3 + $0x1868] sm:$0xff] %v3650
        %v3683 = vld [vmem:[%s932 + $0x2] sm:$0xff]
        %v3684 = vld [vmem:[%s932 + $0xa] sm:$0xff]
        %v3685 = vld [vmem:[%s932 + $0x1a] sm:$0xff]
        %v3686 = vld [vmem:[%s932 + $0x22] sm:$0xff]
        %v3687 = vld [vmem:[%s932 + $0x32] sm:$0xff]
        %v3688 = vld [vmem:[%s932 + $0x3a] sm:$0xff]
        %v3689 = vld [vmem:[%s932 + $0x4a] sm:$0xff]
        %v3690 = vld [vmem:[%s932 + $0x52] sm:$0xff]
        %v3691 = vld [vmem:[%s932 + $0x62] sm:$0xff]
        %v3692 = vld [vmem:[%s932 + $0x6a] sm:$0xff]
        %v3693 = vld [vmem:[%s932 + $0x7a] sm:$0xff]
        %v3694 = vld [vmem:[%s932 + $0x82] sm:$0xff]
        %v3695 = vld [vmem:[%s932 + $0x92] sm:$0xff]
        %v3696 = vld [vmem:[%s932 + $0x9a] sm:$0xff]
        %v3697 = vld [vmem:[%s932 + $0xaa] sm:$0xff]
        %v3698 = vld [vmem:[%s932 + $0xb2] sm:$0xff]
        %v3699 = vld [vmem:[%s932 + $0xc2] sm:$0xff]
        %v3700 = vld [vmem:[%s932 + $0xca] sm:$0xff]
        %v3701 = vld [vmem:[%s932 + $0xda] sm:$0xff]
        %v3702 = vld [vmem:[%s932 + $0xe2] sm:$0xff]
        %v3703 = vld [vmem:[%s932 + $0xf2] sm:$0xff]
        %v3704 = vld [vmem:[%s932 + $0xfa] sm:$0xff]
        %v3705 = vld [vmem:[%s932 + $0x10a] sm:$0xff]
        %v3706 = vld [vmem:[%s932 + $0x112] sm:$0xff]
        %v3707 = vld [vmem:[%s932 + $0x122] sm:$0xff]
        %v3708 = vld [vmem:[%s932 + $0x12a] sm:$0xff]
        %v3709 = vld [vmem:[%s932 + $0x13a] sm:$0xff]
        %v3710 = vld [vmem:[%s932 + $0x142] sm:$0xff]
        %v3711 = vld [vmem:[%s932 + $0x152] sm:$0xff]
        %v3712 = vld [vmem:[%s932 + $0x15a] sm:$0xff]
        %v3713 = vld [vmem:[%s932 + $0x16a] sm:$0xff]
        %v3714 = vld [vmem:[%s932 + $0x172] sm:$0xff]
        %3715 = vst [vmem:[#allocation3 + $0x38] sm:$0xff] %v3683
        %3716 = vst [vmem:[#allocation3 + $0x100] sm:$0xff] %v3684
        %3717 = vst [vmem:[#allocation3 + $0x1c8] sm:$0xff] %v3685
        %3718 = vst [vmem:[#allocation3 + $0x290] sm:$0xff] %v3686
        %3719 = vst [vmem:[#allocation3 + $0x358] sm:$0xff] %v3687
        %3720 = vst [vmem:[#allocation3 + $0x420] sm:$0xff] %v3688
        %3721 = vst [vmem:[#allocation3 + $0x4e8] sm:$0xff] %v3689
        %3722 = vst [vmem:[#allocation3 + $0x5b0] sm:$0xff] %v3690
        %3723 = vst [vmem:[#allocation3 + $0x678] sm:$0xff] %v3691
        %3724 = vst [vmem:[#allocation3 + $0x740] sm:$0xff] %v3692
        %3725 = vst [vmem:[#allocation3 + $0x808] sm:$0xff] %v3693
        %3726 = vst [vmem:[#allocation3 + $0x8d0] sm:$0xff] %v3694
        %3727 = vst [vmem:[#allocation3 + $0x998] sm:$0xff] %v3695
        %3728 = vst [vmem:[#allocation3 + $0xa60] sm:$0xff] %v3696
        %3729 = vst [vmem:[#allocation3 + $0xb28] sm:$0xff] %v3697
        %3730 = vst [vmem:[#allocation3 + $0xbf0] sm:$0xff] %v3698
        %3731 = vst [vmem:[#allocation3 + $0xcb8] sm:$0xff] %v3699
        %3732 = vst [vmem:[#allocation3 + $0xd80] sm:$0xff] %v3700
        %3733 = vst [vmem:[#allocation3 + $0xe48] sm:$0xff] %v3701
        %3734 = vst [vmem:[#allocation3 + $0xf10] sm:$0xff] %v3702
        %3735 = vst [vmem:[#allocation3 + $0xfd8] sm:$0xff] %v3703
        %3736 = vst [vmem:[#allocation3 + $0x10a0] sm:$0xff] %v3704
        %3737 = vst [vmem:[#allocation3 + $0x1168] sm:$0xff] %v3705
        %3738 = vst [vmem:[#allocation3 + $0x1230] sm:$0xff] %v3706
        %3739 = vst [vmem:[#allocation3 + $0x12f8] sm:$0xff] %v3707
        %3740 = vst [vmem:[#allocation3 + $0x13c0] sm:$0xff] %v3708
        %3741 = vst [vmem:[#allocation3 + $0x1488] sm:$0xff] %v3709
        %3742 = vst [vmem:[#allocation3 + $0x1550] sm:$0xff] %v3710
        %3743 = vst [vmem:[#allocation3 + $0x1618] sm:$0xff] %v3711
        %3744 = vst [vmem:[#allocation3 + $0x16e0] sm:$0xff] %v3712
        %3745 = vst [vmem:[#allocation3 + $0x17a8] sm:$0xff] %v3713
        %3746 = vst [vmem:[#allocation3 + $0x1870] sm:$0xff] %v3714
        %v3747 = vld [vmem:[%s932 + $0x3] sm:$0xff]
        %v3748 = vld [vmem:[%s932 + $0xb] sm:$0xff]
        %v3749 = vld [vmem:[%s932 + $0x1b] sm:$0xff]
        %v3750 = vld [vmem:[%s932 + $0x23] sm:$0xff]
        %v3751 = vld [vmem:[%s932 + $0x33] sm:$0xff]
        %v3752 = vld [vmem:[%s932 + $0x3b] sm:$0xff]
        %v3753 = vld [vmem:[%s932 + $0x4b] sm:$0xff]
        %v3754 = vld [vmem:[%s932 + $0x53] sm:$0xff]
        %v3755 = vld [vmem:[%s932 + $0x63] sm:$0xff]
        %v3756 = vld [vmem:[%s932 + $0x6b] sm:$0xff]
        %v3757 = vld [vmem:[%s932 + $0x7b] sm:$0xff]
        %v3758 = vld [vmem:[%s932 + $0x83] sm:$0xff]
        %v3759 = vld [vmem:[%s932 + $0x93] sm:$0xff]
        %v3760 = vld [vmem:[%s932 + $0x9b] sm:$0xff]
        %v3761 = vld [vmem:[%s932 + $0xab] sm:$0xff]
        %v3762 = vld [vmem:[%s932 + $0xb3] sm:$0xff]
        %v3763 = vld [vmem:[%s932 + $0xc3] sm:$0xff]
        %v3764 = vld [vmem:[%s932 + $0xcb] sm:$0xff]
        %v3765 = vld [vmem:[%s932 + $0xdb] sm:$0xff]
        %v3766 = vld [vmem:[%s932 + $0xe3] sm:$0xff]
        %v3767 = vld [vmem:[%s932 + $0xf3] sm:$0xff]
        %v3768 = vld [vmem:[%s932 + $0xfb] sm:$0xff]
        %v3769 = vld [vmem:[%s932 + $0x10b] sm:$0xff]
        %v3770 = vld [vmem:[%s932 + $0x113] sm:$0xff]
        %v3771 = vld [vmem:[%s932 + $0x123] sm:$0xff]
        %v3772 = vld [vmem:[%s932 + $0x12b] sm:$0xff]
        %v3773 = vld [vmem:[%s932 + $0x13b] sm:$0xff]
        %v3774 = vld [vmem:[%s932 + $0x143] sm:$0xff]
        %v3775 = vld [vmem:[%s932 + $0x153] sm:$0xff]
        %v3776 = vld [vmem:[%s932 + $0x15b] sm:$0xff]
        %v3777 = vld [vmem:[%s932 + $0x16b] sm:$0xff]
        %v3778 = vld [vmem:[%s932 + $0x173] sm:$0xff]
        %3779 = vst [vmem:[#allocation3 + $0x40] sm:$0xff] %v3747
        %3780 = vst [vmem:[#allocation3 + $0x108] sm:$0xff] %v3748
        %3781 = vst [vmem:[#allocation3 + $0x1d0] sm:$0xff] %v3749
        %3782 = vst [vmem:[#allocation3 + $0x298] sm:$0xff] %v3750
        %3783 = vst [vmem:[#allocation3 + $0x360] sm:$0xff] %v3751
        %3784 = vst [vmem:[#allocation3 + $0x428] sm:$0xff] %v3752
        %3785 = vst [vmem:[#allocation3 + $0x4f0] sm:$0xff] %v3753
        %3786 = vst [vmem:[#allocation3 + $0x5b8] sm:$0xff] %v3754
        %3787 = vst [vmem:[#allocation3 + $0x680] sm:$0xff] %v3755
        %3788 = vst [vmem:[#allocation3 + $0x748] sm:$0xff] %v3756
        %3789 = vst [vmem:[#allocation3 + $0x810] sm:$0xff] %v3757
        %3790 = vst [vmem:[#allocation3 + $0x8d8] sm:$0xff] %v3758
        %3791 = vst [vmem:[#allocation3 + $0x9a0] sm:$0xff] %v3759
        %3792 = vst [vmem:[#allocation3 + $0xa68] sm:$0xff] %v3760
        %3793 = vst [vmem:[#allocation3 + $0xb30] sm:$0xff] %v3761
        %3794 = vst [vmem:[#allocation3 + $0xbf8] sm:$0xff] %v3762
        %3795 = vst [vmem:[#allocation3 + $0xcc0] sm:$0xff] %v3763
        %3796 = vst [vmem:[#allocation3 + $0xd88] sm:$0xff] %v3764
        %3797 = vst [vmem:[#allocation3 + $0xe50] sm:$0xff] %v3765
        %3798 = vst [vmem:[#allocation3 + $0xf18] sm:$0xff] %v3766
        %3799 = vst [vmem:[#allocation3 + $0xfe0] sm:$0xff] %v3767
        %3800 = vst [vmem:[#allocation3 + $0x10a8] sm:$0xff] %v3768
        %3801 = vst [vmem:[#allocation3 + $0x1170] sm:$0xff] %v3769
        %3802 = vst [vmem:[#allocation3 + $0x1238] sm:$0xff] %v3770
        %3803 = vst [vmem:[#allocation3 + $0x1300] sm:$0xff] %v3771
        %3804 = vst [vmem:[#allocation3 + $0x13c8] sm:$0xff] %v3772
        %3805 = vst [vmem:[#allocation3 + $0x1490] sm:$0xff] %v3773
        %3806 = vst [vmem:[#allocation3 + $0x1558] sm:$0xff] %v3774
        %3807 = vst [vmem:[#allocation3 + $0x1620] sm:$0xff] %v3775
        %3808 = vst [vmem:[#allocation3 + $0x16e8] sm:$0xff] %v3776
        %3809 = vst [vmem:[#allocation3 + $0x17b0] sm:$0xff] %v3777
        %3810 = vst [vmem:[#allocation3 + $0x1878] sm:$0xff] %v3778
        %v3811 = vld [vmem:[%s932 + $0x4] sm:$0xff]
        %v3812 = vld [vmem:[%s932 + $0xc] sm:$0xff]
        %v3813 = vld [vmem:[%s932 + $0x1c] sm:$0xff]
        %v3814 = vld [vmem:[%s932 + $0x24] sm:$0xff]
        %v3815 = vld [vmem:[%s932 + $0x34] sm:$0xff]
        %v3816 = vld [vmem:[%s932 + $0x3c] sm:$0xff]
        %v3817 = vld [vmem:[%s932 + $0x4c] sm:$0xff]
        %v3818 = vld [vmem:[%s932 + $0x54] sm:$0xff]
        %v3819 = vld [vmem:[%s932 + $0x64] sm:$0xff]
        %v3820 = vld [vmem:[%s932 + $0x6c] sm:$0xff]
        %v3821 = vld [vmem:[%s932 + $0x7c] sm:$0xff]
        %v3822 = vld [vmem:[%s932 + $0x84] sm:$0xff]
        %v3823 = vld [vmem:[%s932 + $0x94] sm:$0xff]
        %v3824 = vld [vmem:[%s932 + $0x9c] sm:$0xff]
        %v3825 = vld [vmem:[%s932 + $0xac] sm:$0xff]
        %v3826 = vld [vmem:[%s932 + $0xb4] sm:$0xff]
        %v3827 = vld [vmem:[%s932 + $0xc4] sm:$0xff]
        %v3828 = vld [vmem:[%s932 + $0xcc] sm:$0xff]
        %v3829 = vld [vmem:[%s932 + $0xdc] sm:$0xff]
        %v3830 = vld [vmem:[%s932 + $0xe4] sm:$0xff]
        %v3831 = vld [vmem:[%s932 + $0xf4] sm:$0xff]
        %v3832 = vld [vmem:[%s932 + $0xfc] sm:$0xff]
        %v3833 = vld [vmem:[%s932 + $0x10c] sm:$0xff]
        %v3834 = vld [vmem:[%s932 + $0x114] sm:$0xff]
        %v3835 = vld [vmem:[%s932 + $0x124] sm:$0xff]
        %v3836 = vld [vmem:[%s932 + $0x12c] sm:$0xff]
        %v3837 = vld [vmem:[%s932 + $0x13c] sm:$0xff]
        %v3838 = vld [vmem:[%s932 + $0x144] sm:$0xff]
        %v3839 = vld [vmem:[%s932 + $0x154] sm:$0xff]
        %v3840 = vld [vmem:[%s932 + $0x15c] sm:$0xff]
        %v3841 = vld [vmem:[%s932 + $0x16c] sm:$0xff]
        %v3842 = vld [vmem:[%s932 + $0x174] sm:$0xff]
        %3843 = vst [vmem:[#allocation3 + $0x48] sm:$0xff] %v3811
        %3844 = vst [vmem:[#allocation3 + $0x110] sm:$0xff] %v3812
        %3845 = vst [vmem:[#allocation3 + $0x1d8] sm:$0xff] %v3813
        %3846 = vst [vmem:[#allocation3 + $0x2a0] sm:$0xff] %v3814
        %3847 = vst [vmem:[#allocation3 + $0x368] sm:$0xff] %v3815
        %3848 = vst [vmem:[#allocation3 + $0x430] sm:$0xff] %v3816
        %3849 = vst [vmem:[#allocation3 + $0x4f8] sm:$0xff] %v3817
        %3850 = vst [vmem:[#allocation3 + $0x5c0] sm:$0xff] %v3818
        %3851 = vst [vmem:[#allocation3 + $0x688] sm:$0xff] %v3819
        %3852 = vst [vmem:[#allocation3 + $0x750] sm:$0xff] %v3820
        %3853 = vst [vmem:[#allocation3 + $0x818] sm:$0xff] %v3821
        %3854 = vst [vmem:[#allocation3 + $0x8e0] sm:$0xff] %v3822
        %3855 = vst [vmem:[#allocation3 + $0x9a8] sm:$0xff] %v3823
        %3856 = vst [vmem:[#allocation3 + $0xa70] sm:$0xff] %v3824
        %3857 = vst [vmem:[#allocation3 + $0xb38] sm:$0xff] %v3825
        %3858 = vst [vmem:[#allocation3 + $0xc00] sm:$0xff] %v3826
        %3859 = vst [vmem:[#allocation3 + $0xcc8] sm:$0xff] %v3827
        %3860 = vst [vmem:[#allocation3 + $0xd90] sm:$0xff] %v3828
        %3861 = vst [vmem:[#allocation3 + $0xe58] sm:$0xff] %v3829
        %3862 = vst [vmem:[#allocation3 + $0xf20] sm:$0xff] %v3830
        %3863 = vst [vmem:[#allocation3 + $0xfe8] sm:$0xff] %v3831
        %3864 = vst [vmem:[#allocation3 + $0x10b0] sm:$0xff] %v3832
        %3865 = vst [vmem:[#allocation3 + $0x1178] sm:$0xff] %v3833
        %3866 = vst [vmem:[#allocation3 + $0x1240] sm:$0xff] %v3834
        %3867 = vst [vmem:[#allocation3 + $0x1308] sm:$0xff] %v3835
        %3868 = vst [vmem:[#allocation3 + $0x13d0] sm:$0xff] %v3836
        %3869 = vst [vmem:[#allocation3 + $0x1498] sm:$0xff] %v3837
        %3870 = vst [vmem:[#allocation3 + $0x1560] sm:$0xff] %v3838
        %3871 = vst [vmem:[#allocation3 + $0x1628] sm:$0xff] %v3839
        %3872 = vst [vmem:[#allocation3 + $0x16f0] sm:$0xff] %v3840
        %3873 = vst [vmem:[#allocation3 + $0x17b8] sm:$0xff] %v3841
        %3874 = vst [vmem:[#allocation3 + $0x1880] sm:$0xff] %v3842
        %v3875 = vld [vmem:[%s769] sm:$0xff]
        %v3876 = vld [vmem:[%s769 + $0x8] sm:$0xff]
        %v3877 = vld [vmem:[%s769 + $0x18] sm:$0xff]
        %v3878 = vld [vmem:[%s769 + $0x20] sm:$0xff]
        %v3879 = vld [vmem:[%s769 + $0x30] sm:$0xff]
        %v3880 = vld [vmem:[%s769 + $0x38] sm:$0xff]
        %v3881 = vld [vmem:[%s769 + $0x48] sm:$0xff]
        %v3882 = vld [vmem:[%s769 + $0x50] sm:$0xff]
        %v3883 = vld [vmem:[%s769 + $0x60] sm:$0xff]
        %v3884 = vld [vmem:[%s769 + $0x68] sm:$0xff]
        %v3885 = vld [vmem:[%s769 + $0x78] sm:$0xff]
        %v3886 = vld [vmem:[%s769 + $0x80] sm:$0xff]
        %v3887 = vld [vmem:[%s769 + $0x90] sm:$0xff]
        %v3888 = vld [vmem:[%s769 + $0x98] sm:$0xff]
        %v3889 = vld [vmem:[%s769 + $0xa8] sm:$0xff]
        %v3890 = vld [vmem:[%s769 + $0xb0] sm:$0xff]
        %v3891 = vld [vmem:[%s769 + $0xc0] sm:$0xff]
        %v3892 = vld [vmem:[%s769 + $0xc8] sm:$0xff]
        %v3893 = vld [vmem:[%s769 + $0xd8] sm:$0xff]
        %v3894 = vld [vmem:[%s769 + $0xe0] sm:$0xff]
        %v3895 = vld [vmem:[%s769 + $0xf0] sm:$0xff]
        %v3896 = vld [vmem:[%s769 + $0xf8] sm:$0xff]
        %v3897 = vld [vmem:[%s769 + $0x108] sm:$0xff]
        %v3898 = vld [vmem:[%s769 + $0x110] sm:$0xff]
        %v3899 = vld [vmem:[%s769 + $0x120] sm:$0xff]
        %v3900 = vld [vmem:[%s769 + $0x128] sm:$0xff]
        %v3901 = vld [vmem:[%s769 + $0x138] sm:$0xff]
        %v3902 = vld [vmem:[%s769 + $0x140] sm:$0xff]
        %v3903 = vld [vmem:[%s769 + $0x150] sm:$0xff]
        %v3904 = vld [vmem:[%s769 + $0x158] sm:$0xff]
        %v3905 = vld [vmem:[%s769 + $0x168] sm:$0xff]
        %v3906 = vld [vmem:[%s769 + $0x170] sm:$0xff]
        %3907 = vst [vmem:[#allocation3 + $0x50] sm:$0xff] %v3875
        %3908 = vst [vmem:[#allocation3 + $0x118] sm:$0xff] %v3876
        %3909 = vst [vmem:[#allocation3 + $0x1e0] sm:$0xff] %v3877
        %3910 = vst [vmem:[#allocation3 + $0x2a8] sm:$0xff] %v3878
        %3911 = vst [vmem:[#allocation3 + $0x370] sm:$0xff] %v3879
        %3912 = vst [vmem:[#allocation3 + $0x438] sm:$0xff] %v3880
        %3913 = vst [vmem:[#allocation3 + $0x500] sm:$0xff] %v3881
        %3914 = vst [vmem:[#allocation3 + $0x5c8] sm:$0xff] %v3882
        %3915 = vst [vmem:[#allocation3 + $0x690] sm:$0xff] %v3883
        %3916 = vst [vmem:[#allocation3 + $0x758] sm:$0xff] %v3884
        %3917 = vst [vmem:[#allocation3 + $0x820] sm:$0xff] %v3885
        %3918 = vst [vmem:[#allocation3 + $0x8e8] sm:$0xff] %v3886
        %3919 = vst [vmem:[#allocation3 + $0x9b0] sm:$0xff] %v3887
        %3920 = vst [vmem:[#allocation3 + $0xa78] sm:$0xff] %v3888
        %3921 = vst [vmem:[#allocation3 + $0xb40] sm:$0xff] %v3889
        %3922 = vst [vmem:[#allocation3 + $0xc08] sm:$0xff] %v3890
        %3923 = vst [vmem:[#allocation3 + $0xcd0] sm:$0xff] %v3891
        %3924 = vst [vmem:[#allocation3 + $0xd98] sm:$0xff] %v3892
        %3925 = vst [vmem:[#allocation3 + $0xe60] sm:$0xff] %v3893
        %3926 = vst [vmem:[#allocation3 + $0xf28] sm:$0xff] %v3894
        %3927 = vst [vmem:[#allocation3 + $0xff0] sm:$0xff] %v3895
        %3928 = vst [vmem:[#allocation3 + $0x10b8] sm:$0xff] %v3896
        %3929 = vst [vmem:[#allocation3 + $0x1180] sm:$0xff] %v3897
        %3930 = vst [vmem:[#allocation3 + $0x1248] sm:$0xff] %v3898
        %3931 = vst [vmem:[#allocation3 + $0x1310] sm:$0xff] %v3899
        %3932 = vst [vmem:[#allocation3 + $0x13d8] sm:$0xff] %v3900
        %3933 = vst [vmem:[#allocation3 + $0x14a0] sm:$0xff] %v3901
        %3934 = vst [vmem:[#allocation3 + $0x1568] sm:$0xff] %v3902
        %3935 = vst [vmem:[#allocation3 + $0x1630] sm:$0xff] %v3903
        %3936 = vst [vmem:[#allocation3 + $0x16f8] sm:$0xff] %v3904
        %3937 = vst [vmem:[#allocation3 + $0x17c0] sm:$0xff] %v3905
        %3938 = vst [vmem:[#allocation3 + $0x1888] sm:$0xff] %v3906
        %v3939 = vld [vmem:[%s769 + $0x1] sm:$0xff]
        %v3940 = vld [vmem:[%s769 + $0x9] sm:$0xff]
        %v3941 = vld [vmem:[%s769 + $0x19] sm:$0xff]
        %v3942 = vld [vmem:[%s769 + $0x21] sm:$0xff]
        %v3943 = vld [vmem:[%s769 + $0x31] sm:$0xff]
        %v3944 = vld [vmem:[%s769 + $0x39] sm:$0xff]
        %v3945 = vld [vmem:[%s769 + $0x49] sm:$0xff]
        %v3946 = vld [vmem:[%s769 + $0x51] sm:$0xff]
        %v3947 = vld [vmem:[%s769 + $0x61] sm:$0xff]
        %v3948 = vld [vmem:[%s769 + $0x69] sm:$0xff]
        %v3949 = vld [vmem:[%s769 + $0x79] sm:$0xff]
        %v3950 = vld [vmem:[%s769 + $0x81] sm:$0xff]
        %v3951 = vld [vmem:[%s769 + $0x91] sm:$0xff]
        %v3952 = vld [vmem:[%s769 + $0x99] sm:$0xff]
        %v3953 = vld [vmem:[%s769 + $0xa9] sm:$0xff]
        %v3954 = vld [vmem:[%s769 + $0xb1] sm:$0xff]
        %v3955 = vld [vmem:[%s769 + $0xc1] sm:$0xff]
        %v3956 = vld [vmem:[%s769 + $0xc9] sm:$0xff]
        %v3957 = vld [vmem:[%s769 + $0xd9] sm:$0xff]
        %v3958 = vld [vmem:[%s769 + $0xe1] sm:$0xff]
        %v3959 = vld [vmem:[%s769 + $0xf1] sm:$0xff]
        %v3960 = vld [vmem:[%s769 + $0xf9] sm:$0xff]
        %v3961 = vld [vmem:[%s769 + $0x109] sm:$0xff]
        %v3962 = vld [vmem:[%s769 + $0x111] sm:$0xff]
        %v3963 = vld [vmem:[%s769 + $0x121] sm:$0xff]
        %v3964 = vld [vmem:[%s769 + $0x129] sm:$0xff]
        %v3965 = vld [vmem:[%s769 + $0x139] sm:$0xff]
        %v3966 = vld [vmem:[%s769 + $0x141] sm:$0xff]
        %v3967 = vld [vmem:[%s769 + $0x151] sm:$0xff]
        %v3968 = vld [vmem:[%s769 + $0x159] sm:$0xff]
        %v3969 = vld [vmem:[%s769 + $0x169] sm:$0xff]
        %v3970 = vld [vmem:[%s769 + $0x171] sm:$0xff]
        %3971 = vst [vmem:[#allocation3 + $0x58] sm:$0xff] %v3939
        %3972 = vst [vmem:[#allocation3 + $0x120] sm:$0xff] %v3940
        %3973 = vst [vmem:[#allocation3 + $0x1e8] sm:$0xff] %v3941
        %3974 = vst [vmem:[#allocation3 + $0x2b0] sm:$0xff] %v3942
        %3975 = vst [vmem:[#allocation3 + $0x378] sm:$0xff] %v3943
        %3976 = vst [vmem:[#allocation3 + $0x440] sm:$0xff] %v3944
        %3977 = vst [vmem:[#allocation3 + $0x508] sm:$0xff] %v3945
        %3978 = vst [vmem:[#allocation3 + $0x5d0] sm:$0xff] %v3946
        %3979 = vst [vmem:[#allocation3 + $0x698] sm:$0xff] %v3947
        %3980 = vst [vmem:[#allocation3 + $0x760] sm:$0xff] %v3948
        %3981 = vst [vmem:[#allocation3 + $0x828] sm:$0xff] %v3949
        %3982 = vst [vmem:[#allocation3 + $0x8f0] sm:$0xff] %v3950
        %3983 = vst [vmem:[#allocation3 + $0x9b8] sm:$0xff] %v3951
        %3984 = vst [vmem:[#allocation3 + $0xa80] sm:$0xff] %v3952
        %3985 = vst [vmem:[#allocation3 + $0xb48] sm:$0xff] %v3953
        %3986 = vst [vmem:[#allocation3 + $0xc10] sm:$0xff] %v3954
        %3987 = vst [vmem:[#allocation3 + $0xcd8] sm:$0xff] %v3955
        %3988 = vst [vmem:[#allocation3 + $0xda0] sm:$0xff] %v3956
        %3989 = vst [vmem:[#allocation3 + $0xe68] sm:$0xff] %v3957
        %3990 = vst [vmem:[#allocation3 + $0xf30] sm:$0xff] %v3958
        %3991 = vst [vmem:[#allocation3 + $0xff8] sm:$0xff] %v3959
        %3992 = vst [vmem:[#allocation3 + $0x10c0] sm:$0xff] %v3960
        %3993 = vst [vmem:[#allocation3 + $0x1188] sm:$0xff] %v3961
        %3994 = vst [vmem:[#allocation3 + $0x1250] sm:$0xff] %v3962
        %3995 = vst [vmem:[#allocation3 + $0x1318] sm:$0xff] %v3963
        %3996 = vst [vmem:[#allocation3 + $0x13e0] sm:$0xff] %v3964
        %3997 = vst [vmem:[#allocation3 + $0x14a8] sm:$0xff] %v3965
        %3998 = vst [vmem:[#allocation3 + $0x1570] sm:$0xff] %v3966
        %3999 = vst [vmem:[#allocation3 + $0x1638] sm:$0xff] %v3967
        %4000 = vst [vmem:[#allocation3 + $0x1700] sm:$0xff] %v3968
        %4001 = vst [vmem:[#allocation3 + $0x17c8] sm:$0xff] %v3969
        %4002 = vst [vmem:[#allocation3 + $0x1890] sm:$0xff] %v3970
        %v4003 = vld [vmem:[%s769 + $0x2] sm:$0xff]
        %v4004 = vld [vmem:[%s769 + $0xa] sm:$0xff]
        %v4005 = vld [vmem:[%s769 + $0x1a] sm:$0xff]
        %v4006 = vld [vmem:[%s769 + $0x22] sm:$0xff]
        %v4007 = vld [vmem:[%s769 + $0x32] sm:$0xff]
        %v4008 = vld [vmem:[%s769 + $0x3a] sm:$0xff]
        %v4009 = vld [vmem:[%s769 + $0x4a] sm:$0xff]
        %v4010 = vld [vmem:[%s769 + $0x52] sm:$0xff]
        %v4011 = vld [vmem:[%s769 + $0x62] sm:$0xff]
        %v4012 = vld [vmem:[%s769 + $0x6a] sm:$0xff]
        %v4013 = vld [vmem:[%s769 + $0x7a] sm:$0xff]
        %v4014 = vld [vmem:[%s769 + $0x82] sm:$0xff]
        %v4015 = vld [vmem:[%s769 + $0x92] sm:$0xff]
        %v4016 = vld [vmem:[%s769 + $0x9a] sm:$0xff]
        %v4017 = vld [vmem:[%s769 + $0xaa] sm:$0xff]
        %v4018 = vld [vmem:[%s769 + $0xb2] sm:$0xff]
        %v4019 = vld [vmem:[%s769 + $0xc2] sm:$0xff]
        %v4020 = vld [vmem:[%s769 + $0xca] sm:$0xff]
        %v4021 = vld [vmem:[%s769 + $0xda] sm:$0xff]
        %v4022 = vld [vmem:[%s769 + $0xe2] sm:$0xff]
        %v4023 = vld [vmem:[%s769 + $0xf2] sm:$0xff]
        %v4024 = vld [vmem:[%s769 + $0xfa] sm:$0xff]
        %v4025 = vld [vmem:[%s769 + $0x10a] sm:$0xff]
        %v4026 = vld [vmem:[%s769 + $0x112] sm:$0xff]
        %v4027 = vld [vmem:[%s769 + $0x122] sm:$0xff]
        %v4028 = vld [vmem:[%s769 + $0x12a] sm:$0xff]
        %v4029 = vld [vmem:[%s769 + $0x13a] sm:$0xff]
        %v4030 = vld [vmem:[%s769 + $0x142] sm:$0xff]
        %v4031 = vld [vmem:[%s769 + $0x152] sm:$0xff]
        %v4032 = vld [vmem:[%s769 + $0x15a] sm:$0xff]
        %v4033 = vld [vmem:[%s769 + $0x16a] sm:$0xff]
        %v4034 = vld [vmem:[%s769 + $0x172] sm:$0xff]
        %4035 = vst [vmem:[#allocation3 + $0x60] sm:$0xff] %v4003
        %4036 = vst [vmem:[#allocation3 + $0x128] sm:$0xff] %v4004
        %4037 = vst [vmem:[#allocation3 + $0x1f0] sm:$0xff] %v4005
        %4038 = vst [vmem:[#allocation3 + $0x2b8] sm:$0xff] %v4006
        %4039 = vst [vmem:[#allocation3 + $0x380] sm:$0xff] %v4007
        %4040 = vst [vmem:[#allocation3 + $0x448] sm:$0xff] %v4008
        %4041 = vst [vmem:[#allocation3 + $0x510] sm:$0xff] %v4009
        %4042 = vst [vmem:[#allocation3 + $0x5d8] sm:$0xff] %v4010
        %4043 = vst [vmem:[#allocation3 + $0x6a0] sm:$0xff] %v4011
        %4044 = vst [vmem:[#allocation3 + $0x768] sm:$0xff] %v4012
        %4045 = vst [vmem:[#allocation3 + $0x830] sm:$0xff] %v4013
        %4046 = vst [vmem:[#allocation3 + $0x8f8] sm:$0xff] %v4014
        %4047 = vst [vmem:[#allocation3 + $0x9c0] sm:$0xff] %v4015
        %4048 = vst [vmem:[#allocation3 + $0xa88] sm:$0xff] %v4016
        %4049 = vst [vmem:[#allocation3 + $0xb50] sm:$0xff] %v4017
        %4050 = vst [vmem:[#allocation3 + $0xc18] sm:$0xff] %v4018
        %4051 = vst [vmem:[#allocation3 + $0xce0] sm:$0xff] %v4019
        %4052 = vst [vmem:[#allocation3 + $0xda8] sm:$0xff] %v4020
        %4053 = vst [vmem:[#allocation3 + $0xe70] sm:$0xff] %v4021
        %4054 = vst [vmem:[#allocation3 + $0xf38] sm:$0xff] %v4022
        %4055 = vst [vmem:[#allocation3 + $0x1000] sm:$0xff] %v4023
        %4056 = vst [vmem:[#allocation3 + $0x10c8] sm:$0xff] %v4024
        %4057 = vst [vmem:[#allocation3 + $0x1190] sm:$0xff] %v4025
        %4058 = vst [vmem:[#allocation3 + $0x1258] sm:$0xff] %v4026
        %4059 = vst [vmem:[#allocation3 + $0x1320] sm:$0xff] %v4027
        %4060 = vst [vmem:[#allocation3 + $0x13e8] sm:$0xff] %v4028
        %4061 = vst [vmem:[#allocation3 + $0x14b0] sm:$0xff] %v4029
        %4062 = vst [vmem:[#allocation3 + $0x1578] sm:$0xff] %v4030
        %4063 = vst [vmem:[#allocation3 + $0x1640] sm:$0xff] %v4031
        %4064 = vst [vmem:[#allocation3 + $0x1708] sm:$0xff] %v4032
        %4065 = vst [vmem:[#allocation3 + $0x17d0] sm:$0xff] %v4033
        %4066 = vst [vmem:[#allocation3 + $0x1898] sm:$0xff] %v4034
        %v4067 = vld [vmem:[%s769 + $0x3] sm:$0xff]
        %v4068 = vld [vmem:[%s769 + $0xb] sm:$0xff]
        %v4069 = vld [vmem:[%s769 + $0x1b] sm:$0xff]
        %v4070 = vld [vmem:[%s769 + $0x23] sm:$0xff]
        %v4071 = vld [vmem:[%s769 + $0x33] sm:$0xff]
        %v4072 = vld [vmem:[%s769 + $0x3b] sm:$0xff]
        %v4073 = vld [vmem:[%s769 + $0x4b] sm:$0xff]
        %v4074 = vld [vmem:[%s769 + $0x53] sm:$0xff]
        %v4075 = vld [vmem:[%s769 + $0x63] sm:$0xff]
        %v4076 = vld [vmem:[%s769 + $0x6b] sm:$0xff]
        %v4077 = vld [vmem:[%s769 + $0x7b] sm:$0xff]
        %v4078 = vld [vmem:[%s769 + $0x83] sm:$0xff]
        %v4079 = vld [vmem:[%s769 + $0x93] sm:$0xff]
        %v4080 = vld [vmem:[%s769 + $0x9b] sm:$0xff]
        %v4081 = vld [vmem:[%s769 + $0xab] sm:$0xff]
        %v4082 = vld [vmem:[%s769 + $0xb3] sm:$0xff]
        %v4083 = vld [vmem:[%s769 + $0xc3] sm:$0xff]
        %v4084 = vld [vmem:[%s769 + $0xcb] sm:$0xff]
        %v4085 = vld [vmem:[%s769 + $0xdb] sm:$0xff]
        %v4086 = vld [vmem:[%s769 + $0xe3] sm:$0xff]
        %v4087 = vld [vmem:[%s769 + $0xf3] sm:$0xff]
        %v4088 = vld [vmem:[%s769 + $0xfb] sm:$0xff]
        %v4089 = vld [vmem:[%s769 + $0x10b] sm:$0xff]
        %v4090 = vld [vmem:[%s769 + $0x113] sm:$0xff]
        %v4091 = vld [vmem:[%s769 + $0x123] sm:$0xff]
        %v4092 = vld [vmem:[%s769 + $0x12b] sm:$0xff]
        %v4093 = vld [vmem:[%s769 + $0x13b] sm:$0xff]
        %v4094 = vld [vmem:[%s769 + $0x143] sm:$0xff]
        %v4095 = vld [vmem:[%s769 + $0x153] sm:$0xff]
        %v4096 = vld [vmem:[%s769 + $0x15b] sm:$0xff]
        %v4097 = vld [vmem:[%s769 + $0x16b] sm:$0xff]
        %v4098 = vld [vmem:[%s769 + $0x173] sm:$0xff]
        %4099 = vst [vmem:[#allocation3 + $0x68] sm:$0xff] %v4067
        %4100 = vst [vmem:[#allocation3 + $0x130] sm:$0xff] %v4068
        %4101 = vst [vmem:[#allocation3 + $0x1f8] sm:$0xff] %v4069
        %4102 = vst [vmem:[#allocation3 + $0x2c0] sm:$0xff] %v4070
        %4103 = vst [vmem:[#allocation3 + $0x388] sm:$0xff] %v4071
        %4104 = vst [vmem:[#allocation3 + $0x450] sm:$0xff] %v4072
        %4105 = vst [vmem:[#allocation3 + $0x518] sm:$0xff] %v4073
        %4106 = vst [vmem:[#allocation3 + $0x5e0] sm:$0xff] %v4074
        %4107 = vst [vmem:[#allocation3 + $0x6a8] sm:$0xff] %v4075
        %4108 = vst [vmem:[#allocation3 + $0x770] sm:$0xff] %v4076
        %4109 = vst [vmem:[#allocation3 + $0x838] sm:$0xff] %v4077
        %4110 = vst [vmem:[#allocation3 + $0x900] sm:$0xff] %v4078
        %4111 = vst [vmem:[#allocation3 + $0x9c8] sm:$0xff] %v4079
        %4112 = vst [vmem:[#allocation3 + $0xa90] sm:$0xff] %v4080
        %4113 = vst [vmem:[#allocation3 + $0xb58] sm:$0xff] %v4081
        %4114 = vst [vmem:[#allocation3 + $0xc20] sm:$0xff] %v4082
        %4115 = vst [vmem:[#allocation3 + $0xce8] sm:$0xff] %v4083
        %4116 = vst [vmem:[#allocation3 + $0xdb0] sm:$0xff] %v4084
        %4117 = vst [vmem:[#allocation3 + $0xe78] sm:$0xff] %v4085
        %4118 = vst [vmem:[#allocation3 + $0xf40] sm:$0xff] %v4086
        %4119 = vst [vmem:[#allocation3 + $0x1008] sm:$0xff] %v4087
        %4120 = vst [vmem:[#allocation3 + $0x10d0] sm:$0xff] %v4088
        %4121 = vst [vmem:[#allocation3 + $0x1198] sm:$0xff] %v4089
        %4122 = vst [vmem:[#allocation3 + $0x1260] sm:$0xff] %v4090
        %4123 = vst [vmem:[#allocation3 + $0x1328] sm:$0xff] %v4091
        %4124 = vst [vmem:[#allocation3 + $0x13f0] sm:$0xff] %v4092
        %4125 = vst [vmem:[#allocation3 + $0x14b8] sm:$0xff] %v4093
        %4126 = vst [vmem:[#allocation3 + $0x1580] sm:$0xff] %v4094
        %4127 = vst [vmem:[#allocation3 + $0x1648] sm:$0xff] %v4095
        %4128 = vst [vmem:[#allocation3 + $0x1710] sm:$0xff] %v4096
        %4129 = vst [vmem:[#allocation3 + $0x17d8] sm:$0xff] %v4097
        %4130 = vst [vmem:[#allocation3 + $0x18a0] sm:$0xff] %v4098
        %v4131 = vld [vmem:[%s769 + $0x4] sm:$0xff]
        %v4132 = vld [vmem:[%s769 + $0xc] sm:$0xff]
        %v4133 = vld [vmem:[%s769 + $0x1c] sm:$0xff]
        %v4134 = vld [vmem:[%s769 + $0x24] sm:$0xff]
        %v4135 = vld [vmem:[%s769 + $0x34] sm:$0xff]
        %v4136 = vld [vmem:[%s769 + $0x3c] sm:$0xff]
        %v4137 = vld [vmem:[%s769 + $0x4c] sm:$0xff]
        %v4138 = vld [vmem:[%s769 + $0x54] sm:$0xff]
        %v4139 = vld [vmem:[%s769 + $0x64] sm:$0xff]
        %v4140 = vld [vmem:[%s769 + $0x6c] sm:$0xff]
        %v4141 = vld [vmem:[%s769 + $0x7c] sm:$0xff]
        %v4142 = vld [vmem:[%s769 + $0x84] sm:$0xff]
        %v4143 = vld [vmem:[%s769 + $0x94] sm:$0xff]
        %v4144 = vld [vmem:[%s769 + $0x9c] sm:$0xff]
        %v4145 = vld [vmem:[%s769 + $0xac] sm:$0xff]
        %v4146 = vld [vmem:[%s769 + $0xb4] sm:$0xff]
        %v4147 = vld [vmem:[%s769 + $0xc4] sm:$0xff]
        %v4148 = vld [vmem:[%s769 + $0xcc] sm:$0xff]
        %v4149 = vld [vmem:[%s769 + $0xdc] sm:$0xff]
        %v4150 = vld [vmem:[%s769 + $0xe4] sm:$0xff]
        %v4151 = vld [vmem:[%s769 + $0xf4] sm:$0xff]
        %v4152 = vld [vmem:[%s769 + $0xfc] sm:$0xff]
        %v4153 = vld [vmem:[%s769 + $0x10c] sm:$0xff]
        %v4154 = vld [vmem:[%s769 + $0x114] sm:$0xff]
        %v4155 = vld [vmem:[%s769 + $0x124] sm:$0xff]
        %v4156 = vld [vmem:[%s769 + $0x12c] sm:$0xff]
        %v4157 = vld [vmem:[%s769 + $0x13c] sm:$0xff]
        %v4158 = vld [vmem:[%s769 + $0x144] sm:$0xff]
        %v4159 = vld [vmem:[%s769 + $0x154] sm:$0xff]
        %v4160 = vld [vmem:[%s769 + $0x15c] sm:$0xff]
        %v4161 = vld [vmem:[%s769 + $0x16c] sm:$0xff]
        %v4162 = vld [vmem:[%s769 + $0x174] sm:$0xff]
        %4163 = vst [vmem:[#allocation3 + $0x70] sm:$0xff] %v4131
        %4164 = vst [vmem:[#allocation3 + $0x138] sm:$0xff] %v4132
        %4165 = vst [vmem:[#allocation3 + $0x200] sm:$0xff] %v4133
        %4166 = vst [vmem:[#allocation3 + $0x2c8] sm:$0xff] %v4134
        %4167 = vst [vmem:[#allocation3 + $0x390] sm:$0xff] %v4135
        %4168 = vst [vmem:[#allocation3 + $0x458] sm:$0xff] %v4136
        %4169 = vst [vmem:[#allocation3 + $0x520] sm:$0xff] %v4137
        %4170 = vst [vmem:[#allocation3 + $0x5e8] sm:$0xff] %v4138
        %4171 = vst [vmem:[#allocation3 + $0x6b0] sm:$0xff] %v4139
        %4172 = vst [vmem:[#allocation3 + $0x778] sm:$0xff] %v4140
        %4173 = vst [vmem:[#allocation3 + $0x840] sm:$0xff] %v4141
        %4174 = vst [vmem:[#allocation3 + $0x908] sm:$0xff] %v4142
        %4175 = vst [vmem:[#allocation3 + $0x9d0] sm:$0xff] %v4143
        %4176 = vst [vmem:[#allocation3 + $0xa98] sm:$0xff] %v4144
        %4177 = vst [vmem:[#allocation3 + $0xb60] sm:$0xff] %v4145
        %4178 = vst [vmem:[#allocation3 + $0xc28] sm:$0xff] %v4146
        %4179 = vst [vmem:[#allocation3 + $0xcf0] sm:$0xff] %v4147
        %4180 = vst [vmem:[#allocation3 + $0xdb8] sm:$0xff] %v4148
        %4181 = vst [vmem:[#allocation3 + $0xe80] sm:$0xff] %v4149
        %4182 = vst [vmem:[#allocation3 + $0xf48] sm:$0xff] %v4150
        %4183 = vst [vmem:[#allocation3 + $0x1010] sm:$0xff] %v4151
        %4184 = vst [vmem:[#allocation3 + $0x10d8] sm:$0xff] %v4152
        %4185 = vst [vmem:[#allocation3 + $0x11a0] sm:$0xff] %v4153
        %4186 = vst [vmem:[#allocation3 + $0x1268] sm:$0xff] %v4154
        %4187 = vst [vmem:[#allocation3 + $0x1330] sm:$0xff] %v4155
        %4188 = vst [vmem:[#allocation3 + $0x13f8] sm:$0xff] %v4156
        %4189 = vst [vmem:[#allocation3 + $0x14c0] sm:$0xff] %v4157
        %4190 = vst [vmem:[#allocation3 + $0x1588] sm:$0xff] %v4158
        %4191 = vst [vmem:[#allocation3 + $0x1650] sm:$0xff] %v4159
        %4192 = vst [vmem:[#allocation3 + $0x1718] sm:$0xff] %v4160
        %4193 = vst [vmem:[#allocation3 + $0x17e0] sm:$0xff] %v4161
        %4194 = vst [vmem:[#allocation3 + $0x18a8] sm:$0xff] %v4162
        %v4195 = vld [vmem:[%s1317] sm:$0xff]
        %v4196 = vld [vmem:[%s1317 + $0x8] sm:$0xff]
        %v4197 = vld [vmem:[%s1317 + $0x18] sm:$0xff]
        %v4198 = vld [vmem:[%s1317 + $0x20] sm:$0xff]
        %v4199 = vld [vmem:[%s1317 + $0x30] sm:$0xff]
        %v4200 = vld [vmem:[%s1317 + $0x38] sm:$0xff]
        %v4201 = vld [vmem:[%s1317 + $0x48] sm:$0xff]
        %v4202 = vld [vmem:[%s1317 + $0x50] sm:$0xff]
        %v4203 = vld [vmem:[%s1317 + $0x60] sm:$0xff]
        %v4204 = vld [vmem:[%s1317 + $0x68] sm:$0xff]
        %v4205 = vld [vmem:[%s1317 + $0x78] sm:$0xff]
        %v4206 = vld [vmem:[%s1317 + $0x80] sm:$0xff]
        %v4207 = vld [vmem:[%s1317 + $0x90] sm:$0xff]
        %v4208 = vld [vmem:[%s1317 + $0x98] sm:$0xff]
        %v4209 = vld [vmem:[%s1317 + $0xa8] sm:$0xff]
        %v4210 = vld [vmem:[%s1317 + $0xb0] sm:$0xff]
        %v4211 = vld [vmem:[%s1317 + $0xc0] sm:$0xff]
        %v4212 = vld [vmem:[%s1317 + $0xc8] sm:$0xff]
        %v4213 = vld [vmem:[%s1317 + $0xd8] sm:$0xff]
        %v4214 = vld [vmem:[%s1317 + $0xe0] sm:$0xff]
        %v4215 = vld [vmem:[%s1317 + $0xf0] sm:$0xff]
        %v4216 = vld [vmem:[%s1317 + $0xf8] sm:$0xff]
        %v4217 = vld [vmem:[%s1317 + $0x108] sm:$0xff]
        %v4218 = vld [vmem:[%s1317 + $0x110] sm:$0xff]
        %v4219 = vld [vmem:[%s1317 + $0x120] sm:$0xff]
        %v4220 = vld [vmem:[%s1317 + $0x128] sm:$0xff]
        %v4221 = vld [vmem:[%s1317 + $0x138] sm:$0xff]
        %v4222 = vld [vmem:[%s1317 + $0x140] sm:$0xff]
        %v4223 = vld [vmem:[%s1317 + $0x150] sm:$0xff]
        %v4224 = vld [vmem:[%s1317 + $0x158] sm:$0xff]
        %v4225 = vld [vmem:[%s1317 + $0x168] sm:$0xff]
        %v4226 = vld [vmem:[%s1317 + $0x170] sm:$0xff]
        %4227 = vst [vmem:[#allocation3 + $0x78] sm:$0xff] %v4195
        %4228 = vst [vmem:[#allocation3 + $0x140] sm:$0xff] %v4196
        %4229 = vst [vmem:[#allocation3 + $0x208] sm:$0xff] %v4197
        %4230 = vst [vmem:[#allocation3 + $0x2d0] sm:$0xff] %v4198
        %4231 = vst [vmem:[#allocation3 + $0x398] sm:$0xff] %v4199
        %4232 = vst [vmem:[#allocation3 + $0x460] sm:$0xff] %v4200
        %4233 = vst [vmem:[#allocation3 + $0x528] sm:$0xff] %v4201
        %4234 = vst [vmem:[#allocation3 + $0x5f0] sm:$0xff] %v4202
        %4235 = vst [vmem:[#allocation3 + $0x6b8] sm:$0xff] %v4203
        %4236 = vst [vmem:[#allocation3 + $0x780] sm:$0xff] %v4204
        %4237 = vst [vmem:[#allocation3 + $0x848] sm:$0xff] %v4205
        %4238 = vst [vmem:[#allocation3 + $0x910] sm:$0xff] %v4206
        %4239 = vst [vmem:[#allocation3 + $0x9d8] sm:$0xff] %v4207
        %4240 = vst [vmem:[#allocation3 + $0xaa0] sm:$0xff] %v4208
        %4241 = vst [vmem:[#allocation3 + $0xb68] sm:$0xff] %v4209
        %4242 = vst [vmem:[#allocation3 + $0xc30] sm:$0xff] %v4210
        %4243 = vst [vmem:[#allocation3 + $0xcf8] sm:$0xff] %v4211
        %4244 = vst [vmem:[#allocation3 + $0xdc0] sm:$0xff] %v4212
        %4245 = vst [vmem:[#allocation3 + $0xe88] sm:$0xff] %v4213
        %4246 = vst [vmem:[#allocation3 + $0xf50] sm:$0xff] %v4214
        %4247 = vst [vmem:[#allocation3 + $0x1018] sm:$0xff] %v4215
        %4248 = vst [vmem:[#allocation3 + $0x10e0] sm:$0xff] %v4216
        %4249 = vst [vmem:[#allocation3 + $0x11a8] sm:$0xff] %v4217
        %4250 = vst [vmem:[#allocation3 + $0x1270] sm:$0xff] %v4218
        %4251 = vst [vmem:[#allocation3 + $0x1338] sm:$0xff] %v4219
        %4252 = vst [vmem:[#allocation3 + $0x1400] sm:$0xff] %v4220
        %4253 = vst [vmem:[#allocation3 + $0x14c8] sm:$0xff] %v4221
        %4254 = vst [vmem:[#allocation3 + $0x1590] sm:$0xff] %v4222
        %4255 = vst [vmem:[#allocation3 + $0x1658] sm:$0xff] %v4223
        %4256 = vst [vmem:[#allocation3 + $0x1720] sm:$0xff] %v4224
        %4257 = vst [vmem:[#allocation3 + $0x17e8] sm:$0xff] %v4225
        %4258 = vst [vmem:[#allocation3 + $0x18b0] sm:$0xff] %v4226
        %v4259 = vld [vmem:[%s1317 + $0x1] sm:$0xff]
        %v4260 = vld [vmem:[%s1317 + $0x9] sm:$0xff]
        %v4261 = vld [vmem:[%s1317 + $0x19] sm:$0xff]
        %v4262 = vld [vmem:[%s1317 + $0x21] sm:$0xff]
        %v4263 = vld [vmem:[%s1317 + $0x31] sm:$0xff]
        %v4264 = vld [vmem:[%s1317 + $0x39] sm:$0xff]
        %v4265 = vld [vmem:[%s1317 + $0x49] sm:$0xff]
        %v4266 = vld [vmem:[%s1317 + $0x51] sm:$0xff]
        %v4267 = vld [vmem:[%s1317 + $0x61] sm:$0xff]
        %v4268 = vld [vmem:[%s1317 + $0x69] sm:$0xff]
        %v4269 = vld [vmem:[%s1317 + $0x79] sm:$0xff]
        %v4270 = vld [vmem:[%s1317 + $0x81] sm:$0xff]
        %v4271 = vld [vmem:[%s1317 + $0x91] sm:$0xff]
        %v4272 = vld [vmem:[%s1317 + $0x99] sm:$0xff]
        %v4273 = vld [vmem:[%s1317 + $0xa9] sm:$0xff]
        %v4274 = vld [vmem:[%s1317 + $0xb1] sm:$0xff]
        %v4275 = vld [vmem:[%s1317 + $0xc1] sm:$0xff]
        %v4276 = vld [vmem:[%s1317 + $0xc9] sm:$0xff]
        %v4277 = vld [vmem:[%s1317 + $0xd9] sm:$0xff]
        %v4278 = vld [vmem:[%s1317 + $0xe1] sm:$0xff]
        %v4279 = vld [vmem:[%s1317 + $0xf1] sm:$0xff]
        %v4280 = vld [vmem:[%s1317 + $0xf9] sm:$0xff]
        %v4281 = vld [vmem:[%s1317 + $0x109] sm:$0xff]
        %v4282 = vld [vmem:[%s1317 + $0x111] sm:$0xff]
        %v4283 = vld [vmem:[%s1317 + $0x121] sm:$0xff]
        %v4284 = vld [vmem:[%s1317 + $0x129] sm:$0xff]
        %v4285 = vld [vmem:[%s1317 + $0x139] sm:$0xff]
        %v4286 = vld [vmem:[%s1317 + $0x141] sm:$0xff]
        %v4287 = vld [vmem:[%s1317 + $0x151] sm:$0xff]
        %v4288 = vld [vmem:[%s1317 + $0x159] sm:$0xff]
        %v4289 = vld [vmem:[%s1317 + $0x169] sm:$0xff]
        %v4290 = vld [vmem:[%s1317 + $0x171] sm:$0xff]
        %4291 = vst [vmem:[#allocation3 + $0x80] sm:$0xff] %v4259
        %4292 = vst [vmem:[#allocation3 + $0x148] sm:$0xff] %v4260
        %4293 = vst [vmem:[#allocation3 + $0x210] sm:$0xff] %v4261
        %4294 = vst [vmem:[#allocation3 + $0x2d8] sm:$0xff] %v4262
        %4295 = vst [vmem:[#allocation3 + $0x3a0] sm:$0xff] %v4263
        %4296 = vst [vmem:[#allocation3 + $0x468] sm:$0xff] %v4264
        %4297 = vst [vmem:[#allocation3 + $0x530] sm:$0xff] %v4265
        %4298 = vst [vmem:[#allocation3 + $0x5f8] sm:$0xff] %v4266
        %4299 = vst [vmem:[#allocation3 + $0x6c0] sm:$0xff] %v4267
        %4300 = vst [vmem:[#allocation3 + $0x788] sm:$0xff] %v4268
        %4301 = vst [vmem:[#allocation3 + $0x850] sm:$0xff] %v4269
        %4302 = vst [vmem:[#allocation3 + $0x918] sm:$0xff] %v4270
        %4303 = vst [vmem:[#allocation3 + $0x9e0] sm:$0xff] %v4271
        %4304 = vst [vmem:[#allocation3 + $0xaa8] sm:$0xff] %v4272
        %4305 = vst [vmem:[#allocation3 + $0xb70] sm:$0xff] %v4273
        %4306 = vst [vmem:[#allocation3 + $0xc38] sm:$0xff] %v4274
        %4307 = vst [vmem:[#allocation3 + $0xd00] sm:$0xff] %v4275
        %4308 = vst [vmem:[#allocation3 + $0xdc8] sm:$0xff] %v4276
        %4309 = vst [vmem:[#allocation3 + $0xe90] sm:$0xff] %v4277
        %4310 = vst [vmem:[#allocation3 + $0xf58] sm:$0xff] %v4278
        %4311 = vst [vmem:[#allocation3 + $0x1020] sm:$0xff] %v4279
        %4312 = vst [vmem:[#allocation3 + $0x10e8] sm:$0xff] %v4280
        %4313 = vst [vmem:[#allocation3 + $0x11b0] sm:$0xff] %v4281
        %4314 = vst [vmem:[#allocation3 + $0x1278] sm:$0xff] %v4282
        %4315 = vst [vmem:[#allocation3 + $0x1340] sm:$0xff] %v4283
        %4316 = vst [vmem:[#allocation3 + $0x1408] sm:$0xff] %v4284
        %4317 = vst [vmem:[#allocation3 + $0x14d0] sm:$0xff] %v4285
        %4318 = vst [vmem:[#allocation3 + $0x1598] sm:$0xff] %v4286
        %4319 = vst [vmem:[#allocation3 + $0x1660] sm:$0xff] %v4287
        %4320 = vst [vmem:[#allocation3 + $0x1728] sm:$0xff] %v4288
        %4321 = vst [vmem:[#allocation3 + $0x17f0] sm:$0xff] %v4289
        %4322 = vst [vmem:[#allocation3 + $0x18b8] sm:$0xff] %v4290
        %v4323 = vld [vmem:[%s1317 + $0x2] sm:$0xff]
        %v4324 = vld [vmem:[%s1317 + $0xa] sm:$0xff]
        %v4325 = vld [vmem:[%s1317 + $0x1a] sm:$0xff]
        %v4326 = vld [vmem:[%s1317 + $0x22] sm:$0xff]
        %v4327 = vld [vmem:[%s1317 + $0x32] sm:$0xff]
        %v4328 = vld [vmem:[%s1317 + $0x3a] sm:$0xff]
        %v4329 = vld [vmem:[%s1317 + $0x4a] sm:$0xff]
        %v4330 = vld [vmem:[%s1317 + $0x52] sm:$0xff]
        %v4331 = vld [vmem:[%s1317 + $0x62] sm:$0xff]
        %v4332 = vld [vmem:[%s1317 + $0x6a] sm:$0xff]
        %v4333 = vld [vmem:[%s1317 + $0x7a] sm:$0xff]
        %v4334 = vld [vmem:[%s1317 + $0x82] sm:$0xff]
        %v4335 = vld [vmem:[%s1317 + $0x92] sm:$0xff]
        %v4336 = vld [vmem:[%s1317 + $0x9a] sm:$0xff]
        %v4337 = vld [vmem:[%s1317 + $0xaa] sm:$0xff]
        %v4338 = vld [vmem:[%s1317 + $0xb2] sm:$0xff]
        %v4339 = vld [vmem:[%s1317 + $0xc2] sm:$0xff]
        %v4340 = vld [vmem:[%s1317 + $0xca] sm:$0xff]
        %v4341 = vld [vmem:[%s1317 + $0xda] sm:$0xff]
        %v4342 = vld [vmem:[%s1317 + $0xe2] sm:$0xff]
        %v4343 = vld [vmem:[%s1317 + $0xf2] sm:$0xff]
        %v4344 = vld [vmem:[%s1317 + $0xfa] sm:$0xff]
        %v4345 = vld [vmem:[%s1317 + $0x10a] sm:$0xff]
        %v4346 = vld [vmem:[%s1317 + $0x112] sm:$0xff]
        %v4347 = vld [vmem:[%s1317 + $0x122] sm:$0xff]
        %v4348 = vld [vmem:[%s1317 + $0x12a] sm:$0xff]
        %v4349 = vld [vmem:[%s1317 + $0x13a] sm:$0xff]
        %v4350 = vld [vmem:[%s1317 + $0x142] sm:$0xff]
        %v4351 = vld [vmem:[%s1317 + $0x152] sm:$0xff]
        %v4352 = vld [vmem:[%s1317 + $0x15a] sm:$0xff]
        %v4353 = vld [vmem:[%s1317 + $0x16a] sm:$0xff]
        %v4354 = vld [vmem:[%s1317 + $0x172] sm:$0xff]
        %4355 = vst [vmem:[#allocation3 + $0x88] sm:$0xff] %v4323
        %4356 = vst [vmem:[#allocation3 + $0x150] sm:$0xff] %v4324
        %4357 = vst [vmem:[#allocation3 + $0x218] sm:$0xff] %v4325
        %4358 = vst [vmem:[#allocation3 + $0x2e0] sm:$0xff] %v4326
        %4359 = vst [vmem:[#allocation3 + $0x3a8] sm:$0xff] %v4327
        %4360 = vst [vmem:[#allocation3 + $0x470] sm:$0xff] %v4328
        %4361 = vst [vmem:[#allocation3 + $0x538] sm:$0xff] %v4329
        %4362 = vst [vmem:[#allocation3 + $0x600] sm:$0xff] %v4330
        %4363 = vst [vmem:[#allocation3 + $0x6c8] sm:$0xff] %v4331
        %4364 = vst [vmem:[#allocation3 + $0x790] sm:$0xff] %v4332
        %4365 = vst [vmem:[#allocation3 + $0x858] sm:$0xff] %v4333
        %4366 = vst [vmem:[#allocation3 + $0x920] sm:$0xff] %v4334
        %4367 = vst [vmem:[#allocation3 + $0x9e8] sm:$0xff] %v4335
        %4368 = vst [vmem:[#allocation3 + $0xab0] sm:$0xff] %v4336
        %4369 = vst [vmem:[#allocation3 + $0xb78] sm:$0xff] %v4337
        %4370 = vst [vmem:[#allocation3 + $0xc40] sm:$0xff] %v4338
        %4371 = vst [vmem:[#allocation3 + $0xd08] sm:$0xff] %v4339
        %4372 = vst [vmem:[#allocation3 + $0xdd0] sm:$0xff] %v4340
        %4373 = vst [vmem:[#allocation3 + $0xe98] sm:$0xff] %v4341
        %4374 = vst [vmem:[#allocation3 + $0xf60] sm:$0xff] %v4342
        %4375 = vst [vmem:[#allocation3 + $0x1028] sm:$0xff] %v4343
        %4376 = vst [vmem:[#allocation3 + $0x10f0] sm:$0xff] %v4344
        %4377 = vst [vmem:[#allocation3 + $0x11b8] sm:$0xff] %v4345
        %4378 = vst [vmem:[#allocation3 + $0x1280] sm:$0xff] %v4346
        %4379 = vst [vmem:[#allocation3 + $0x1348] sm:$0xff] %v4347
        %4380 = vst [vmem:[#allocation3 + $0x1410] sm:$0xff] %v4348
        %4381 = vst [vmem:[#allocation3 + $0x14d8] sm:$0xff] %v4349
        %4382 = vst [vmem:[#allocation3 + $0x15a0] sm:$0xff] %v4350
        %4383 = vst [vmem:[#allocation3 + $0x1668] sm:$0xff] %v4351
        %4384 = vst [vmem:[#allocation3 + $0x1730] sm:$0xff] %v4352
        %4385 = vst [vmem:[#allocation3 + $0x17f8] sm:$0xff] %v4353
        %4386 = vst [vmem:[#allocation3 + $0x18c0] sm:$0xff] %v4354
        %v4387 = vld [vmem:[%s1317 + $0x3] sm:$0xff]
        %v4388 = vld [vmem:[%s1317 + $0xb] sm:$0xff]
        %v4389 = vld [vmem:[%s1317 + $0x1b] sm:$0xff]
        %v4390 = vld [vmem:[%s1317 + $0x23] sm:$0xff]
        %v4391 = vld [vmem:[%s1317 + $0x33] sm:$0xff]
        %v4392 = vld [vmem:[%s1317 + $0x3b] sm:$0xff]
        %v4393 = vld [vmem:[%s1317 + $0x4b] sm:$0xff]
        %v4394 = vld [vmem:[%s1317 + $0x53] sm:$0xff]
        %v4395 = vld [vmem:[%s1317 + $0x63] sm:$0xff]
        %v4396 = vld [vmem:[%s1317 + $0x6b] sm:$0xff]
        %v4397 = vld [vmem:[%s1317 + $0x7b] sm:$0xff]
        %v4398 = vld [vmem:[%s1317 + $0x83] sm:$0xff]
        %v4399 = vld [vmem:[%s1317 + $0x93] sm:$0xff]
        %v4400 = vld [vmem:[%s1317 + $0x9b] sm:$0xff]
        %v4401 = vld [vmem:[%s1317 + $0xab] sm:$0xff]
        %v4402 = vld [vmem:[%s1317 + $0xb3] sm:$0xff]
        %v4403 = vld [vmem:[%s1317 + $0xc3] sm:$0xff]
        %v4404 = vld [vmem:[%s1317 + $0xcb] sm:$0xff]
        %v4405 = vld [vmem:[%s1317 + $0xdb] sm:$0xff]
        %v4406 = vld [vmem:[%s1317 + $0xe3] sm:$0xff]
        %v4407 = vld [vmem:[%s1317 + $0xf3] sm:$0xff]
        %v4408 = vld [vmem:[%s1317 + $0xfb] sm:$0xff]
        %v4409 = vld [vmem:[%s1317 + $0x10b] sm:$0xff]
        %v4410 = vld [vmem:[%s1317 + $0x113] sm:$0xff]
        %v4411 = vld [vmem:[%s1317 + $0x123] sm:$0xff]
        %v4412 = vld [vmem:[%s1317 + $0x12b] sm:$0xff]
        %v4413 = vld [vmem:[%s1317 + $0x13b] sm:$0xff]
        %v4414 = vld [vmem:[%s1317 + $0x143] sm:$0xff]
        %v4415 = vld [vmem:[%s1317 + $0x153] sm:$0xff]
        %v4416 = vld [vmem:[%s1317 + $0x15b] sm:$0xff]
        %v4417 = vld [vmem:[%s1317 + $0x16b] sm:$0xff]
        %v4418 = vld [vmem:[%s1317 + $0x173] sm:$0xff]
        %4419 = vst [vmem:[#allocation3 + $0x90] sm:$0xff] %v4387
        %4420 = vst [vmem:[#allocation3 + $0x158] sm:$0xff] %v4388
        %4421 = vst [vmem:[#allocation3 + $0x220] sm:$0xff] %v4389
        %4422 = vst [vmem:[#allocation3 + $0x2e8] sm:$0xff] %v4390
        %4423 = vst [vmem:[#allocation3 + $0x3b0] sm:$0xff] %v4391
        %4424 = vst [vmem:[#allocation3 + $0x478] sm:$0xff] %v4392
        %4425 = vst [vmem:[#allocation3 + $0x540] sm:$0xff] %v4393
        %4426 = vst [vmem:[#allocation3 + $0x608] sm:$0xff] %v4394
        %4427 = vst [vmem:[#allocation3 + $0x6d0] sm:$0xff] %v4395
        %4428 = vst [vmem:[#allocation3 + $0x798] sm:$0xff] %v4396
        %4429 = vst [vmem:[#allocation3 + $0x860] sm:$0xff] %v4397
        %4430 = vst [vmem:[#allocation3 + $0x928] sm:$0xff] %v4398
        %4431 = vst [vmem:[#allocation3 + $0x9f0] sm:$0xff] %v4399
        %4432 = vst [vmem:[#allocation3 + $0xab8] sm:$0xff] %v4400
        %4433 = vst [vmem:[#allocation3 + $0xb80] sm:$0xff] %v4401
        %4434 = vst [vmem:[#allocation3 + $0xc48] sm:$0xff] %v4402
        %4435 = vst [vmem:[#allocation3 + $0xd10] sm:$0xff] %v4403
        %4436 = vst [vmem:[#allocation3 + $0xdd8] sm:$0xff] %v4404
        %4437 = vst [vmem:[#allocation3 + $0xea0] sm:$0xff] %v4405
        %4438 = vst [vmem:[#allocation3 + $0xf68] sm:$0xff] %v4406
        %4439 = vst [vmem:[#allocation3 + $0x1030] sm:$0xff] %v4407
        %4440 = vst [vmem:[#allocation3 + $0x10f8] sm:$0xff] %v4408
        %4441 = vst [vmem:[#allocation3 + $0x11c0] sm:$0xff] %v4409
        %4442 = vst [vmem:[#allocation3 + $0x1288] sm:$0xff] %v4410
        %4443 = vst [vmem:[#allocation3 + $0x1350] sm:$0xff] %v4411
        %4444 = vst [vmem:[#allocation3 + $0x1418] sm:$0xff] %v4412
        %4445 = vst [vmem:[#allocation3 + $0x14e0] sm:$0xff] %v4413
        %4446 = vst [vmem:[#allocation3 + $0x15a8] sm:$0xff] %v4414
        %4447 = vst [vmem:[#allocation3 + $0x1670] sm:$0xff] %v4415
        %4448 = vst [vmem:[#allocation3 + $0x1738] sm:$0xff] %v4416
        %4449 = vst [vmem:[#allocation3 + $0x1800] sm:$0xff] %v4417
        %4450 = vst [vmem:[#allocation3 + $0x18c8] sm:$0xff] %v4418
        %v4451 = vld [vmem:[%s1317 + $0x4] sm:$0xff]
        %v4452 = vld [vmem:[%s1317 + $0xc] sm:$0xff]
        %v4453 = vld [vmem:[%s1317 + $0x1c] sm:$0xff]
        %v4454 = vld [vmem:[%s1317 + $0x24] sm:$0xff]
        %v4455 = vld [vmem:[%s1317 + $0x34] sm:$0xff]
        %v4456 = vld [vmem:[%s1317 + $0x3c] sm:$0xff]
        %v4457 = vld [vmem:[%s1317 + $0x4c] sm:$0xff]
        %v4458 = vld [vmem:[%s1317 + $0x54] sm:$0xff]
        %v4459 = vld [vmem:[%s1317 + $0x64] sm:$0xff]
        %v4460 = vld [vmem:[%s1317 + $0x6c] sm:$0xff]
        %v4461 = vld [vmem:[%s1317 + $0x7c] sm:$0xff]
        %v4462 = vld [vmem:[%s1317 + $0x84] sm:$0xff]
        %v4463 = vld [vmem:[%s1317 + $0x94] sm:$0xff]
        %v4464 = vld [vmem:[%s1317 + $0x9c] sm:$0xff]
        %v4465 = vld [vmem:[%s1317 + $0xac] sm:$0xff]
        %v4466 = vld [vmem:[%s1317 + $0xb4] sm:$0xff]
        %v4467 = vld [vmem:[%s1317 + $0xc4] sm:$0xff]
        %v4468 = vld [vmem:[%s1317 + $0xcc] sm:$0xff]
        %v4469 = vld [vmem:[%s1317 + $0xdc] sm:$0xff]
        %v4470 = vld [vmem:[%s1317 + $0xe4] sm:$0xff]
        %v4471 = vld [vmem:[%s1317 + $0xf4] sm:$0xff]
        %v4472 = vld [vmem:[%s1317 + $0xfc] sm:$0xff]
        %v4473 = vld [vmem:[%s1317 + $0x10c] sm:$0xff]
        %v4474 = vld [vmem:[%s1317 + $0x114] sm:$0xff]
        %v4475 = vld [vmem:[%s1317 + $0x124] sm:$0xff]
        %v4476 = vld [vmem:[%s1317 + $0x12c] sm:$0xff]
        %v4477 = vld [vmem:[%s1317 + $0x13c] sm:$0xff]
        %v4478 = vld [vmem:[%s1317 + $0x144] sm:$0xff]
        %v4479 = vld [vmem:[%s1317 + $0x154] sm:$0xff]
        %v4480 = vld [vmem:[%s1317 + $0x15c] sm:$0xff]
        %v4481 = vld [vmem:[%s1317 + $0x16c] sm:$0xff]
        %v4482 = vld [vmem:[%s1317 + $0x174] sm:$0xff]
        %4483 = vst [vmem:[#allocation3 + $0x98] sm:$0xff] %v4451
        %4484 = vst [vmem:[#allocation3 + $0x160] sm:$0xff] %v4452
        %4485 = vst [vmem:[#allocation3 + $0x228] sm:$0xff] %v4453
        %4486 = vst [vmem:[#allocation3 + $0x2f0] sm:$0xff] %v4454
        %4487 = vst [vmem:[#allocation3 + $0x3b8] sm:$0xff] %v4455
        %4488 = vst [vmem:[#allocation3 + $0x480] sm:$0xff] %v4456
        %4489 = vst [vmem:[#allocation3 + $0x548] sm:$0xff] %v4457
        %4490 = vst [vmem:[#allocation3 + $0x610] sm:$0xff] %v4458
        %4491 = vst [vmem:[#allocation3 + $0x6d8] sm:$0xff] %v4459
        %4492 = vst [vmem:[#allocation3 + $0x7a0] sm:$0xff] %v4460
        %4493 = vst [vmem:[#allocation3 + $0x868] sm:$0xff] %v4461
        %4494 = vst [vmem:[#allocation3 + $0x930] sm:$0xff] %v4462
        %4495 = vst [vmem:[#allocation3 + $0x9f8] sm:$0xff] %v4463
        %4496 = vst [vmem:[#allocation3 + $0xac0] sm:$0xff] %v4464
        %4497 = vst [vmem:[#allocation3 + $0xb88] sm:$0xff] %v4465
        %4498 = vst [vmem:[#allocation3 + $0xc50] sm:$0xff] %v4466
        %4499 = vst [vmem:[#allocation3 + $0xd18] sm:$0xff] %v4467
        %4500 = vst [vmem:[#allocation3 + $0xde0] sm:$0xff] %v4468
        %4501 = vst [vmem:[#allocation3 + $0xea8] sm:$0xff] %v4469
        %4502 = vst [vmem:[#allocation3 + $0xf70] sm:$0xff] %v4470
        %4503 = vst [vmem:[#allocation3 + $0x1038] sm:$0xff] %v4471
        %4504 = vst [vmem:[#allocation3 + $0x1100] sm:$0xff] %v4472
        %4505 = vst [vmem:[#allocation3 + $0x11c8] sm:$0xff] %v4473
        %4506 = vst [vmem:[#allocation3 + $0x1290] sm:$0xff] %v4474
        %4507 = vst [vmem:[#allocation3 + $0x1358] sm:$0xff] %v4475
        %4508 = vst [vmem:[#allocation3 + $0x1420] sm:$0xff] %v4476
        %4509 = vst [vmem:[#allocation3 + $0x14e8] sm:$0xff] %v4477
        %4510 = vst [vmem:[#allocation3 + $0x15b0] sm:$0xff] %v4478
        %4511 = vst [vmem:[#allocation3 + $0x1678] sm:$0xff] %v4479
        %4512 = vst [vmem:[#allocation3 + $0x1740] sm:$0xff] %v4480
        %4513 = vst [vmem:[#allocation3 + $0x1808] sm:$0xff] %v4481
        %4514 = vst [vmem:[#allocation3 + $0x18d0] sm:$0xff] %v4482
        %s4515 = scalar_lea.vmem [#allocation2], 96
        %v4516 = vld [vmem:[%s4515] sm:$0xff]
        %v4517 = vld [vmem:[%s4515 + $0x8] sm:$0xff]
        %v4518 = vld [vmem:[%s4515 + $0x18] sm:$0xff]
        %v4519 = vld [vmem:[%s4515 + $0x20] sm:$0xff]
        %v4520 = vld [vmem:[%s4515 + $0x30] sm:$0xff]
        %v4521 = vld [vmem:[%s4515 + $0x38] sm:$0xff]
        %v4522 = vld [vmem:[%s4515 + $0x48] sm:$0xff]
        %v4523 = vld [vmem:[%s4515 + $0x50] sm:$0xff]
        %v4524 = vld [vmem:[%s4515 + $0x60] sm:$0xff]
        %v4525 = vld [vmem:[%s4515 + $0x68] sm:$0xff]
        %v4526 = vld [vmem:[%s4515 + $0x78] sm:$0xff]
        %v4527 = vld [vmem:[%s4515 + $0x80] sm:$0xff]
        %v4528 = vld [vmem:[%s4515 + $0x90] sm:$0xff]
        %v4529 = vld [vmem:[%s4515 + $0x98] sm:$0xff]
        %v4530 = vld [vmem:[%s4515 + $0xa8] sm:$0xff]
        %v4531 = vld [vmem:[%s4515 + $0xb0] sm:$0xff]
        %v4532 = vld [vmem:[%s4515 + $0xc0] sm:$0xff]
        %v4533 = vld [vmem:[%s4515 + $0xc8] sm:$0xff]
        %v4534 = vld [vmem:[%s4515 + $0xd8] sm:$0xff]
        %v4535 = vld [vmem:[%s4515 + $0xe0] sm:$0xff]
        %v4536 = vld [vmem:[%s4515 + $0xf0] sm:$0xff]
        %v4537 = vld [vmem:[%s4515 + $0xf8] sm:$0xff]
        %v4538 = vld [vmem:[%s4515 + $0x108] sm:$0xff]
        %v4539 = vld [vmem:[%s4515 + $0x110] sm:$0xff]
        %v4540 = vld [vmem:[%s4515 + $0x120] sm:$0xff]
        %v4541 = vld [vmem:[%s4515 + $0x128] sm:$0xff]
        %v4542 = vld [vmem:[%s4515 + $0x138] sm:$0xff]
        %v4543 = vld [vmem:[%s4515 + $0x140] sm:$0xff]
        %v4544 = vld [vmem:[%s4515 + $0x150] sm:$0xff]
        %v4545 = vld [vmem:[%s4515 + $0x158] sm:$0xff]
        %v4546 = vld [vmem:[%s4515 + $0x168] sm:$0xff]
        %v4547 = vld [vmem:[%s4515 + $0x170] sm:$0xff]
        %4548 = vst [vmem:[#allocation3 + $0xa0] sm:$0xff] %v4516
        %4549 = vst [vmem:[#allocation3 + $0x168] sm:$0xff] %v4517
        %4550 = vst [vmem:[#allocation3 + $0x230] sm:$0xff] %v4518
        %4551 = vst [vmem:[#allocation3 + $0x2f8] sm:$0xff] %v4519
        %4552 = vst [vmem:[#allocation3 + $0x3c0] sm:$0xff] %v4520
        %4553 = vst [vmem:[#allocation3 + $0x488] sm:$0xff] %v4521
        %4554 = vst [vmem:[#allocation3 + $0x550] sm:$0xff] %v4522
        %4555 = vst [vmem:[#allocation3 + $0x618] sm:$0xff] %v4523
        %4556 = vst [vmem:[#allocation3 + $0x6e0] sm:$0xff] %v4524
        %4557 = vst [vmem:[#allocation3 + $0x7a8] sm:$0xff] %v4525
        %4558 = vst [vmem:[#allocation3 + $0x870] sm:$0xff] %v4526
        %4559 = vst [vmem:[#allocation3 + $0x938] sm:$0xff] %v4527
        %4560 = vst [vmem:[#allocation3 + $0xa00] sm:$0xff] %v4528
        %4561 = vst [vmem:[#allocation3 + $0xac8] sm:$0xff] %v4529
        %4562 = vst [vmem:[#allocation3 + $0xb90] sm:$0xff] %v4530
        %4563 = vst [vmem:[#allocation3 + $0xc58] sm:$0xff] %v4531
        %4564 = vst [vmem:[#allocation3 + $0xd20] sm:$0xff] %v4532
        %4565 = vst [vmem:[#allocation3 + $0xde8] sm:$0xff] %v4533
        %4566 = vst [vmem:[#allocation3 + $0xeb0] sm:$0xff] %v4534
        %4567 = vst [vmem:[#allocation3 + $0xf78] sm:$0xff] %v4535
        %4568 = vst [vmem:[#allocation3 + $0x1040] sm:$0xff] %v4536
        %4569 = vst [vmem:[#allocation3 + $0x1108] sm:$0xff] %v4537
        %4570 = vst [vmem:[#allocation3 + $0x11d0] sm:$0xff] %v4538
        %4571 = vst [vmem:[#allocation3 + $0x1298] sm:$0xff] %v4539
        %4572 = vst [vmem:[#allocation3 + $0x1360] sm:$0xff] %v4540
        %4573 = vst [vmem:[#allocation3 + $0x1428] sm:$0xff] %v4541
        %4574 = vst [vmem:[#allocation3 + $0x14f0] sm:$0xff] %v4542
        %4575 = vst [vmem:[#allocation3 + $0x15b8] sm:$0xff] %v4543
        %4576 = vst [vmem:[#allocation3 + $0x1680] sm:$0xff] %v4544
        %4577 = vst [vmem:[#allocation3 + $0x1748] sm:$0xff] %v4545
        %4578 = vst [vmem:[#allocation3 + $0x1810] sm:$0xff] %v4546
        %4579 = vst [vmem:[#allocation3 + $0x18d8] sm:$0xff] %v4547
        %v4580 = vld [vmem:[%s4515 + $0x1] sm:$0xff]
        %v4581 = vld [vmem:[%s4515 + $0x9] sm:$0xff]
        %v4582 = vld [vmem:[%s4515 + $0x19] sm:$0xff]
        %v4583 = vld [vmem:[%s4515 + $0x21] sm:$0xff]
        %v4584 = vld [vmem:[%s4515 + $0x31] sm:$0xff]
        %v4585 = vld [vmem:[%s4515 + $0x39] sm:$0xff]
        %v4586 = vld [vmem:[%s4515 + $0x49] sm:$0xff]
        %v4587 = vld [vmem:[%s4515 + $0x51] sm:$0xff]
        %v4588 = vld [vmem:[%s4515 + $0x61] sm:$0xff]
        %v4589 = vld [vmem:[%s4515 + $0x69] sm:$0xff]
        %v4590 = vld [vmem:[%s4515 + $0x79] sm:$0xff]
        %v4591 = vld [vmem:[%s4515 + $0x81] sm:$0xff]
        %v4592 = vld [vmem:[%s4515 + $0x91] sm:$0xff]
        %v4593 = vld [vmem:[%s4515 + $0x99] sm:$0xff]
        %v4594 = vld [vmem:[%s4515 + $0xa9] sm:$0xff]
        %v4595 = vld [vmem:[%s4515 + $0xb1] sm:$0xff]
        %v4596 = vld [vmem:[%s4515 + $0xc1] sm:$0xff]
        %v4597 = vld [vmem:[%s4515 + $0xc9] sm:$0xff]
        %v4598 = vld [vmem:[%s4515 + $0xd9] sm:$0xff]
        %v4599 = vld [vmem:[%s4515 + $0xe1] sm:$0xff]
        %v4600 = vld [vmem:[%s4515 + $0xf1] sm:$0xff]
        %v4601 = vld [vmem:[%s4515 + $0xf9] sm:$0xff]
        %v4602 = vld [vmem:[%s4515 + $0x109] sm:$0xff]
        %v4603 = vld [vmem:[%s4515 + $0x111] sm:$0xff]
        %v4604 = vld [vmem:[%s4515 + $0x121] sm:$0xff]
        %v4605 = vld [vmem:[%s4515 + $0x129] sm:$0xff]
        %v4606 = vld [vmem:[%s4515 + $0x139] sm:$0xff]
        %v4607 = vld [vmem:[%s4515 + $0x141] sm:$0xff]
        %v4608 = vld [vmem:[%s4515 + $0x151] sm:$0xff]
        %v4609 = vld [vmem:[%s4515 + $0x159] sm:$0xff]
        %v4610 = vld [vmem:[%s4515 + $0x169] sm:$0xff]
        %v4611 = vld [vmem:[%s4515 + $0x171] sm:$0xff]
        %4612 = vst [vmem:[#allocation3 + $0xa8] sm:$0xff] %v4580
        %4613 = vst [vmem:[#allocation3 + $0x170] sm:$0xff] %v4581
        %4614 = vst [vmem:[#allocation3 + $0x238] sm:$0xff] %v4582
        %4615 = vst [vmem:[#allocation3 + $0x300] sm:$0xff] %v4583
        %4616 = vst [vmem:[#allocation3 + $0x3c8] sm:$0xff] %v4584
        %4617 = vst [vmem:[#allocation3 + $0x490] sm:$0xff] %v4585
        %4618 = vst [vmem:[#allocation3 + $0x558] sm:$0xff] %v4586
        %4619 = vst [vmem:[#allocation3 + $0x620] sm:$0xff] %v4587
        %4620 = vst [vmem:[#allocation3 + $0x6e8] sm:$0xff] %v4588
        %4621 = vst [vmem:[#allocation3 + $0x7b0] sm:$0xff] %v4589
        %4622 = vst [vmem:[#allocation3 + $0x878] sm:$0xff] %v4590
        %4623 = vst [vmem:[#allocation3 + $0x940] sm:$0xff] %v4591
        %4624 = vst [vmem:[#allocation3 + $0xa08] sm:$0xff] %v4592
        %4625 = vst [vmem:[#allocation3 + $0xad0] sm:$0xff] %v4593
        %4626 = vst [vmem:[#allocation3 + $0xb98] sm:$0xff] %v4594
        %4627 = vst [vmem:[#allocation3 + $0xc60] sm:$0xff] %v4595
        %4628 = vst [vmem:[#allocation3 + $0xd28] sm:$0xff] %v4596
        %4629 = vst [vmem:[#allocation3 + $0xdf0] sm:$0xff] %v4597
        %4630 = vst [vmem:[#allocation3 + $0xeb8] sm:$0xff] %v4598
        %4631 = vst [vmem:[#allocation3 + $0xf80] sm:$0xff] %v4599
        %4632 = vst [vmem:[#allocation3 + $0x1048] sm:$0xff] %v4600
        %4633 = vst [vmem:[#allocation3 + $0x1110] sm:$0xff] %v4601
        %4634 = vst [vmem:[#allocation3 + $0x11d8] sm:$0xff] %v4602
        %4635 = vst [vmem:[#allocation3 + $0x12a0] sm:$0xff] %v4603
        %4636 = vst [vmem:[#allocation3 + $0x1368] sm:$0xff] %v4604
        %4637 = vst [vmem:[#allocation3 + $0x1430] sm:$0xff] %v4605
        %4638 = vst [vmem:[#allocation3 + $0x14f8] sm:$0xff] %v4606
        %4639 = vst [vmem:[#allocation3 + $0x15c0] sm:$0xff] %v4607
        %4640 = vst [vmem:[#allocation3 + $0x1688] sm:$0xff] %v4608
        %4641 = vst [vmem:[#allocation3 + $0x1750] sm:$0xff] %v4609
        %4642 = vst [vmem:[#allocation3 + $0x1818] sm:$0xff] %v4610
        %4643 = vst [vmem:[#allocation3 + $0x18e0] sm:$0xff] %v4611
        %v4644 = vld [vmem:[%s4515 + $0x2] sm:$0xff]
        %v4645 = vld [vmem:[%s4515 + $0xa] sm:$0xff]
        %v4646 = vld [vmem:[%s4515 + $0x1a] sm:$0xff]
        %v4647 = vld [vmem:[%s4515 + $0x22] sm:$0xff]
        %v4648 = vld [vmem:[%s4515 + $0x32] sm:$0xff]
        %v4649 = vld [vmem:[%s4515 + $0x3a] sm:$0xff]
        %v4650 = vld [vmem:[%s4515 + $0x4a] sm:$0xff]
        %v4651 = vld [vmem:[%s4515 + $0x52] sm:$0xff]
        %v4652 = vld [vmem:[%s4515 + $0x62] sm:$0xff]
        %v4653 = vld [vmem:[%s4515 + $0x6a] sm:$0xff]
        %v4654 = vld [vmem:[%s4515 + $0x7a] sm:$0xff]
        %v4655 = vld [vmem:[%s4515 + $0x82] sm:$0xff]
        %v4656 = vld [vmem:[%s4515 + $0x92] sm:$0xff]
        %v4657 = vld [vmem:[%s4515 + $0x9a] sm:$0xff]
        %v4658 = vld [vmem:[%s4515 + $0xaa] sm:$0xff]
        %v4659 = vld [vmem:[%s4515 + $0xb2] sm:$0xff]
        %v4660 = vld [vmem:[%s4515 + $0xc2] sm:$0xff]
        %v4661 = vld [vmem:[%s4515 + $0xca] sm:$0xff]
        %v4662 = vld [vmem:[%s4515 + $0xda] sm:$0xff]
        %v4663 = vld [vmem:[%s4515 + $0xe2] sm:$0xff]
        %v4664 = vld [vmem:[%s4515 + $0xf2] sm:$0xff]
        %v4665 = vld [vmem:[%s4515 + $0xfa] sm:$0xff]
        %v4666 = vld [vmem:[%s4515 + $0x10a] sm:$0xff]
        %v4667 = vld [vmem:[%s4515 + $0x112] sm:$0xff]
        %v4668 = vld [vmem:[%s4515 + $0x122] sm:$0xff]
        %v4669 = vld [vmem:[%s4515 + $0x12a] sm:$0xff]
        %v4670 = vld [vmem:[%s4515 + $0x13a] sm:$0xff]
        %v4671 = vld [vmem:[%s4515 + $0x142] sm:$0xff]
        %v4672 = vld [vmem:[%s4515 + $0x152] sm:$0xff]
        %v4673 = vld [vmem:[%s4515 + $0x15a] sm:$0xff]
        %v4674 = vld [vmem:[%s4515 + $0x16a] sm:$0xff]
        %v4675 = vld [vmem:[%s4515 + $0x172] sm:$0xff]
        %4676 = vst [vmem:[#allocation3 + $0xb0] sm:$0xff] %v4644
        %4677 = vst [vmem:[#allocation3 + $0x178] sm:$0xff] %v4645
        %4678 = vst [vmem:[#allocation3 + $0x240] sm:$0xff] %v4646
        %4679 = vst [vmem:[#allocation3 + $0x308] sm:$0xff] %v4647
        %4680 = vst [vmem:[#allocation3 + $0x3d0] sm:$0xff] %v4648
        %4681 = vst [vmem:[#allocation3 + $0x498] sm:$0xff] %v4649
        %4682 = vst [vmem:[#allocation3 + $0x560] sm:$0xff] %v4650
        %4683 = vst [vmem:[#allocation3 + $0x628] sm:$0xff] %v4651
        %4684 = vst [vmem:[#allocation3 + $0x6f0] sm:$0xff] %v4652
        %4685 = vst [vmem:[#allocation3 + $0x7b8] sm:$0xff] %v4653
        %4686 = vst [vmem:[#allocation3 + $0x880] sm:$0xff] %v4654
        %4687 = vst [vmem:[#allocation3 + $0x948] sm:$0xff] %v4655
        %4688 = vst [vmem:[#allocation3 + $0xa10] sm:$0xff] %v4656
        %4689 = vst [vmem:[#allocation3 + $0xad8] sm:$0xff] %v4657
        %4690 = vst [vmem:[#allocation3 + $0xba0] sm:$0xff] %v4658
        %4691 = vst [vmem:[#allocation3 + $0xc68] sm:$0xff] %v4659
        %4692 = vst [vmem:[#allocation3 + $0xd30] sm:$0xff] %v4660
        %4693 = vst [vmem:[#allocation3 + $0xdf8] sm:$0xff] %v4661
        %4694 = vst [vmem:[#allocation3 + $0xec0] sm:$0xff] %v4662
        %4695 = vst [vmem:[#allocation3 + $0xf88] sm:$0xff] %v4663
        %4696 = vst [vmem:[#allocation3 + $0x1050] sm:$0xff] %v4664
        %4697 = vst [vmem:[#allocation3 + $0x1118] sm:$0xff] %v4665
        %4698 = vst [vmem:[#allocation3 + $0x11e0] sm:$0xff] %v4666
        %4699 = vst [vmem:[#allocation3 + $0x12a8] sm:$0xff] %v4667
        %4700 = vst [vmem:[#allocation3 + $0x1370] sm:$0xff] %v4668
        %4701 = vst [vmem:[#allocation3 + $0x1438] sm:$0xff] %v4669
        %4702 = vst [vmem:[#allocation3 + $0x1500] sm:$0xff] %v4670
        %4703 = vst [vmem:[#allocation3 + $0x15c8] sm:$0xff] %v4671
        %4704 = vst [vmem:[#allocation3 + $0x1690] sm:$0xff] %v4672
        %4705 = vst [vmem:[#allocation3 + $0x1758] sm:$0xff] %v4673
        %4706 = vst [vmem:[#allocation3 + $0x1820] sm:$0xff] %v4674
        %4707 = vst [vmem:[#allocation3 + $0x18e8] sm:$0xff] %v4675
        %v4708 = vld [vmem:[%s4515 + $0x3] sm:$0xff]
        %v4709 = vld [vmem:[%s4515 + $0xb] sm:$0xff]
        %v4710 = vld [vmem:[%s4515 + $0x1b] sm:$0xff]
        %v4711 = vld [vmem:[%s4515 + $0x23] sm:$0xff]
        %v4712 = vld [vmem:[%s4515 + $0x33] sm:$0xff]
        %v4713 = vld [vmem:[%s4515 + $0x3b] sm:$0xff]
        %v4714 = vld [vmem:[%s4515 + $0x4b] sm:$0xff]
        %v4715 = vld [vmem:[%s4515 + $0x53] sm:$0xff]
        %v4716 = vld [vmem:[%s4515 + $0x63] sm:$0xff]
        %v4717 = vld [vmem:[%s4515 + $0x6b] sm:$0xff]
        %v4718 = vld [vmem:[%s4515 + $0x7b] sm:$0xff]
        %v4719 = vld [vmem:[%s4515 + $0x83] sm:$0xff]
        %v4720 = vld [vmem:[%s4515 + $0x93] sm:$0xff]
        %v4721 = vld [vmem:[%s4515 + $0x9b] sm:$0xff]
        %v4722 = vld [vmem:[%s4515 + $0xab] sm:$0xff]
        %v4723 = vld [vmem:[%s4515 + $0xb3] sm:$0xff]
        %v4724 = vld [vmem:[%s4515 + $0xc3] sm:$0xff]
        %v4725 = vld [vmem:[%s4515 + $0xcb] sm:$0xff]
        %v4726 = vld [vmem:[%s4515 + $0xdb] sm:$0xff]
        %v4727 = vld [vmem:[%s4515 + $0xe3] sm:$0xff]
        %v4728 = vld [vmem:[%s4515 + $0xf3] sm:$0xff]
        %v4729 = vld [vmem:[%s4515 + $0xfb] sm:$0xff]
        %v4730 = vld [vmem:[%s4515 + $0x10b] sm:$0xff]
        %v4731 = vld [vmem:[%s4515 + $0x113] sm:$0xff]
        %v4732 = vld [vmem:[%s4515 + $0x123] sm:$0xff]
        %v4733 = vld [vmem:[%s4515 + $0x12b] sm:$0xff]
        %v4734 = vld [vmem:[%s4515 + $0x13b] sm:$0xff]
        %v4735 = vld [vmem:[%s4515 + $0x143] sm:$0xff]
        %v4736 = vld [vmem:[%s4515 + $0x153] sm:$0xff]
        %v4737 = vld [vmem:[%s4515 + $0x15b] sm:$0xff]
        %v4738 = vld [vmem:[%s4515 + $0x16b] sm:$0xff]
        %v4739 = vld [vmem:[%s4515 + $0x173] sm:$0xff]
        %4740 = vst [vmem:[#allocation3 + $0xb8] sm:$0xff] %v4708
        %4741 = vst [vmem:[#allocation3 + $0x180] sm:$0xff] %v4709
        %4742 = vst [vmem:[#allocation3 + $0x248] sm:$0xff] %v4710
        %4743 = vst [vmem:[#allocation3 + $0x310] sm:$0xff] %v4711
        %4744 = vst [vmem:[#allocation3 + $0x3d8] sm:$0xff] %v4712
        %4745 = vst [vmem:[#allocation3 + $0x4a0] sm:$0xff] %v4713
        %4746 = vst [vmem:[#allocation3 + $0x568] sm:$0xff] %v4714
        %4747 = vst [vmem:[#allocation3 + $0x630] sm:$0xff] %v4715
        %4748 = vst [vmem:[#allocation3 + $0x6f8] sm:$0xff] %v4716
        %4749 = vst [vmem:[#allocation3 + $0x7c0] sm:$0xff] %v4717
        %4750 = vst [vmem:[#allocation3 + $0x888] sm:$0xff] %v4718
        %4751 = vst [vmem:[#allocation3 + $0x950] sm:$0xff] %v4719
        %4752 = vst [vmem:[#allocation3 + $0xa18] sm:$0xff] %v4720
        %4753 = vst [vmem:[#allocation3 + $0xae0] sm:$0xff] %v4721
        %4754 = vst [vmem:[#allocation3 + $0xba8] sm:$0xff] %v4722
        %4755 = vst [vmem:[#allocation3 + $0xc70] sm:$0xff] %v4723
        %4756 = vst [vmem:[#allocation3 + $0xd38] sm:$0xff] %v4724
        %4757 = vst [vmem:[#allocation3 + $0xe00] sm:$0xff] %v4725
        %4758 = vst [vmem:[#allocation3 + $0xec8] sm:$0xff] %v4726
        %4759 = vst [vmem:[#allocation3 + $0xf90] sm:$0xff] %v4727
        %4760 = vst [vmem:[#allocation3 + $0x1058] sm:$0xff] %v4728
        %4761 = vst [vmem:[#allocation3 + $0x1120] sm:$0xff] %v4729
        %4762 = vst [vmem:[#allocation3 + $0x11e8] sm:$0xff] %v4730
        %4763 = vst [vmem:[#allocation3 + $0x12b0] sm:$0xff] %v4731
        %4764 = vst [vmem:[#allocation3 + $0x1378] sm:$0xff] %v4732
        %4765 = vst [vmem:[#allocation3 + $0x1440] sm:$0xff] %v4733
        %4766 = vst [vmem:[#allocation3 + $0x1508] sm:$0xff] %v4734
        %4767 = vst [vmem:[#allocation3 + $0x15d0] sm:$0xff] %v4735
        %4768 = vst [vmem:[#allocation3 + $0x1698] sm:$0xff] %v4736
        %4769 = vst [vmem:[#allocation3 + $0x1760] sm:$0xff] %v4737
        %4770 = vst [vmem:[#allocation3 + $0x1828] sm:$0xff] %v4738
        %4771 = vst [vmem:[#allocation3 + $0x18f0] sm:$0xff] %v4739
        %v4772 = vld [vmem:[%s4515 + $0x4] sm:$0xff]
        %v4773 = vld [vmem:[%s4515 + $0xc] sm:$0xff]
        %v4774 = vld [vmem:[%s4515 + $0x1c] sm:$0xff]
        %v4775 = vld [vmem:[%s4515 + $0x24] sm:$0xff]
        %v4776 = vld [vmem:[%s4515 + $0x34] sm:$0xff]
        %v4777 = vld [vmem:[%s4515 + $0x3c] sm:$0xff]
        %v4778 = vld [vmem:[%s4515 + $0x4c] sm:$0xff]
        %v4779 = vld [vmem:[%s4515 + $0x54] sm:$0xff]
        %v4780 = vld [vmem:[%s4515 + $0x64] sm:$0xff]
        %v4781 = vld [vmem:[%s4515 + $0x6c] sm:$0xff]
        %v4782 = vld [vmem:[%s4515 + $0x7c] sm:$0xff]
        %v4783 = vld [vmem:[%s4515 + $0x84] sm:$0xff]
        %v4784 = vld [vmem:[%s4515 + $0x94] sm:$0xff]
        %v4785 = vld [vmem:[%s4515 + $0x9c] sm:$0xff]
        %v4786 = vld [vmem:[%s4515 + $0xac] sm:$0xff]
        %v4787 = vld [vmem:[%s4515 + $0xb4] sm:$0xff]
        %v4788 = vld [vmem:[%s4515 + $0xc4] sm:$0xff]
        %v4789 = vld [vmem:[%s4515 + $0xcc] sm:$0xff]
        %v4790 = vld [vmem:[%s4515 + $0xdc] sm:$0xff]
        %v4791 = vld [vmem:[%s4515 + $0xe4] sm:$0xff]
        %v4792 = vld [vmem:[%s4515 + $0xf4] sm:$0xff]
        %v4793 = vld [vmem:[%s4515 + $0xfc] sm:$0xff]
        %v4794 = vld [vmem:[%s4515 + $0x10c] sm:$0xff]
        %v4795 = vld [vmem:[%s4515 + $0x114] sm:$0xff]
        %v4796 = vld [vmem:[%s4515 + $0x124] sm:$0xff]
        %v4797 = vld [vmem:[%s4515 + $0x12c] sm:$0xff]
        %v4798 = vld [vmem:[%s4515 + $0x13c] sm:$0xff]
        %v4799 = vld [vmem:[%s4515 + $0x144] sm:$0xff]
        %v4800 = vld [vmem:[%s4515 + $0x154] sm:$0xff]
        %v4801 = vld [vmem:[%s4515 + $0x15c] sm:$0xff]
        %v4802 = vld [vmem:[%s4515 + $0x16c] sm:$0xff]
        %v4803 = vld [vmem:[%s4515 + $0x174] sm:$0xff]
        %4804 = vst [vmem:[#allocation3 + $0xc0] sm:$0xff] %v4772
        %4805 = vst [vmem:[#allocation3 + $0x188] sm:$0xff] %v4773
        %4806 = vst [vmem:[#allocation3 + $0x250] sm:$0xff] %v4774
        %4807 = vst [vmem:[#allocation3 + $0x318] sm:$0xff] %v4775
        %4808 = vst [vmem:[#allocation3 + $0x3e0] sm:$0xff] %v4776
        %4809 = vst [vmem:[#allocation3 + $0x4a8] sm:$0xff] %v4777
        %4810 = vst [vmem:[#allocation3 + $0x570] sm:$0xff] %v4778
        %4811 = vst [vmem:[#allocation3 + $0x638] sm:$0xff] %v4779
        %4812 = vst [vmem:[#allocation3 + $0x700] sm:$0xff] %v4780
        %4813 = vst [vmem:[#allocation3 + $0x7c8] sm:$0xff] %v4781
        %4814 = vst [vmem:[#allocation3 + $0x890] sm:$0xff] %v4782
        %4815 = vst [vmem:[#allocation3 + $0x958] sm:$0xff] %v4783
        %4816 = vst [vmem:[#allocation3 + $0xa20] sm:$0xff] %v4784
        %4817 = vst [vmem:[#allocation3 + $0xae8] sm:$0xff] %v4785
        %4818 = vst [vmem:[#allocation3 + $0xbb0] sm:$0xff] %v4786
        %4819 = vst [vmem:[#allocation3 + $0xc78] sm:$0xff] %v4787
        %4820 = vst [vmem:[#allocation3 + $0xd40] sm:$0xff] %v4788
        %4821 = vst [vmem:[#allocation3 + $0xe08] sm:$0xff] %v4789
        %4822 = vst [vmem:[#allocation3 + $0xed0] sm:$0xff] %v4790
        %4823 = vst [vmem:[#allocation3 + $0xf98] sm:$0xff] %v4791
        %4824 = vst [vmem:[#allocation3 + $0x1060] sm:$0xff] %v4792
        %4825 = vst [vmem:[#allocation3 + $0x1128] sm:$0xff] %v4793
        %4826 = vst [vmem:[#allocation3 + $0x11f0] sm:$0xff] %v4794
        %4827 = vst [vmem:[#allocation3 + $0x12b8] sm:$0xff] %v4795
        %4828 = vst [vmem:[#allocation3 + $0x1380] sm:$0xff] %v4796
        %4829 = vst [vmem:[#allocation3 + $0x1448] sm:$0xff] %v4797
        %4830 = vst [vmem:[#allocation3 + $0x1510] sm:$0xff] %v4798
        %4831 = vst [vmem:[#allocation3 + $0x15d8] sm:$0xff] %v4799
        %4832 = vst [vmem:[#allocation3 + $0x16a0] sm:$0xff] %v4800
        %4833 = vst [vmem:[#allocation3 + $0x1768] sm:$0xff] %v4801
        %4834 = vst [vmem:[#allocation3 + $0x1830] sm:$0xff] %v4802
        %4835 = vst [vmem:[#allocation3 + $0x18f8] sm:$0xff] %v4803
        %v4836 = vld [vmem:[#allocation3] sm:$0xff]
        %v4837 = vld [vmem:[#allocation3 + $0x8] sm:$0xff]
        %v4838 = vld [vmem:[#allocation3 + $0x10] sm:$0xff]
        %v4839 = vld [vmem:[#allocation3 + $0x18] sm:$0xff]
        %v4840 = vld [vmem:[#allocation3 + $0x20] sm:$0xff]
        %v4841 = vld [vmem:[#allocation3 + $0x28] sm:$0xff]
        %v4842 = vld [vmem:[#allocation3 + $0x30] sm:$0xff]
        %v4843 = vld [vmem:[#allocation3 + $0x38] sm:$0xff]
        %v4844 = vld [vmem:[#allocation3 + $0x40] sm:$0xff]
        %v4845 = vld [vmem:[#allocation3 + $0x48] sm:$0xff]
        %v4846 = vld [vmem:[#allocation3 + $0x50] sm:$0xff]
        %v4847 = vld [vmem:[#allocation3 + $0x58] sm:$0xff]
        %v4848 = vld [vmem:[#allocation3 + $0x60] sm:$0xff]
        %v4849 = vld [vmem:[#allocation3 + $0x68] sm:$0xff]
        %v4850 = vld [vmem:[#allocation3 + $0x70] sm:$0xff]
        %v4851 = vld [vmem:[#allocation3 + $0x78] sm:$0xff]
        %v4852 = vld [vmem:[#allocation3 + $0x80] sm:$0xff]
        %v4853 = vld [vmem:[#allocation3 + $0x88] sm:$0xff]
        %v4854 = vld [vmem:[#allocation3 + $0x90] sm:$0xff]
        %v4855 = vld [vmem:[#allocation3 + $0x98] sm:$0xff]
        %v4856 = vld [vmem:[#allocation3 + $0xa0] sm:$0xff]
        %v4857 = vld [vmem:[#allocation3 + $0xa8] sm:$0xff]
        %v4858 = vld [vmem:[#allocation3 + $0xb0] sm:$0xff]
        %v4859 = vld [vmem:[#allocation3 + $0xb8] sm:$0xff]
        %v4860 = vld [vmem:[#allocation3 + $0xc0] sm:$0xff]
        %v4861 = vld [vmem:[#allocation3 + $0xc8] sm:$0xff]
        %v4862 = vld [vmem:[#allocation3 + $0xd0] sm:$0xff]
        %v4863 = vld [vmem:[#allocation3 + $0xd8] sm:$0xff]
        %v4864 = vld [vmem:[#allocation3 + $0xe0] sm:$0xff]
        %v4865 = vld [vmem:[#allocation3 + $0xe8] sm:$0xff]
        %v4866 = vld [vmem:[#allocation3 + $0xf0] sm:$0xff]
        %v4867 = vld [vmem:[#allocation3 + $0xf8] sm:$0xff]
        %v4868 = vld [vmem:[#allocation3 + $0x100] sm:$0xff]
        %v4869 = vld [vmem:[#allocation3 + $0x108] sm:$0xff]
        %v4870 = vld [vmem:[#allocation3 + $0x110] sm:$0xff]
        %v4871 = vld [vmem:[#allocation3 + $0x118] sm:$0xff]
        %v4872 = vld [vmem:[#allocation3 + $0x120] sm:$0xff]
        %v4873 = vld [vmem:[#allocation3 + $0x128] sm:$0xff]
        %v4874 = vld [vmem:[#allocation3 + $0x130] sm:$0xff]
        %v4875 = vld [vmem:[#allocation3 + $0x138] sm:$0xff]
        %v4876 = vld [vmem:[#allocation3 + $0x140] sm:$0xff]
        %v4877 = vld [vmem:[#allocation3 + $0x148] sm:$0xff]
        %v4878 = vld [vmem:[#allocation3 + $0x150] sm:$0xff]
        %v4879 = vld [vmem:[#allocation3 + $0x158] sm:$0xff]
        %v4880 = vld [vmem:[#allocation3 + $0x160] sm:$0xff]
        %v4881 = vld [vmem:[#allocation3 + $0x168] sm:$0xff]
        %v4882 = vld [vmem:[#allocation3 + $0x170] sm:$0xff]
        %v4883 = vld [vmem:[#allocation3 + $0x178] sm:$0xff]
        %v4884 = vld [vmem:[#allocation3 + $0x180] sm:$0xff]
        %v4885 = vld [vmem:[#allocation3 + $0x188] sm:$0xff]
        %v4886 = vld [vmem:[#allocation3 + $0x190] sm:$0xff]
        %v4887 = vld [vmem:[#allocation3 + $0x198] sm:$0xff]
        %v4888 = vld [vmem:[#allocation3 + $0x1a0] sm:$0xff]
        %v4889 = vld [vmem:[#allocation3 + $0x1a8] sm:$0xff]
        %v4890 = vld [vmem:[#allocation3 + $0x1b0] sm:$0xff]
        %v4891 = vld [vmem:[#allocation3 + $0x1b8] sm:$0xff]
        %v4892 = vld [vmem:[#allocation3 + $0x1c0] sm:$0xff]
        %v4893 = vld [vmem:[#allocation3 + $0x1c8] sm:$0xff]
        %v4894 = vld [vmem:[#allocation3 + $0x1d0] sm:$0xff]
        %v4895 = vld [vmem:[#allocation3 + $0x1d8] sm:$0xff]
        %v4896 = vld [vmem:[#allocation3 + $0x1e0] sm:$0xff]
        %v4897 = vld [vmem:[#allocation3 + $0x1e8] sm:$0xff]
        %v4898 = vld [vmem:[#allocation3 + $0x1f0] sm:$0xff]
        %v4899 = vld [vmem:[#allocation3 + $0x1f8] sm:$0xff]
        %v4900 = vld [vmem:[#allocation3 + $0x200] sm:$0xff]
        %v4901 = vld [vmem:[#allocation3 + $0x208] sm:$0xff]
        %v4902 = vld [vmem:[#allocation3 + $0x210] sm:$0xff]
        %v4903 = vld [vmem:[#allocation3 + $0x218] sm:$0xff]
        %v4904 = vld [vmem:[#allocation3 + $0x220] sm:$0xff]
        %v4905 = vld [vmem:[#allocation3 + $0x228] sm:$0xff]
        %v4906 = vld [vmem:[#allocation3 + $0x230] sm:$0xff]
        %v4907 = vld [vmem:[#allocation3 + $0x238] sm:$0xff]
        %v4908 = vld [vmem:[#allocation3 + $0x240] sm:$0xff]
        %v4909 = vld [vmem:[#allocation3 + $0x248] sm:$0xff]
        %v4910 = vld [vmem:[#allocation3 + $0x250] sm:$0xff]
        %v4911 = vld [vmem:[#allocation3 + $0x258] sm:$0xff]
        %v4912 = vld [vmem:[#allocation3 + $0x260] sm:$0xff]
        %v4913 = vld [vmem:[#allocation3 + $0x268] sm:$0xff]
        %v4914 = vld [vmem:[#allocation3 + $0x270] sm:$0xff]
        %v4915 = vld [vmem:[#allocation3 + $0x278] sm:$0xff]
        %v4916 = vld [vmem:[#allocation3 + $0x280] sm:$0xff]
        %v4917 = vld [vmem:[#allocation3 + $0x288] sm:$0xff]
        %v4918 = vld [vmem:[#allocation3 + $0x290] sm:$0xff]
        %v4919 = vld [vmem:[#allocation3 + $0x298] sm:$0xff]
        %v4920 = vld [vmem:[#allocation3 + $0x2a0] sm:$0xff]
        %v4921 = vld [vmem:[#allocation3 + $0x2a8] sm:$0xff]
        %v4922 = vld [vmem:[#allocation3 + $0x2b0] sm:$0xff]
        %v4923 = vld [vmem:[#allocation3 + $0x2b8] sm:$0xff]
        %v4924 = vld [vmem:[#allocation3 + $0x2c0] sm:$0xff]
        %v4925 = vld [vmem:[#allocation3 + $0x2c8] sm:$0xff]
        %v4926 = vld [vmem:[#allocation3 + $0x2d0] sm:$0xff]
        %v4927 = vld [vmem:[#allocation3 + $0x2d8] sm:$0xff]
        %v4928 = vld [vmem:[#allocation3 + $0x2e0] sm:$0xff]
        %v4929 = vld [vmem:[#allocation3 + $0x2e8] sm:$0xff]
        %v4930 = vld [vmem:[#allocation3 + $0x2f0] sm:$0xff]
        %v4931 = vld [vmem:[#allocation3 + $0x2f8] sm:$0xff]
        %v4932 = vld [vmem:[#allocation3 + $0x300] sm:$0xff]
        %v4933 = vld [vmem:[#allocation3 + $0x308] sm:$0xff]
        %v4934 = vld [vmem:[#allocation3 + $0x310] sm:$0xff]
        %v4935 = vld [vmem:[#allocation3 + $0x318] sm:$0xff]
        %v4936 = vld [vmem:[#allocation3 + $0x320] sm:$0xff]
        %v4937 = vld [vmem:[#allocation3 + $0x328] sm:$0xff]
        %v4938 = vld [vmem:[#allocation3 + $0x330] sm:$0xff]
        %v4939 = vld [vmem:[#allocation3 + $0x338] sm:$0xff]
        %v4940 = vld [vmem:[#allocation3 + $0x340] sm:$0xff]
        %v4941 = vld [vmem:[#allocation3 + $0x348] sm:$0xff]
        %v4942 = vld [vmem:[#allocation3 + $0x350] sm:$0xff]
        %v4943 = vld [vmem:[#allocation3 + $0x358] sm:$0xff]
        %v4944 = vld [vmem:[#allocation3 + $0x360] sm:$0xff]
        %v4945 = vld [vmem:[#allocation3 + $0x368] sm:$0xff]
        %v4946 = vld [vmem:[#allocation3 + $0x370] sm:$0xff]
        %v4947 = vld [vmem:[#allocation3 + $0x378] sm:$0xff]
        %v4948 = vld [vmem:[#allocation3 + $0x380] sm:$0xff]
        %v4949 = vld [vmem:[#allocation3 + $0x388] sm:$0xff]
        %v4950 = vld [vmem:[#allocation3 + $0x390] sm:$0xff]
        %v4951 = vld [vmem:[#allocation3 + $0x398] sm:$0xff]
        %v4952 = vld [vmem:[#allocation3 + $0x3a0] sm:$0xff]
        %v4953 = vld [vmem:[#allocation3 + $0x3a8] sm:$0xff]
        %v4954 = vld [vmem:[#allocation3 + $0x3b0] sm:$0xff]
        %v4955 = vld [vmem:[#allocation3 + $0x3b8] sm:$0xff]
        %v4956 = vld [vmem:[#allocation3 + $0x3c0] sm:$0xff]
        %v4957 = vld [vmem:[#allocation3 + $0x3c8] sm:$0xff]
        %v4958 = vld [vmem:[#allocation3 + $0x3d0] sm:$0xff]
        %v4959 = vld [vmem:[#allocation3 + $0x3d8] sm:$0xff]
        %v4960 = vld [vmem:[#allocation3 + $0x3e0] sm:$0xff]
        %v4961 = vld [vmem:[#allocation3 + $0x3e8] sm:$0xff]
        %v4962 = vld [vmem:[#allocation3 + $0x3f0] sm:$0xff]
        %v4963 = vld [vmem:[#allocation3 + $0x3f8] sm:$0xff]
        %v4964 = vld [vmem:[#allocation3 + $0x400] sm:$0xff]
        %v4965 = vld [vmem:[#allocation3 + $0x408] sm:$0xff]
        %v4966 = vld [vmem:[#allocation3 + $0x410] sm:$0xff]
        %v4967 = vld [vmem:[#allocation3 + $0x418] sm:$0xff]
        %v4968 = vld [vmem:[#allocation3 + $0x420] sm:$0xff]
        %v4969 = vld [vmem:[#allocation3 + $0x428] sm:$0xff]
        %v4970 = vld [vmem:[#allocation3 + $0x430] sm:$0xff]
        %v4971 = vld [vmem:[#allocation3 + $0x438] sm:$0xff]
        %v4972 = vld [vmem:[#allocation3 + $0x440] sm:$0xff]
        %v4973 = vld [vmem:[#allocation3 + $0x448] sm:$0xff]
        %v4974 = vld [vmem:[#allocation3 + $0x450] sm:$0xff]
        %v4975 = vld [vmem:[#allocation3 + $0x458] sm:$0xff]
        %v4976 = vld [vmem:[#allocation3 + $0x460] sm:$0xff]
        %v4977 = vld [vmem:[#allocation3 + $0x468] sm:$0xff]
        %v4978 = vld [vmem:[#allocation3 + $0x470] sm:$0xff]
        %v4979 = vld [vmem:[#allocation3 + $0x478] sm:$0xff]
        %v4980 = vld [vmem:[#allocation3 + $0x480] sm:$0xff]
        %v4981 = vld [vmem:[#allocation3 + $0x488] sm:$0xff]
        %v4982 = vld [vmem:[#allocation3 + $0x490] sm:$0xff]
        %v4983 = vld [vmem:[#allocation3 + $0x498] sm:$0xff]
        %v4984 = vld [vmem:[#allocation3 + $0x4a0] sm:$0xff]
        %v4985 = vld [vmem:[#allocation3 + $0x4a8] sm:$0xff]
        %v4986 = vld [vmem:[#allocation3 + $0x4b0] sm:$0xff]
        %v4987 = vld [vmem:[#allocation3 + $0x4b8] sm:$0xff]
        %v4988 = vld [vmem:[#allocation3 + $0x4c0] sm:$0xff]
        %v4989 = vld [vmem:[#allocation3 + $0x4c8] sm:$0xff]
        %v4990 = vld [vmem:[#allocation3 + $0x4d0] sm:$0xff]
        %v4991 = vld [vmem:[#allocation3 + $0x4d8] sm:$0xff]
        %v4992 = vld [vmem:[#allocation3 + $0x4e0] sm:$0xff]
        %v4993 = vld [vmem:[#allocation3 + $0x4e8] sm:$0xff]
        %v4994 = vld [vmem:[#allocation3 + $0x4f0] sm:$0xff]
        %v4995 = vld [vmem:[#allocation3 + $0x4f8] sm:$0xff]
        %v4996 = vld [vmem:[#allocation3 + $0x500] sm:$0xff]
        %v4997 = vld [vmem:[#allocation3 + $0x508] sm:$0xff]
        %v4998 = vld [vmem:[#allocation3 + $0x510] sm:$0xff]
        %v4999 = vld [vmem:[#allocation3 + $0x518] sm:$0xff]
        %v5000 = vld [vmem:[#allocation3 + $0x520] sm:$0xff]
        %v5001 = vld [vmem:[#allocation3 + $0x528] sm:$0xff]
        %v5002 = vld [vmem:[#allocation3 + $0x530] sm:$0xff]
        %v5003 = vld [vmem:[#allocation3 + $0x538] sm:$0xff]
        %v5004 = vld [vmem:[#allocation3 + $0x540] sm:$0xff]
        %v5005 = vld [vmem:[#allocation3 + $0x548] sm:$0xff]
        %v5006 = vld [vmem:[#allocation3 + $0x550] sm:$0xff]
        %v5007 = vld [vmem:[#allocation3 + $0x558] sm:$0xff]
        %v5008 = vld [vmem:[#allocation3 + $0x560] sm:$0xff]
        %v5009 = vld [vmem:[#allocation3 + $0x568] sm:$0xff]
        %v5010 = vld [vmem:[#allocation3 + $0x570] sm:$0xff]
        %v5011 = vld [vmem:[#allocation3 + $0x578] sm:$0xff]
        %v5012 = vld [vmem:[#allocation3 + $0x580] sm:$0xff]
        %v5013 = vld [vmem:[#allocation3 + $0x588] sm:$0xff]
        %v5014 = vld [vmem:[#allocation3 + $0x590] sm:$0xff]
        %v5015 = vld [vmem:[#allocation3 + $0x598] sm:$0xff]
        %v5016 = vld [vmem:[#allocation3 + $0x5a0] sm:$0xff]
        %v5017 = vld [vmem:[#allocation3 + $0x5a8] sm:$0xff]
        %v5018 = vld [vmem:[#allocation3 + $0x5b0] sm:$0xff]
        %v5019 = vld [vmem:[#allocation3 + $0x5b8] sm:$0xff]
        %v5020 = vld [vmem:[#allocation3 + $0x5c0] sm:$0xff]
        %v5021 = vld [vmem:[#allocation3 + $0x5c8] sm:$0xff]
        %v5022 = vld [vmem:[#allocation3 + $0x5d0] sm:$0xff]
        %v5023 = vld [vmem:[#allocation3 + $0x5d8] sm:$0xff]
        %v5024 = vld [vmem:[#allocation3 + $0x5e0] sm:$0xff]
        %v5025 = vld [vmem:[#allocation3 + $0x5e8] sm:$0xff]
        %v5026 = vld [vmem:[#allocation3 + $0x5f0] sm:$0xff]
        %v5027 = vld [vmem:[#allocation3 + $0x5f8] sm:$0xff]
        %v5028 = vld [vmem:[#allocation3 + $0x600] sm:$0xff]
        %v5029 = vld [vmem:[#allocation3 + $0x608] sm:$0xff]
        %v5030 = vld [vmem:[#allocation3 + $0x610] sm:$0xff]
        %v5031 = vld [vmem:[#allocation3 + $0x618] sm:$0xff]
        %v5032 = vld [vmem:[#allocation3 + $0x620] sm:$0xff]
        %v5033 = vld [vmem:[#allocation3 + $0x628] sm:$0xff]
        %v5034 = vld [vmem:[#allocation3 + $0x630] sm:$0xff]
        %v5035 = vld [vmem:[#allocation3 + $0x638] sm:$0xff]
        %v5036 = vld [vmem:[#allocation3 + $0x640] sm:$0xff]
        %v5037 = vld [vmem:[#allocation3 + $0x648] sm:$0xff]
        %v5038 = vld [vmem:[#allocation3 + $0x650] sm:$0xff]
        %v5039 = vld [vmem:[#allocation3 + $0x658] sm:$0xff]
        %v5040 = vld [vmem:[#allocation3 + $0x660] sm:$0xff]
        %v5041 = vld [vmem:[#allocation3 + $0x668] sm:$0xff]
        %v5042 = vld [vmem:[#allocation3 + $0x670] sm:$0xff]
        %v5043 = vld [vmem:[#allocation3 + $0x678] sm:$0xff]
        %v5044 = vld [vmem:[#allocation3 + $0x680] sm:$0xff]
        %v5045 = vld [vmem:[#allocation3 + $0x688] sm:$0xff]
        %v5046 = vld [vmem:[#allocation3 + $0x690] sm:$0xff]
        %v5047 = vld [vmem:[#allocation3 + $0x698] sm:$0xff]
        %v5048 = vld [vmem:[#allocation3 + $0x6a0] sm:$0xff]
        %v5049 = vld [vmem:[#allocation3 + $0x6a8] sm:$0xff]
        %v5050 = vld [vmem:[#allocation3 + $0x6b0] sm:$0xff]
        %v5051 = vld [vmem:[#allocation3 + $0x6b8] sm:$0xff]
        %v5052 = vld [vmem:[#allocation3 + $0x6c0] sm:$0xff]
        %v5053 = vld [vmem:[#allocation3 + $0x6c8] sm:$0xff]
        %v5054 = vld [vmem:[#allocation3 + $0x6d0] sm:$0xff]
        %v5055 = vld [vmem:[#allocation3 + $0x6d8] sm:$0xff]
        %v5056 = vld [vmem:[#allocation3 + $0x6e0] sm:$0xff]
        %v5057 = vld [vmem:[#allocation3 + $0x6e8] sm:$0xff]
        %v5058 = vld [vmem:[#allocation3 + $0x6f0] sm:$0xff]
        %v5059 = vld [vmem:[#allocation3 + $0x6f8] sm:$0xff]
        %v5060 = vld [vmem:[#allocation3 + $0x700] sm:$0xff]
        %v5061 = vld [vmem:[#allocation3 + $0x708] sm:$0xff]
        %v5062 = vld [vmem:[#allocation3 + $0x710] sm:$0xff]
        %v5063 = vld [vmem:[#allocation3 + $0x718] sm:$0xff]
        %v5064 = vld [vmem:[#allocation3 + $0x720] sm:$0xff]
        %v5065 = vld [vmem:[#allocation3 + $0x728] sm:$0xff]
        %v5066 = vld [vmem:[#allocation3 + $0x730] sm:$0xff]
        %v5067 = vld [vmem:[#allocation3 + $0x738] sm:$0xff]
        %v5068 = vld [vmem:[#allocation3 + $0x740] sm:$0xff]
        %v5069 = vld [vmem:[#allocation3 + $0x748] sm:$0xff]
        %v5070 = vld [vmem:[#allocation3 + $0x750] sm:$0xff]
        %v5071 = vld [vmem:[#allocation3 + $0x758] sm:$0xff]
        %v5072 = vld [vmem:[#allocation3 + $0x760] sm:$0xff]
        %v5073 = vld [vmem:[#allocation3 + $0x768] sm:$0xff]
        %v5074 = vld [vmem:[#allocation3 + $0x770] sm:$0xff]
        %v5075 = vld [vmem:[#allocation3 + $0x778] sm:$0xff]
        %v5076 = vld [vmem:[#allocation3 + $0x780] sm:$0xff]
        %v5077 = vld [vmem:[#allocation3 + $0x788] sm:$0xff]
        %v5078 = vld [vmem:[#allocation3 + $0x790] sm:$0xff]
        %v5079 = vld [vmem:[#allocation3 + $0x798] sm:$0xff]
        %v5080 = vld [vmem:[#allocation3 + $0x7a0] sm:$0xff]
        %v5081 = vld [vmem:[#allocation3 + $0x7a8] sm:$0xff]
        %v5082 = vld [vmem:[#allocation3 + $0x7b0] sm:$0xff]
        %v5083 = vld [vmem:[#allocation3 + $0x7b8] sm:$0xff]
        %v5084 = vld [vmem:[#allocation3 + $0x7c0] sm:$0xff]
        %v5085 = vld [vmem:[#allocation3 + $0x7c8] sm:$0xff]
        %v5086 = vld [vmem:[#allocation3 + $0x7d0] sm:$0xff]
        %v5087 = vld [vmem:[#allocation3 + $0x7d8] sm:$0xff]
        %v5088 = vld [vmem:[#allocation3 + $0x7e0] sm:$0xff]
        %v5089 = vld [vmem:[#allocation3 + $0x7e8] sm:$0xff]
        %v5090 = vld [vmem:[#allocation3 + $0x7f0] sm:$0xff]
        %v5091 = vld [vmem:[#allocation3 + $0x7f8] sm:$0xff]
        %v5092 = vld [vmem:[#allocation3 + $0x800] sm:$0xff]
        %v5093 = vld [vmem:[#allocation3 + $0x808] sm:$0xff]
        %v5094 = vld [vmem:[#allocation3 + $0x810] sm:$0xff]
        %v5095 = vld [vmem:[#allocation3 + $0x818] sm:$0xff]
        %v5096 = vld [vmem:[#allocation3 + $0x820] sm:$0xff]
        %v5097 = vld [vmem:[#allocation3 + $0x828] sm:$0xff]
        %v5098 = vld [vmem:[#allocation3 + $0x830] sm:$0xff]
        %v5099 = vld [vmem:[#allocation3 + $0x838] sm:$0xff]
        %v5100 = vld [vmem:[#allocation3 + $0x840] sm:$0xff]
        %v5101 = vld [vmem:[#allocation3 + $0x848] sm:$0xff]
        %v5102 = vld [vmem:[#allocation3 + $0x850] sm:$0xff]
        %v5103 = vld [vmem:[#allocation3 + $0x858] sm:$0xff]
        %v5104 = vld [vmem:[#allocation3 + $0x860] sm:$0xff]
        %v5105 = vld [vmem:[#allocation3 + $0x868] sm:$0xff]
        %v5106 = vld [vmem:[#allocation3 + $0x870] sm:$0xff]
        %v5107 = vld [vmem:[#allocation3 + $0x878] sm:$0xff]
        %v5108 = vld [vmem:[#allocation3 + $0x880] sm:$0xff]
        %v5109 = vld [vmem:[#allocation3 + $0x888] sm:$0xff]
        %v5110 = vld [vmem:[#allocation3 + $0x890] sm:$0xff]
        %v5111 = vld [vmem:[#allocation3 + $0x898] sm:$0xff]
        %v5112 = vld [vmem:[#allocation3 + $0x8a0] sm:$0xff]
        %v5113 = vld [vmem:[#allocation3 + $0x8a8] sm:$0xff]
        %v5114 = vld [vmem:[#allocation3 + $0x8b0] sm:$0xff]
        %v5115 = vld [vmem:[#allocation3 + $0x8b8] sm:$0xff]
        %v5116 = vld [vmem:[#allocation3 + $0x8c0] sm:$0xff]
        %v5117 = vld [vmem:[#allocation3 + $0x8c8] sm:$0xff]
        %v5118 = vld [vmem:[#allocation3 + $0x8d0] sm:$0xff]
        %v5119 = vld [vmem:[#allocation3 + $0x8d8] sm:$0xff]
        %v5120 = vld [vmem:[#allocation3 + $0x8e0] sm:$0xff]
        %v5121 = vld [vmem:[#allocation3 + $0x8e8] sm:$0xff]
        %v5122 = vld [vmem:[#allocation3 + $0x8f0] sm:$0xff]
        %v5123 = vld [vmem:[#allocation3 + $0x8f8] sm:$0xff]
        %v5124 = vld [vmem:[#allocation3 + $0x900] sm:$0xff]
        %v5125 = vld [vmem:[#allocation3 + $0x908] sm:$0xff]
        %v5126 = vld [vmem:[#allocation3 + $0x910] sm:$0xff]
        %v5127 = vld [vmem:[#allocation3 + $0x918] sm:$0xff]
        %v5128 = vld [vmem:[#allocation3 + $0x920] sm:$0xff]
        %v5129 = vld [vmem:[#allocation3 + $0x928] sm:$0xff]
        %v5130 = vld [vmem:[#allocation3 + $0x930] sm:$0xff]
        %v5131 = vld [vmem:[#allocation3 + $0x938] sm:$0xff]
        %v5132 = vld [vmem:[#allocation3 + $0x940] sm:$0xff]
        %v5133 = vld [vmem:[#allocation3 + $0x948] sm:$0xff]
        %v5134 = vld [vmem:[#allocation3 + $0x950] sm:$0xff]
        %v5135 = vld [vmem:[#allocation3 + $0x958] sm:$0xff]
        %v5136 = vld [vmem:[#allocation3 + $0x960] sm:$0xff]
        %v5137 = vld [vmem:[#allocation3 + $0x968] sm:$0xff]
        %v5138 = vld [vmem:[#allocation3 + $0x970] sm:$0xff]
        %v5139 = vld [vmem:[#allocation3 + $0x978] sm:$0xff]
        %v5140 = vld [vmem:[#allocation3 + $0x980] sm:$0xff]
        %v5141 = vld [vmem:[#allocation3 + $0x988] sm:$0xff]
        %v5142 = vld [vmem:[#allocation3 + $0x990] sm:$0xff]
        %v5143 = vld [vmem:[#allocation3 + $0x998] sm:$0xff]
        %v5144 = vld [vmem:[#allocation3 + $0x9a0] sm:$0xff]
        %v5145 = vld [vmem:[#allocation3 + $0x9a8] sm:$0xff]
        %v5146 = vld [vmem:[#allocation3 + $0x9b0] sm:$0xff]
        %v5147 = vld [vmem:[#allocation3 + $0x9b8] sm:$0xff]
        %v5148 = vld [vmem:[#allocation3 + $0x9c0] sm:$0xff]
        %v5149 = vld [vmem:[#allocation3 + $0x9c8] sm:$0xff]
        %v5150 = vld [vmem:[#allocation3 + $0x9d0] sm:$0xff]
        %v5151 = vld [vmem:[#allocation3 + $0x9d8] sm:$0xff]
        %v5152 = vld [vmem:[#allocation3 + $0x9e0] sm:$0xff]
        %v5153 = vld [vmem:[#allocation3 + $0x9e8] sm:$0xff]
        %v5154 = vld [vmem:[#allocation3 + $0x9f0] sm:$0xff]
        %v5155 = vld [vmem:[#allocation3 + $0x9f8] sm:$0xff]
        %v5156 = vld [vmem:[#allocation3 + $0xa00] sm:$0xff]
        %v5157 = vld [vmem:[#allocation3 + $0xa08] sm:$0xff]
        %v5158 = vld [vmem:[#allocation3 + $0xa10] sm:$0xff]
        %v5159 = vld [vmem:[#allocation3 + $0xa18] sm:$0xff]
        %v5160 = vld [vmem:[#allocation3 + $0xa20] sm:$0xff]
        %v5161 = vld [vmem:[#allocation3 + $0xa28] sm:$0xff]
        %v5162 = vld [vmem:[#allocation3 + $0xa30] sm:$0xff]
        %v5163 = vld [vmem:[#allocation3 + $0xa38] sm:$0xff]
        %v5164 = vld [vmem:[#allocation3 + $0xa40] sm:$0xff]
        %v5165 = vld [vmem:[#allocation3 + $0xa48] sm:$0xff]
        %v5166 = vld [vmem:[#allocation3 + $0xa50] sm:$0xff]
        %v5167 = vld [vmem:[#allocation3 + $0xa58] sm:$0xff]
        %v5168 = vld [vmem:[#allocation3 + $0xa60] sm:$0xff]
        %v5169 = vld [vmem:[#allocation3 + $0xa68] sm:$0xff]
        %v5170 = vld [vmem:[#allocation3 + $0xa70] sm:$0xff]
        %v5171 = vld [vmem:[#allocation3 + $0xa78] sm:$0xff]
        %v5172 = vld [vmem:[#allocation3 + $0xa80] sm:$0xff]
        %v5173 = vld [vmem:[#allocation3 + $0xa88] sm:$0xff]
        %v5174 = vld [vmem:[#allocation3 + $0xa90] sm:$0xff]
        %v5175 = vld [vmem:[#allocation3 + $0xa98] sm:$0xff]
        %v5176 = vld [vmem:[#allocation3 + $0xaa0] sm:$0xff]
        %v5177 = vld [vmem:[#allocation3 + $0xaa8] sm:$0xff]
        %v5178 = vld [vmem:[#allocation3 + $0xab0] sm:$0xff]
        %v5179 = vld [vmem:[#allocation3 + $0xab8] sm:$0xff]
        %v5180 = vld [vmem:[#allocation3 + $0xac0] sm:$0xff]
        %v5181 = vld [vmem:[#allocation3 + $0xac8] sm:$0xff]
        %v5182 = vld [vmem:[#allocation3 + $0xad0] sm:$0xff]
        %v5183 = vld [vmem:[#allocation3 + $0xad8] sm:$0xff]
        %v5184 = vld [vmem:[#allocation3 + $0xae0] sm:$0xff]
        %v5185 = vld [vmem:[#allocation3 + $0xae8] sm:$0xff]
        %v5186 = vld [vmem:[#allocation3 + $0xaf0] sm:$0xff]
        %v5187 = vld [vmem:[#allocation3 + $0xaf8] sm:$0xff]
        %v5188 = vld [vmem:[#allocation3 + $0xb00] sm:$0xff]
        %v5189 = vld [vmem:[#allocation3 + $0xb08] sm:$0xff]
        %v5190 = vld [vmem:[#allocation3 + $0xb10] sm:$0xff]
        %v5191 = vld [vmem:[#allocation3 + $0xb18] sm:$0xff]
        %v5192 = vld [vmem:[#allocation3 + $0xb20] sm:$0xff]
        %v5193 = vld [vmem:[#allocation3 + $0xb28] sm:$0xff]
        %v5194 = vld [vmem:[#allocation3 + $0xb30] sm:$0xff]
        %v5195 = vld [vmem:[#allocation3 + $0xb38] sm:$0xff]
        %v5196 = vld [vmem:[#allocation3 + $0xb40] sm:$0xff]
        %v5197 = vld [vmem:[#allocation3 + $0xb48] sm:$0xff]
        %v5198 = vld [vmem:[#allocation3 + $0xb50] sm:$0xff]
        %v5199 = vld [vmem:[#allocation3 + $0xb58] sm:$0xff]
        %v5200 = vld [vmem:[#allocation3 + $0xb60] sm:$0xff]
        %v5201 = vld [vmem:[#allocation3 + $0xb68] sm:$0xff]
        %v5202 = vld [vmem:[#allocation3 + $0xb70] sm:$0xff]
        %v5203 = vld [vmem:[#allocation3 + $0xb78] sm:$0xff]
        %v5204 = vld [vmem:[#allocation3 + $0xb80] sm:$0xff]
        %v5205 = vld [vmem:[#allocation3 + $0xb88] sm:$0xff]
        %v5206 = vld [vmem:[#allocation3 + $0xb90] sm:$0xff]
        %v5207 = vld [vmem:[#allocation3 + $0xb98] sm:$0xff]
        %v5208 = vld [vmem:[#allocation3 + $0xba0] sm:$0xff]
        %v5209 = vld [vmem:[#allocation3 + $0xba8] sm:$0xff]
        %v5210 = vld [vmem:[#allocation3 + $0xbb0] sm:$0xff]
        %v5211 = vld [vmem:[#allocation3 + $0xbb8] sm:$0xff]
        %v5212 = vld [vmem:[#allocation3 + $0xbc0] sm:$0xff]
        %v5213 = vld [vmem:[#allocation3 + $0xbc8] sm:$0xff]
        %v5214 = vld [vmem:[#allocation3 + $0xbd0] sm:$0xff]
        %v5215 = vld [vmem:[#allocation3 + $0xbd8] sm:$0xff]
        %v5216 = vld [vmem:[#allocation3 + $0xbe0] sm:$0xff]
        %v5217 = vld [vmem:[#allocation3 + $0xbe8] sm:$0xff]
        %v5218 = vld [vmem:[#allocation3 + $0xbf0] sm:$0xff]
        %v5219 = vld [vmem:[#allocation3 + $0xbf8] sm:$0xff]
        %v5220 = vld [vmem:[#allocation3 + $0xc00] sm:$0xff]
        %v5221 = vld [vmem:[#allocation3 + $0xc08] sm:$0xff]
        %v5222 = vld [vmem:[#allocation3 + $0xc10] sm:$0xff]
        %v5223 = vld [vmem:[#allocation3 + $0xc18] sm:$0xff]
        %v5224 = vld [vmem:[#allocation3 + $0xc20] sm:$0xff]
        %v5225 = vld [vmem:[#allocation3 + $0xc28] sm:$0xff]
        %v5226 = vld [vmem:[#allocation3 + $0xc30] sm:$0xff]
        %v5227 = vld [vmem:[#allocation3 + $0xc38] sm:$0xff]
        %v5228 = vld [vmem:[#allocation3 + $0xc40] sm:$0xff]
        %v5229 = vld [vmem:[#allocation3 + $0xc48] sm:$0xff]
        %v5230 = vld [vmem:[#allocation3 + $0xc50] sm:$0xff]
        %v5231 = vld [vmem:[#allocation3 + $0xc58] sm:$0xff]
        %v5232 = vld [vmem:[#allocation3 + $0xc60] sm:$0xff]
        %v5233 = vld [vmem:[#allocation3 + $0xc68] sm:$0xff]
        %v5234 = vld [vmem:[#allocation3 + $0xc70] sm:$0xff]
        %v5235 = vld [vmem:[#allocation3 + $0xc78] sm:$0xff]
        %v5236 = vld [vmem:[#allocation3 + $0xc80] sm:$0xff]
        %v5237 = vld [vmem:[#allocation3 + $0xc88] sm:$0xff]
        %v5238 = vld [vmem:[#allocation3 + $0xc90] sm:$0xff]
        %v5239 = vld [vmem:[#allocation3 + $0xc98] sm:$0xff]
        %v5240 = vld [vmem:[#allocation3 + $0xca0] sm:$0xff]
        %v5241 = vld [vmem:[#allocation3 + $0xca8] sm:$0xff]
        %v5242 = vld [vmem:[#allocation3 + $0xcb0] sm:$0xff]
        %v5243 = vld [vmem:[#allocation3 + $0xcb8] sm:$0xff]
        %v5244 = vld [vmem:[#allocation3 + $0xcc0] sm:$0xff]
        %v5245 = vld [vmem:[#allocation3 + $0xcc8] sm:$0xff]
        %v5246 = vld [vmem:[#allocation3 + $0xcd0] sm:$0xff]
        %v5247 = vld [vmem:[#allocation3 + $0xcd8] sm:$0xff]
        %v5248 = vld [vmem:[#allocation3 + $0xce0] sm:$0xff]
        %v5249 = vld [vmem:[#allocation3 + $0xce8] sm:$0xff]
        %v5250 = vld [vmem:[#allocation3 + $0xcf0] sm:$0xff]
        %v5251 = vld [vmem:[#allocation3 + $0xcf8] sm:$0xff]
        %v5252 = vld [vmem:[#allocation3 + $0xd00] sm:$0xff]
        %v5253 = vld [vmem:[#allocation3 + $0xd08] sm:$0xff]
        %v5254 = vld [vmem:[#allocation3 + $0xd10] sm:$0xff]
        %v5255 = vld [vmem:[#allocation3 + $0xd18] sm:$0xff]
        %v5256 = vld [vmem:[#allocation3 + $0xd20] sm:$0xff]
        %v5257 = vld [vmem:[#allocation3 + $0xd28] sm:$0xff]
        %v5258 = vld [vmem:[#allocation3 + $0xd30] sm:$0xff]
        %v5259 = vld [vmem:[#allocation3 + $0xd38] sm:$0xff]
        %v5260 = vld [vmem:[#allocation3 + $0xd40] sm:$0xff]
        %v5261 = vld [vmem:[#allocation3 + $0xd48] sm:$0xff]
        %v5262 = vld [vmem:[#allocation3 + $0xd50] sm:$0xff]
        %v5263 = vld [vmem:[#allocation3 + $0xd58] sm:$0xff]
        %v5264 = vld [vmem:[#allocation3 + $0xd60] sm:$0xff]
        %v5265 = vld [vmem:[#allocation3 + $0xd68] sm:$0xff]
        %v5266 = vld [vmem:[#allocation3 + $0xd70] sm:$0xff]
        %v5267 = vld [vmem:[#allocation3 + $0xd78] sm:$0xff]
        %v5268 = vld [vmem:[#allocation3 + $0xd80] sm:$0xff]
        %v5269 = vld [vmem:[#allocation3 + $0xd88] sm:$0xff]
        %v5270 = vld [vmem:[#allocation3 + $0xd90] sm:$0xff]
        %v5271 = vld [vmem:[#allocation3 + $0xd98] sm:$0xff]
        %v5272 = vld [vmem:[#allocation3 + $0xda0] sm:$0xff]
        %v5273 = vld [vmem:[#allocation3 + $0xda8] sm:$0xff]
        %v5274 = vld [vmem:[#allocation3 + $0xdb0] sm:$0xff]
        %v5275 = vld [vmem:[#allocation3 + $0xdb8] sm:$0xff]
        %v5276 = vld [vmem:[#allocation3 + $0xdc0] sm:$0xff]
        %v5277 = vld [vmem:[#allocation3 + $0xdc8] sm:$0xff]
        %v5278 = vld [vmem:[#allocation3 + $0xdd0] sm:$0xff]
        %v5279 = vld [vmem:[#allocation3 + $0xdd8] sm:$0xff]
        %v5280 = vld [vmem:[#allocation3 + $0xde0] sm:$0xff]
        %v5281 = vld [vmem:[#allocation3 + $0xde8] sm:$0xff]
        %v5282 = vld [vmem:[#allocation3 + $0xdf0] sm:$0xff]
        %v5283 = vld [vmem:[#allocation3 + $0xdf8] sm:$0xff]
        %v5284 = vld [vmem:[#allocation3 + $0xe00] sm:$0xff]
        %v5285 = vld [vmem:[#allocation3 + $0xe08] sm:$0xff]
        %v5286 = vld [vmem:[#allocation3 + $0xe10] sm:$0xff]
        %v5287 = vld [vmem:[#allocation3 + $0xe18] sm:$0xff]
        %v5288 = vld [vmem:[#allocation3 + $0xe20] sm:$0xff]
        %v5289 = vld [vmem:[#allocation3 + $0xe28] sm:$0xff]
        %v5290 = vld [vmem:[#allocation3 + $0xe30] sm:$0xff]
        %v5291 = vld [vmem:[#allocation3 + $0xe38] sm:$0xff]
        %v5292 = vld [vmem:[#allocation3 + $0xe40] sm:$0xff]
        %v5293 = vld [vmem:[#allocation3 + $0xe48] sm:$0xff]
        %v5294 = vld [vmem:[#allocation3 + $0xe50] sm:$0xff]
        %v5295 = vld [vmem:[#allocation3 + $0xe58] sm:$0xff]
        %v5296 = vld [vmem:[#allocation3 + $0xe60] sm:$0xff]
        %v5297 = vld [vmem:[#allocation3 + $0xe68] sm:$0xff]
        %v5298 = vld [vmem:[#allocation3 + $0xe70] sm:$0xff]
        %v5299 = vld [vmem:[#allocation3 + $0xe78] sm:$0xff]
        %v5300 = vld [vmem:[#allocation3 + $0xe80] sm:$0xff]
        %v5301 = vld [vmem:[#allocation3 + $0xe88] sm:$0xff]
        %v5302 = vld [vmem:[#allocation3 + $0xe90] sm:$0xff]
        %v5303 = vld [vmem:[#allocation3 + $0xe98] sm:$0xff]
        %v5304 = vld [vmem:[#allocation3 + $0xea0] sm:$0xff]
        %v5305 = vld [vmem:[#allocation3 + $0xea8] sm:$0xff]
        %v5306 = vld [vmem:[#allocation3 + $0xeb0] sm:$0xff]
        %v5307 = vld [vmem:[#allocation3 + $0xeb8] sm:$0xff]
        %v5308 = vld [vmem:[#allocation3 + $0xec0] sm:$0xff]
        %v5309 = vld [vmem:[#allocation3 + $0xec8] sm:$0xff]
        %v5310 = vld [vmem:[#allocation3 + $0xed0] sm:$0xff]
        %v5311 = vld [vmem:[#allocation3 + $0xed8] sm:$0xff]
        %v5312 = vld [vmem:[#allocation3 + $0xee0] sm:$0xff]
        %v5313 = vld [vmem:[#allocation3 + $0xee8] sm:$0xff]
        %v5314 = vld [vmem:[#allocation3 + $0xef0] sm:$0xff]
        %v5315 = vld [vmem:[#allocation3 + $0xef8] sm:$0xff]
        %v5316 = vld [vmem:[#allocation3 + $0xf00] sm:$0xff]
        %v5317 = vld [vmem:[#allocation3 + $0xf08] sm:$0xff]
        %v5318 = vld [vmem:[#allocation3 + $0xf10] sm:$0xff]
        %v5319 = vld [vmem:[#allocation3 + $0xf18] sm:$0xff]
        %v5320 = vld [vmem:[#allocation3 + $0xf20] sm:$0xff]
        %v5321 = vld [vmem:[#allocation3 + $0xf28] sm:$0xff]
        %v5322 = vld [vmem:[#allocation3 + $0xf30] sm:$0xff]
        %v5323 = vld [vmem:[#allocation3 + $0xf38] sm:$0xff]
        %v5324 = vld [vmem:[#allocation3 + $0xf40] sm:$0xff]
        %v5325 = vld [vmem:[#allocation3 + $0xf48] sm:$0xff]
        %v5326 = vld [vmem:[#allocation3 + $0xf50] sm:$0xff]
        %v5327 = vld [vmem:[#allocation3 + $0xf58] sm:$0xff]
        %v5328 = vld [vmem:[#allocation3 + $0xf60] sm:$0xff]
        %v5329 = vld [vmem:[#allocation3 + $0xf68] sm:$0xff]
        %v5330 = vld [vmem:[#allocation3 + $0xf70] sm:$0xff]
        %v5331 = vld [vmem:[#allocation3 + $0xf78] sm:$0xff]
        %v5332 = vld [vmem:[#allocation3 + $0xf80] sm:$0xff]
        %v5333 = vld [vmem:[#allocation3 + $0xf88] sm:$0xff]
        %v5334 = vld [vmem:[#allocation3 + $0xf90] sm:$0xff]
        %v5335 = vld [vmem:[#allocation3 + $0xf98] sm:$0xff]
        %v5336 = vld [vmem:[#allocation3 + $0xfa0] sm:$0xff]
        %v5337 = vld [vmem:[#allocation3 + $0xfa8] sm:$0xff]
        %v5338 = vld [vmem:[#allocation3 + $0xfb0] sm:$0xff]
        %v5339 = vld [vmem:[#allocation3 + $0xfb8] sm:$0xff]
        %v5340 = vld [vmem:[#allocation3 + $0xfc0] sm:$0xff]
        %v5341 = vld [vmem:[#allocation3 + $0xfc8] sm:$0xff]
        %v5342 = vld [vmem:[#allocation3 + $0xfd0] sm:$0xff]
        %v5343 = vld [vmem:[#allocation3 + $0xfd8] sm:$0xff]
        %v5344 = vld [vmem:[#allocation3 + $0xfe0] sm:$0xff]
        %v5345 = vld [vmem:[#allocation3 + $0xfe8] sm:$0xff]
        %v5346 = vld [vmem:[#allocation3 + $0xff0] sm:$0xff]
        %v5347 = vld [vmem:[#allocation3 + $0xff8] sm:$0xff]
        %v5348 = vld [vmem:[#allocation3 + $0x1000] sm:$0xff]
        %v5349 = vld [vmem:[#allocation3 + $0x1008] sm:$0xff]
        %v5350 = vld [vmem:[#allocation3 + $0x1010] sm:$0xff]
        %v5351 = vld [vmem:[#allocation3 + $0x1018] sm:$0xff]
        %v5352 = vld [vmem:[#allocation3 + $0x1020] sm:$0xff]
        %v5353 = vld [vmem:[#allocation3 + $0x1028] sm:$0xff]
        %v5354 = vld [vmem:[#allocation3 + $0x1030] sm:$0xff]
        %v5355 = vld [vmem:[#allocation3 + $0x1038] sm:$0xff]
        %v5356 = vld [vmem:[#allocation3 + $0x1040] sm:$0xff]
        %v5357 = vld [vmem:[#allocation3 + $0x1048] sm:$0xff]
        %v5358 = vld [vmem:[#allocation3 + $0x1050] sm:$0xff]
        %v5359 = vld [vmem:[#allocation3 + $0x1058] sm:$0xff]
        %v5360 = vld [vmem:[#allocation3 + $0x1060] sm:$0xff]
        %v5361 = vld [vmem:[#allocation3 + $0x1068] sm:$0xff]
        %v5362 = vld [vmem:[#allocation3 + $0x1070] sm:$0xff]
        %v5363 = vld [vmem:[#allocation3 + $0x1078] sm:$0xff]
        %v5364 = vld [vmem:[#allocation3 + $0x1080] sm:$0xff]
        %v5365 = vld [vmem:[#allocation3 + $0x1088] sm:$0xff]
        %v5366 = vld [vmem:[#allocation3 + $0x1090] sm:$0xff]
        %v5367 = vld [vmem:[#allocation3 + $0x1098] sm:$0xff]
        %v5368 = vld [vmem:[#allocation3 + $0x10a0] sm:$0xff]
        %v5369 = vld [vmem:[#allocation3 + $0x10a8] sm:$0xff]
        %v5370 = vld [vmem:[#allocation3 + $0x10b0] sm:$0xff]
        %v5371 = vld [vmem:[#allocation3 + $0x10b8] sm:$0xff]
        %v5372 = vld [vmem:[#allocation3 + $0x10c0] sm:$0xff]
        %v5373 = vld [vmem:[#allocation3 + $0x10c8] sm:$0xff]
        %v5374 = vld [vmem:[#allocation3 + $0x10d0] sm:$0xff]
        %v5375 = vld [vmem:[#allocation3 + $0x10d8] sm:$0xff]
        %v5376 = vld [vmem:[#allocation3 + $0x10e0] sm:$0xff]
        %v5377 = vld [vmem:[#allocation3 + $0x10e8] sm:$0xff]
        %v5378 = vld [vmem:[#allocation3 + $0x10f0] sm:$0xff]
        %v5379 = vld [vmem:[#allocation3 + $0x10f8] sm:$0xff]
        %v5380 = vld [vmem:[#allocation3 + $0x1100] sm:$0xff]
        %v5381 = vld [vmem:[#allocation3 + $0x1108] sm:$0xff]
        %v5382 = vld [vmem:[#allocation3 + $0x1110] sm:$0xff]
        %v5383 = vld [vmem:[#allocation3 + $0x1118] sm:$0xff]
        %v5384 = vld [vmem:[#allocation3 + $0x1120] sm:$0xff]
        %v5385 = vld [vmem:[#allocation3 + $0x1128] sm:$0xff]
        %v5386 = vld [vmem:[#allocation3 + $0x1130] sm:$0xff]
        %v5387 = vld [vmem:[#allocation3 + $0x1138] sm:$0xff]
        %v5388 = vld [vmem:[#allocation3 + $0x1140] sm:$0xff]
        %v5389 = vld [vmem:[#allocation3 + $0x1148] sm:$0xff]
        %v5390 = vld [vmem:[#allocation3 + $0x1150] sm:$0xff]
        %v5391 = vld [vmem:[#allocation3 + $0x1158] sm:$0xff]
        %v5392 = vld [vmem:[#allocation3 + $0x1160] sm:$0xff]
        %v5393 = vld [vmem:[#allocation3 + $0x1168] sm:$0xff]
        %v5394 = vld [vmem:[#allocation3 + $0x1170] sm:$0xff]
        %v5395 = vld [vmem:[#allocation3 + $0x1178] sm:$0xff]
        %v5396 = vld [vmem:[#allocation3 + $0x1180] sm:$0xff]
        %v5397 = vld [vmem:[#allocation3 + $0x1188] sm:$0xff]
        %v5398 = vld [vmem:[#allocation3 + $0x1190] sm:$0xff]
        %v5399 = vld [vmem:[#allocation3 + $0x1198] sm:$0xff]
        %v5400 = vld [vmem:[#allocation3 + $0x11a0] sm:$0xff]
        %v5401 = vld [vmem:[#allocation3 + $0x11a8] sm:$0xff]
        %v5402 = vld [vmem:[#allocation3 + $0x11b0] sm:$0xff]
        %v5403 = vld [vmem:[#allocation3 + $0x11b8] sm:$0xff]
        %v5404 = vld [vmem:[#allocation3 + $0x11c0] sm:$0xff]
        %v5405 = vld [vmem:[#allocation3 + $0x11c8] sm:$0xff]
        %v5406 = vld [vmem:[#allocation3 + $0x11d0] sm:$0xff]
        %v5407 = vld [vmem:[#allocation3 + $0x11d8] sm:$0xff]
        %v5408 = vld [vmem:[#allocation3 + $0x11e0] sm:$0xff]
        %v5409 = vld [vmem:[#allocation3 + $0x11e8] sm:$0xff]
        %v5410 = vld [vmem:[#allocation3 + $0x11f0] sm:$0xff]
        %v5411 = vld [vmem:[#allocation3 + $0x11f8] sm:$0xff]
        %v5412 = vld [vmem:[#allocation3 + $0x1200] sm:$0xff]
        %v5413 = vld [vmem:[#allocation3 + $0x1208] sm:$0xff]
        %v5414 = vld [vmem:[#allocation3 + $0x1210] sm:$0xff]
        %v5415 = vld [vmem:[#allocation3 + $0x1218] sm:$0xff]
        %v5416 = vld [vmem:[#allocation3 + $0x1220] sm:$0xff]
        %v5417 = vld [vmem:[#allocation3 + $0x1228] sm:$0xff]
        %v5418 = vld [vmem:[#allocation3 + $0x1230] sm:$0xff]
        %v5419 = vld [vmem:[#allocation3 + $0x1238] sm:$0xff]
        %v5420 = vld [vmem:[#allocation3 + $0x1240] sm:$0xff]
        %v5421 = vld [vmem:[#allocation3 + $0x1248] sm:$0xff]
        %v5422 = vld [vmem:[#allocation3 + $0x1250] sm:$0xff]
        %v5423 = vld [vmem:[#allocation3 + $0x1258] sm:$0xff]
        %v5424 = vld [vmem:[#allocation3 + $0x1260] sm:$0xff]
        %v5425 = vld [vmem:[#allocation3 + $0x1268] sm:$0xff]
        %v5426 = vld [vmem:[#allocation3 + $0x1270] sm:$0xff]
        %v5427 = vld [vmem:[#allocation3 + $0x1278] sm:$0xff]
        %v5428 = vld [vmem:[#allocation3 + $0x1280] sm:$0xff]
        %v5429 = vld [vmem:[#allocation3 + $0x1288] sm:$0xff]
        %v5430 = vld [vmem:[#allocation3 + $0x1290] sm:$0xff]
        %v5431 = vld [vmem:[#allocation3 + $0x1298] sm:$0xff]
        %v5432 = vld [vmem:[#allocation3 + $0x12a0] sm:$0xff]
        %v5433 = vld [vmem:[#allocation3 + $0x12a8] sm:$0xff]
        %v5434 = vld [vmem:[#allocation3 + $0x12b0] sm:$0xff]
        %v5435 = vld [vmem:[#allocation3 + $0x12b8] sm:$0xff]
        %v5436 = vld [vmem:[#allocation3 + $0x12c0] sm:$0xff]
        %v5437 = vld [vmem:[#allocation3 + $0x12c8] sm:$0xff]
        %v5438 = vld [vmem:[#allocation3 + $0x12d0] sm:$0xff]
        %v5439 = vld [vmem:[#allocation3 + $0x12d8] sm:$0xff]
        %v5440 = vld [vmem:[#allocation3 + $0x12e0] sm:$0xff]
        %v5441 = vld [vmem:[#allocation3 + $0x12e8] sm:$0xff]
        %v5442 = vld [vmem:[#allocation3 + $0x12f0] sm:$0xff]
        %v5443 = vld [vmem:[#allocation3 + $0x12f8] sm:$0xff]
        %v5444 = vld [vmem:[#allocation3 + $0x1300] sm:$0xff]
        %v5445 = vld [vmem:[#allocation3 + $0x1308] sm:$0xff]
        %v5446 = vld [vmem:[#allocation3 + $0x1310] sm:$0xff]
        %v5447 = vld [vmem:[#allocation3 + $0x1318] sm:$0xff]
        %v5448 = vld [vmem:[#allocation3 + $0x1320] sm:$0xff]
        %v5449 = vld [vmem:[#allocation3 + $0x1328] sm:$0xff]
        %v5450 = vld [vmem:[#allocation3 + $0x1330] sm:$0xff]
        %v5451 = vld [vmem:[#allocation3 + $0x1338] sm:$0xff]
        %v5452 = vld [vmem:[#allocation3 + $0x1340] sm:$0xff]
        %v5453 = vld [vmem:[#allocation3 + $0x1348] sm:$0xff]
        %v5454 = vld [vmem:[#allocation3 + $0x1350] sm:$0xff]
        %v5455 = vld [vmem:[#allocation3 + $0x1358] sm:$0xff]
        %v5456 = vld [vmem:[#allocation3 + $0x1360] sm:$0xff]
        %v5457 = vld [vmem:[#allocation3 + $0x1368] sm:$0xff]
        %v5458 = vld [vmem:[#allocation3 + $0x1370] sm:$0xff]
        %v5459 = vld [vmem:[#allocation3 + $0x1378] sm:$0xff]
        %v5460 = vld [vmem:[#allocation3 + $0x1380] sm:$0xff]
        %v5461 = vld [vmem:[#allocation3 + $0x1388] sm:$0xff]
        %v5462 = vld [vmem:[#allocation3 + $0x1390] sm:$0xff]
        %v5463 = vld [vmem:[#allocation3 + $0x1398] sm:$0xff]
        %v5464 = vld [vmem:[#allocation3 + $0x13a0] sm:$0xff]
        %v5465 = vld [vmem:[#allocation3 + $0x13a8] sm:$0xff]
        %v5466 = vld [vmem:[#allocation3 + $0x13b0] sm:$0xff]
        %v5467 = vld [vmem:[#allocation3 + $0x13b8] sm:$0xff]
        %v5468 = vld [vmem:[#allocation3 + $0x13c0] sm:$0xff]
        %v5469 = vld [vmem:[#allocation3 + $0x13c8] sm:$0xff]
        %v5470 = vld [vmem:[#allocation3 + $0x13d0] sm:$0xff]
        %v5471 = vld [vmem:[#allocation3 + $0x13d8] sm:$0xff]
        %v5472 = vld [vmem:[#allocation3 + $0x13e0] sm:$0xff]
        %v5473 = vld [vmem:[#allocation3 + $0x13e8] sm:$0xff]
        %v5474 = vld [vmem:[#allocation3 + $0x13f0] sm:$0xff]
        %v5475 = vld [vmem:[#allocation3 + $0x13f8] sm:$0xff]
        %v5476 = vld [vmem:[#allocation3 + $0x1400] sm:$0xff]
        %v5477 = vld [vmem:[#allocation3 + $0x1408] sm:$0xff]
        %v5478 = vld [vmem:[#allocation3 + $0x1410] sm:$0xff]
        %v5479 = vld [vmem:[#allocation3 + $0x1418] sm:$0xff]
        %v5480 = vld [vmem:[#allocation3 + $0x1420] sm:$0xff]
        %v5481 = vld [vmem:[#allocation3 + $0x1428] sm:$0xff]
        %v5482 = vld [vmem:[#allocation3 + $0x1430] sm:$0xff]
        %v5483 = vld [vmem:[#allocation3 + $0x1438] sm:$0xff]
        %v5484 = vld [vmem:[#allocation3 + $0x1440] sm:$0xff]
        %v5485 = vld [vmem:[#allocation3 + $0x1448] sm:$0xff]
        %v5486 = vld [vmem:[#allocation3 + $0x1450] sm:$0xff]
        %v5487 = vld [vmem:[#allocation3 + $0x1458] sm:$0xff]
        %v5488 = vld [vmem:[#allocation3 + $0x1460] sm:$0xff]
        %v5489 = vld [vmem:[#allocation3 + $0x1468] sm:$0xff]
        %v5490 = vld [vmem:[#allocation3 + $0x1470] sm:$0xff]
        %v5491 = vld [vmem:[#allocation3 + $0x1478] sm:$0xff]
        %v5492 = vld [vmem:[#allocation3 + $0x1480] sm:$0xff]
        %v5493 = vld [vmem:[#allocation3 + $0x1488] sm:$0xff]
        %v5494 = vld [vmem:[#allocation3 + $0x1490] sm:$0xff]
        %v5495 = vld [vmem:[#allocation3 + $0x1498] sm:$0xff]
        %v5496 = vld [vmem:[#allocation3 + $0x14a0] sm:$0xff]
        %v5497 = vld [vmem:[#allocation3 + $0x14a8] sm:$0xff]
        %v5498 = vld [vmem:[#allocation3 + $0x14b0] sm:$0xff]
        %v5499 = vld [vmem:[#allocation3 + $0x14b8] sm:$0xff]
        %v5500 = vld [vmem:[#allocation3 + $0x14c0] sm:$0xff]
        %v5501 = vld [vmem:[#allocation3 + $0x14c8] sm:$0xff]
        %v5502 = vld [vmem:[#allocation3 + $0x14d0] sm:$0xff]
        %v5503 = vld [vmem:[#allocation3 + $0x14d8] sm:$0xff]
        %v5504 = vld [vmem:[#allocation3 + $0x14e0] sm:$0xff]
        %v5505 = vld [vmem:[#allocation3 + $0x14e8] sm:$0xff]
        %v5506 = vld [vmem:[#allocation3 + $0x14f0] sm:$0xff]
        %v5507 = vld [vmem:[#allocation3 + $0x14f8] sm:$0xff]
        %v5508 = vld [vmem:[#allocation3 + $0x1500] sm:$0xff]
        %v5509 = vld [vmem:[#allocation3 + $0x1508] sm:$0xff]
        %v5510 = vld [vmem:[#allocation3 + $0x1510] sm:$0xff]
        %v5511 = vld [vmem:[#allocation3 + $0x1518] sm:$0xff]
        %v5512 = vld [vmem:[#allocation3 + $0x1520] sm:$0xff]
        %v5513 = vld [vmem:[#allocation3 + $0x1528] sm:$0xff]
        %v5514 = vld [vmem:[#allocation3 + $0x1530] sm:$0xff]
        %v5515 = vld [vmem:[#allocation3 + $0x1538] sm:$0xff]
        %v5516 = vld [vmem:[#allocation3 + $0x1540] sm:$0xff]
        %v5517 = vld [vmem:[#allocation3 + $0x1548] sm:$0xff]
        %v5518 = vld [vmem:[#allocation3 + $0x1550] sm:$0xff]
        %v5519 = vld [vmem:[#allocation3 + $0x1558] sm:$0xff]
        %v5520 = vld [vmem:[#allocation3 + $0x1560] sm:$0xff]
        %v5521 = vld [vmem:[#allocation3 + $0x1568] sm:$0xff]
        %v5522 = vld [vmem:[#allocation3 + $0x1570] sm:$0xff]
        %v5523 = vld [vmem:[#allocation3 + $0x1578] sm:$0xff]
        %v5524 = vld [vmem:[#allocation3 + $0x1580] sm:$0xff]
        %v5525 = vld [vmem:[#allocation3 + $0x1588] sm:$0xff]
        %v5526 = vld [vmem:[#allocation3 + $0x1590] sm:$0xff]
        %v5527 = vld [vmem:[#allocation3 + $0x1598] sm:$0xff]
        %v5528 = vld [vmem:[#allocation3 + $0x15a0] sm:$0xff]
        %v5529 = vld [vmem:[#allocation3 + $0x15a8] sm:$0xff]
        %v5530 = vld [vmem:[#allocation3 + $0x15b0] sm:$0xff]
        %v5531 = vld [vmem:[#allocation3 + $0x15b8] sm:$0xff]
        %v5532 = vld [vmem:[#allocation3 + $0x15c0] sm:$0xff]
        %v5533 = vld [vmem:[#allocation3 + $0x15c8] sm:$0xff]
        %v5534 = vld [vmem:[#allocation3 + $0x15d0] sm:$0xff]
        %v5535 = vld [vmem:[#allocation3 + $0x15d8] sm:$0xff]
        %v5536 = vld [vmem:[#allocation3 + $0x15e0] sm:$0xff]
        %v5537 = vld [vmem:[#allocation3 + $0x15e8] sm:$0xff]
        %v5538 = vld [vmem:[#allocation3 + $0x15f0] sm:$0xff]
        %v5539 = vld [vmem:[#allocation3 + $0x15f8] sm:$0xff]
        %v5540 = vld [vmem:[#allocation3 + $0x1600] sm:$0xff]
        %v5541 = vld [vmem:[#allocation3 + $0x1608] sm:$0xff]
        %v5542 = vld [vmem:[#allocation3 + $0x1610] sm:$0xff]
        %v5543 = vld [vmem:[#allocation3 + $0x1618] sm:$0xff]
        %v5544 = vld [vmem:[#allocation3 + $0x1620] sm:$0xff]
        %v5545 = vld [vmem:[#allocation3 + $0x1628] sm:$0xff]
        %v5546 = vld [vmem:[#allocation3 + $0x1630] sm:$0xff]
        %v5547 = vld [vmem:[#allocation3 + $0x1638] sm:$0xff]
        %v5548 = vld [vmem:[#allocation3 + $0x1640] sm:$0xff]
        %v5549 = vld [vmem:[#allocation3 + $0x1648] sm:$0xff]
        %v5550 = vld [vmem:[#allocation3 + $0x1650] sm:$0xff]
        %v5551 = vld [vmem:[#allocation3 + $0x1658] sm:$0xff]
        %v5552 = vld [vmem:[#allocation3 + $0x1660] sm:$0xff]
        %v5553 = vld [vmem:[#allocation3 + $0x1668] sm:$0xff]
        %v5554 = vld [vmem:[#allocation3 + $0x1670] sm:$0xff]
        %v5555 = vld [vmem:[#allocation3 + $0x1678] sm:$0xff]
        %v5556 = vld [vmem:[#allocation3 + $0x1680] sm:$0xff]
        %v5557 = vld [vmem:[#allocation3 + $0x1688] sm:$0xff]
        %v5558 = vld [vmem:[#allocation3 + $0x1690] sm:$0xff]
        %v5559 = vld [vmem:[#allocation3 + $0x1698] sm:$0xff]
        %v5560 = vld [vmem:[#allocation3 + $0x16a0] sm:$0xff]
        %v5561 = vld [vmem:[#allocation3 + $0x16a8] sm:$0xff]
        %v5562 = vld [vmem:[#allocation3 + $0x16b0] sm:$0xff]
        %v5563 = vld [vmem:[#allocation3 + $0x16b8] sm:$0xff]
        %v5564 = vld [vmem:[#allocation3 + $0x16c0] sm:$0xff]
        %v5565 = vld [vmem:[#allocation3 + $0x16c8] sm:$0xff]
        %v5566 = vld [vmem:[#allocation3 + $0x16d0] sm:$0xff]
        %v5567 = vld [vmem:[#allocation3 + $0x16d8] sm:$0xff]
        %v5568 = vld [vmem:[#allocation3 + $0x16e0] sm:$0xff]
        %v5569 = vld [vmem:[#allocation3 + $0x16e8] sm:$0xff]
        %v5570 = vld [vmem:[#allocation3 + $0x16f0] sm:$0xff]
        %v5571 = vld [vmem:[#allocation3 + $0x16f8] sm:$0xff]
        %v5572 = vld [vmem:[#allocation3 + $0x1700] sm:$0xff]
        %v5573 = vld [vmem:[#allocation3 + $0x1708] sm:$0xff]
        %v5574 = vld [vmem:[#allocation3 + $0x1710] sm:$0xff]
        %v5575 = vld [vmem:[#allocation3 + $0x1718] sm:$0xff]
        %v5576 = vld [vmem:[#allocation3 + $0x1720] sm:$0xff]
        %v5577 = vld [vmem:[#allocation3 + $0x1728] sm:$0xff]
        %v5578 = vld [vmem:[#allocation3 + $0x1730] sm:$0xff]
        %v5579 = vld [vmem:[#allocation3 + $0x1738] sm:$0xff]
        %v5580 = vld [vmem:[#allocation3 + $0x1740] sm:$0xff]
        %v5581 = vld [vmem:[#allocation3 + $0x1748] sm:$0xff]
        %v5582 = vld [vmem:[#allocation3 + $0x1750] sm:$0xff]
        %v5583 = vld [vmem:[#allocation3 + $0x1758] sm:$0xff]
        %v5584 = vld [vmem:[#allocation3 + $0x1760] sm:$0xff]
        %v5585 = vld [vmem:[#allocation3 + $0x1768] sm:$0xff]
        %v5586 = vld [vmem:[#allocation3 + $0x1770] sm:$0xff]
        %v5587 = vld [vmem:[#allocation3 + $0x1778] sm:$0xff]
        %v5588 = vld [vmem:[#allocation3 + $0x1780] sm:$0xff]
        %v5589 = vld [vmem:[#allocation3 + $0x1788] sm:$0xff]
        %v5590 = vld [vmem:[#allocation3 + $0x1790] sm:$0xff]
        %v5591 = vld [vmem:[#allocation3 + $0x1798] sm:$0xff]
        %v5592 = vld [vmem:[#allocation3 + $0x17a0] sm:$0xff]
        %v5593 = vld [vmem:[#allocation3 + $0x17a8] sm:$0xff]
        %v5594 = vld [vmem:[#allocation3 + $0x17b0] sm:$0xff]
        %v5595 = vld [vmem:[#allocation3 + $0x17b8] sm:$0xff]
        %v5596 = vld [vmem:[#allocation3 + $0x17c0] sm:$0xff]
        %v5597 = vld [vmem:[#allocation3 + $0x17c8] sm:$0xff]
        %v5598 = vld [vmem:[#allocation3 + $0x17d0] sm:$0xff]
        %v5599 = vld [vmem:[#allocation3 + $0x17d8] sm:$0xff]
        %v5600 = vld [vmem:[#allocation3 + $0x17e0] sm:$0xff]
        %v5601 = vld [vmem:[#allocation3 + $0x17e8] sm:$0xff]
        %v5602 = vld [vmem:[#allocation3 + $0x17f0] sm:$0xff]
        %v5603 = vld [vmem:[#allocation3 + $0x17f8] sm:$0xff]
        %v5604 = vld [vmem:[#allocation3 + $0x1800] sm:$0xff]
        %v5605 = vld [vmem:[#allocation3 + $0x1808] sm:$0xff]
        %v5606 = vld [vmem:[#allocation3 + $0x1810] sm:$0xff]
        %v5607 = vld [vmem:[#allocation3 + $0x1818] sm:$0xff]
        %v5608 = vld [vmem:[#allocation3 + $0x1820] sm:$0xff]
        %v5609 = vld [vmem:[#allocation3 + $0x1828] sm:$0xff]
        %v5610 = vld [vmem:[#allocation3 + $0x1830] sm:$0xff]
        %v5611 = vld [vmem:[#allocation3 + $0x1838] sm:$0xff]
        %v5612 = vld [vmem:[#allocation3 + $0x1840] sm:$0xff]
        %v5613 = vld [vmem:[#allocation3 + $0x1848] sm:$0xff]
        %v5614 = vld [vmem:[#allocation3 + $0x1850] sm:$0xff]
        %v5615 = vld [vmem:[#allocation3 + $0x1858] sm:$0xff]
        %v5616 = vld [vmem:[#allocation3 + $0x1860] sm:$0xff]
        %v5617 = vld [vmem:[#allocation3 + $0x1868] sm:$0xff]
        %v5618 = vld [vmem:[#allocation3 + $0x1870] sm:$0xff]
        %v5619 = vld [vmem:[#allocation3 + $0x1878] sm:$0xff]
        %v5620 = vld [vmem:[#allocation3 + $0x1880] sm:$0xff]
        %v5621 = vld [vmem:[#allocation3 + $0x1888] sm:$0xff]
        %v5622 = vld [vmem:[#allocation3 + $0x1890] sm:$0xff]
        %v5623 = vld [vmem:[#allocation3 + $0x1898] sm:$0xff]
        %v5624 = vld [vmem:[#allocation3 + $0x18a0] sm:$0xff]
        %v5625 = vld [vmem:[#allocation3 + $0x18a8] sm:$0xff]
        %v5626 = vld [vmem:[#allocation3 + $0x18b0] sm:$0xff]
        %v5627 = vld [vmem:[#allocation3 + $0x18b8] sm:$0xff]
        %v5628 = vld [vmem:[#allocation3 + $0x18c0] sm:$0xff]
        %v5629 = vld [vmem:[#allocation3 + $0x18c8] sm:$0xff]
        %v5630 = vld [vmem:[#allocation3 + $0x18d0] sm:$0xff]
        %v5631 = vld [vmem:[#allocation3 + $0x18d8] sm:$0xff]
        %v5632 = vld [vmem:[#allocation3 + $0x18e0] sm:$0xff]
        %v5633 = vld [vmem:[#allocation3 + $0x18e8] sm:$0xff]
        %v5634 = vld [vmem:[#allocation3 + $0x18f0] sm:$0xff]
        %v5635 = vld [vmem:[#allocation3 + $0x18f8] sm:$0xff]
        %v5636 = vld [vmem:[#allocation10] sm:$0xff]
        %v5637 = vld [vmem:[#allocation10 + $0x8] sm:$0xff]
        %v5638 = vld [vmem:[#allocation10 + $0x10] sm:$0xff]
        %v5639 = vld [vmem:[#allocation10 + $0x18] sm:$0xff]
        %v5640 = vld [vmem:[#allocation10 + $0x20] sm:$0xff]
        %v5641 = vld [vmem:[#allocation10 + $0x28] sm:$0xff]
        %v5642 = vld [vmem:[#allocation10 + $0x30] sm:$0xff]
        %v5643 = vld [vmem:[#allocation10 + $0x38] sm:$0xff]
        %v5644 = vld [vmem:[#allocation10 + $0x40] sm:$0xff]
        %v5645 = vld [vmem:[#allocation10 + $0x48] sm:$0xff]
        %v5646 = vld [vmem:[#allocation10 + $0x50] sm:$0xff]
        %v5647 = vld [vmem:[#allocation10 + $0x58] sm:$0xff]
        %v5648 = vld [vmem:[#allocation10 + $0x60] sm:$0xff]
        %v5649 = vld [vmem:[#allocation10 + $0x68] sm:$0xff]
        %v5650 = vld [vmem:[#allocation10 + $0x70] sm:$0xff]
        %v5651 = vld [vmem:[#allocation10 + $0x78] sm:$0xff]
        %v5652 = vld [vmem:[#allocation10 + $0x80] sm:$0xff]
        %v5653 = vld [vmem:[#allocation10 + $0x88] sm:$0xff]
        %v5654 = vld [vmem:[#allocation10 + $0x90] sm:$0xff]
        %v5655 = vld [vmem:[#allocation10 + $0x98] sm:$0xff]
        %v5656 = vld [vmem:[#allocation10 + $0xa0] sm:$0xff]
        %v5657 = vld [vmem:[#allocation10 + $0xa8] sm:$0xff]
        %v5658 = vld [vmem:[#allocation10 + $0xb0] sm:$0xff]
        %v5659 = vld [vmem:[#allocation10 + $0xb8] sm:$0xff]
        %v5660 = vld [vmem:[#allocation10 + $0xc0] sm:$0xff]
        %v5661 = vld [vmem:[#allocation10 + $0xc8] sm:$0xff]
        %v5662 = vld [vmem:[#allocation10 + $0xd0] sm:$0xff]
        %v5663 = vld [vmem:[#allocation10 + $0xd8] sm:$0xff]
        %v5664 = vld [vmem:[#allocation10 + $0xe0] sm:$0xff]
        %v5665 = vld [vmem:[#allocation10 + $0xe8] sm:$0xff]
        %v5666 = vld [vmem:[#allocation10 + $0xf0] sm:$0xff]
        %v5667 = vld [vmem:[#allocation10 + $0xf8] sm:$0xff]
        %v5668 = vld [vmem:[#allocation10 + $0x100] sm:$0xff]
        %v5669 = vld [vmem:[#allocation10 + $0x108] sm:$0xff]
        %v5670 = vld [vmem:[#allocation10 + $0x110] sm:$0xff]
        %v5671 = vld [vmem:[#allocation10 + $0x118] sm:$0xff]
        %v5672 = vld [vmem:[#allocation10 + $0x120] sm:$0xff]
        %v5673 = vld [vmem:[#allocation10 + $0x128] sm:$0xff]
        %v5674 = vld [vmem:[#allocation10 + $0x130] sm:$0xff]
        %v5675 = vld [vmem:[#allocation10 + $0x138] sm:$0xff]
        %v5676 = vld [vmem:[#allocation10 + $0x140] sm:$0xff]
        %v5677 = vld [vmem:[#allocation10 + $0x148] sm:$0xff]
        %v5678 = vld [vmem:[#allocation10 + $0x150] sm:$0xff]
        %v5679 = vld [vmem:[#allocation10 + $0x158] sm:$0xff]
        %v5680 = vld [vmem:[#allocation10 + $0x160] sm:$0xff]
        %v5681 = vld [vmem:[#allocation10 + $0x168] sm:$0xff]
        %v5682 = vld [vmem:[#allocation10 + $0x170] sm:$0xff]
        %v5683 = vld [vmem:[#allocation10 + $0x178] sm:$0xff]
        %v5684 = vld [vmem:[#allocation10 + $0x180] sm:$0xff]
        %v5685 = vld [vmem:[#allocation10 + $0x188] sm:$0xff]
        %v5686 = vld [vmem:[#allocation10 + $0x190] sm:$0xff]
        %v5687 = vld [vmem:[#allocation10 + $0x198] sm:$0xff]
        %v5688 = vld [vmem:[#allocation10 + $0x1a0] sm:$0xff]
        %v5689 = vld [vmem:[#allocation10 + $0x1a8] sm:$0xff]
        %v5690 = vld [vmem:[#allocation10 + $0x1b0] sm:$0xff]
        %v5691 = vld [vmem:[#allocation10 + $0x1b8] sm:$0xff]
        %v5692 = vld [vmem:[#allocation10 + $0x1c0] sm:$0xff]
        %v5693 = vld [vmem:[#allocation10 + $0x1c8] sm:$0xff]
        %v5694 = vld [vmem:[#allocation10 + $0x1d0] sm:$0xff]
        %v5695 = vld [vmem:[#allocation10 + $0x1d8] sm:$0xff]
        %v5696 = vld [vmem:[#allocation10 + $0x1e0] sm:$0xff]
        %v5697 = vld [vmem:[#allocation10 + $0x1e8] sm:$0xff]
        %v5698 = vld [vmem:[#allocation10 + $0x1f0] sm:$0xff]
        %v5699 = vld [vmem:[#allocation10 + $0x1f8] sm:$0xff]
        %v5700 = vld [vmem:[#allocation10 + $0x200] sm:$0xff]
        %v5701 = vld [vmem:[#allocation10 + $0x208] sm:$0xff]
        %v5702 = vld [vmem:[#allocation10 + $0x210] sm:$0xff]
        %v5703 = vld [vmem:[#allocation10 + $0x218] sm:$0xff]
        %v5704 = vld [vmem:[#allocation10 + $0x220] sm:$0xff]
        %v5705 = vld [vmem:[#allocation10 + $0x228] sm:$0xff]
        %v5706 = vld [vmem:[#allocation10 + $0x230] sm:$0xff]
        %v5707 = vld [vmem:[#allocation10 + $0x238] sm:$0xff]
        %v5708 = vld [vmem:[#allocation10 + $0x240] sm:$0xff]
        %v5709 = vld [vmem:[#allocation10 + $0x248] sm:$0xff]
        %v5710 = vld [vmem:[#allocation10 + $0x250] sm:$0xff]
        %v5711 = vld [vmem:[#allocation10 + $0x258] sm:$0xff]
        %v5712 = vld [vmem:[#allocation10 + $0x260] sm:$0xff]
        %v5713 = vld [vmem:[#allocation10 + $0x268] sm:$0xff]
        %v5714 = vld [vmem:[#allocation10 + $0x270] sm:$0xff]
        %v5715 = vld [vmem:[#allocation10 + $0x278] sm:$0xff]
        %v5716 = vld [vmem:[#allocation10 + $0x280] sm:$0xff]
        %v5717 = vld [vmem:[#allocation10 + $0x288] sm:$0xff]
        %v5718 = vld [vmem:[#allocation10 + $0x290] sm:$0xff]
        %v5719 = vld [vmem:[#allocation10 + $0x298] sm:$0xff]
        %v5720 = vld [vmem:[#allocation10 + $0x2a0] sm:$0xff]
        %v5721 = vld [vmem:[#allocation10 + $0x2a8] sm:$0xff]
        %v5722 = vld [vmem:[#allocation10 + $0x2b0] sm:$0xff]
        %v5723 = vld [vmem:[#allocation10 + $0x2b8] sm:$0xff]
        %v5724 = vld [vmem:[#allocation10 + $0x2c0] sm:$0xff]
        %v5725 = vld [vmem:[#allocation10 + $0x2c8] sm:$0xff]
        %v5726 = vld [vmem:[#allocation10 + $0x2d0] sm:$0xff]
        %v5727 = vld [vmem:[#allocation10 + $0x2d8] sm:$0xff]
        %v5728 = vld [vmem:[#allocation10 + $0x2e0] sm:$0xff]
        %v5729 = vld [vmem:[#allocation10 + $0x2e8] sm:$0xff]
        %v5730 = vld [vmem:[#allocation10 + $0x2f0] sm:$0xff]
        %v5731 = vld [vmem:[#allocation10 + $0x2f8] sm:$0xff]
        %v5732 = vld [vmem:[#allocation10 + $0x300] sm:$0xff]
        %v5733 = vld [vmem:[#allocation10 + $0x308] sm:$0xff]
        %v5734 = vld [vmem:[#allocation10 + $0x310] sm:$0xff]
        %v5735 = vld [vmem:[#allocation10 + $0x318] sm:$0xff]
        %v5736 = vld [vmem:[#allocation10 + $0x320] sm:$0xff]
        %v5737 = vld [vmem:[#allocation10 + $0x328] sm:$0xff]
        %v5738 = vld [vmem:[#allocation10 + $0x330] sm:$0xff]
        %v5739 = vld [vmem:[#allocation10 + $0x338] sm:$0xff]
        %v5740 = vld [vmem:[#allocation10 + $0x340] sm:$0xff]
        %v5741 = vld [vmem:[#allocation10 + $0x348] sm:$0xff]
        %v5742 = vld [vmem:[#allocation10 + $0x350] sm:$0xff]
        %v5743 = vld [vmem:[#allocation10 + $0x358] sm:$0xff]
        %v5744 = vld [vmem:[#allocation10 + $0x360] sm:$0xff]
        %v5745 = vld [vmem:[#allocation10 + $0x368] sm:$0xff]
        %v5746 = vld [vmem:[#allocation10 + $0x370] sm:$0xff]
        %v5747 = vld [vmem:[#allocation10 + $0x378] sm:$0xff]
        %v5748 = vld [vmem:[#allocation10 + $0x380] sm:$0xff]
        %v5749 = vld [vmem:[#allocation10 + $0x388] sm:$0xff]
        %v5750 = vld [vmem:[#allocation10 + $0x390] sm:$0xff]
        %v5751 = vld [vmem:[#allocation10 + $0x398] sm:$0xff]
        %v5752 = vld [vmem:[#allocation10 + $0x3a0] sm:$0xff]
        %v5753 = vld [vmem:[#allocation10 + $0x3a8] sm:$0xff]
        %v5754 = vld [vmem:[#allocation10 + $0x3b0] sm:$0xff]
        %v5755 = vld [vmem:[#allocation10 + $0x3b8] sm:$0xff]
        %v5756 = vld [vmem:[#allocation10 + $0x3c0] sm:$0xff]
        %v5757 = vld [vmem:[#allocation10 + $0x3c8] sm:$0xff]
        %v5758 = vld [vmem:[#allocation10 + $0x3d0] sm:$0xff]
        %v5759 = vld [vmem:[#allocation10 + $0x3d8] sm:$0xff]
        %v5760 = vld [vmem:[#allocation10 + $0x3e0] sm:$0xff]
        %v5761 = vld [vmem:[#allocation10 + $0x3e8] sm:$0xff]
        %v5762 = vld [vmem:[#allocation10 + $0x3f0] sm:$0xff]
        %v5763 = vld [vmem:[#allocation10 + $0x3f8] sm:$0xff]
        %v5764 = vld [vmem:[#allocation10 + $0x400] sm:$0xff]
        %v5765 = vld [vmem:[#allocation10 + $0x408] sm:$0xff]
        %v5766 = vld [vmem:[#allocation10 + $0x410] sm:$0xff]
        %v5767 = vld [vmem:[#allocation10 + $0x418] sm:$0xff]
        %v5768 = vld [vmem:[#allocation10 + $0x420] sm:$0xff]
        %v5769 = vld [vmem:[#allocation10 + $0x428] sm:$0xff]
        %v5770 = vld [vmem:[#allocation10 + $0x430] sm:$0xff]
        %v5771 = vld [vmem:[#allocation10 + $0x438] sm:$0xff]
        %v5772 = vld [vmem:[#allocation10 + $0x440] sm:$0xff]
        %v5773 = vld [vmem:[#allocation10 + $0x448] sm:$0xff]
        %v5774 = vld [vmem:[#allocation10 + $0x450] sm:$0xff]
        %v5775 = vld [vmem:[#allocation10 + $0x458] sm:$0xff]
        %v5776 = vld [vmem:[#allocation10 + $0x460] sm:$0xff]
        %v5777 = vld [vmem:[#allocation10 + $0x468] sm:$0xff]
        %v5778 = vld [vmem:[#allocation10 + $0x470] sm:$0xff]
        %v5779 = vld [vmem:[#allocation10 + $0x478] sm:$0xff]
        %v5780 = vld [vmem:[#allocation10 + $0x480] sm:$0xff]
        %v5781 = vld [vmem:[#allocation10 + $0x488] sm:$0xff]
        %v5782 = vld [vmem:[#allocation10 + $0x490] sm:$0xff]
        %v5783 = vld [vmem:[#allocation10 + $0x498] sm:$0xff]
        %v5784 = vld [vmem:[#allocation10 + $0x4a0] sm:$0xff]
        %v5785 = vld [vmem:[#allocation10 + $0x4a8] sm:$0xff]
        %v5786 = vld [vmem:[#allocation10 + $0x4b0] sm:$0xff]
        %v5787 = vld [vmem:[#allocation10 + $0x4b8] sm:$0xff]
        %v5788 = vld [vmem:[#allocation10 + $0x4c0] sm:$0xff]
        %v5789 = vld [vmem:[#allocation10 + $0x4c8] sm:$0xff]
        %v5790 = vld [vmem:[#allocation10 + $0x4d0] sm:$0xff]
        %v5791 = vld [vmem:[#allocation10 + $0x4d8] sm:$0xff]
        %v5792 = vld [vmem:[#allocation10 + $0x4e0] sm:$0xff]
        %v5793 = vld [vmem:[#allocation10 + $0x4e8] sm:$0xff]
        %v5794 = vld [vmem:[#allocation10 + $0x4f0] sm:$0xff]
        %v5795 = vld [vmem:[#allocation10 + $0x4f8] sm:$0xff]
        %v5796 = vld [vmem:[#allocation10 + $0x500] sm:$0xff]
        %v5797 = vld [vmem:[#allocation10 + $0x508] sm:$0xff]
        %v5798 = vld [vmem:[#allocation10 + $0x510] sm:$0xff]
        %v5799 = vld [vmem:[#allocation10 + $0x518] sm:$0xff]
        %v5800 = vld [vmem:[#allocation10 + $0x520] sm:$0xff]
        %v5801 = vld [vmem:[#allocation10 + $0x528] sm:$0xff]
        %v5802 = vld [vmem:[#allocation10 + $0x530] sm:$0xff]
        %v5803 = vld [vmem:[#allocation10 + $0x538] sm:$0xff]
        %v5804 = vld [vmem:[#allocation10 + $0x540] sm:$0xff]
        %v5805 = vld [vmem:[#allocation10 + $0x548] sm:$0xff]
        %v5806 = vld [vmem:[#allocation10 + $0x550] sm:$0xff]
        %v5807 = vld [vmem:[#allocation10 + $0x558] sm:$0xff]
        %v5808 = vld [vmem:[#allocation10 + $0x560] sm:$0xff]
        %v5809 = vld [vmem:[#allocation10 + $0x568] sm:$0xff]
        %v5810 = vld [vmem:[#allocation10 + $0x570] sm:$0xff]
        %v5811 = vld [vmem:[#allocation10 + $0x578] sm:$0xff]
        %v5812 = vld [vmem:[#allocation10 + $0x580] sm:$0xff]
        %v5813 = vld [vmem:[#allocation10 + $0x588] sm:$0xff]
        %v5814 = vld [vmem:[#allocation10 + $0x590] sm:$0xff]
        %v5815 = vld [vmem:[#allocation10 + $0x598] sm:$0xff]
        %v5816 = vld [vmem:[#allocation10 + $0x5a0] sm:$0xff]
        %v5817 = vld [vmem:[#allocation10 + $0x5a8] sm:$0xff]
        %v5818 = vld [vmem:[#allocation10 + $0x5b0] sm:$0xff]
        %v5819 = vld [vmem:[#allocation10 + $0x5b8] sm:$0xff]
        %v5820 = vld [vmem:[#allocation10 + $0x5c0] sm:$0xff]
        %v5821 = vld [vmem:[#allocation10 + $0x5c8] sm:$0xff]
        %v5822 = vld [vmem:[#allocation10 + $0x5d0] sm:$0xff]
        %v5823 = vld [vmem:[#allocation10 + $0x5d8] sm:$0xff]
        %v5824 = vld [vmem:[#allocation10 + $0x5e0] sm:$0xff]
        %v5825 = vld [vmem:[#allocation10 + $0x5e8] sm:$0xff]
        %v5826 = vld [vmem:[#allocation10 + $0x5f0] sm:$0xff]
        %v5827 = vld [vmem:[#allocation10 + $0x5f8] sm:$0xff]
        %v5828 = vld [vmem:[#allocation10 + $0x600] sm:$0xff]
        %v5829 = vld [vmem:[#allocation10 + $0x608] sm:$0xff]
        %v5830 = vld [vmem:[#allocation10 + $0x610] sm:$0xff]
        %v5831 = vld [vmem:[#allocation10 + $0x618] sm:$0xff]
        %v5832 = vld [vmem:[#allocation10 + $0x620] sm:$0xff]
        %v5833 = vld [vmem:[#allocation10 + $0x628] sm:$0xff]
        %v5834 = vld [vmem:[#allocation10 + $0x630] sm:$0xff]
        %v5835 = vld [vmem:[#allocation10 + $0x638] sm:$0xff]
        %v5836 = vld [vmem:[#allocation10 + $0x640] sm:$0xff]
        %v5837 = vld [vmem:[#allocation10 + $0x648] sm:$0xff]
        %v5838 = vld [vmem:[#allocation10 + $0x650] sm:$0xff]
        %v5839 = vld [vmem:[#allocation10 + $0x658] sm:$0xff]
        %v5840 = vld [vmem:[#allocation10 + $0x660] sm:$0xff]
        %v5841 = vld [vmem:[#allocation10 + $0x668] sm:$0xff]
        %v5842 = vld [vmem:[#allocation10 + $0x670] sm:$0xff]
        %v5843 = vld [vmem:[#allocation10 + $0x678] sm:$0xff]
        %v5844 = vld [vmem:[#allocation10 + $0x680] sm:$0xff]
        %v5845 = vld [vmem:[#allocation10 + $0x688] sm:$0xff]
        %v5846 = vld [vmem:[#allocation10 + $0x690] sm:$0xff]
        %v5847 = vld [vmem:[#allocation10 + $0x698] sm:$0xff]
        %v5848 = vld [vmem:[#allocation10 + $0x6a0] sm:$0xff]
        %v5849 = vld [vmem:[#allocation10 + $0x6a8] sm:$0xff]
        %v5850 = vld [vmem:[#allocation10 + $0x6b0] sm:$0xff]
        %v5851 = vld [vmem:[#allocation10 + $0x6b8] sm:$0xff]
        %v5852 = vld [vmem:[#allocation10 + $0x6c0] sm:$0xff]
        %v5853 = vld [vmem:[#allocation10 + $0x6c8] sm:$0xff]
        %v5854 = vld [vmem:[#allocation10 + $0x6d0] sm:$0xff]
        %v5855 = vld [vmem:[#allocation10 + $0x6d8] sm:$0xff]
        %v5856 = vld [vmem:[#allocation10 + $0x6e0] sm:$0xff]
        %v5857 = vld [vmem:[#allocation10 + $0x6e8] sm:$0xff]
        %v5858 = vld [vmem:[#allocation10 + $0x6f0] sm:$0xff]
        %v5859 = vld [vmem:[#allocation10 + $0x6f8] sm:$0xff]
        %v5860 = vld [vmem:[#allocation10 + $0x700] sm:$0xff]
        %v5861 = vld [vmem:[#allocation10 + $0x708] sm:$0xff]
        %v5862 = vld [vmem:[#allocation10 + $0x710] sm:$0xff]
        %v5863 = vld [vmem:[#allocation10 + $0x718] sm:$0xff]
        %v5864 = vld [vmem:[#allocation10 + $0x720] sm:$0xff]
        %v5865 = vld [vmem:[#allocation10 + $0x728] sm:$0xff]
        %v5866 = vld [vmem:[#allocation10 + $0x730] sm:$0xff]
        %v5867 = vld [vmem:[#allocation10 + $0x738] sm:$0xff]
        %v5868 = vld [vmem:[#allocation10 + $0x740] sm:$0xff]
        %v5869 = vld [vmem:[#allocation10 + $0x748] sm:$0xff]
        %v5870 = vld [vmem:[#allocation10 + $0x750] sm:$0xff]
        %v5871 = vld [vmem:[#allocation10 + $0x758] sm:$0xff]
        %v5872 = vld [vmem:[#allocation10 + $0x760] sm:$0xff]
        %v5873 = vld [vmem:[#allocation10 + $0x768] sm:$0xff]
        %v5874 = vld [vmem:[#allocation10 + $0x770] sm:$0xff]
        %v5875 = vld [vmem:[#allocation10 + $0x778] sm:$0xff]
        %v5876 = vld [vmem:[#allocation10 + $0x780] sm:$0xff]
        %v5877 = vld [vmem:[#allocation10 + $0x788] sm:$0xff]
        %v5878 = vld [vmem:[#allocation10 + $0x790] sm:$0xff]
        %v5879 = vld [vmem:[#allocation10 + $0x798] sm:$0xff]
        %v5880 = vld [vmem:[#allocation10 + $0x7a0] sm:$0xff]
        %v5881 = vld [vmem:[#allocation10 + $0x7a8] sm:$0xff]
        %v5882 = vld [vmem:[#allocation10 + $0x7b0] sm:$0xff]
        %v5883 = vld [vmem:[#allocation10 + $0x7b8] sm:$0xff]
        %v5884 = vld [vmem:[#allocation10 + $0x7c0] sm:$0xff]
        %v5885 = vld [vmem:[#allocation10 + $0x7c8] sm:$0xff]
        %v5886 = vld [vmem:[#allocation10 + $0x7d0] sm:$0xff]
        %v5887 = vld [vmem:[#allocation10 + $0x7d8] sm:$0xff]
        %v5888 = vld [vmem:[#allocation10 + $0x7e0] sm:$0xff]
        %v5889 = vld [vmem:[#allocation10 + $0x7e8] sm:$0xff]
        %v5890 = vld [vmem:[#allocation10 + $0x7f0] sm:$0xff]
        %v5891 = vld [vmem:[#allocation10 + $0x7f8] sm:$0xff]
        %v5892 = vld [vmem:[#allocation10 + $0x800] sm:$0xff]
        %v5893 = vld [vmem:[#allocation10 + $0x808] sm:$0xff]
        %v5894 = vld [vmem:[#allocation10 + $0x810] sm:$0xff]
        %v5895 = vld [vmem:[#allocation10 + $0x818] sm:$0xff]
        %v5896 = vld [vmem:[#allocation10 + $0x820] sm:$0xff]
        %v5897 = vld [vmem:[#allocation10 + $0x828] sm:$0xff]
        %v5898 = vld [vmem:[#allocation10 + $0x830] sm:$0xff]
        %v5899 = vld [vmem:[#allocation10 + $0x838] sm:$0xff]
        %v5900 = vld [vmem:[#allocation10 + $0x840] sm:$0xff]
        %v5901 = vld [vmem:[#allocation10 + $0x848] sm:$0xff]
        %v5902 = vld [vmem:[#allocation10 + $0x850] sm:$0xff]
        %v5903 = vld [vmem:[#allocation10 + $0x858] sm:$0xff]
        %v5904 = vld [vmem:[#allocation10 + $0x860] sm:$0xff]
        %v5905 = vld [vmem:[#allocation10 + $0x868] sm:$0xff]
        %v5906 = vld [vmem:[#allocation10 + $0x870] sm:$0xff]
        %v5907 = vld [vmem:[#allocation10 + $0x878] sm:$0xff]
        %v5908 = vld [vmem:[#allocation10 + $0x880] sm:$0xff]
        %v5909 = vld [vmem:[#allocation10 + $0x888] sm:$0xff]
        %v5910 = vld [vmem:[#allocation10 + $0x890] sm:$0xff]
        %v5911 = vld [vmem:[#allocation10 + $0x898] sm:$0xff]
        %v5912 = vld [vmem:[#allocation10 + $0x8a0] sm:$0xff]
        %v5913 = vld [vmem:[#allocation10 + $0x8a8] sm:$0xff]
        %v5914 = vld [vmem:[#allocation10 + $0x8b0] sm:$0xff]
        %v5915 = vld [vmem:[#allocation10 + $0x8b8] sm:$0xff]
        %v5916 = vld [vmem:[#allocation10 + $0x8c0] sm:$0xff]
        %v5917 = vld [vmem:[#allocation10 + $0x8c8] sm:$0xff]
        %v5918 = vld [vmem:[#allocation10 + $0x8d0] sm:$0xff]
        %v5919 = vld [vmem:[#allocation10 + $0x8d8] sm:$0xff]
        %v5920 = vld [vmem:[#allocation10 + $0x8e0] sm:$0xff]
        %v5921 = vld [vmem:[#allocation10 + $0x8e8] sm:$0xff]
        %v5922 = vld [vmem:[#allocation10 + $0x8f0] sm:$0xff]
        %v5923 = vld [vmem:[#allocation10 + $0x8f8] sm:$0xff]
        %v5924 = vld [vmem:[#allocation10 + $0x900] sm:$0xff]
        %v5925 = vld [vmem:[#allocation10 + $0x908] sm:$0xff]
        %v5926 = vld [vmem:[#allocation10 + $0x910] sm:$0xff]
        %v5927 = vld [vmem:[#allocation10 + $0x918] sm:$0xff]
        %v5928 = vld [vmem:[#allocation10 + $0x920] sm:$0xff]
        %v5929 = vld [vmem:[#allocation10 + $0x928] sm:$0xff]
        %v5930 = vld [vmem:[#allocation10 + $0x930] sm:$0xff]
        %v5931 = vld [vmem:[#allocation10 + $0x938] sm:$0xff]
        %v5932 = vld [vmem:[#allocation10 + $0x940] sm:$0xff]
        %v5933 = vld [vmem:[#allocation10 + $0x948] sm:$0xff]
        %v5934 = vld [vmem:[#allocation10 + $0x950] sm:$0xff]
        %v5935 = vld [vmem:[#allocation10 + $0x958] sm:$0xff]
        %v5936 = vld [vmem:[#allocation10 + $0x960] sm:$0xff]
        %v5937 = vld [vmem:[#allocation10 + $0x968] sm:$0xff]
        %v5938 = vld [vmem:[#allocation10 + $0x970] sm:$0xff]
        %v5939 = vld [vmem:[#allocation10 + $0x978] sm:$0xff]
        %v5940 = vld [vmem:[#allocation10 + $0x980] sm:$0xff]
        %v5941 = vld [vmem:[#allocation10 + $0x988] sm:$0xff]
        %v5942 = vld [vmem:[#allocation10 + $0x990] sm:$0xff]
        %v5943 = vld [vmem:[#allocation10 + $0x998] sm:$0xff]
        %v5944 = vld [vmem:[#allocation10 + $0x9a0] sm:$0xff]
        %v5945 = vld [vmem:[#allocation10 + $0x9a8] sm:$0xff]
        %v5946 = vld [vmem:[#allocation10 + $0x9b0] sm:$0xff]
        %v5947 = vld [vmem:[#allocation10 + $0x9b8] sm:$0xff]
        %v5948 = vld [vmem:[#allocation10 + $0x9c0] sm:$0xff]
        %v5949 = vld [vmem:[#allocation10 + $0x9c8] sm:$0xff]
        %v5950 = vld [vmem:[#allocation10 + $0x9d0] sm:$0xff]
        %v5951 = vld [vmem:[#allocation10 + $0x9d8] sm:$0xff]
        %v5952 = vld [vmem:[#allocation10 + $0x9e0] sm:$0xff]
        %v5953 = vld [vmem:[#allocation10 + $0x9e8] sm:$0xff]
        %v5954 = vld [vmem:[#allocation10 + $0x9f0] sm:$0xff]
        %v5955 = vld [vmem:[#allocation10 + $0x9f8] sm:$0xff]
        %v5956 = vld [vmem:[#allocation10 + $0xa00] sm:$0xff]
        %v5957 = vld [vmem:[#allocation10 + $0xa08] sm:$0xff]
        %v5958 = vld [vmem:[#allocation10 + $0xa10] sm:$0xff]
        %v5959 = vld [vmem:[#allocation10 + $0xa18] sm:$0xff]
        %v5960 = vld [vmem:[#allocation10 + $0xa20] sm:$0xff]
        %v5961 = vld [vmem:[#allocation10 + $0xa28] sm:$0xff]
        %v5962 = vld [vmem:[#allocation10 + $0xa30] sm:$0xff]
        %v5963 = vld [vmem:[#allocation10 + $0xa38] sm:$0xff]
        %v5964 = vld [vmem:[#allocation10 + $0xa40] sm:$0xff]
        %v5965 = vld [vmem:[#allocation10 + $0xa48] sm:$0xff]
        %v5966 = vld [vmem:[#allocation10 + $0xa50] sm:$0xff]
        %v5967 = vld [vmem:[#allocation10 + $0xa58] sm:$0xff]
        %v5968 = vld [vmem:[#allocation10 + $0xa60] sm:$0xff]
        %v5969 = vld [vmem:[#allocation10 + $0xa68] sm:$0xff]
        %v5970 = vld [vmem:[#allocation10 + $0xa70] sm:$0xff]
        %v5971 = vld [vmem:[#allocation10 + $0xa78] sm:$0xff]
        %v5972 = vld [vmem:[#allocation10 + $0xa80] sm:$0xff]
        %v5973 = vld [vmem:[#allocation10 + $0xa88] sm:$0xff]
        %v5974 = vld [vmem:[#allocation10 + $0xa90] sm:$0xff]
        %v5975 = vld [vmem:[#allocation10 + $0xa98] sm:$0xff]
        %v5976 = vld [vmem:[#allocation10 + $0xaa0] sm:$0xff]
        %v5977 = vld [vmem:[#allocation10 + $0xaa8] sm:$0xff]
        %v5978 = vld [vmem:[#allocation10 + $0xab0] sm:$0xff]
        %v5979 = vld [vmem:[#allocation10 + $0xab8] sm:$0xff]
        %v5980 = vld [vmem:[#allocation10 + $0xac0] sm:$0xff]
        %v5981 = vld [vmem:[#allocation10 + $0xac8] sm:$0xff]
        %v5982 = vld [vmem:[#allocation10 + $0xad0] sm:$0xff]
        %v5983 = vld [vmem:[#allocation10 + $0xad8] sm:$0xff]
        %v5984 = vld [vmem:[#allocation10 + $0xae0] sm:$0xff]
        %v5985 = vld [vmem:[#allocation10 + $0xae8] sm:$0xff]
        %v5986 = vld [vmem:[#allocation10 + $0xaf0] sm:$0xff]
        %v5987 = vld [vmem:[#allocation10 + $0xaf8] sm:$0xff]
        %v5988 = vld [vmem:[#allocation10 + $0xb00] sm:$0xff]
        %v5989 = vld [vmem:[#allocation10 + $0xb08] sm:$0xff]
        %v5990 = vld [vmem:[#allocation10 + $0xb10] sm:$0xff]
        %v5991 = vld [vmem:[#allocation10 + $0xb18] sm:$0xff]
        %v5992 = vld [vmem:[#allocation10 + $0xb20] sm:$0xff]
        %v5993 = vld [vmem:[#allocation10 + $0xb28] sm:$0xff]
        %v5994 = vld [vmem:[#allocation10 + $0xb30] sm:$0xff]
        %v5995 = vld [vmem:[#allocation10 + $0xb38] sm:$0xff]
        %v5996 = vld [vmem:[#allocation10 + $0xb40] sm:$0xff]
        %v5997 = vld [vmem:[#allocation10 + $0xb48] sm:$0xff]
        %v5998 = vld [vmem:[#allocation10 + $0xb50] sm:$0xff]
        %v5999 = vld [vmem:[#allocation10 + $0xb58] sm:$0xff]
        %v6000 = vld [vmem:[#allocation10 + $0xb60] sm:$0xff]
        %v6001 = vld [vmem:[#allocation10 + $0xb68] sm:$0xff]
        %v6002 = vld [vmem:[#allocation10 + $0xb70] sm:$0xff]
        %v6003 = vld [vmem:[#allocation10 + $0xb78] sm:$0xff]
        %v6004 = vld [vmem:[#allocation10 + $0xb80] sm:$0xff]
        %v6005 = vld [vmem:[#allocation10 + $0xb88] sm:$0xff]
        %v6006 = vld [vmem:[#allocation10 + $0xb90] sm:$0xff]
        %v6007 = vld [vmem:[#allocation10 + $0xb98] sm:$0xff]
        %v6008 = vld [vmem:[#allocation10 + $0xba0] sm:$0xff]
        %v6009 = vld [vmem:[#allocation10 + $0xba8] sm:$0xff]
        %v6010 = vld [vmem:[#allocation10 + $0xbb0] sm:$0xff]
        %v6011 = vld [vmem:[#allocation10 + $0xbb8] sm:$0xff]
        %v6012 = vld [vmem:[#allocation10 + $0xbc0] sm:$0xff]
        %v6013 = vld [vmem:[#allocation10 + $0xbc8] sm:$0xff]
        %v6014 = vld [vmem:[#allocation10 + $0xbd0] sm:$0xff]
        %v6015 = vld [vmem:[#allocation10 + $0xbd8] sm:$0xff]
        %v6016 = vld [vmem:[#allocation10 + $0xbe0] sm:$0xff]
        %v6017 = vld [vmem:[#allocation10 + $0xbe8] sm:$0xff]
        %v6018 = vld [vmem:[#allocation10 + $0xbf0] sm:$0xff]
        %v6019 = vld [vmem:[#allocation10 + $0xbf8] sm:$0xff]
        %v6020 = vld [vmem:[#allocation10 + $0xc00] sm:$0xff]
        %v6021 = vld [vmem:[#allocation10 + $0xc08] sm:$0xff]
        %v6022 = vld [vmem:[#allocation10 + $0xc10] sm:$0xff]
        %v6023 = vld [vmem:[#allocation10 + $0xc18] sm:$0xff]
        %v6024 = vld [vmem:[#allocation10 + $0xc20] sm:$0xff]
        %v6025 = vld [vmem:[#allocation10 + $0xc28] sm:$0xff]
        %v6026 = vld [vmem:[#allocation10 + $0xc30] sm:$0xff]
        %v6027 = vld [vmem:[#allocation10 + $0xc38] sm:$0xff]
        %v6028 = vld [vmem:[#allocation10 + $0xc40] sm:$0xff]
        %v6029 = vld [vmem:[#allocation10 + $0xc48] sm:$0xff]
        %v6030 = vld [vmem:[#allocation10 + $0xc50] sm:$0xff]
        %v6031 = vld [vmem:[#allocation10 + $0xc58] sm:$0xff]
        %v6032 = vld [vmem:[#allocation10 + $0xc60] sm:$0xff]
        %v6033 = vld [vmem:[#allocation10 + $0xc68] sm:$0xff]
        %v6034 = vld [vmem:[#allocation10 + $0xc70] sm:$0xff]
        %v6035 = vld [vmem:[#allocation10 + $0xc78] sm:$0xff]
        %v6036 = vld [vmem:[#allocation12] sm:$0x1]
        %v6038 = vlaneseq
        %v6039 = vshrl.u32 %v6038, 7
        %v6040 = vsub.s32 0, %v6039
        %v6041 = vrot.slane %v6036, %v6040
        %6043 = vmatprep.subr.mxu0 0.0
        %6044 = vmatpush1.msra.mxu0 %v5651
        %6045 = vmatprep.subr.mxu0 0.0
        %6046 = vmatpush1.msra.mxu0 %v5650
        %6047 = vmatprep.subr.mxu0 0.0
        %6048 = vmatpush1.msra.mxu0 %v5649
        %6049 = vmatprep.subr.mxu0 0.0
        %6050 = vmatpush1.msra.mxu0 %v5648
        %6051 = vmatprep.subr.mxu0 0.0
        %6052 = vmatpush1.msra.mxu0 %v5647
        %6053 = vmatprep.subr.mxu0 0.0
        %6054 = vmatpush1.msra.mxu0 %v5646
        %6055 = vmatprep.subr.mxu0 0.0
        %6056 = vmatpush1.msra.mxu0 %v5645
        %6057 = vmatprep.subr.mxu0 0.0
        %6058 = vmatpush1.msra.mxu0 %v5644
        %6059 = vmatprep.subr.mxu0 0.0
        %6060 = vmatpush1.msra.mxu0 %v5643
        %6061 = vmatprep.subr.mxu0 0.0
        %6062 = vmatpush1.msra.mxu0 %v5642
        %6063 = vmatprep.subr.mxu0 0.0
        %6064 = vmatpush1.msra.mxu0 %v5641
        %6065 = vmatprep.subr.mxu0 0.0
        %6066 = vmatpush1.msra.mxu0 %v5640
        %6067 = vmatprep.subr.mxu0 0.0
        %6068 = vmatpush1.msra.mxu0 %v5639
        %6069 = vmatprep.subr.mxu0 0.0
        %6070 = vmatpush1.msra.mxu0 %v5638
        %6071 = vmatprep.subr.mxu0 0.0
        %6072 = vmatpush1.msra.mxu0 %v5637
        %6073 = vmatprep.subr.mxu0 0.0
        %6074 = vmatpush1.msra.mxu0 %v5636
        %6075 = vmatprep.subr.mxu0 0.0
        %6076 = vmatpush2.msra.mxu0 %v5667
        %6077 = vmatprep.subr.mxu0 0.0
        %6078 = vmatpush2.msra.mxu0 %v5666
        %6079 = vmatprep.subr.mxu0 0.0
        %6080 = vmatpush2.msra.mxu0 %v5665
        %6081 = vmatprep.subr.mxu0 0.0
        %6082 = vmatpush2.msra.mxu0 %v5664
        %6083 = vmatprep.subr.mxu0 0.0
        %6084 = vmatpush2.msra.mxu0 %v5663
        %6085 = vmatprep.subr.mxu0 0.0
        %6086 = vmatpush2.msra.mxu0 %v5662
        %6087 = vmatprep.subr.mxu0 0.0
        %6088 = vmatpush2.msra.mxu0 %v5661
        %6089 = vmatprep.subr.mxu0 0.0
        %6090 = vmatpush2.msra.mxu0 %v5660
        %6091 = vmatprep.subr.mxu0 0.0
        %6092 = vmatpush2.msra.mxu0 %v5659
        %6093 = vmatprep.subr.mxu0 0.0
        %6094 = vmatpush2.msra.mxu0 %v5658
        %6095 = vmatprep.subr.mxu0 0.0
        %6096 = vmatpush2.msra.mxu0 %v5657
        %6097 = vmatprep.subr.mxu0 0.0
        %6098 = vmatpush2.msra.mxu0 %v5656
        %6099 = vmatprep.subr.mxu0 0.0
        %6100 = vmatpush2.msra.mxu0 %v5655
        %6101 = vmatprep.subr.mxu0 0.0
        %6102 = vmatpush2.msra.mxu0 %v5654
        %6103 = vmatprep.subr.mxu0 0.0
        %6104 = vmatpush2.msra.mxu0 %v5653
        %6105 = vmatprep.subr.mxu0 0.0
        %6106 = vmatpush2.msra.mxu0 %v5652
        %6107 = vmatprep.mubr.f32.mxu0 %v4837
        %6108 = vmatmul.mubr.f32.gmra.mxu0 %v4836
        %v6109 = vpop.f32.mrf.mxu0
        %v6110 = vadd.f32 %v6041, %v6109
        %v6111 = vpop.f32.mrf.mxu0
        %6112 = vmatprep.mubr.f32.mxu0 %v4862
        %6113 = vmatmul.mubr.f32.gmra.mxu0 %v4861
        %v6114 = vpop.f32.mrf.mxu0
        %v6115 = vadd.f32 %v6041, %v6114
        %v6116 = vpop.f32.mrf.mxu0
        %6117 = vmatprep.mubr.f32.mxu0 %v4887
        %6118 = vmatmul.mubr.f32.gmra.mxu0 %v4886
        %v6119 = vpop.f32.mrf.mxu0
        %v6120 = vadd.f32 %v6041, %v6119
        %v6121 = vpop.f32.mrf.mxu0
        %6122 = vmatprep.mubr.f32.mxu0 %v4912
        %6123 = vmatmul.mubr.f32.gmra.mxu0 %v4911
        %v6124 = vpop.f32.mrf.mxu0
        %v6125 = vadd.f32 %v6041, %v6124
        %v6126 = vpop.f32.mrf.mxu0
        %6127 = vmatprep.mubr.f32.mxu0 %v4937
        %6128 = vmatmul.mubr.f32.gmra.mxu0 %v4936
        %v6129 = vpop.f32.mrf.mxu0
        %v6130 = vadd.f32 %v6041, %v6129
        %v6131 = vpop.f32.mrf.mxu0
        %6132 = vmatprep.mubr.f32.mxu0 %v4962
        %6133 = vmatmul.mubr.f32.gmra.mxu0 %v4961
        %v6134 = vpop.f32.mrf.mxu0
        %v6135 = vadd.f32 %v6041, %v6134
        %v6136 = vpop.f32.mrf.mxu0
        %6137 = vmatprep.mubr.f32.mxu0 %v4987
        %6138 = vmatmul.mubr.f32.gmra.mxu0 %v4986
        %v6139 = vpop.f32.mrf.mxu0
        %v6140 = vadd.f32 %v6041, %v6139
        %v6141 = vpop.f32.mrf.mxu0
        %6142 = vmatprep.mubr.f32.mxu0 %v5012
        %6143 = vmatmul.mubr.f32.gmra.mxu0 %v5011
        %v6144 = vpop.f32.mrf.mxu0
        %v6145 = vadd.f32 %v6041, %v6144
        %v6146 = vpop.f32.mrf.mxu0
        %6147 = vmatprep.mubr.f32.mxu0 %v5037
        %6148 = vmatmul.mubr.f32.gmra.mxu0 %v5036
        %v6149 = vpop.f32.mrf.mxu0
        %v6150 = vadd.f32 %v6041, %v6149
        %v6151 = vpop.f32.mrf.mxu0
        %6152 = vmatprep.mubr.f32.mxu0 %v5062
        %6153 = vmatmul.mubr.f32.gmra.mxu0 %v5061
        %v6154 = vpop.f32.mrf.mxu0
        %v6155 = vadd.f32 %v6041, %v6154
        %v6156 = vpop.f32.mrf.mxu0
        %6157 = vmatprep.mubr.f32.mxu0 %v5087
        %6158 = vmatmul.mubr.f32.gmra.mxu0 %v5086
        %v6159 = vpop.f32.mrf.mxu0
        %v6160 = vadd.f32 %v6041, %v6159
        %v6161 = vpop.f32.mrf.mxu0
        %6162 = vmatprep.mubr.f32.mxu0 %v5112
        %6163 = vmatmul.mubr.f32.gmra.mxu0 %v5111
        %v6164 = vpop.f32.mrf.mxu0
        %v6165 = vadd.f32 %v6041, %v6164
        %v6166 = vpop.f32.mrf.mxu0
        %6167 = vmatprep.mubr.f32.mxu0 %v5137
        %6168 = vmatmul.mubr.f32.gmra.mxu0 %v5136
        %v6169 = vpop.f32.mrf.mxu0
        %v6170 = vadd.f32 %v6041, %v6169
        %v6171 = vpop.f32.mrf.mxu0
        %6172 = vmatprep.mubr.f32.mxu0 %v5162
        %6173 = vmatmul.mubr.f32.gmra.mxu0 %v5161
        %v6174 = vpop.f32.mrf.mxu0
        %v6175 = vadd.f32 %v6041, %v6174
        %v6176 = vpop.f32.mrf.mxu0
        %6177 = vmatprep.mubr.f32.mxu0 %v5187
        %6178 = vmatmul.mubr.f32.gmra.mxu0 %v5186
        %v6179 = vpop.f32.mrf.mxu0
        %v6180 = vadd.f32 %v6041, %v6179
        %v6181 = vpop.f32.mrf.mxu0
        %6182 = vmatprep.mubr.f32.mxu0 %v5212
        %6183 = vmatmul.mubr.f32.gmra.mxu0 %v5211
        %v6184 = vpop.f32.mrf.mxu0
        %v6185 = vadd.f32 %v6041, %v6184
        %v6186 = vpop.f32.mrf.mxu0
        %6187 = vmatprep.mubr.f32.mxu0 %v5237
        %6188 = vmatmul.mubr.f32.gmra.mxu0 %v5236
        %v6189 = vpop.f32.mrf.mxu0
        %v6190 = vadd.f32 %v6041, %v6189
        %v6191 = vpop.f32.mrf.mxu0
        %6192 = vmatprep.mubr.f32.mxu0 %v5262
        %6193 = vmatmul.mubr.f32.gmra.mxu0 %v5261
        %v6194 = vpop.f32.mrf.mxu0
        %v6195 = vadd.f32 %v6041, %v6194
        %v6196 = vpop.f32.mrf.mxu0
        %6197 = vmatprep.mubr.f32.mxu0 %v5287
        %6198 = vmatmul.mubr.f32.gmra.mxu0 %v5286
        %v6199 = vpop.f32.mrf.mxu0
        %v6200 = vadd.f32 %v6041, %v6199
        %v6201 = vpop.f32.mrf.mxu0
        %6202 = vmatprep.mubr.f32.mxu0 %v5312
        %6203 = vmatmul.mubr.f32.gmra.mxu0 %v5311
        %v6204 = vpop.f32.mrf.mxu0
        %v6205 = vadd.f32 %v6041, %v6204
        %v6206 = vpop.f32.mrf.mxu0
        %6207 = vmatprep.mubr.f32.mxu0 %v5337
        %6208 = vmatmul.mubr.f32.gmra.mxu0 %v5336
        %v6209 = vpop.f32.mrf.mxu0
        %v6210 = vadd.f32 %v6041, %v6209
        %v6211 = vpop.f32.mrf.mxu0
        %6212 = vmatprep.mubr.f32.mxu0 %v5362
        %6213 = vmatmul.mubr.f32.gmra.mxu0 %v5361
        %v6214 = vpop.f32.mrf.mxu0
        %v6215 = vadd.f32 %v6041, %v6214
        %v6216 = vpop.f32.mrf.mxu0
        %6217 = vmatprep.mubr.f32.mxu0 %v5387
        %6218 = vmatmul.mubr.f32.gmra.mxu0 %v5386
        %v6219 = vpop.f32.mrf.mxu0
        %v6220 = vadd.f32 %v6041, %v6219
        %v6221 = vpop.f32.mrf.mxu0
        %6222 = vmatprep.mubr.f32.mxu0 %v5412
        %6223 = vmatmul.mubr.f32.gmra.mxu0 %v5411
        %v6224 = vpop.f32.mrf.mxu0
        %v6225 = vadd.f32 %v6041, %v6224
        %v6226 = vpop.f32.mrf.mxu0
        %6227 = vmatprep.mubr.f32.mxu0 %v5437
        %6228 = vmatmul.mubr.f32.gmra.mxu0 %v5436
        %v6229 = vpop.f32.mrf.mxu0
        %v6230 = vadd.f32 %v6041, %v6229
        %v6231 = vpop.f32.mrf.mxu0
        %6232 = vmatprep.mubr.f32.mxu0 %v5462
        %6233 = vmatmul.mubr.f32.gmra.mxu0 %v5461
        %v6234 = vpop.f32.mrf.mxu0
        %v6235 = vadd.f32 %v6041, %v6234
        %v6236 = vpop.f32.mrf.mxu0
        %6237 = vmatprep.mubr.f32.mxu0 %v5487
        %6238 = vmatmul.mubr.f32.gmra.mxu0 %v5486
        %v6239 = vpop.f32.mrf.mxu0
        %v6240 = vadd.f32 %v6041, %v6239
        %v6241 = vpop.f32.mrf.mxu0
        %6242 = vmatprep.mubr.f32.mxu0 %v5512
        %6243 = vmatmul.mubr.f32.gmra.mxu0 %v5511
        %v6244 = vpop.f32.mrf.mxu0
        %v6245 = vadd.f32 %v6041, %v6244
        %v6246 = vpop.f32.mrf.mxu0
        %6247 = vmatprep.mubr.f32.mxu0 %v5537
        %6248 = vmatmul.mubr.f32.gmra.mxu0 %v5536
        %v6249 = vpop.f32.mrf.mxu0
        %v6250 = vadd.f32 %v6041, %v6249
        %v6251 = vpop.f32.mrf.mxu0
        %6252 = vmatprep.mubr.f32.mxu0 %v5562
        %6253 = vmatmul.mubr.f32.gmra.mxu0 %v5561
        %v6254 = vpop.f32.mrf.mxu0
        %v6255 = vadd.f32 %v6041, %v6254
        %v6256 = vpop.f32.mrf.mxu0
        %6257 = vmatprep.mubr.f32.mxu0 %v5587
        %6258 = vmatmul.mubr.f32.gmra.mxu0 %v5586
        %v6259 = vpop.f32.mrf.mxu0
        %v6260 = vadd.f32 %v6041, %v6259
        %v6261 = vpop.f32.mrf.mxu0
        %6262 = vmatprep.mubr.f32.mxu0 %v5612
        %6263 = vmatmul.mubr.f32.gmra.mxu0 %v5611
        %v6264 = vpop.f32.mrf.mxu0
        %v6265 = vadd.f32 %v6041, %v6264
        %v6266 = vpop.f32.mrf.mxu0
        %6267 = vdwg.mxu0
        %6268 = vmatprep.subr.mxu0 0.0
        %6269 = vmatpush1.msra.mxu0 %v5683
        %6270 = vmatprep.subr.mxu0 0.0
        %6271 = vmatpush1.msra.mxu0 %v5682
        %6272 = vmatprep.subr.mxu0 0.0
        %6273 = vmatpush1.msra.mxu0 %v5681
        %6274 = vmatprep.subr.mxu0 0.0
        %6275 = vmatpush1.msra.mxu0 %v5680
        %6276 = vmatprep.subr.mxu0 0.0
        %6277 = vmatpush1.msra.mxu0 %v5679
        %6278 = vmatprep.subr.mxu0 0.0
        %6279 = vmatpush1.msra.mxu0 %v5678
        %6280 = vmatprep.subr.mxu0 0.0
        %6281 = vmatpush1.msra.mxu0 %v5677
        %6282 = vmatprep.subr.mxu0 0.0
        %6283 = vmatpush1.msra.mxu0 %v5676
        %6284 = vmatprep.subr.mxu0 0.0
        %6285 = vmatpush1.msra.mxu0 %v5675
        %6286 = vmatprep.subr.mxu0 0.0
        %6287 = vmatpush1.msra.mxu0 %v5674
        %6288 = vmatprep.subr.mxu0 0.0
        %6289 = vmatpush1.msra.mxu0 %v5673
        %6290 = vmatprep.subr.mxu0 0.0
        %6291 = vmatpush1.msra.mxu0 %v5672
        %6292 = vmatprep.subr.mxu0 0.0
        %6293 = vmatpush1.msra.mxu0 %v5671
        %6294 = vmatprep.subr.mxu0 0.0
        %6295 = vmatpush1.msra.mxu0 %v5670
        %6296 = vmatprep.subr.mxu0 0.0
        %6297 = vmatpush1.msra.mxu0 %v5669
        %6298 = vmatprep.subr.mxu0 0.0
        %6299 = vmatpush1.msra.mxu0 %v5668
        %6300 = vmatprep.subr.mxu0 0.0
        %6301 = vmatpush2.msra.mxu0 %v5699
        %6302 = vmatprep.subr.mxu0 0.0
        %6303 = vmatpush2.msra.mxu0 %v5698
        %6304 = vmatprep.subr.mxu0 0.0
        %6305 = vmatpush2.msra.mxu0 %v5697
        %6306 = vmatprep.subr.mxu0 0.0
        %6307 = vmatpush2.msra.mxu0 %v5696
        %6308 = vmatprep.subr.mxu0 0.0
        %6309 = vmatpush2.msra.mxu0 %v5695
        %6310 = vmatprep.subr.mxu0 0.0
        %6311 = vmatpush2.msra.mxu0 %v5694
        %6312 = vmatprep.subr.mxu0 0.0
        %6313 = vmatpush2.msra.mxu0 %v5693
        %6314 = vmatprep.subr.mxu0 0.0
        %6315 = vmatpush2.msra.mxu0 %v5692
        %6316 = vmatprep.subr.mxu0 0.0
        %6317 = vmatpush2.msra.mxu0 %v5691
        %6318 = vmatprep.subr.mxu0 0.0
        %6319 = vmatpush2.msra.mxu0 %v5690
        %6320 = vmatprep.subr.mxu0 0.0
        %6321 = vmatpush2.msra.mxu0 %v5689
        %6322 = vmatprep.subr.mxu0 0.0
        %6323 = vmatpush2.msra.mxu0 %v5688
        %6324 = vmatprep.subr.mxu0 0.0
        %6325 = vmatpush2.msra.mxu0 %v5687
        %6326 = vmatprep.subr.mxu0 0.0
        %6327 = vmatpush2.msra.mxu0 %v5686
        %6328 = vmatprep.subr.mxu0 0.0
        %6329 = vmatpush2.msra.mxu0 %v5685
        %6330 = vmatprep.subr.mxu0 0.0
        %6331 = vmatpush2.msra.mxu0 %v5684
        %6332 = vmatprep.mubr.f32.mxu0 %v4839
        %6333 = vmatmul.mubr.f32.gmra.mxu0 %v4838
        %v6334 = vpop.f32.mrf.mxu0
        %v6335 = vadd.f32 %v6110, %v6334
        %v6336 = vpop.f32.mrf.mxu0
        %6337 = vmatprep.mubr.f32.mxu0 %v4864
        %6338 = vmatmul.mubr.f32.gmra.mxu0 %v4863
        %v6339 = vpop.f32.mrf.mxu0
        %v6340 = vadd.f32 %v6115, %v6339
        %v6341 = vpop.f32.mrf.mxu0
        %6342 = vmatprep.mubr.f32.mxu0 %v4889
        %6343 = vmatmul.mubr.f32.gmra.mxu0 %v4888
        %v6344 = vpop.f32.mrf.mxu0
        %v6345 = vadd.f32 %v6120, %v6344
        %v6346 = vpop.f32.mrf.mxu0
        %6347 = vmatprep.mubr.f32.mxu0 %v4914
        %6348 = vmatmul.mubr.f32.gmra.mxu0 %v4913
        %v6349 = vpop.f32.mrf.mxu0
        %v6350 = vadd.f32 %v6125, %v6349
        %v6351 = vpop.f32.mrf.mxu0
        %6352 = vmatprep.mubr.f32.mxu0 %v4939
        %6353 = vmatmul.mubr.f32.gmra.mxu0 %v4938
        %v6354 = vpop.f32.mrf.mxu0
        %v6355 = vadd.f32 %v6130, %v6354
        %v6356 = vpop.f32.mrf.mxu0
        %6357 = vmatprep.mubr.f32.mxu0 %v4964
        %6358 = vmatmul.mubr.f32.gmra.mxu0 %v4963
        %v6359 = vpop.f32.mrf.mxu0
        %v6360 = vadd.f32 %v6135, %v6359
        %v6361 = vpop.f32.mrf.mxu0
        %6362 = vmatprep.mubr.f32.mxu0 %v4989
        %6363 = vmatmul.mubr.f32.gmra.mxu0 %v4988
        %v6364 = vpop.f32.mrf.mxu0
        %v6365 = vadd.f32 %v6140, %v6364
        %v6366 = vpop.f32.mrf.mxu0
        %6367 = vmatprep.mubr.f32.mxu0 %v5014
        %6368 = vmatmul.mubr.f32.gmra.mxu0 %v5013
        %v6369 = vpop.f32.mrf.mxu0
        %v6370 = vadd.f32 %v6145, %v6369
        %v6371 = vpop.f32.mrf.mxu0
        %6372 = vmatprep.mubr.f32.mxu0 %v5039
        %6373 = vmatmul.mubr.f32.gmra.mxu0 %v5038
        %v6374 = vpop.f32.mrf.mxu0
        %v6375 = vadd.f32 %v6150, %v6374
        %v6376 = vpop.f32.mrf.mxu0
        %6377 = vmatprep.mubr.f32.mxu0 %v5064
        %6378 = vmatmul.mubr.f32.gmra.mxu0 %v5063
        %v6379 = vpop.f32.mrf.mxu0
        %v6380 = vadd.f32 %v6155, %v6379
        %v6381 = vpop.f32.mrf.mxu0
        %6382 = vmatprep.mubr.f32.mxu0 %v5089
        %6383 = vmatmul.mubr.f32.gmra.mxu0 %v5088
        %v6384 = vpop.f32.mrf.mxu0
        %v6385 = vadd.f32 %v6160, %v6384
        %v6386 = vpop.f32.mrf.mxu0
        %6387 = vmatprep.mubr.f32.mxu0 %v5114
        %6388 = vmatmul.mubr.f32.gmra.mxu0 %v5113
        %v6389 = vpop.f32.mrf.mxu0
        %v6390 = vadd.f32 %v6165, %v6389
        %v6391 = vpop.f32.mrf.mxu0
        %6392 = vmatprep.mubr.f32.mxu0 %v5139
        %6393 = vmatmul.mubr.f32.gmra.mxu0 %v5138
        %v6394 = vpop.f32.mrf.mxu0
        %v6395 = vadd.f32 %v6170, %v6394
        %v6396 = vpop.f32.mrf.mxu0
        %6397 = vmatprep.mubr.f32.mxu0 %v5164
        %6398 = vmatmul.mubr.f32.gmra.mxu0 %v5163
        %v6399 = vpop.f32.mrf.mxu0
        %v6400 = vadd.f32 %v6175, %v6399
        %v6401 = vpop.f32.mrf.mxu0
        %6402 = vmatprep.mubr.f32.mxu0 %v5189
        %6403 = vmatmul.mubr.f32.gmra.mxu0 %v5188
        %v6404 = vpop.f32.mrf.mxu0
        %v6405 = vadd.f32 %v6180, %v6404
        %v6406 = vpop.f32.mrf.mxu0
        %6407 = vmatprep.mubr.f32.mxu0 %v5214
        %6408 = vmatmul.mubr.f32.gmra.mxu0 %v5213
        %v6409 = vpop.f32.mrf.mxu0
        %v6410 = vadd.f32 %v6185, %v6409
        %v6411 = vpop.f32.mrf.mxu0
        %6412 = vmatprep.mubr.f32.mxu0 %v5239
        %6413 = vmatmul.mubr.f32.gmra.mxu0 %v5238
        %v6414 = vpop.f32.mrf.mxu0
        %v6415 = vadd.f32 %v6190, %v6414
        %v6416 = vpop.f32.mrf.mxu0
        %6417 = vmatprep.mubr.f32.mxu0 %v5264
        %6418 = vmatmul.mubr.f32.gmra.mxu0 %v5263
        %v6419 = vpop.f32.mrf.mxu0
        %v6420 = vadd.f32 %v6195, %v6419
        %v6421 = vpop.f32.mrf.mxu0
        %6422 = vmatprep.mubr.f32.mxu0 %v5289
        %6423 = vmatmul.mubr.f32.gmra.mxu0 %v5288
        %v6424 = vpop.f32.mrf.mxu0
        %v6425 = vadd.f32 %v6200, %v6424
        %v6426 = vpop.f32.mrf.mxu0
        %6427 = vmatprep.mubr.f32.mxu0 %v5314
        %6428 = vmatmul.mubr.f32.gmra.mxu0 %v5313
        %v6429 = vpop.f32.mrf.mxu0
        %v6430 = vadd.f32 %v6205, %v6429
        %v6431 = vpop.f32.mrf.mxu0
        %6432 = vmatprep.mubr.f32.mxu0 %v5339
        %6433 = vmatmul.mubr.f32.gmra.mxu0 %v5338
        %v6434 = vpop.f32.mrf.mxu0
        %v6435 = vadd.f32 %v6210, %v6434
        %v6436 = vpop.f32.mrf.mxu0
        %6437 = vmatprep.mubr.f32.mxu0 %v5364
        %6438 = vmatmul.mubr.f32.gmra.mxu0 %v5363
        %v6439 = vpop.f32.mrf.mxu0
        %v6440 = vadd.f32 %v6215, %v6439
        %v6441 = vpop.f32.mrf.mxu0
        %6442 = vmatprep.mubr.f32.mxu0 %v5389
        %6443 = vmatmul.mubr.f32.gmra.mxu0 %v5388
        %v6444 = vpop.f32.mrf.mxu0
        %v6445 = vadd.f32 %v6220, %v6444
        %v6446 = vpop.f32.mrf.mxu0
        %6447 = vmatprep.mubr.f32.mxu0 %v5414
        %6448 = vmatmul.mubr.f32.gmra.mxu0 %v5413
        %v6449 = vpop.f32.mrf.mxu0
        %v6450 = vadd.f32 %v6225, %v6449
        %v6451 = vpop.f32.mrf.mxu0
        %6452 = vmatprep.mubr.f32.mxu0 %v5439
        %6453 = vmatmul.mubr.f32.gmra.mxu0 %v5438
        %v6454 = vpop.f32.mrf.mxu0
        %v6455 = vadd.f32 %v6230, %v6454
        %v6456 = vpop.f32.mrf.mxu0
        %6457 = vmatprep.mubr.f32.mxu0 %v5464
        %6458 = vmatmul.mubr.f32.gmra.mxu0 %v5463
        %v6459 = vpop.f32.mrf.mxu0
        %v6460 = vadd.f32 %v6235, %v6459
        %v6461 = vpop.f32.mrf.mxu0
        %6462 = vmatprep.mubr.f32.mxu0 %v5489
        %6463 = vmatmul.mubr.f32.gmra.mxu0 %v5488
        %v6464 = vpop.f32.mrf.mxu0
        %v6465 = vadd.f32 %v6240, %v6464
        %v6466 = vpop.f32.mrf.mxu0
        %6467 = vmatprep.mubr.f32.mxu0 %v5514
        %6468 = vmatmul.mubr.f32.gmra.mxu0 %v5513
        %v6469 = vpop.f32.mrf.mxu0
        %v6470 = vadd.f32 %v6245, %v6469
        %v6471 = vpop.f32.mrf.mxu0
        %6472 = vmatprep.mubr.f32.mxu0 %v5539
        %6473 = vmatmul.mubr.f32.gmra.mxu0 %v5538
        %v6474 = vpop.f32.mrf.mxu0
        %v6475 = vadd.f32 %v6250, %v6474
        %v6476 = vpop.f32.mrf.mxu0
        %6477 = vmatprep.mubr.f32.mxu0 %v5564
        %6478 = vmatmul.mubr.f32.gmra.mxu0 %v5563
        %v6479 = vpop.f32.mrf.mxu0
        %v6480 = vadd.f32 %v6255, %v6479
        %v6481 = vpop.f32.mrf.mxu0
        %6482 = vmatprep.mubr.f32.mxu0 %v5589
        %6483 = vmatmul.mubr.f32.gmra.mxu0 %v5588
        %v6484 = vpop.f32.mrf.mxu0
        %v6485 = vadd.f32 %v6260, %v6484
        %v6486 = vpop.f32.mrf.mxu0
        %6487 = vmatprep.mubr.f32.mxu0 %v5614
        %6488 = vmatmul.mubr.f32.gmra.mxu0 %v5613
        %v6489 = vpop.f32.mrf.mxu0
        %v6490 = vadd.f32 %v6265, %v6489
        %v6491 = vpop.f32.mrf.mxu0
        %6492 = vdwg.mxu0
        %6493 = vmatprep.subr.mxu0 0.0
        %6494 = vmatpush1.msra.mxu0 %v5715
        %6495 = vmatprep.subr.mxu0 0.0
        %6496 = vmatpush1.msra.mxu0 %v5714
        %6497 = vmatprep.subr.mxu0 0.0
        %6498 = vmatpush1.msra.mxu0 %v5713
        %6499 = vmatprep.subr.mxu0 0.0
        %6500 = vmatpush1.msra.mxu0 %v5712
        %6501 = vmatprep.subr.mxu0 0.0
        %6502 = vmatpush1.msra.mxu0 %v5711
        %6503 = vmatprep.subr.mxu0 0.0
        %6504 = vmatpush1.msra.mxu0 %v5710
        %6505 = vmatprep.subr.mxu0 0.0
        %6506 = vmatpush1.msra.mxu0 %v5709
        %6507 = vmatprep.subr.mxu0 0.0
        %6508 = vmatpush1.msra.mxu0 %v5708
        %6509 = vmatprep.subr.mxu0 0.0
        %6510 = vmatpush1.msra.mxu0 %v5707
        %6511 = vmatprep.subr.mxu0 0.0
        %6512 = vmatpush1.msra.mxu0 %v5706
        %6513 = vmatprep.subr.mxu0 0.0
        %6514 = vmatpush1.msra.mxu0 %v5705
        %6515 = vmatprep.subr.mxu0 0.0
        %6516 = vmatpush1.msra.mxu0 %v5704
        %6517 = vmatprep.subr.mxu0 0.0
        %6518 = vmatpush1.msra.mxu0 %v5703
        %6519 = vmatprep.subr.mxu0 0.0
        %6520 = vmatpush1.msra.mxu0 %v5702
        %6521 = vmatprep.subr.mxu0 0.0
        %6522 = vmatpush1.msra.mxu0 %v5701
        %6523 = vmatprep.subr.mxu0 0.0
        %6524 = vmatpush1.msra.mxu0 %v5700
        %6525 = vmatprep.subr.mxu0 0.0
        %6526 = vmatpush2.msra.mxu0 %v5731
        %6527 = vmatprep.subr.mxu0 0.0
        %6528 = vmatpush2.msra.mxu0 %v5730
        %6529 = vmatprep.subr.mxu0 0.0
        %6530 = vmatpush2.msra.mxu0 %v5729
        %6531 = vmatprep.subr.mxu0 0.0
        %6532 = vmatpush2.msra.mxu0 %v5728
        %6533 = vmatprep.subr.mxu0 0.0
        %6534 = vmatpush2.msra.mxu0 %v5727
        %6535 = vmatprep.subr.mxu0 0.0
        %6536 = vmatpush2.msra.mxu0 %v5726
        %6537 = vmatprep.subr.mxu0 0.0
        %6538 = vmatpush2.msra.mxu0 %v5725
        %6539 = vmatprep.subr.mxu0 0.0
        %6540 = vmatpush2.msra.mxu0 %v5724
        %6541 = vmatprep.subr.mxu0 0.0
        %6542 = vmatpush2.msra.mxu0 %v5723
        %6543 = vmatprep.subr.mxu0 0.0
        %6544 = vmatpush2.msra.mxu0 %v5722
        %6545 = vmatprep.subr.mxu0 0.0
        %6546 = vmatpush2.msra.mxu0 %v5721
        %6547 = vmatprep.subr.mxu0 0.0
        %6548 = vmatpush2.msra.mxu0 %v5720
        %6549 = vmatprep.subr.mxu0 0.0
        %6550 = vmatpush2.msra.mxu0 %v5719
        %6551 = vmatprep.subr.mxu0 0.0
        %6552 = vmatpush2.msra.mxu0 %v5718
        %6553 = vmatprep.subr.mxu0 0.0
        %6554 = vmatpush2.msra.mxu0 %v5717
        %6555 = vmatprep.subr.mxu0 0.0
        %6556 = vmatpush2.msra.mxu0 %v5716
        %6557 = vmatprep.mubr.f32.mxu0 %v4841
        %6558 = vmatmul.mubr.f32.gmra.mxu0 %v4840
        %v6559 = vpop.f32.mrf.mxu0
        %v6560 = vadd.f32 %v6335, %v6559
        %v6561 = vpop.f32.mrf.mxu0
        %6562 = vmatprep.mubr.f32.mxu0 %v4866
        %6563 = vmatmul.mubr.f32.gmra.mxu0 %v4865
        %v6564 = vpop.f32.mrf.mxu0
        %v6565 = vadd.f32 %v6340, %v6564
        %v6566 = vpop.f32.mrf.mxu0
        %6567 = vmatprep.mubr.f32.mxu0 %v4891
        %6568 = vmatmul.mubr.f32.gmra.mxu0 %v4890
        %v6569 = vpop.f32.mrf.mxu0
        %v6570 = vadd.f32 %v6345, %v6569
        %v6571 = vpop.f32.mrf.mxu0
        %6572 = vmatprep.mubr.f32.mxu0 %v4916
        %6573 = vmatmul.mubr.f32.gmra.mxu0 %v4915
        %v6574 = vpop.f32.mrf.mxu0
        %v6575 = vadd.f32 %v6350, %v6574
        %v6576 = vpop.f32.mrf.mxu0
        %6577 = vmatprep.mubr.f32.mxu0 %v4941
        %6578 = vmatmul.mubr.f32.gmra.mxu0 %v4940
        %v6579 = vpop.f32.mrf.mxu0
        %v6580 = vadd.f32 %v6355, %v6579
        %v6581 = vpop.f32.mrf.mxu0
        %6582 = vmatprep.mubr.f32.mxu0 %v4966
        %6583 = vmatmul.mubr.f32.gmra.mxu0 %v4965
        %v6584 = vpop.f32.mrf.mxu0
        %v6585 = vadd.f32 %v6360, %v6584
        %v6586 = vpop.f32.mrf.mxu0
        %6587 = vmatprep.mubr.f32.mxu0 %v4991
        %6588 = vmatmul.mubr.f32.gmra.mxu0 %v4990
        %v6589 = vpop.f32.mrf.mxu0
        %v6590 = vadd.f32 %v6365, %v6589
        %v6591 = vpop.f32.mrf.mxu0
        %6592 = vmatprep.mubr.f32.mxu0 %v5016
        %6593 = vmatmul.mubr.f32.gmra.mxu0 %v5015
        %v6594 = vpop.f32.mrf.mxu0
        %v6595 = vadd.f32 %v6370, %v6594
        %v6596 = vpop.f32.mrf.mxu0
        %6597 = vmatprep.mubr.f32.mxu0 %v5041
        %6598 = vmatmul.mubr.f32.gmra.mxu0 %v5040
        %v6599 = vpop.f32.mrf.mxu0
        %v6600 = vadd.f32 %v6375, %v6599
        %v6601 = vpop.f32.mrf.mxu0
        %6602 = vmatprep.mubr.f32.mxu0 %v5066
        %6603 = vmatmul.mubr.f32.gmra.mxu0 %v5065
        %v6604 = vpop.f32.mrf.mxu0
        %v6605 = vadd.f32 %v6380, %v6604
        %v6606 = vpop.f32.mrf.mxu0
        %6607 = vmatprep.mubr.f32.mxu0 %v5091
        %6608 = vmatmul.mubr.f32.gmra.mxu0 %v5090
        %v6609 = vpop.f32.mrf.mxu0
        %v6610 = vadd.f32 %v6385, %v6609
        %v6611 = vpop.f32.mrf.mxu0
        %6612 = vmatprep.mubr.f32.mxu0 %v5116
        %6613 = vmatmul.mubr.f32.gmra.mxu0 %v5115
        %v6614 = vpop.f32.mrf.mxu0
        %v6615 = vadd.f32 %v6390, %v6614
        %v6616 = vpop.f32.mrf.mxu0
        %6617 = vmatprep.mubr.f32.mxu0 %v5141
        %6618 = vmatmul.mubr.f32.gmra.mxu0 %v5140
        %v6619 = vpop.f32.mrf.mxu0
        %v6620 = vadd.f32 %v6395, %v6619
        %v6621 = vpop.f32.mrf.mxu0
        %6622 = vmatprep.mubr.f32.mxu0 %v5166
        %6623 = vmatmul.mubr.f32.gmra.mxu0 %v5165
        %v6624 = vpop.f32.mrf.mxu0
        %v6625 = vadd.f32 %v6400, %v6624
        %v6626 = vpop.f32.mrf.mxu0
        %6627 = vmatprep.mubr.f32.mxu0 %v5191
        %6628 = vmatmul.mubr.f32.gmra.mxu0 %v5190
        %v6629 = vpop.f32.mrf.mxu0
        %v6630 = vadd.f32 %v6405, %v6629
        %v6631 = vpop.f32.mrf.mxu0
        %6632 = vmatprep.mubr.f32.mxu0 %v5216
        %6633 = vmatmul.mubr.f32.gmra.mxu0 %v5215
        %v6634 = vpop.f32.mrf.mxu0
        %v6635 = vadd.f32 %v6410, %v6634
        %v6636 = vpop.f32.mrf.mxu0
        %6637 = vmatprep.mubr.f32.mxu0 %v5241
        %6638 = vmatmul.mubr.f32.gmra.mxu0 %v5240
        %v6639 = vpop.f32.mrf.mxu0
        %v6640 = vadd.f32 %v6415, %v6639
        %v6641 = vpop.f32.mrf.mxu0
        %6642 = vmatprep.mubr.f32.mxu0 %v5266
        %6643 = vmatmul.mubr.f32.gmra.mxu0 %v5265
        %v6644 = vpop.f32.mrf.mxu0
        %v6645 = vadd.f32 %v6420, %v6644
        %v6646 = vpop.f32.mrf.mxu0
        %6647 = vmatprep.mubr.f32.mxu0 %v5291
        %6648 = vmatmul.mubr.f32.gmra.mxu0 %v5290
        %v6649 = vpop.f32.mrf.mxu0
        %v6650 = vadd.f32 %v6425, %v6649
        %v6651 = vpop.f32.mrf.mxu0
        %6652 = vmatprep.mubr.f32.mxu0 %v5316
        %6653 = vmatmul.mubr.f32.gmra.mxu0 %v5315
        %v6654 = vpop.f32.mrf.mxu0
        %v6655 = vadd.f32 %v6430, %v6654
        %v6656 = vpop.f32.mrf.mxu0
        %6657 = vmatprep.mubr.f32.mxu0 %v5341
        %6658 = vmatmul.mubr.f32.gmra.mxu0 %v5340
        %v6659 = vpop.f32.mrf.mxu0
        %v6660 = vadd.f32 %v6435, %v6659
        %v6661 = vpop.f32.mrf.mxu0
        %6662 = vmatprep.mubr.f32.mxu0 %v5366
        %6663 = vmatmul.mubr.f32.gmra.mxu0 %v5365
        %v6664 = vpop.f32.mrf.mxu0
        %v6665 = vadd.f32 %v6440, %v6664
        %v6666 = vpop.f32.mrf.mxu0
        %6667 = vmatprep.mubr.f32.mxu0 %v5391
        %6668 = vmatmul.mubr.f32.gmra.mxu0 %v5390
        %v6669 = vpop.f32.mrf.mxu0
        %v6670 = vadd.f32 %v6445, %v6669
        %v6671 = vpop.f32.mrf.mxu0
        %6672 = vmatprep.mubr.f32.mxu0 %v5416
        %6673 = vmatmul.mubr.f32.gmra.mxu0 %v5415
        %v6674 = vpop.f32.mrf.mxu0
        %v6675 = vadd.f32 %v6450, %v6674
        %v6676 = vpop.f32.mrf.mxu0
        %6677 = vmatprep.mubr.f32.mxu0 %v5441
        %6678 = vmatmul.mubr.f32.gmra.mxu0 %v5440
        %v6679 = vpop.f32.mrf.mxu0
        %v6680 = vadd.f32 %v6455, %v6679
        %v6681 = vpop.f32.mrf.mxu0
        %6682 = vmatprep.mubr.f32.mxu0 %v5466
        %6683 = vmatmul.mubr.f32.gmra.mxu0 %v5465
        %v6684 = vpop.f32.mrf.mxu0
        %v6685 = vadd.f32 %v6460, %v6684
        %v6686 = vpop.f32.mrf.mxu0
        %6687 = vmatprep.mubr.f32.mxu0 %v5491
        %6688 = vmatmul.mubr.f32.gmra.mxu0 %v5490
        %v6689 = vpop.f32.mrf.mxu0
        %v6690 = vadd.f32 %v6465, %v6689
        %v6691 = vpop.f32.mrf.mxu0
        %6692 = vmatprep.mubr.f32.mxu0 %v5516
        %6693 = vmatmul.mubr.f32.gmra.mxu0 %v5515
        %v6694 = vpop.f32.mrf.mxu0
        %v6695 = vadd.f32 %v6470, %v6694
        %v6696 = vpop.f32.mrf.mxu0
        %6697 = vmatprep.mubr.f32.mxu0 %v5541
        %6698 = vmatmul.mubr.f32.gmra.mxu0 %v5540
        %v6699 = vpop.f32.mrf.mxu0
        %v6700 = vadd.f32 %v6475, %v6699
        %v6701 = vpop.f32.mrf.mxu0
        %6702 = vmatprep.mubr.f32.mxu0 %v5566
        %6703 = vmatmul.mubr.f32.gmra.mxu0 %v5565
        %v6704 = vpop.f32.mrf.mxu0
        %v6705 = vadd.f32 %v6480, %v6704
        %v6706 = vpop.f32.mrf.mxu0
        %6707 = vmatprep.mubr.f32.mxu0 %v5591
        %6708 = vmatmul.mubr.f32.gmra.mxu0 %v5590
        %v6709 = vpop.f32.mrf.mxu0
        %v6710 = vadd.f32 %v6485, %v6709
        %v6711 = vpop.f32.mrf.mxu0
        %6712 = vmatprep.mubr.f32.mxu0 %v5616
        %6713 = vmatmul.mubr.f32.gmra.mxu0 %v5615
        %v6714 = vpop.f32.mrf.mxu0
        %v6715 = vadd.f32 %v6490, %v6714
        %v6716 = vpop.f32.mrf.mxu0
        %6717 = vdwg.mxu0
        %6718 = vmatprep.subr.mxu0 0.0
        %6719 = vmatpush1.msra.mxu0 %v5747
        %6720 = vmatprep.subr.mxu0 0.0
        %6721 = vmatpush1.msra.mxu0 %v5746
        %6722 = vmatprep.subr.mxu0 0.0
        %6723 = vmatpush1.msra.mxu0 %v5745
        %6724 = vmatprep.subr.mxu0 0.0
        %6725 = vmatpush1.msra.mxu0 %v5744
        %6726 = vmatprep.subr.mxu0 0.0
        %6727 = vmatpush1.msra.mxu0 %v5743
        %6728 = vmatprep.subr.mxu0 0.0
        %6729 = vmatpush1.msra.mxu0 %v5742
        %6730 = vmatprep.subr.mxu0 0.0
        %6731 = vmatpush1.msra.mxu0 %v5741
        %6732 = vmatprep.subr.mxu0 0.0
        %6733 = vmatpush1.msra.mxu0 %v5740
        %6734 = vmatprep.subr.mxu0 0.0
        %6735 = vmatpush1.msra.mxu0 %v5739
        %6736 = vmatprep.subr.mxu0 0.0
        %6737 = vmatpush1.msra.mxu0 %v5738
        %6738 = vmatprep.subr.mxu0 0.0
        %6739 = vmatpush1.msra.mxu0 %v5737
        %6740 = vmatprep.subr.mxu0 0.0
        %6741 = vmatpush1.msra.mxu0 %v5736
        %6742 = vmatprep.subr.mxu0 0.0
        %6743 = vmatpush1.msra.mxu0 %v5735
        %6744 = vmatprep.subr.mxu0 0.0
        %6745 = vmatpush1.msra.mxu0 %v5734
        %6746 = vmatprep.subr.mxu0 0.0
        %6747 = vmatpush1.msra.mxu0 %v5733
        %6748 = vmatprep.subr.mxu0 0.0
        %6749 = vmatpush1.msra.mxu0 %v5732
        %6750 = vmatprep.subr.mxu0 0.0
        %6751 = vmatpush2.msra.mxu0 %v5763
        %6752 = vmatprep.subr.mxu0 0.0
        %6753 = vmatpush2.msra.mxu0 %v5762
        %6754 = vmatprep.subr.mxu0 0.0
        %6755 = vmatpush2.msra.mxu0 %v5761
        %6756 = vmatprep.subr.mxu0 0.0
        %6757 = vmatpush2.msra.mxu0 %v5760
        %6758 = vmatprep.subr.mxu0 0.0
        %6759 = vmatpush2.msra.mxu0 %v5759
        %6760 = vmatprep.subr.mxu0 0.0
        %6761 = vmatpush2.msra.mxu0 %v5758
        %6762 = vmatprep.subr.mxu0 0.0
        %6763 = vmatpush2.msra.mxu0 %v5757
        %6764 = vmatprep.subr.mxu0 0.0
        %6765 = vmatpush2.msra.mxu0 %v5756
        %6766 = vmatprep.subr.mxu0 0.0
        %6767 = vmatpush2.msra.mxu0 %v5755
        %6768 = vmatprep.subr.mxu0 0.0
        %6769 = vmatpush2.msra.mxu0 %v5754
        %6770 = vmatprep.subr.mxu0 0.0
        %6771 = vmatpush2.msra.mxu0 %v5753
        %6772 = vmatprep.subr.mxu0 0.0
        %6773 = vmatpush2.msra.mxu0 %v5752
        %6774 = vmatprep.subr.mxu0 0.0
        %6775 = vmatpush2.msra.mxu0 %v5751
        %6776 = vmatprep.subr.mxu0 0.0
        %6777 = vmatpush2.msra.mxu0 %v5750
        %6778 = vmatprep.subr.mxu0 0.0
        %6779 = vmatpush2.msra.mxu0 %v5749
        %6780 = vmatprep.subr.mxu0 0.0
        %6781 = vmatpush2.msra.mxu0 %v5748
        %6782 = vmatprep.mubr.f32.mxu0 %v4843
        %6783 = vmatmul.mubr.f32.gmra.mxu0 %v4842
        %v6784 = vpop.f32.mrf.mxu0
        %v6785 = vadd.f32 %v6560, %v6784
        %v6786 = vpop.f32.mrf.mxu0
        %6787 = vmatprep.mubr.f32.mxu0 %v4868
        %6788 = vmatmul.mubr.f32.gmra.mxu0 %v4867
        %v6789 = vpop.f32.mrf.mxu0
        %v6790 = vadd.f32 %v6565, %v6789
        %v6791 = vpop.f32.mrf.mxu0
        %6792 = vmatprep.mubr.f32.mxu0 %v4893
        %6793 = vmatmul.mubr.f32.gmra.mxu0 %v4892
        %v6794 = vpop.f32.mrf.mxu0
        %v6795 = vadd.f32 %v6570, %v6794
        %v6796 = vpop.f32.mrf.mxu0
        %6797 = vmatprep.mubr.f32.mxu0 %v4918
        %6798 = vmatmul.mubr.f32.gmra.mxu0 %v4917
        %v6799 = vpop.f32.mrf.mxu0
        %v6800 = vadd.f32 %v6575, %v6799
        %v6801 = vpop.f32.mrf.mxu0
        %6802 = vmatprep.mubr.f32.mxu0 %v4943
        %6803 = vmatmul.mubr.f32.gmra.mxu0 %v4942
        %v6804 = vpop.f32.mrf.mxu0
        %v6805 = vadd.f32 %v6580, %v6804
        %v6806 = vpop.f32.mrf.mxu0
        %6807 = vmatprep.mubr.f32.mxu0 %v4968
        %6808 = vmatmul.mubr.f32.gmra.mxu0 %v4967
        %v6809 = vpop.f32.mrf.mxu0
        %v6810 = vadd.f32 %v6585, %v6809
        %v6811 = vpop.f32.mrf.mxu0
        %6812 = vmatprep.mubr.f32.mxu0 %v4993
        %6813 = vmatmul.mubr.f32.gmra.mxu0 %v4992
        %v6814 = vpop.f32.mrf.mxu0
        %v6815 = vadd.f32 %v6590, %v6814
        %v6816 = vpop.f32.mrf.mxu0
        %6817 = vmatprep.mubr.f32.mxu0 %v5018
        %6818 = vmatmul.mubr.f32.gmra.mxu0 %v5017
        %v6819 = vpop.f32.mrf.mxu0
        %v6820 = vadd.f32 %v6595, %v6819
        %v6821 = vpop.f32.mrf.mxu0
        %6822 = vmatprep.mubr.f32.mxu0 %v5043
        %6823 = vmatmul.mubr.f32.gmra.mxu0 %v5042
        %v6824 = vpop.f32.mrf.mxu0
        %v6825 = vadd.f32 %v6600, %v6824
        %v6826 = vpop.f32.mrf.mxu0
        %6827 = vmatprep.mubr.f32.mxu0 %v5068
        %6828 = vmatmul.mubr.f32.gmra.mxu0 %v5067
        %v6829 = vpop.f32.mrf.mxu0
        %v6830 = vadd.f32 %v6605, %v6829
        %v6831 = vpop.f32.mrf.mxu0
        %6832 = vmatprep.mubr.f32.mxu0 %v5093
        %6833 = vmatmul.mubr.f32.gmra.mxu0 %v5092
        %v6834 = vpop.f32.mrf.mxu0
        %v6835 = vadd.f32 %v6610, %v6834
        %v6836 = vpop.f32.mrf.mxu0
        %6837 = vmatprep.mubr.f32.mxu0 %v5118
        %6838 = vmatmul.mubr.f32.gmra.mxu0 %v5117
        %v6839 = vpop.f32.mrf.mxu0
        %v6840 = vadd.f32 %v6615, %v6839
        %v6841 = vpop.f32.mrf.mxu0
        %6842 = vmatprep.mubr.f32.mxu0 %v5143
        %6843 = vmatmul.mubr.f32.gmra.mxu0 %v5142
        %v6844 = vpop.f32.mrf.mxu0
        %v6845 = vadd.f32 %v6620, %v6844
        %v6846 = vpop.f32.mrf.mxu0
        %6847 = vmatprep.mubr.f32.mxu0 %v5168
        %6848 = vmatmul.mubr.f32.gmra.mxu0 %v5167
        %v6849 = vpop.f32.mrf.mxu0
        %v6850 = vadd.f32 %v6625, %v6849
        %v6851 = vpop.f32.mrf.mxu0
        %6852 = vmatprep.mubr.f32.mxu0 %v5193
        %6853 = vmatmul.mubr.f32.gmra.mxu0 %v5192
        %v6854 = vpop.f32.mrf.mxu0
        %v6855 = vadd.f32 %v6630, %v6854
        %v6856 = vpop.f32.mrf.mxu0
        %6857 = vmatprep.mubr.f32.mxu0 %v5218
        %6858 = vmatmul.mubr.f32.gmra.mxu0 %v5217
        %v6859 = vpop.f32.mrf.mxu0
        %v6860 = vadd.f32 %v6635, %v6859
        %v6861 = vpop.f32.mrf.mxu0
        %6862 = vmatprep.mubr.f32.mxu0 %v5243
        %6863 = vmatmul.mubr.f32.gmra.mxu0 %v5242
        %v6864 = vpop.f32.mrf.mxu0
        %v6865 = vadd.f32 %v6640, %v6864
        %v6866 = vpop.f32.mrf.mxu0
        %6867 = vmatprep.mubr.f32.mxu0 %v5268
        %6868 = vmatmul.mubr.f32.gmra.mxu0 %v5267
        %v6869 = vpop.f32.mrf.mxu0
        %v6870 = vadd.f32 %v6645, %v6869
        %v6871 = vpop.f32.mrf.mxu0
        %6872 = vmatprep.mubr.f32.mxu0 %v5293
        %6873 = vmatmul.mubr.f32.gmra.mxu0 %v5292
        %v6874 = vpop.f32.mrf.mxu0
        %v6875 = vadd.f32 %v6650, %v6874
        %v6876 = vpop.f32.mrf.mxu0
        %6877 = vmatprep.mubr.f32.mxu0 %v5318
        %6878 = vmatmul.mubr.f32.gmra.mxu0 %v5317
        %v6879 = vpop.f32.mrf.mxu0
        %v6880 = vadd.f32 %v6655, %v6879
        %v6881 = vpop.f32.mrf.mxu0
        %6882 = vmatprep.mubr.f32.mxu0 %v5343
        %6883 = vmatmul.mubr.f32.gmra.mxu0 %v5342
        %v6884 = vpop.f32.mrf.mxu0
        %v6885 = vadd.f32 %v6660, %v6884
        %v6886 = vpop.f32.mrf.mxu0
        %6887 = vmatprep.mubr.f32.mxu0 %v5368
        %6888 = vmatmul.mubr.f32.gmra.mxu0 %v5367
        %v6889 = vpop.f32.mrf.mxu0
        %v6890 = vadd.f32 %v6665, %v6889
        %v6891 = vpop.f32.mrf.mxu0
        %6892 = vmatprep.mubr.f32.mxu0 %v5393
        %6893 = vmatmul.mubr.f32.gmra.mxu0 %v5392
        %v6894 = vpop.f32.mrf.mxu0
        %v6895 = vadd.f32 %v6670, %v6894
        %v6896 = vpop.f32.mrf.mxu0
        %6897 = vmatprep.mubr.f32.mxu0 %v5418
        %6898 = vmatmul.mubr.f32.gmra.mxu0 %v5417
        %v6899 = vpop.f32.mrf.mxu0
        %v6900 = vadd.f32 %v6675, %v6899
        %v6901 = vpop.f32.mrf.mxu0
        %6902 = vmatprep.mubr.f32.mxu0 %v5443
        %6903 = vmatmul.mubr.f32.gmra.mxu0 %v5442
        %v6904 = vpop.f32.mrf.mxu0
        %v6905 = vadd.f32 %v6680, %v6904
        %v6906 = vpop.f32.mrf.mxu0
        %6907 = vmatprep.mubr.f32.mxu0 %v5468
        %6908 = vmatmul.mubr.f32.gmra.mxu0 %v5467
        %v6909 = vpop.f32.mrf.mxu0
        %v6910 = vadd.f32 %v6685, %v6909
        %v6911 = vpop.f32.mrf.mxu0
        %6912 = vmatprep.mubr.f32.mxu0 %v5493
        %6913 = vmatmul.mubr.f32.gmra.mxu0 %v5492
        %v6914 = vpop.f32.mrf.mxu0
        %v6915 = vadd.f32 %v6690, %v6914
        %v6916 = vpop.f32.mrf.mxu0
        %6917 = vmatprep.mubr.f32.mxu0 %v5518
        %6918 = vmatmul.mubr.f32.gmra.mxu0 %v5517
        %v6919 = vpop.f32.mrf.mxu0
        %v6920 = vadd.f32 %v6695, %v6919
        %v6921 = vpop.f32.mrf.mxu0
        %6922 = vmatprep.mubr.f32.mxu0 %v5543
        %6923 = vmatmul.mubr.f32.gmra.mxu0 %v5542
        %v6924 = vpop.f32.mrf.mxu0
        %v6925 = vadd.f32 %v6700, %v6924
        %v6926 = vpop.f32.mrf.mxu0
        %6927 = vmatprep.mubr.f32.mxu0 %v5568
        %6928 = vmatmul.mubr.f32.gmra.mxu0 %v5567
        %v6929 = vpop.f32.mrf.mxu0
        %v6930 = vadd.f32 %v6705, %v6929
        %v6931 = vpop.f32.mrf.mxu0
        %6932 = vmatprep.mubr.f32.mxu0 %v5593
        %6933 = vmatmul.mubr.f32.gmra.mxu0 %v5592
        %v6934 = vpop.f32.mrf.mxu0
        %v6935 = vadd.f32 %v6710, %v6934
        %v6936 = vpop.f32.mrf.mxu0
        %6937 = vmatprep.mubr.f32.mxu0 %v5618
        %6938 = vmatmul.mubr.f32.gmra.mxu0 %v5617
        %v6939 = vpop.f32.mrf.mxu0
        %v6940 = vadd.f32 %v6715, %v6939
        %v6941 = vpop.f32.mrf.mxu0
        %6942 = vdwg.mxu0
        %6943 = vmatprep.subr.mxu0 0.0
        %6944 = vmatpush1.msra.mxu0 %v5779
        %6945 = vmatprep.subr.mxu0 0.0
        %6946 = vmatpush1.msra.mxu0 %v5778
        %6947 = vmatprep.subr.mxu0 0.0
        %6948 = vmatpush1.msra.mxu0 %v5777
        %6949 = vmatprep.subr.mxu0 0.0
        %6950 = vmatpush1.msra.mxu0 %v5776
        %6951 = vmatprep.subr.mxu0 0.0
        %6952 = vmatpush1.msra.mxu0 %v5775
        %6953 = vmatprep.subr.mxu0 0.0
        %6954 = vmatpush1.msra.mxu0 %v5774
        %6955 = vmatprep.subr.mxu0 0.0
        %6956 = vmatpush1.msra.mxu0 %v5773
        %6957 = vmatprep.subr.mxu0 0.0
        %6958 = vmatpush1.msra.mxu0 %v5772
        %6959 = vmatprep.subr.mxu0 0.0
        %6960 = vmatpush1.msra.mxu0 %v5771
        %6961 = vmatprep.subr.mxu0 0.0
        %6962 = vmatpush1.msra.mxu0 %v5770
        %6963 = vmatprep.subr.mxu0 0.0
        %6964 = vmatpush1.msra.mxu0 %v5769
        %6965 = vmatprep.subr.mxu0 0.0
        %6966 = vmatpush1.msra.mxu0 %v5768
        %6967 = vmatprep.subr.mxu0 0.0
        %6968 = vmatpush1.msra.mxu0 %v5767
        %6969 = vmatprep.subr.mxu0 0.0
        %6970 = vmatpush1.msra.mxu0 %v5766
        %6971 = vmatprep.subr.mxu0 0.0
        %6972 = vmatpush1.msra.mxu0 %v5765
        %6973 = vmatprep.subr.mxu0 0.0
        %6974 = vmatpush1.msra.mxu0 %v5764
        %6975 = vmatprep.subr.mxu0 0.0
        %6976 = vmatpush2.msra.mxu0 %v5795
        %6977 = vmatprep.subr.mxu0 0.0
        %6978 = vmatpush2.msra.mxu0 %v5794
        %6979 = vmatprep.subr.mxu0 0.0
        %6980 = vmatpush2.msra.mxu0 %v5793
        %6981 = vmatprep.subr.mxu0 0.0
        %6982 = vmatpush2.msra.mxu0 %v5792
        %6983 = vmatprep.subr.mxu0 0.0
        %6984 = vmatpush2.msra.mxu0 %v5791
        %6985 = vmatprep.subr.mxu0 0.0
        %6986 = vmatpush2.msra.mxu0 %v5790
        %6987 = vmatprep.subr.mxu0 0.0
        %6988 = vmatpush2.msra.mxu0 %v5789
        %6989 = vmatprep.subr.mxu0 0.0
        %6990 = vmatpush2.msra.mxu0 %v5788
        %6991 = vmatprep.subr.mxu0 0.0
        %6992 = vmatpush2.msra.mxu0 %v5787
        %6993 = vmatprep.subr.mxu0 0.0
        %6994 = vmatpush2.msra.mxu0 %v5786
        %6995 = vmatprep.subr.mxu0 0.0
        %6996 = vmatpush2.msra.mxu0 %v5785
        %6997 = vmatprep.subr.mxu0 0.0
        %6998 = vmatpush2.msra.mxu0 %v5784
        %6999 = vmatprep.subr.mxu0 0.0
        %7000 = vmatpush2.msra.mxu0 %v5783
        %7001 = vmatprep.subr.mxu0 0.0
        %7002 = vmatpush2.msra.mxu0 %v5782
        %7003 = vmatprep.subr.mxu0 0.0
        %7004 = vmatpush2.msra.mxu0 %v5781
        %7005 = vmatprep.subr.mxu0 0.0
        %7006 = vmatpush2.msra.mxu0 %v5780
        %7007 = vmatprep.mubr.f32.mxu0 %v4845
        %7008 = vmatmul.mubr.f32.gmra.mxu0 %v4844
        %v7009 = vpop.f32.mrf.mxu0
        %v7010 = vadd.f32 %v6785, %v7009
        %v7011 = vpop.f32.mrf.mxu0
        %7012 = vmatprep.mubr.f32.mxu0 %v4870
        %7013 = vmatmul.mubr.f32.gmra.mxu0 %v4869
        %v7014 = vpop.f32.mrf.mxu0
        %v7015 = vadd.f32 %v6790, %v7014
        %v7016 = vpop.f32.mrf.mxu0
        %7017 = vmatprep.mubr.f32.mxu0 %v4895
        %7018 = vmatmul.mubr.f32.gmra.mxu0 %v4894
        %v7019 = vpop.f32.mrf.mxu0
        %v7020 = vadd.f32 %v6795, %v7019
        %v7021 = vpop.f32.mrf.mxu0
        %7022 = vmatprep.mubr.f32.mxu0 %v4920
        %7023 = vmatmul.mubr.f32.gmra.mxu0 %v4919
        %v7024 = vpop.f32.mrf.mxu0
        %v7025 = vadd.f32 %v6800, %v7024
        %v7026 = vpop.f32.mrf.mxu0
        %7027 = vmatprep.mubr.f32.mxu0 %v4945
        %7028 = vmatmul.mubr.f32.gmra.mxu0 %v4944
        %v7029 = vpop.f32.mrf.mxu0
        %v7030 = vadd.f32 %v6805, %v7029
        %v7031 = vpop.f32.mrf.mxu0
        %7032 = vmatprep.mubr.f32.mxu0 %v4970
        %7033 = vmatmul.mubr.f32.gmra.mxu0 %v4969
        %v7034 = vpop.f32.mrf.mxu0
        %v7035 = vadd.f32 %v6810, %v7034
        %v7036 = vpop.f32.mrf.mxu0
        %7037 = vmatprep.mubr.f32.mxu0 %v4995
        %7038 = vmatmul.mubr.f32.gmra.mxu0 %v4994
        %v7039 = vpop.f32.mrf.mxu0
        %v7040 = vadd.f32 %v6815, %v7039
        %v7041 = vpop.f32.mrf.mxu0
        %7042 = vmatprep.mubr.f32.mxu0 %v5020
        %7043 = vmatmul.mubr.f32.gmra.mxu0 %v5019
        %v7044 = vpop.f32.mrf.mxu0
        %v7045 = vadd.f32 %v6820, %v7044
        %v7046 = vpop.f32.mrf.mxu0
        %7047 = vmatprep.mubr.f32.mxu0 %v5045
        %7048 = vmatmul.mubr.f32.gmra.mxu0 %v5044
        %v7049 = vpop.f32.mrf.mxu0
        %v7050 = vadd.f32 %v6825, %v7049
        %v7051 = vpop.f32.mrf.mxu0
        %7052 = vmatprep.mubr.f32.mxu0 %v5070
        %7053 = vmatmul.mubr.f32.gmra.mxu0 %v5069
        %v7054 = vpop.f32.mrf.mxu0
        %v7055 = vadd.f32 %v6830, %v7054
        %v7056 = vpop.f32.mrf.mxu0
        %7057 = vmatprep.mubr.f32.mxu0 %v5095
        %7058 = vmatmul.mubr.f32.gmra.mxu0 %v5094
        %v7059 = vpop.f32.mrf.mxu0
        %v7060 = vadd.f32 %v6835, %v7059
        %v7061 = vpop.f32.mrf.mxu0
        %7062 = vmatprep.mubr.f32.mxu0 %v5120
        %7063 = vmatmul.mubr.f32.gmra.mxu0 %v5119
        %v7064 = vpop.f32.mrf.mxu0
        %v7065 = vadd.f32 %v6840, %v7064
        %v7066 = vpop.f32.mrf.mxu0
        %7067 = vmatprep.mubr.f32.mxu0 %v5145
        %7068 = vmatmul.mubr.f32.gmra.mxu0 %v5144
        %v7069 = vpop.f32.mrf.mxu0
        %v7070 = vadd.f32 %v6845, %v7069
        %v7071 = vpop.f32.mrf.mxu0
        %7072 = vmatprep.mubr.f32.mxu0 %v5170
        %7073 = vmatmul.mubr.f32.gmra.mxu0 %v5169
        %v7074 = vpop.f32.mrf.mxu0
        %v7075 = vadd.f32 %v6850, %v7074
        %v7076 = vpop.f32.mrf.mxu0
        %7077 = vmatprep.mubr.f32.mxu0 %v5195
        %7078 = vmatmul.mubr.f32.gmra.mxu0 %v5194
        %v7079 = vpop.f32.mrf.mxu0
        %v7080 = vadd.f32 %v6855, %v7079
        %v7081 = vpop.f32.mrf.mxu0
        %7082 = vmatprep.mubr.f32.mxu0 %v5220
        %7083 = vmatmul.mubr.f32.gmra.mxu0 %v5219
        %v7084 = vpop.f32.mrf.mxu0
        %v7085 = vadd.f32 %v6860, %v7084
        %v7086 = vpop.f32.mrf.mxu0
        %7087 = vmatprep.mubr.f32.mxu0 %v5245
        %7088 = vmatmul.mubr.f32.gmra.mxu0 %v5244
        %v7089 = vpop.f32.mrf.mxu0
        %v7090 = vadd.f32 %v6865, %v7089
        %v7091 = vpop.f32.mrf.mxu0
        %7092 = vmatprep.mubr.f32.mxu0 %v5270
        %7093 = vmatmul.mubr.f32.gmra.mxu0 %v5269
        %v7094 = vpop.f32.mrf.mxu0
        %v7095 = vadd.f32 %v6870, %v7094
        %v7096 = vpop.f32.mrf.mxu0
        %7097 = vmatprep.mubr.f32.mxu0 %v5295
        %7098 = vmatmul.mubr.f32.gmra.mxu0 %v5294
        %v7099 = vpop.f32.mrf.mxu0
        %v7100 = vadd.f32 %v6875, %v7099
        %v7101 = vpop.f32.mrf.mxu0
        %7102 = vmatprep.mubr.f32.mxu0 %v5320
        %7103 = vmatmul.mubr.f32.gmra.mxu0 %v5319
        %v7104 = vpop.f32.mrf.mxu0
        %v7105 = vadd.f32 %v6880, %v7104
        %v7106 = vpop.f32.mrf.mxu0
        %7107 = vmatprep.mubr.f32.mxu0 %v5345
        %7108 = vmatmul.mubr.f32.gmra.mxu0 %v5344
        %v7109 = vpop.f32.mrf.mxu0
        %v7110 = vadd.f32 %v6885, %v7109
        %v7111 = vpop.f32.mrf.mxu0
        %7112 = vmatprep.mubr.f32.mxu0 %v5370
        %7113 = vmatmul.mubr.f32.gmra.mxu0 %v5369
        %v7114 = vpop.f32.mrf.mxu0
        %v7115 = vadd.f32 %v6890, %v7114
        %v7116 = vpop.f32.mrf.mxu0
        %7117 = vmatprep.mubr.f32.mxu0 %v5395
        %7118 = vmatmul.mubr.f32.gmra.mxu0 %v5394
        %v7119 = vpop.f32.mrf.mxu0
        %v7120 = vadd.f32 %v6895, %v7119
        %v7121 = vpop.f32.mrf.mxu0
        %7122 = vmatprep.mubr.f32.mxu0 %v5420
        %7123 = vmatmul.mubr.f32.gmra.mxu0 %v5419
        %v7124 = vpop.f32.mrf.mxu0
        %v7125 = vadd.f32 %v6900, %v7124
        %v7126 = vpop.f32.mrf.mxu0
        %7127 = vmatprep.mubr.f32.mxu0 %v5445
        %7128 = vmatmul.mubr.f32.gmra.mxu0 %v5444
        %v7129 = vpop.f32.mrf.mxu0
        %v7130 = vadd.f32 %v6905, %v7129
        %v7131 = vpop.f32.mrf.mxu0
        %7132 = vmatprep.mubr.f32.mxu0 %v5470
        %7133 = vmatmul.mubr.f32.gmra.mxu0 %v5469
        %v7134 = vpop.f32.mrf.mxu0
        %v7135 = vadd.f32 %v6910, %v7134
        %v7136 = vpop.f32.mrf.mxu0
        %7137 = vmatprep.mubr.f32.mxu0 %v5495
        %7138 = vmatmul.mubr.f32.gmra.mxu0 %v5494
        %v7139 = vpop.f32.mrf.mxu0
        %v7140 = vadd.f32 %v6915, %v7139
        %v7141 = vpop.f32.mrf.mxu0
        %7142 = vmatprep.mubr.f32.mxu0 %v5520
        %7143 = vmatmul.mubr.f32.gmra.mxu0 %v5519
        %v7144 = vpop.f32.mrf.mxu0
        %v7145 = vadd.f32 %v6920, %v7144
        %v7146 = vpop.f32.mrf.mxu0
        %7147 = vmatprep.mubr.f32.mxu0 %v5545
        %7148 = vmatmul.mubr.f32.gmra.mxu0 %v5544
        %v7149 = vpop.f32.mrf.mxu0
        %v7150 = vadd.f32 %v6925, %v7149
        %v7151 = vpop.f32.mrf.mxu0
        %7152 = vmatprep.mubr.f32.mxu0 %v5570
        %7153 = vmatmul.mubr.f32.gmra.mxu0 %v5569
        %v7154 = vpop.f32.mrf.mxu0
        %v7155 = vadd.f32 %v6930, %v7154
        %v7156 = vpop.f32.mrf.mxu0
        %7157 = vmatprep.mubr.f32.mxu0 %v5595
        %7158 = vmatmul.mubr.f32.gmra.mxu0 %v5594
        %v7159 = vpop.f32.mrf.mxu0
        %v7160 = vadd.f32 %v6935, %v7159
        %v7161 = vpop.f32.mrf.mxu0
        %7162 = vmatprep.mubr.f32.mxu0 %v5620
        %7163 = vmatmul.mubr.f32.gmra.mxu0 %v5619
        %v7164 = vpop.f32.mrf.mxu0
        %v7165 = vadd.f32 %v6940, %v7164
        %v7166 = vpop.f32.mrf.mxu0
        %7167 = vdwg.mxu0
        %7168 = vmatprep.subr.mxu0 0.0
        %7169 = vmatpush1.msra.mxu0 %v5811
        %7170 = vmatprep.subr.mxu0 0.0
        %7171 = vmatpush1.msra.mxu0 %v5810
        %7172 = vmatprep.subr.mxu0 0.0
        %7173 = vmatpush1.msra.mxu0 %v5809
        %7174 = vmatprep.subr.mxu0 0.0
        %7175 = vmatpush1.msra.mxu0 %v5808
        %7176 = vmatprep.subr.mxu0 0.0
        %7177 = vmatpush1.msra.mxu0 %v5807
        %7178 = vmatprep.subr.mxu0 0.0
        %7179 = vmatpush1.msra.mxu0 %v5806
        %7180 = vmatprep.subr.mxu0 0.0
        %7181 = vmatpush1.msra.mxu0 %v5805
        %7182 = vmatprep.subr.mxu0 0.0
        %7183 = vmatpush1.msra.mxu0 %v5804
        %7184 = vmatprep.subr.mxu0 0.0
        %7185 = vmatpush1.msra.mxu0 %v5803
        %7186 = vmatprep.subr.mxu0 0.0
        %7187 = vmatpush1.msra.mxu0 %v5802
        %7188 = vmatprep.subr.mxu0 0.0
        %7189 = vmatpush1.msra.mxu0 %v5801
        %7190 = vmatprep.subr.mxu0 0.0
        %7191 = vmatpush1.msra.mxu0 %v5800
        %7192 = vmatprep.subr.mxu0 0.0
        %7193 = vmatpush1.msra.mxu0 %v5799
        %7194 = vmatprep.subr.mxu0 0.0
        %7195 = vmatpush1.msra.mxu0 %v5798
        %7196 = vmatprep.subr.mxu0 0.0
        %7197 = vmatpush1.msra.mxu0 %v5797
        %7198 = vmatprep.subr.mxu0 0.0
        %7199 = vmatpush1.msra.mxu0 %v5796
        %7200 = vmatprep.subr.mxu0 0.0
        %7201 = vmatpush2.msra.mxu0 %v5827
        %7202 = vmatprep.subr.mxu0 0.0
        %7203 = vmatpush2.msra.mxu0 %v5826
        %7204 = vmatprep.subr.mxu0 0.0
        %7205 = vmatpush2.msra.mxu0 %v5825
        %7206 = vmatprep.subr.mxu0 0.0
        %7207 = vmatpush2.msra.mxu0 %v5824
        %7208 = vmatprep.subr.mxu0 0.0
        %7209 = vmatpush2.msra.mxu0 %v5823
        %7210 = vmatprep.subr.mxu0 0.0
        %7211 = vmatpush2.msra.mxu0 %v5822
        %7212 = vmatprep.subr.mxu0 0.0
        %7213 = vmatpush2.msra.mxu0 %v5821
        %7214 = vmatprep.subr.mxu0 0.0
        %7215 = vmatpush2.msra.mxu0 %v5820
        %7216 = vmatprep.subr.mxu0 0.0
        %7217 = vmatpush2.msra.mxu0 %v5819
        %7218 = vmatprep.subr.mxu0 0.0
        %7219 = vmatpush2.msra.mxu0 %v5818
        %7220 = vmatprep.subr.mxu0 0.0
        %7221 = vmatpush2.msra.mxu0 %v5817
        %7222 = vmatprep.subr.mxu0 0.0
        %7223 = vmatpush2.msra.mxu0 %v5816
        %7224 = vmatprep.subr.mxu0 0.0
        %7225 = vmatpush2.msra.mxu0 %v5815
        %7226 = vmatprep.subr.mxu0 0.0
        %7227 = vmatpush2.msra.mxu0 %v5814
        %7228 = vmatprep.subr.mxu0 0.0
        %7229 = vmatpush2.msra.mxu0 %v5813
        %7230 = vmatprep.subr.mxu0 0.0
        %7231 = vmatpush2.msra.mxu0 %v5812
        %7232 = vmatprep.mubr.f32.mxu0 %v4847
        %7233 = vmatmul.mubr.f32.gmra.mxu0 %v4846
        %v7234 = vpop.f32.mrf.mxu0
        %v7235 = vadd.f32 %v7010, %v7234
        %v7236 = vpop.f32.mrf.mxu0
        %7237 = vmatprep.mubr.f32.mxu0 %v4872
        %7238 = vmatmul.mubr.f32.gmra.mxu0 %v4871
        %v7239 = vpop.f32.mrf.mxu0
        %v7240 = vadd.f32 %v7015, %v7239
        %v7241 = vpop.f32.mrf.mxu0
        %7242 = vmatprep.mubr.f32.mxu0 %v4897
        %7243 = vmatmul.mubr.f32.gmra.mxu0 %v4896
        %v7244 = vpop.f32.mrf.mxu0
        %v7245 = vadd.f32 %v7020, %v7244
        %v7246 = vpop.f32.mrf.mxu0
        %7247 = vmatprep.mubr.f32.mxu0 %v4922
        %7248 = vmatmul.mubr.f32.gmra.mxu0 %v4921
        %v7249 = vpop.f32.mrf.mxu0
        %v7250 = vadd.f32 %v7025, %v7249
        %v7251 = vpop.f32.mrf.mxu0
        %7252 = vmatprep.mubr.f32.mxu0 %v4947
        %7253 = vmatmul.mubr.f32.gmra.mxu0 %v4946
        %v7254 = vpop.f32.mrf.mxu0
        %v7255 = vadd.f32 %v7030, %v7254
        %v7256 = vpop.f32.mrf.mxu0
        %7257 = vmatprep.mubr.f32.mxu0 %v4972
        %7258 = vmatmul.mubr.f32.gmra.mxu0 %v4971
        %v7259 = vpop.f32.mrf.mxu0
        %v7260 = vadd.f32 %v7035, %v7259
        %v7261 = vpop.f32.mrf.mxu0
        %7262 = vmatprep.mubr.f32.mxu0 %v4997
        %7263 = vmatmul.mubr.f32.gmra.mxu0 %v4996
        %v7264 = vpop.f32.mrf.mxu0
        %v7265 = vadd.f32 %v7040, %v7264
        %v7266 = vpop.f32.mrf.mxu0
        %7267 = vmatprep.mubr.f32.mxu0 %v5022
        %7268 = vmatmul.mubr.f32.gmra.mxu0 %v5021
        %v7269 = vpop.f32.mrf.mxu0
        %v7270 = vadd.f32 %v7045, %v7269
        %v7271 = vpop.f32.mrf.mxu0
        %7272 = vmatprep.mubr.f32.mxu0 %v5047
        %7273 = vmatmul.mubr.f32.gmra.mxu0 %v5046
        %v7274 = vpop.f32.mrf.mxu0
        %v7275 = vadd.f32 %v7050, %v7274
        %v7276 = vpop.f32.mrf.mxu0
        %7277 = vmatprep.mubr.f32.mxu0 %v5072
        %7278 = vmatmul.mubr.f32.gmra.mxu0 %v5071
        %v7279 = vpop.f32.mrf.mxu0
        %v7280 = vadd.f32 %v7055, %v7279
        %v7281 = vpop.f32.mrf.mxu0
        %7282 = vmatprep.mubr.f32.mxu0 %v5097
        %7283 = vmatmul.mubr.f32.gmra.mxu0 %v5096
        %v7284 = vpop.f32.mrf.mxu0
        %v7285 = vadd.f32 %v7060, %v7284
        %v7286 = vpop.f32.mrf.mxu0
        %7287 = vmatprep.mubr.f32.mxu0 %v5122
        %7288 = vmatmul.mubr.f32.gmra.mxu0 %v5121
        %v7289 = vpop.f32.mrf.mxu0
        %v7290 = vadd.f32 %v7065, %v7289
        %v7291 = vpop.f32.mrf.mxu0
        %7292 = vmatprep.mubr.f32.mxu0 %v5147
        %7293 = vmatmul.mubr.f32.gmra.mxu0 %v5146
        %v7294 = vpop.f32.mrf.mxu0
        %v7295 = vadd.f32 %v7070, %v7294
        %v7296 = vpop.f32.mrf.mxu0
        %7297 = vmatprep.mubr.f32.mxu0 %v5172
        %7298 = vmatmul.mubr.f32.gmra.mxu0 %v5171
        %v7299 = vpop.f32.mrf.mxu0
        %v7300 = vadd.f32 %v7075, %v7299
        %v7301 = vpop.f32.mrf.mxu0
        %7302 = vmatprep.mubr.f32.mxu0 %v5197
        %7303 = vmatmul.mubr.f32.gmra.mxu0 %v5196
        %v7304 = vpop.f32.mrf.mxu0
        %v7305 = vadd.f32 %v7080, %v7304
        %v7306 = vpop.f32.mrf.mxu0
        %7307 = vmatprep.mubr.f32.mxu0 %v5222
        %7308 = vmatmul.mubr.f32.gmra.mxu0 %v5221
        %v7309 = vpop.f32.mrf.mxu0
        %v7310 = vadd.f32 %v7085, %v7309
        %v7311 = vpop.f32.mrf.mxu0
        %7312 = vmatprep.mubr.f32.mxu0 %v5247
        %7313 = vmatmul.mubr.f32.gmra.mxu0 %v5246
        %v7314 = vpop.f32.mrf.mxu0
        %v7315 = vadd.f32 %v7090, %v7314
        %v7316 = vpop.f32.mrf.mxu0
        %7317 = vmatprep.mubr.f32.mxu0 %v5272
        %7318 = vmatmul.mubr.f32.gmra.mxu0 %v5271
        %v7319 = vpop.f32.mrf.mxu0
        %v7320 = vadd.f32 %v7095, %v7319
        %v7321 = vpop.f32.mrf.mxu0
        %7322 = vmatprep.mubr.f32.mxu0 %v5297
        %7323 = vmatmul.mubr.f32.gmra.mxu0 %v5296
        %v7324 = vpop.f32.mrf.mxu0
        %v7325 = vadd.f32 %v7100, %v7324
        %v7326 = vpop.f32.mrf.mxu0
        %7327 = vmatprep.mubr.f32.mxu0 %v5322
        %7328 = vmatmul.mubr.f32.gmra.mxu0 %v5321
        %v7329 = vpop.f32.mrf.mxu0
        %v7330 = vadd.f32 %v7105, %v7329
        %v7331 = vpop.f32.mrf.mxu0
        %7332 = vmatprep.mubr.f32.mxu0 %v5347
        %7333 = vmatmul.mubr.f32.gmra.mxu0 %v5346
        %v7334 = vpop.f32.mrf.mxu0
        %v7335 = vadd.f32 %v7110, %v7334
        %v7336 = vpop.f32.mrf.mxu0
        %7337 = vmatprep.mubr.f32.mxu0 %v5372
        %7338 = vmatmul.mubr.f32.gmra.mxu0 %v5371
        %v7339 = vpop.f32.mrf.mxu0
        %v7340 = vadd.f32 %v7115, %v7339
        %v7341 = vpop.f32.mrf.mxu0
        %7342 = vmatprep.mubr.f32.mxu0 %v5397
        %7343 = vmatmul.mubr.f32.gmra.mxu0 %v5396
        %v7344 = vpop.f32.mrf.mxu0
        %v7345 = vadd.f32 %v7120, %v7344
        %v7346 = vpop.f32.mrf.mxu0
        %7347 = vmatprep.mubr.f32.mxu0 %v5422
        %7348 = vmatmul.mubr.f32.gmra.mxu0 %v5421
        %v7349 = vpop.f32.mrf.mxu0
        %v7350 = vadd.f32 %v7125, %v7349
        %v7351 = vpop.f32.mrf.mxu0
        %7352 = vmatprep.mubr.f32.mxu0 %v5447
        %7353 = vmatmul.mubr.f32.gmra.mxu0 %v5446
        %v7354 = vpop.f32.mrf.mxu0
        %v7355 = vadd.f32 %v7130, %v7354
        %v7356 = vpop.f32.mrf.mxu0
        %7357 = vmatprep.mubr.f32.mxu0 %v5472
        %7358 = vmatmul.mubr.f32.gmra.mxu0 %v5471
        %v7359 = vpop.f32.mrf.mxu0
        %v7360 = vadd.f32 %v7135, %v7359
        %v7361 = vpop.f32.mrf.mxu0
        %7362 = vmatprep.mubr.f32.mxu0 %v5497
        %7363 = vmatmul.mubr.f32.gmra.mxu0 %v5496
        %v7364 = vpop.f32.mrf.mxu0
        %v7365 = vadd.f32 %v7140, %v7364
        %v7366 = vpop.f32.mrf.mxu0
        %7367 = vmatprep.mubr.f32.mxu0 %v5522
        %7368 = vmatmul.mubr.f32.gmra.mxu0 %v5521
        %v7369 = vpop.f32.mrf.mxu0
        %v7370 = vadd.f32 %v7145, %v7369
        %v7371 = vpop.f32.mrf.mxu0
        %7372 = vmatprep.mubr.f32.mxu0 %v5547
        %7373 = vmatmul.mubr.f32.gmra.mxu0 %v5546
        %v7374 = vpop.f32.mrf.mxu0
        %v7375 = vadd.f32 %v7150, %v7374
        %v7376 = vpop.f32.mrf.mxu0
        %7377 = vmatprep.mubr.f32.mxu0 %v5572
        %7378 = vmatmul.mubr.f32.gmra.mxu0 %v5571
        %v7379 = vpop.f32.mrf.mxu0
        %v7380 = vadd.f32 %v7155, %v7379
        %v7381 = vpop.f32.mrf.mxu0
        %7382 = vmatprep.mubr.f32.mxu0 %v5597
        %7383 = vmatmul.mubr.f32.gmra.mxu0 %v5596
        %v7384 = vpop.f32.mrf.mxu0
        %v7385 = vadd.f32 %v7160, %v7384
        %v7386 = vpop.f32.mrf.mxu0
        %7387 = vmatprep.mubr.f32.mxu0 %v5622
        %7388 = vmatmul.mubr.f32.gmra.mxu0 %v5621
        %v7389 = vpop.f32.mrf.mxu0
        %v7390 = vadd.f32 %v7165, %v7389
        %v7391 = vpop.f32.mrf.mxu0
        %7392 = vdwg.mxu0
        %7393 = vmatprep.subr.mxu0 0.0
        %7394 = vmatpush1.msra.mxu0 %v5843
        %7395 = vmatprep.subr.mxu0 0.0
        %7396 = vmatpush1.msra.mxu0 %v5842
        %7397 = vmatprep.subr.mxu0 0.0
        %7398 = vmatpush1.msra.mxu0 %v5841
        %7399 = vmatprep.subr.mxu0 0.0
        %7400 = vmatpush1.msra.mxu0 %v5840
        %7401 = vmatprep.subr.mxu0 0.0
        %7402 = vmatpush1.msra.mxu0 %v5839
        %7403 = vmatprep.subr.mxu0 0.0
        %7404 = vmatpush1.msra.mxu0 %v5838
        %7405 = vmatprep.subr.mxu0 0.0
        %7406 = vmatpush1.msra.mxu0 %v5837
        %7407 = vmatprep.subr.mxu0 0.0
        %7408 = vmatpush1.msra.mxu0 %v5836
        %7409 = vmatprep.subr.mxu0 0.0
        %7410 = vmatpush1.msra.mxu0 %v5835
        %7411 = vmatprep.subr.mxu0 0.0
        %7412 = vmatpush1.msra.mxu0 %v5834
        %7413 = vmatprep.subr.mxu0 0.0
        %7414 = vmatpush1.msra.mxu0 %v5833
        %7415 = vmatprep.subr.mxu0 0.0
        %7416 = vmatpush1.msra.mxu0 %v5832
        %7417 = vmatprep.subr.mxu0 0.0
        %7418 = vmatpush1.msra.mxu0 %v5831
        %7419 = vmatprep.subr.mxu0 0.0
        %7420 = vmatpush1.msra.mxu0 %v5830
        %7421 = vmatprep.subr.mxu0 0.0
        %7422 = vmatpush1.msra.mxu0 %v5829
        %7423 = vmatprep.subr.mxu0 0.0
        %7424 = vmatpush1.msra.mxu0 %v5828
        %7425 = vmatprep.subr.mxu0 0.0
        %7426 = vmatpush2.msra.mxu0 %v5859
        %7427 = vmatprep.subr.mxu0 0.0
        %7428 = vmatpush2.msra.mxu0 %v5858
        %7429 = vmatprep.subr.mxu0 0.0
        %7430 = vmatpush2.msra.mxu0 %v5857
        %7431 = vmatprep.subr.mxu0 0.0
        %7432 = vmatpush2.msra.mxu0 %v5856
        %7433 = vmatprep.subr.mxu0 0.0
        %7434 = vmatpush2.msra.mxu0 %v5855
        %7435 = vmatprep.subr.mxu0 0.0
        %7436 = vmatpush2.msra.mxu0 %v5854
        %7437 = vmatprep.subr.mxu0 0.0
        %7438 = vmatpush2.msra.mxu0 %v5853
        %7439 = vmatprep.subr.mxu0 0.0
        %7440 = vmatpush2.msra.mxu0 %v5852
        %7441 = vmatprep.subr.mxu0 0.0
        %7442 = vmatpush2.msra.mxu0 %v5851
        %7443 = vmatprep.subr.mxu0 0.0
        %7444 = vmatpush2.msra.mxu0 %v5850
        %7445 = vmatprep.subr.mxu0 0.0
        %7446 = vmatpush2.msra.mxu0 %v5849
        %7447 = vmatprep.subr.mxu0 0.0
        %7448 = vmatpush2.msra.mxu0 %v5848
        %7449 = vmatprep.subr.mxu0 0.0
        %7450 = vmatpush2.msra.mxu0 %v5847
        %7451 = vmatprep.subr.mxu0 0.0
        %7452 = vmatpush2.msra.mxu0 %v5846
        %7453 = vmatprep.subr.mxu0 0.0
        %7454 = vmatpush2.msra.mxu0 %v5845
        %7455 = vmatprep.subr.mxu0 0.0
        %7456 = vmatpush2.msra.mxu0 %v5844
        %7457 = vmatprep.mubr.f32.mxu0 %v4849
        %7458 = vmatmul.mubr.f32.gmra.mxu0 %v4848
        %v7459 = vpop.f32.mrf.mxu0
        %v7460 = vadd.f32 %v7235, %v7459
        %v7461 = vpop.f32.mrf.mxu0
        %7462 = vmatprep.mubr.f32.mxu0 %v4874
        %7463 = vmatmul.mubr.f32.gmra.mxu0 %v4873
        %v7464 = vpop.f32.mrf.mxu0
        %v7465 = vadd.f32 %v7240, %v7464
        %v7466 = vpop.f32.mrf.mxu0
        %7467 = vmatprep.mubr.f32.mxu0 %v4899
        %7468 = vmatmul.mubr.f32.gmra.mxu0 %v4898
        %v7469 = vpop.f32.mrf.mxu0
        %v7470 = vadd.f32 %v7245, %v7469
        %v7471 = vpop.f32.mrf.mxu0
        %7472 = vmatprep.mubr.f32.mxu0 %v4924
        %7473 = vmatmul.mubr.f32.gmra.mxu0 %v4923
        %v7474 = vpop.f32.mrf.mxu0
        %v7475 = vadd.f32 %v7250, %v7474
        %v7476 = vpop.f32.mrf.mxu0
        %7477 = vmatprep.mubr.f32.mxu0 %v4949
        %7478 = vmatmul.mubr.f32.gmra.mxu0 %v4948
        %v7479 = vpop.f32.mrf.mxu0
        %v7480 = vadd.f32 %v7255, %v7479
        %v7481 = vpop.f32.mrf.mxu0
        %7482 = vmatprep.mubr.f32.mxu0 %v4974
        %7483 = vmatmul.mubr.f32.gmra.mxu0 %v4973
        %v7484 = vpop.f32.mrf.mxu0
        %v7485 = vadd.f32 %v7260, %v7484
        %v7486 = vpop.f32.mrf.mxu0
        %7487 = vmatprep.mubr.f32.mxu0 %v4999
        %7488 = vmatmul.mubr.f32.gmra.mxu0 %v4998
        %v7489 = vpop.f32.mrf.mxu0
        %v7490 = vadd.f32 %v7265, %v7489
        %v7491 = vpop.f32.mrf.mxu0
        %7492 = vmatprep.mubr.f32.mxu0 %v5024
        %7493 = vmatmul.mubr.f32.gmra.mxu0 %v5023
        %v7494 = vpop.f32.mrf.mxu0
        %v7495 = vadd.f32 %v7270, %v7494
        %v7496 = vpop.f32.mrf.mxu0
        %7497 = vmatprep.mubr.f32.mxu0 %v5049
        %7498 = vmatmul.mubr.f32.gmra.mxu0 %v5048
        %v7499 = vpop.f32.mrf.mxu0
        %v7500 = vadd.f32 %v7275, %v7499
        %v7501 = vpop.f32.mrf.mxu0
        %7502 = vmatprep.mubr.f32.mxu0 %v5074
        %7503 = vmatmul.mubr.f32.gmra.mxu0 %v5073
        %v7504 = vpop.f32.mrf.mxu0
        %v7505 = vadd.f32 %v7280, %v7504
        %v7506 = vpop.f32.mrf.mxu0
        %7507 = vmatprep.mubr.f32.mxu0 %v5099
        %7508 = vmatmul.mubr.f32.gmra.mxu0 %v5098
        %v7509 = vpop.f32.mrf.mxu0
        %v7510 = vadd.f32 %v7285, %v7509
        %v7511 = vpop.f32.mrf.mxu0
        %7512 = vmatprep.mubr.f32.mxu0 %v5124
        %7513 = vmatmul.mubr.f32.gmra.mxu0 %v5123
        %v7514 = vpop.f32.mrf.mxu0
        %v7515 = vadd.f32 %v7290, %v7514
        %v7516 = vpop.f32.mrf.mxu0
        %7517 = vmatprep.mubr.f32.mxu0 %v5149
        %7518 = vmatmul.mubr.f32.gmra.mxu0 %v5148
        %v7519 = vpop.f32.mrf.mxu0
        %v7520 = vadd.f32 %v7295, %v7519
        %v7521 = vpop.f32.mrf.mxu0
        %7522 = vmatprep.mubr.f32.mxu0 %v5174
        %7523 = vmatmul.mubr.f32.gmra.mxu0 %v5173
        %v7524 = vpop.f32.mrf.mxu0
        %v7525 = vadd.f32 %v7300, %v7524
        %v7526 = vpop.f32.mrf.mxu0
        %7527 = vmatprep.mubr.f32.mxu0 %v5199
        %7528 = vmatmul.mubr.f32.gmra.mxu0 %v5198
        %v7529 = vpop.f32.mrf.mxu0
        %v7530 = vadd.f32 %v7305, %v7529
        %v7531 = vpop.f32.mrf.mxu0
        %7532 = vmatprep.mubr.f32.mxu0 %v5224
        %7533 = vmatmul.mubr.f32.gmra.mxu0 %v5223
        %v7534 = vpop.f32.mrf.mxu0
        %v7535 = vadd.f32 %v7310, %v7534
        %v7536 = vpop.f32.mrf.mxu0
        %7537 = vmatprep.mubr.f32.mxu0 %v5249
        %7538 = vmatmul.mubr.f32.gmra.mxu0 %v5248
        %v7539 = vpop.f32.mrf.mxu0
        %v7540 = vadd.f32 %v7315, %v7539
        %v7541 = vpop.f32.mrf.mxu0
        %7542 = vmatprep.mubr.f32.mxu0 %v5274
        %7543 = vmatmul.mubr.f32.gmra.mxu0 %v5273
        %v7544 = vpop.f32.mrf.mxu0
        %v7545 = vadd.f32 %v7320, %v7544
        %v7546 = vpop.f32.mrf.mxu0
        %7547 = vmatprep.mubr.f32.mxu0 %v5299
        %7548 = vmatmul.mubr.f32.gmra.mxu0 %v5298
        %v7549 = vpop.f32.mrf.mxu0
        %v7550 = vadd.f32 %v7325, %v7549
        %v7551 = vpop.f32.mrf.mxu0
        %7552 = vmatprep.mubr.f32.mxu0 %v5324
        %7553 = vmatmul.mubr.f32.gmra.mxu0 %v5323
        %v7554 = vpop.f32.mrf.mxu0
        %v7555 = vadd.f32 %v7330, %v7554
        %v7556 = vpop.f32.mrf.mxu0
        %7557 = vmatprep.mubr.f32.mxu0 %v5349
        %7558 = vmatmul.mubr.f32.gmra.mxu0 %v5348
        %v7559 = vpop.f32.mrf.mxu0
        %v7560 = vadd.f32 %v7335, %v7559
        %v7561 = vpop.f32.mrf.mxu0
        %7562 = vmatprep.mubr.f32.mxu0 %v5374
        %7563 = vmatmul.mubr.f32.gmra.mxu0 %v5373
        %v7564 = vpop.f32.mrf.mxu0
        %v7565 = vadd.f32 %v7340, %v7564
        %v7566 = vpop.f32.mrf.mxu0
        %7567 = vmatprep.mubr.f32.mxu0 %v5399
        %7568 = vmatmul.mubr.f32.gmra.mxu0 %v5398
        %v7569 = vpop.f32.mrf.mxu0
        %v7570 = vadd.f32 %v7345, %v7569
        %v7571 = vpop.f32.mrf.mxu0
        %7572 = vmatprep.mubr.f32.mxu0 %v5424
        %7573 = vmatmul.mubr.f32.gmra.mxu0 %v5423
        %v7574 = vpop.f32.mrf.mxu0
        %v7575 = vadd.f32 %v7350, %v7574
        %v7576 = vpop.f32.mrf.mxu0
        %7577 = vmatprep.mubr.f32.mxu0 %v5449
        %7578 = vmatmul.mubr.f32.gmra.mxu0 %v5448
        %v7579 = vpop.f32.mrf.mxu0
        %v7580 = vadd.f32 %v7355, %v7579
        %v7581 = vpop.f32.mrf.mxu0
        %7582 = vmatprep.mubr.f32.mxu0 %v5474
        %7583 = vmatmul.mubr.f32.gmra.mxu0 %v5473
        %v7584 = vpop.f32.mrf.mxu0
        %v7585 = vadd.f32 %v7360, %v7584
        %v7586 = vpop.f32.mrf.mxu0
        %7587 = vmatprep.mubr.f32.mxu0 %v5499
        %7588 = vmatmul.mubr.f32.gmra.mxu0 %v5498
        %v7589 = vpop.f32.mrf.mxu0
        %v7590 = vadd.f32 %v7365, %v7589
        %v7591 = vpop.f32.mrf.mxu0
        %7592 = vmatprep.mubr.f32.mxu0 %v5524
        %7593 = vmatmul.mubr.f32.gmra.mxu0 %v5523
        %v7594 = vpop.f32.mrf.mxu0
        %v7595 = vadd.f32 %v7370, %v7594
        %v7596 = vpop.f32.mrf.mxu0
        %7597 = vmatprep.mubr.f32.mxu0 %v5549
        %7598 = vmatmul.mubr.f32.gmra.mxu0 %v5548
        %v7599 = vpop.f32.mrf.mxu0
        %v7600 = vadd.f32 %v7375, %v7599
        %v7601 = vpop.f32.mrf.mxu0
        %7602 = vmatprep.mubr.f32.mxu0 %v5574
        %7603 = vmatmul.mubr.f32.gmra.mxu0 %v5573
        %v7604 = vpop.f32.mrf.mxu0
        %v7605 = vadd.f32 %v7380, %v7604
        %v7606 = vpop.f32.mrf.mxu0
        %7607 = vmatprep.mubr.f32.mxu0 %v5599
        %7608 = vmatmul.mubr.f32.gmra.mxu0 %v5598
        %v7609 = vpop.f32.mrf.mxu0
        %v7610 = vadd.f32 %v7385, %v7609
        %v7611 = vpop.f32.mrf.mxu0
        %7612 = vmatprep.mubr.f32.mxu0 %v5624
        %7613 = vmatmul.mubr.f32.gmra.mxu0 %v5623
        %v7614 = vpop.f32.mrf.mxu0
        %v7615 = vadd.f32 %v7390, %v7614
        %v7616 = vpop.f32.mrf.mxu0
        %7617 = vdwg.mxu0
        %7618 = vmatprep.subr.mxu0 0.0
        %7619 = vmatpush1.msra.mxu0 %v5875
        %7620 = vmatprep.subr.mxu0 0.0
        %7621 = vmatpush1.msra.mxu0 %v5874
        %7622 = vmatprep.subr.mxu0 0.0
        %7623 = vmatpush1.msra.mxu0 %v5873
        %7624 = vmatprep.subr.mxu0 0.0
        %7625 = vmatpush1.msra.mxu0 %v5872
        %7626 = vmatprep.subr.mxu0 0.0
        %7627 = vmatpush1.msra.mxu0 %v5871
        %7628 = vmatprep.subr.mxu0 0.0
        %7629 = vmatpush1.msra.mxu0 %v5870
        %7630 = vmatprep.subr.mxu0 0.0
        %7631 = vmatpush1.msra.mxu0 %v5869
        %7632 = vmatprep.subr.mxu0 0.0
        %7633 = vmatpush1.msra.mxu0 %v5868
        %7634 = vmatprep.subr.mxu0 0.0
        %7635 = vmatpush1.msra.mxu0 %v5867
        %7636 = vmatprep.subr.mxu0 0.0
        %7637 = vmatpush1.msra.mxu0 %v5866
        %7638 = vmatprep.subr.mxu0 0.0
        %7639 = vmatpush1.msra.mxu0 %v5865
        %7640 = vmatprep.subr.mxu0 0.0
        %7641 = vmatpush1.msra.mxu0 %v5864
        %7642 = vmatprep.subr.mxu0 0.0
        %7643 = vmatpush1.msra.mxu0 %v5863
        %7644 = vmatprep.subr.mxu0 0.0
        %7645 = vmatpush1.msra.mxu0 %v5862
        %7646 = vmatprep.subr.mxu0 0.0
        %7647 = vmatpush1.msra.mxu0 %v5861
        %7648 = vmatprep.subr.mxu0 0.0
        %7649 = vmatpush1.msra.mxu0 %v5860
        %7650 = vmatprep.subr.mxu0 0.0
        %7651 = vmatpush2.msra.mxu0 %v5891
        %7652 = vmatprep.subr.mxu0 0.0
        %7653 = vmatpush2.msra.mxu0 %v5890
        %7654 = vmatprep.subr.mxu0 0.0
        %7655 = vmatpush2.msra.mxu0 %v5889
        %7656 = vmatprep.subr.mxu0 0.0
        %7657 = vmatpush2.msra.mxu0 %v5888
        %7658 = vmatprep.subr.mxu0 0.0
        %7659 = vmatpush2.msra.mxu0 %v5887
        %7660 = vmatprep.subr.mxu0 0.0
        %7661 = vmatpush2.msra.mxu0 %v5886
        %7662 = vmatprep.subr.mxu0 0.0
        %7663 = vmatpush2.msra.mxu0 %v5885
        %7664 = vmatprep.subr.mxu0 0.0
        %7665 = vmatpush2.msra.mxu0 %v5884
        %7666 = vmatprep.subr.mxu0 0.0
        %7667 = vmatpush2.msra.mxu0 %v5883
        %7668 = vmatprep.subr.mxu0 0.0
        %7669 = vmatpush2.msra.mxu0 %v5882
        %7670 = vmatprep.subr.mxu0 0.0
        %7671 = vmatpush2.msra.mxu0 %v5881
        %7672 = vmatprep.subr.mxu0 0.0
        %7673 = vmatpush2.msra.mxu0 %v5880
        %7674 = vmatprep.subr.mxu0 0.0
        %7675 = vmatpush2.msra.mxu0 %v5879
        %7676 = vmatprep.subr.mxu0 0.0
        %7677 = vmatpush2.msra.mxu0 %v5878
        %7678 = vmatprep.subr.mxu0 0.0
        %7679 = vmatpush2.msra.mxu0 %v5877
        %7680 = vmatprep.subr.mxu0 0.0
        %7681 = vmatpush2.msra.mxu0 %v5876
        %7682 = vmatprep.mubr.f32.mxu0 %v4851
        %7683 = vmatmul.mubr.f32.gmra.mxu0 %v4850
        %v7684 = vpop.f32.mrf.mxu0
        %v7685 = vadd.f32 %v7460, %v7684
        %v7686 = vpop.f32.mrf.mxu0
        %7687 = vmatprep.mubr.f32.mxu0 %v4876
        %7688 = vmatmul.mubr.f32.gmra.mxu0 %v4875
        %v7689 = vpop.f32.mrf.mxu0
        %v7690 = vadd.f32 %v7465, %v7689
        %v7691 = vpop.f32.mrf.mxu0
        %7692 = vmatprep.mubr.f32.mxu0 %v4901
        %7693 = vmatmul.mubr.f32.gmra.mxu0 %v4900
        %v7694 = vpop.f32.mrf.mxu0
        %v7695 = vadd.f32 %v7470, %v7694
        %v7696 = vpop.f32.mrf.mxu0
        %7697 = vmatprep.mubr.f32.mxu0 %v4926
        %7698 = vmatmul.mubr.f32.gmra.mxu0 %v4925
        %v7699 = vpop.f32.mrf.mxu0
        %v7700 = vadd.f32 %v7475, %v7699
        %v7701 = vpop.f32.mrf.mxu0
        %7702 = vmatprep.mubr.f32.mxu0 %v4951
        %7703 = vmatmul.mubr.f32.gmra.mxu0 %v4950
        %v7704 = vpop.f32.mrf.mxu0
        %v7705 = vadd.f32 %v7480, %v7704
        %v7706 = vpop.f32.mrf.mxu0
        %7707 = vmatprep.mubr.f32.mxu0 %v4976
        %7708 = vmatmul.mubr.f32.gmra.mxu0 %v4975
        %v7709 = vpop.f32.mrf.mxu0
        %v7710 = vadd.f32 %v7485, %v7709
        %v7711 = vpop.f32.mrf.mxu0
        %7712 = vmatprep.mubr.f32.mxu0 %v5001
        %7713 = vmatmul.mubr.f32.gmra.mxu0 %v5000
        %v7714 = vpop.f32.mrf.mxu0
        %v7715 = vadd.f32 %v7490, %v7714
        %v7716 = vpop.f32.mrf.mxu0
        %7717 = vmatprep.mubr.f32.mxu0 %v5026
        %7718 = vmatmul.mubr.f32.gmra.mxu0 %v5025
        %v7719 = vpop.f32.mrf.mxu0
        %v7720 = vadd.f32 %v7495, %v7719
        %v7721 = vpop.f32.mrf.mxu0
        %7722 = vmatprep.mubr.f32.mxu0 %v5051
        %7723 = vmatmul.mubr.f32.gmra.mxu0 %v5050
        %v7724 = vpop.f32.mrf.mxu0
        %v7725 = vadd.f32 %v7500, %v7724
        %v7726 = vpop.f32.mrf.mxu0
        %7727 = vmatprep.mubr.f32.mxu0 %v5076
        %7728 = vmatmul.mubr.f32.gmra.mxu0 %v5075
        %v7729 = vpop.f32.mrf.mxu0
        %v7730 = vadd.f32 %v7505, %v7729
        %v7731 = vpop.f32.mrf.mxu0
        %7732 = vmatprep.mubr.f32.mxu0 %v5101
        %7733 = vmatmul.mubr.f32.gmra.mxu0 %v5100
        %v7734 = vpop.f32.mrf.mxu0
        %v7735 = vadd.f32 %v7510, %v7734
        %v7736 = vpop.f32.mrf.mxu0
        %7737 = vmatprep.mubr.f32.mxu0 %v5126
        %7738 = vmatmul.mubr.f32.gmra.mxu0 %v5125
        %v7739 = vpop.f32.mrf.mxu0
        %v7740 = vadd.f32 %v7515, %v7739
        %v7741 = vpop.f32.mrf.mxu0
        %7742 = vmatprep.mubr.f32.mxu0 %v5151
        %7743 = vmatmul.mubr.f32.gmra.mxu0 %v5150
        %v7744 = vpop.f32.mrf.mxu0
        %v7745 = vadd.f32 %v7520, %v7744
        %v7746 = vpop.f32.mrf.mxu0
        %7747 = vmatprep.mubr.f32.mxu0 %v5176
        %7748 = vmatmul.mubr.f32.gmra.mxu0 %v5175
        %v7749 = vpop.f32.mrf.mxu0
        %v7750 = vadd.f32 %v7525, %v7749
        %v7751 = vpop.f32.mrf.mxu0
        %7752 = vmatprep.mubr.f32.mxu0 %v5201
        %7753 = vmatmul.mubr.f32.gmra.mxu0 %v5200
        %v7754 = vpop.f32.mrf.mxu0
        %v7755 = vadd.f32 %v7530, %v7754
        %v7756 = vpop.f32.mrf.mxu0
        %7757 = vmatprep.mubr.f32.mxu0 %v5226
        %7758 = vmatmul.mubr.f32.gmra.mxu0 %v5225
        %v7759 = vpop.f32.mrf.mxu0
        %v7760 = vadd.f32 %v7535, %v7759
        %v7761 = vpop.f32.mrf.mxu0
        %7762 = vmatprep.mubr.f32.mxu0 %v5251
        %7763 = vmatmul.mubr.f32.gmra.mxu0 %v5250
        %v7764 = vpop.f32.mrf.mxu0
        %v7765 = vadd.f32 %v7540, %v7764
        %v7766 = vpop.f32.mrf.mxu0
        %7767 = vmatprep.mubr.f32.mxu0 %v5276
        %7768 = vmatmul.mubr.f32.gmra.mxu0 %v5275
        %v7769 = vpop.f32.mrf.mxu0
        %v7770 = vadd.f32 %v7545, %v7769
        %v7771 = vpop.f32.mrf.mxu0
        %7772 = vmatprep.mubr.f32.mxu0 %v5301
        %7773 = vmatmul.mubr.f32.gmra.mxu0 %v5300
        %v7774 = vpop.f32.mrf.mxu0
        %v7775 = vadd.f32 %v7550, %v7774
        %v7776 = vpop.f32.mrf.mxu0
        %7777 = vmatprep.mubr.f32.mxu0 %v5326
        %7778 = vmatmul.mubr.f32.gmra.mxu0 %v5325
        %v7779 = vpop.f32.mrf.mxu0
        %v7780 = vadd.f32 %v7555, %v7779
        %v7781 = vpop.f32.mrf.mxu0
        %7782 = vmatprep.mubr.f32.mxu0 %v5351
        %7783 = vmatmul.mubr.f32.gmra.mxu0 %v5350
        %v7784 = vpop.f32.mrf.mxu0
        %v7785 = vadd.f32 %v7560, %v7784
        %v7786 = vpop.f32.mrf.mxu0
        %7787 = vmatprep.mubr.f32.mxu0 %v5376
        %7788 = vmatmul.mubr.f32.gmra.mxu0 %v5375
        %v7789 = vpop.f32.mrf.mxu0
        %v7790 = vadd.f32 %v7565, %v7789
        %v7791 = vpop.f32.mrf.mxu0
        %7792 = vmatprep.mubr.f32.mxu0 %v5401
        %7793 = vmatmul.mubr.f32.gmra.mxu0 %v5400
        %v7794 = vpop.f32.mrf.mxu0
        %v7795 = vadd.f32 %v7570, %v7794
        %v7796 = vpop.f32.mrf.mxu0
        %7797 = vmatprep.mubr.f32.mxu0 %v5426
        %7798 = vmatmul.mubr.f32.gmra.mxu0 %v5425
        %v7799 = vpop.f32.mrf.mxu0
        %v7800 = vadd.f32 %v7575, %v7799
        %v7801 = vpop.f32.mrf.mxu0
        %7802 = vmatprep.mubr.f32.mxu0 %v5451
        %7803 = vmatmul.mubr.f32.gmra.mxu0 %v5450
        %v7804 = vpop.f32.mrf.mxu0
        %v7805 = vadd.f32 %v7580, %v7804
        %v7806 = vpop.f32.mrf.mxu0
        %7807 = vmatprep.mubr.f32.mxu0 %v5476
        %7808 = vmatmul.mubr.f32.gmra.mxu0 %v5475
        %v7809 = vpop.f32.mrf.mxu0
        %v7810 = vadd.f32 %v7585, %v7809
        %v7811 = vpop.f32.mrf.mxu0
        %7812 = vmatprep.mubr.f32.mxu0 %v5501
        %7813 = vmatmul.mubr.f32.gmra.mxu0 %v5500
        %v7814 = vpop.f32.mrf.mxu0
        %v7815 = vadd.f32 %v7590, %v7814
        %v7816 = vpop.f32.mrf.mxu0
        %7817 = vmatprep.mubr.f32.mxu0 %v5526
        %7818 = vmatmul.mubr.f32.gmra.mxu0 %v5525
        %v7819 = vpop.f32.mrf.mxu0
        %v7820 = vadd.f32 %v7595, %v7819
        %v7821 = vpop.f32.mrf.mxu0
        %7822 = vmatprep.mubr.f32.mxu0 %v5551
        %7823 = vmatmul.mubr.f32.gmra.mxu0 %v5550
        %v7824 = vpop.f32.mrf.mxu0
        %v7825 = vadd.f32 %v7600, %v7824
        %v7826 = vpop.f32.mrf.mxu0
        %7827 = vmatprep.mubr.f32.mxu0 %v5576
        %7828 = vmatmul.mubr.f32.gmra.mxu0 %v5575
        %v7829 = vpop.f32.mrf.mxu0
        %v7830 = vadd.f32 %v7605, %v7829
        %v7831 = vpop.f32.mrf.mxu0
        %7832 = vmatprep.mubr.f32.mxu0 %v5601
        %7833 = vmatmul.mubr.f32.gmra.mxu0 %v5600
        %v7834 = vpop.f32.mrf.mxu0
        %v7835 = vadd.f32 %v7610, %v7834
        %v7836 = vpop.f32.mrf.mxu0
        %7837 = vmatprep.mubr.f32.mxu0 %v5626
        %7838 = vmatmul.mubr.f32.gmra.mxu0 %v5625
        %v7839 = vpop.f32.mrf.mxu0
        %v7840 = vadd.f32 %v7615, %v7839
        %v7841 = vpop.f32.mrf.mxu0
        %7842 = vdwg.mxu0
        %7843 = vmatprep.subr.mxu0 0.0
        %7844 = vmatpush1.msra.mxu0 %v5907
        %7845 = vmatprep.subr.mxu0 0.0
        %7846 = vmatpush1.msra.mxu0 %v5906
        %7847 = vmatprep.subr.mxu0 0.0
        %7848 = vmatpush1.msra.mxu0 %v5905
        %7849 = vmatprep.subr.mxu0 0.0
        %7850 = vmatpush1.msra.mxu0 %v5904
        %7851 = vmatprep.subr.mxu0 0.0
        %7852 = vmatpush1.msra.mxu0 %v5903
        %7853 = vmatprep.subr.mxu0 0.0
        %7854 = vmatpush1.msra.mxu0 %v5902
        %7855 = vmatprep.subr.mxu0 0.0
        %7856 = vmatpush1.msra.mxu0 %v5901
        %7857 = vmatprep.subr.mxu0 0.0
        %7858 = vmatpush1.msra.mxu0 %v5900
        %7859 = vmatprep.subr.mxu0 0.0
        %7860 = vmatpush1.msra.mxu0 %v5899
        %7861 = vmatprep.subr.mxu0 0.0
        %7862 = vmatpush1.msra.mxu0 %v5898
        %7863 = vmatprep.subr.mxu0 0.0
        %7864 = vmatpush1.msra.mxu0 %v5897
        %7865 = vmatprep.subr.mxu0 0.0
        %7866 = vmatpush1.msra.mxu0 %v5896
        %7867 = vmatprep.subr.mxu0 0.0
        %7868 = vmatpush1.msra.mxu0 %v5895
        %7869 = vmatprep.subr.mxu0 0.0
        %7870 = vmatpush1.msra.mxu0 %v5894
        %7871 = vmatprep.subr.mxu0 0.0
        %7872 = vmatpush1.msra.mxu0 %v5893
        %7873 = vmatprep.subr.mxu0 0.0
        %7874 = vmatpush1.msra.mxu0 %v5892
        %7875 = vmatprep.subr.mxu0 0.0
        %7876 = vmatpush2.msra.mxu0 %v5923
        %7877 = vmatprep.subr.mxu0 0.0
        %7878 = vmatpush2.msra.mxu0 %v5922
        %7879 = vmatprep.subr.mxu0 0.0
        %7880 = vmatpush2.msra.mxu0 %v5921
        %7881 = vmatprep.subr.mxu0 0.0
        %7882 = vmatpush2.msra.mxu0 %v5920
        %7883 = vmatprep.subr.mxu0 0.0
        %7884 = vmatpush2.msra.mxu0 %v5919
        %7885 = vmatprep.subr.mxu0 0.0
        %7886 = vmatpush2.msra.mxu0 %v5918
        %7887 = vmatprep.subr.mxu0 0.0
        %7888 = vmatpush2.msra.mxu0 %v5917
        %7889 = vmatprep.subr.mxu0 0.0
        %7890 = vmatpush2.msra.mxu0 %v5916
        %7891 = vmatprep.subr.mxu0 0.0
        %7892 = vmatpush2.msra.mxu0 %v5915
        %7893 = vmatprep.subr.mxu0 0.0
        %7894 = vmatpush2.msra.mxu0 %v5914
        %7895 = vmatprep.subr.mxu0 0.0
        %7896 = vmatpush2.msra.mxu0 %v5913
        %7897 = vmatprep.subr.mxu0 0.0
        %7898 = vmatpush2.msra.mxu0 %v5912
        %7899 = vmatprep.subr.mxu0 0.0
        %7900 = vmatpush2.msra.mxu0 %v5911
        %7901 = vmatprep.subr.mxu0 0.0
        %7902 = vmatpush2.msra.mxu0 %v5910
        %7903 = vmatprep.subr.mxu0 0.0
        %7904 = vmatpush2.msra.mxu0 %v5909
        %7905 = vmatprep.subr.mxu0 0.0
        %7906 = vmatpush2.msra.mxu0 %v5908
        %7907 = vmatprep.mubr.f32.mxu0 %v4853
        %7908 = vmatmul.mubr.f32.gmra.mxu0 %v4852
        %v7909 = vpop.f32.mrf.mxu0
        %v7910 = vadd.f32 %v7685, %v7909
        %v7911 = vpop.f32.mrf.mxu0
        %7912 = vmatprep.mubr.f32.mxu0 %v4878
        %7913 = vmatmul.mubr.f32.gmra.mxu0 %v4877
        %v7914 = vpop.f32.mrf.mxu0
        %v7915 = vadd.f32 %v7690, %v7914
        %v7916 = vpop.f32.mrf.mxu0
        %7917 = vmatprep.mubr.f32.mxu0 %v4903
        %7918 = vmatmul.mubr.f32.gmra.mxu0 %v4902
        %v7919 = vpop.f32.mrf.mxu0
        %v7920 = vadd.f32 %v7695, %v7919
        %v7921 = vpop.f32.mrf.mxu0
        %7922 = vmatprep.mubr.f32.mxu0 %v4928
        %7923 = vmatmul.mubr.f32.gmra.mxu0 %v4927
        %v7924 = vpop.f32.mrf.mxu0
        %v7925 = vadd.f32 %v7700, %v7924
        %v7926 = vpop.f32.mrf.mxu0
        %7927 = vmatprep.mubr.f32.mxu0 %v4953
        %7928 = vmatmul.mubr.f32.gmra.mxu0 %v4952
        %v7929 = vpop.f32.mrf.mxu0
        %v7930 = vadd.f32 %v7705, %v7929
        %v7931 = vpop.f32.mrf.mxu0
        %7932 = vmatprep.mubr.f32.mxu0 %v4978
        %7933 = vmatmul.mubr.f32.gmra.mxu0 %v4977
        %v7934 = vpop.f32.mrf.mxu0
        %v7935 = vadd.f32 %v7710, %v7934
        %v7936 = vpop.f32.mrf.mxu0
        %7937 = vmatprep.mubr.f32.mxu0 %v5003
        %7938 = vmatmul.mubr.f32.gmra.mxu0 %v5002
        %v7939 = vpop.f32.mrf.mxu0
        %v7940 = vadd.f32 %v7715, %v7939
        %v7941 = vpop.f32.mrf.mxu0
        %7942 = vmatprep.mubr.f32.mxu0 %v5028
        %7943 = vmatmul.mubr.f32.gmra.mxu0 %v5027
        %v7944 = vpop.f32.mrf.mxu0
        %v7945 = vadd.f32 %v7720, %v7944
        %v7946 = vpop.f32.mrf.mxu0
        %7947 = vmatprep.mubr.f32.mxu0 %v5053
        %7948 = vmatmul.mubr.f32.gmra.mxu0 %v5052
        %v7949 = vpop.f32.mrf.mxu0
        %v7950 = vadd.f32 %v7725, %v7949
        %v7951 = vpop.f32.mrf.mxu0
        %7952 = vmatprep.mubr.f32.mxu0 %v5078
        %7953 = vmatmul.mubr.f32.gmra.mxu0 %v5077
        %v7954 = vpop.f32.mrf.mxu0
        %v7955 = vadd.f32 %v7730, %v7954
        %v7956 = vpop.f32.mrf.mxu0
        %7957 = vmatprep.mubr.f32.mxu0 %v5103
        %7958 = vmatmul.mubr.f32.gmra.mxu0 %v5102
        %v7959 = vpop.f32.mrf.mxu0
        %v7960 = vadd.f32 %v7735, %v7959
        %v7961 = vpop.f32.mrf.mxu0
        %7962 = vmatprep.mubr.f32.mxu0 %v5128
        %7963 = vmatmul.mubr.f32.gmra.mxu0 %v5127
        %v7964 = vpop.f32.mrf.mxu0
        %v7965 = vadd.f32 %v7740, %v7964
        %v7966 = vpop.f32.mrf.mxu0
        %7967 = vmatprep.mubr.f32.mxu0 %v5153
        %7968 = vmatmul.mubr.f32.gmra.mxu0 %v5152
        %v7969 = vpop.f32.mrf.mxu0
        %v7970 = vadd.f32 %v7745, %v7969
        %v7971 = vpop.f32.mrf.mxu0
        %7972 = vmatprep.mubr.f32.mxu0 %v5178
        %7973 = vmatmul.mubr.f32.gmra.mxu0 %v5177
        %v7974 = vpop.f32.mrf.mxu0
        %v7975 = vadd.f32 %v7750, %v7974
        %v7976 = vpop.f32.mrf.mxu0
        %7977 = vmatprep.mubr.f32.mxu0 %v5203
        %7978 = vmatmul.mubr.f32.gmra.mxu0 %v5202
        %v7979 = vpop.f32.mrf.mxu0
        %v7980 = vadd.f32 %v7755, %v7979
        %v7981 = vpop.f32.mrf.mxu0
        %7982 = vmatprep.mubr.f32.mxu0 %v5228
        %7983 = vmatmul.mubr.f32.gmra.mxu0 %v5227
        %v7984 = vpop.f32.mrf.mxu0
        %v7985 = vadd.f32 %v7760, %v7984
        %v7986 = vpop.f32.mrf.mxu0
        %7987 = vmatprep.mubr.f32.mxu0 %v5253
        %7988 = vmatmul.mubr.f32.gmra.mxu0 %v5252
        %v7989 = vpop.f32.mrf.mxu0
        %v7990 = vadd.f32 %v7765, %v7989
        %v7991 = vpop.f32.mrf.mxu0
        %7992 = vmatprep.mubr.f32.mxu0 %v5278
        %7993 = vmatmul.mubr.f32.gmra.mxu0 %v5277
        %v7994 = vpop.f32.mrf.mxu0
        %v7995 = vadd.f32 %v7770, %v7994
        %v7996 = vpop.f32.mrf.mxu0
        %7997 = vmatprep.mubr.f32.mxu0 %v5303
        %7998 = vmatmul.mubr.f32.gmra.mxu0 %v5302
        %v7999 = vpop.f32.mrf.mxu0
        %v8000 = vadd.f32 %v7775, %v7999
        %v8001 = vpop.f32.mrf.mxu0
        %8002 = vmatprep.mubr.f32.mxu0 %v5328
        %8003 = vmatmul.mubr.f32.gmra.mxu0 %v5327
        %v8004 = vpop.f32.mrf.mxu0
        %v8005 = vadd.f32 %v7780, %v8004
        %v8006 = vpop.f32.mrf.mxu0
        %8007 = vmatprep.mubr.f32.mxu0 %v5353
        %8008 = vmatmul.mubr.f32.gmra.mxu0 %v5352
        %v8009 = vpop.f32.mrf.mxu0
        %v8010 = vadd.f32 %v7785, %v8009
        %v8011 = vpop.f32.mrf.mxu0
        %8012 = vmatprep.mubr.f32.mxu0 %v5378
        %8013 = vmatmul.mubr.f32.gmra.mxu0 %v5377
        %v8014 = vpop.f32.mrf.mxu0
        %v8015 = vadd.f32 %v7790, %v8014
        %v8016 = vpop.f32.mrf.mxu0
        %8017 = vmatprep.mubr.f32.mxu0 %v5403
        %8018 = vmatmul.mubr.f32.gmra.mxu0 %v5402
        %v8019 = vpop.f32.mrf.mxu0
        %v8020 = vadd.f32 %v7795, %v8019
        %v8021 = vpop.f32.mrf.mxu0
        %8022 = vmatprep.mubr.f32.mxu0 %v5428
        %8023 = vmatmul.mubr.f32.gmra.mxu0 %v5427
        %v8024 = vpop.f32.mrf.mxu0
        %v8025 = vadd.f32 %v7800, %v8024
        %v8026 = vpop.f32.mrf.mxu0
        %8027 = vmatprep.mubr.f32.mxu0 %v5453
        %8028 = vmatmul.mubr.f32.gmra.mxu0 %v5452
        %v8029 = vpop.f32.mrf.mxu0
        %v8030 = vadd.f32 %v7805, %v8029
        %v8031 = vpop.f32.mrf.mxu0
        %8032 = vmatprep.mubr.f32.mxu0 %v5478
        %8033 = vmatmul.mubr.f32.gmra.mxu0 %v5477
        %v8034 = vpop.f32.mrf.mxu0
        %v8035 = vadd.f32 %v7810, %v8034
        %v8036 = vpop.f32.mrf.mxu0
        %8037 = vmatprep.mubr.f32.mxu0 %v5503
        %8038 = vmatmul.mubr.f32.gmra.mxu0 %v5502
        %v8039 = vpop.f32.mrf.mxu0
        %v8040 = vadd.f32 %v7815, %v8039
        %v8041 = vpop.f32.mrf.mxu0
        %8042 = vmatprep.mubr.f32.mxu0 %v5528
        %8043 = vmatmul.mubr.f32.gmra.mxu0 %v5527
        %v8044 = vpop.f32.mrf.mxu0
        %v8045 = vadd.f32 %v7820, %v8044
        %v8046 = vpop.f32.mrf.mxu0
        %8047 = vmatprep.mubr.f32.mxu0 %v5553
        %8048 = vmatmul.mubr.f32.gmra.mxu0 %v5552
        %v8049 = vpop.f32.mrf.mxu0
        %v8050 = vadd.f32 %v7825, %v8049
        %v8051 = vpop.f32.mrf.mxu0
        %8052 = vmatprep.mubr.f32.mxu0 %v5578
        %8053 = vmatmul.mubr.f32.gmra.mxu0 %v5577
        %v8054 = vpop.f32.mrf.mxu0
        %v8055 = vadd.f32 %v7830, %v8054
        %v8056 = vpop.f32.mrf.mxu0
        %8057 = vmatprep.mubr.f32.mxu0 %v5603
        %8058 = vmatmul.mubr.f32.gmra.mxu0 %v5602
        %v8059 = vpop.f32.mrf.mxu0
        %v8060 = vadd.f32 %v7835, %v8059
        %v8061 = vpop.f32.mrf.mxu0
        %8062 = vmatprep.mubr.f32.mxu0 %v5628
        %8063 = vmatmul.mubr.f32.gmra.mxu0 %v5627
        %v8064 = vpop.f32.mrf.mxu0
        %v8065 = vadd.f32 %v7840, %v8064
        %v8066 = vpop.f32.mrf.mxu0
        %8067 = vdwg.mxu0
        %8068 = vmatprep.subr.mxu0 0.0
        %8069 = vmatpush1.msra.mxu0 %v5939
        %8070 = vmatprep.subr.mxu0 0.0
        %8071 = vmatpush1.msra.mxu0 %v5938
        %8072 = vmatprep.subr.mxu0 0.0
        %8073 = vmatpush1.msra.mxu0 %v5937
        %8074 = vmatprep.subr.mxu0 0.0
        %8075 = vmatpush1.msra.mxu0 %v5936
        %8076 = vmatprep.subr.mxu0 0.0
        %8077 = vmatpush1.msra.mxu0 %v5935
        %8078 = vmatprep.subr.mxu0 0.0
        %8079 = vmatpush1.msra.mxu0 %v5934
        %8080 = vmatprep.subr.mxu0 0.0
        %8081 = vmatpush1.msra.mxu0 %v5933
        %8082 = vmatprep.subr.mxu0 0.0
        %8083 = vmatpush1.msra.mxu0 %v5932
        %8084 = vmatprep.subr.mxu0 0.0
        %8085 = vmatpush1.msra.mxu0 %v5931
        %8086 = vmatprep.subr.mxu0 0.0
        %8087 = vmatpush1.msra.mxu0 %v5930
        %8088 = vmatprep.subr.mxu0 0.0
        %8089 = vmatpush1.msra.mxu0 %v5929
        %8090 = vmatprep.subr.mxu0 0.0
        %8091 = vmatpush1.msra.mxu0 %v5928
        %8092 = vmatprep.subr.mxu0 0.0
        %8093 = vmatpush1.msra.mxu0 %v5927
        %8094 = vmatprep.subr.mxu0 0.0
        %8095 = vmatpush1.msra.mxu0 %v5926
        %8096 = vmatprep.subr.mxu0 0.0
        %8097 = vmatpush1.msra.mxu0 %v5925
        %8098 = vmatprep.subr.mxu0 0.0
        %8099 = vmatpush1.msra.mxu0 %v5924
        %8100 = vmatprep.subr.mxu0 0.0
        %8101 = vmatpush2.msra.mxu0 %v5955
        %8102 = vmatprep.subr.mxu0 0.0
        %8103 = vmatpush2.msra.mxu0 %v5954
        %8104 = vmatprep.subr.mxu0 0.0
        %8105 = vmatpush2.msra.mxu0 %v5953
        %8106 = vmatprep.subr.mxu0 0.0
        %8107 = vmatpush2.msra.mxu0 %v5952
        %8108 = vmatprep.subr.mxu0 0.0
        %8109 = vmatpush2.msra.mxu0 %v5951
        %8110 = vmatprep.subr.mxu0 0.0
        %8111 = vmatpush2.msra.mxu0 %v5950
        %8112 = vmatprep.subr.mxu0 0.0
        %8113 = vmatpush2.msra.mxu0 %v5949
        %8114 = vmatprep.subr.mxu0 0.0
        %8115 = vmatpush2.msra.mxu0 %v5948
        %8116 = vmatprep.subr.mxu0 0.0
        %8117 = vmatpush2.msra.mxu0 %v5947
        %8118 = vmatprep.subr.mxu0 0.0
        %8119 = vmatpush2.msra.mxu0 %v5946
        %8120 = vmatprep.subr.mxu0 0.0
        %8121 = vmatpush2.msra.mxu0 %v5945
        %8122 = vmatprep.subr.mxu0 0.0
        %8123 = vmatpush2.msra.mxu0 %v5944
        %8124 = vmatprep.subr.mxu0 0.0
        %8125 = vmatpush2.msra.mxu0 %v5943
        %8126 = vmatprep.subr.mxu0 0.0
        %8127 = vmatpush2.msra.mxu0 %v5942
        %8128 = vmatprep.subr.mxu0 0.0
        %8129 = vmatpush2.msra.mxu0 %v5941
        %8130 = vmatprep.subr.mxu0 0.0
        %8131 = vmatpush2.msra.mxu0 %v5940
        %8132 = vmatprep.mubr.f32.mxu0 %v4855
        %8133 = vmatmul.mubr.f32.gmra.mxu0 %v4854
        %v8134 = vpop.f32.mrf.mxu0
        %v8135 = vadd.f32 %v7910, %v8134
        %v8136 = vpop.f32.mrf.mxu0
        %8137 = vmatprep.mubr.f32.mxu0 %v4880
        %8138 = vmatmul.mubr.f32.gmra.mxu0 %v4879
        %v8139 = vpop.f32.mrf.mxu0
        %v8140 = vadd.f32 %v7915, %v8139
        %v8141 = vpop.f32.mrf.mxu0
        %8142 = vmatprep.mubr.f32.mxu0 %v4905
        %8143 = vmatmul.mubr.f32.gmra.mxu0 %v4904
        %v8144 = vpop.f32.mrf.mxu0
        %v8145 = vadd.f32 %v7920, %v8144
        %v8146 = vpop.f32.mrf.mxu0
        %8147 = vmatprep.mubr.f32.mxu0 %v4930
        %8148 = vmatmul.mubr.f32.gmra.mxu0 %v4929
        %v8149 = vpop.f32.mrf.mxu0
        %v8150 = vadd.f32 %v7925, %v8149
        %v8151 = vpop.f32.mrf.mxu0
        %8152 = vmatprep.mubr.f32.mxu0 %v4955
        %8153 = vmatmul.mubr.f32.gmra.mxu0 %v4954
        %v8154 = vpop.f32.mrf.mxu0
        %v8155 = vadd.f32 %v7930, %v8154
        %v8156 = vpop.f32.mrf.mxu0
        %8157 = vmatprep.mubr.f32.mxu0 %v4980
        %8158 = vmatmul.mubr.f32.gmra.mxu0 %v4979
        %v8159 = vpop.f32.mrf.mxu0
        %v8160 = vadd.f32 %v7935, %v8159
        %v8161 = vpop.f32.mrf.mxu0
        %8162 = vmatprep.mubr.f32.mxu0 %v5005
        %8163 = vmatmul.mubr.f32.gmra.mxu0 %v5004
        %v8164 = vpop.f32.mrf.mxu0
        %v8165 = vadd.f32 %v7940, %v8164
        %v8166 = vpop.f32.mrf.mxu0
        %8167 = vmatprep.mubr.f32.mxu0 %v5030
        %8168 = vmatmul.mubr.f32.gmra.mxu0 %v5029
        %v8169 = vpop.f32.mrf.mxu0
        %v8170 = vadd.f32 %v7945, %v8169
        %v8171 = vpop.f32.mrf.mxu0
        %8172 = vmatprep.mubr.f32.mxu0 %v5055
        %8173 = vmatmul.mubr.f32.gmra.mxu0 %v5054
        %v8174 = vpop.f32.mrf.mxu0
        %v8175 = vadd.f32 %v7950, %v8174
        %v8176 = vpop.f32.mrf.mxu0
        %8177 = vmatprep.mubr.f32.mxu0 %v5080
        %8178 = vmatmul.mubr.f32.gmra.mxu0 %v5079
        %v8179 = vpop.f32.mrf.mxu0
        %v8180 = vadd.f32 %v7955, %v8179
        %v8181 = vpop.f32.mrf.mxu0
        %8182 = vmatprep.mubr.f32.mxu0 %v5105
        %8183 = vmatmul.mubr.f32.gmra.mxu0 %v5104
        %v8184 = vpop.f32.mrf.mxu0
        %v8185 = vadd.f32 %v7960, %v8184
        %v8186 = vpop.f32.mrf.mxu0
        %8187 = vmatprep.mubr.f32.mxu0 %v5130
        %8188 = vmatmul.mubr.f32.gmra.mxu0 %v5129
        %v8189 = vpop.f32.mrf.mxu0
        %v8190 = vadd.f32 %v7965, %v8189
        %v8191 = vpop.f32.mrf.mxu0
        %8192 = vmatprep.mubr.f32.mxu0 %v5155
        %8193 = vmatmul.mubr.f32.gmra.mxu0 %v5154
        %v8194 = vpop.f32.mrf.mxu0
        %v8195 = vadd.f32 %v7970, %v8194
        %v8196 = vpop.f32.mrf.mxu0
        %8197 = vmatprep.mubr.f32.mxu0 %v5180
        %8198 = vmatmul.mubr.f32.gmra.mxu0 %v5179
        %v8199 = vpop.f32.mrf.mxu0
        %v8200 = vadd.f32 %v7975, %v8199
        %v8201 = vpop.f32.mrf.mxu0
        %8202 = vmatprep.mubr.f32.mxu0 %v5205
        %8203 = vmatmul.mubr.f32.gmra.mxu0 %v5204
        %v8204 = vpop.f32.mrf.mxu0
        %v8205 = vadd.f32 %v7980, %v8204
        %v8206 = vpop.f32.mrf.mxu0
        %8207 = vmatprep.mubr.f32.mxu0 %v5230
        %8208 = vmatmul.mubr.f32.gmra.mxu0 %v5229
        %v8209 = vpop.f32.mrf.mxu0
        %v8210 = vadd.f32 %v7985, %v8209
        %v8211 = vpop.f32.mrf.mxu0
        %8212 = vmatprep.mubr.f32.mxu0 %v5255
        %8213 = vmatmul.mubr.f32.gmra.mxu0 %v5254
        %v8214 = vpop.f32.mrf.mxu0
        %v8215 = vadd.f32 %v7990, %v8214
        %v8216 = vpop.f32.mrf.mxu0
        %8217 = vmatprep.mubr.f32.mxu0 %v5280
        %8218 = vmatmul.mubr.f32.gmra.mxu0 %v5279
        %v8219 = vpop.f32.mrf.mxu0
        %v8220 = vadd.f32 %v7995, %v8219
        %v8221 = vpop.f32.mrf.mxu0
        %8222 = vmatprep.mubr.f32.mxu0 %v5305
        %8223 = vmatmul.mubr.f32.gmra.mxu0 %v5304
        %v8224 = vpop.f32.mrf.mxu0
        %v8225 = vadd.f32 %v8000, %v8224
        %v8226 = vpop.f32.mrf.mxu0
        %8227 = vmatprep.mubr.f32.mxu0 %v5330
        %8228 = vmatmul.mubr.f32.gmra.mxu0 %v5329
        %v8229 = vpop.f32.mrf.mxu0
        %v8230 = vadd.f32 %v8005, %v8229
        %v8231 = vpop.f32.mrf.mxu0
        %8232 = vmatprep.mubr.f32.mxu0 %v5355
        %8233 = vmatmul.mubr.f32.gmra.mxu0 %v5354
        %v8234 = vpop.f32.mrf.mxu0
        %v8235 = vadd.f32 %v8010, %v8234
        %v8236 = vpop.f32.mrf.mxu0
        %8237 = vmatprep.mubr.f32.mxu0 %v5380
        %8238 = vmatmul.mubr.f32.gmra.mxu0 %v5379
        %v8239 = vpop.f32.mrf.mxu0
        %v8240 = vadd.f32 %v8015, %v8239
        %v8241 = vpop.f32.mrf.mxu0
        %8242 = vmatprep.mubr.f32.mxu0 %v5405
        %8243 = vmatmul.mubr.f32.gmra.mxu0 %v5404
        %v8244 = vpop.f32.mrf.mxu0
        %v8245 = vadd.f32 %v8020, %v8244
        %v8246 = vpop.f32.mrf.mxu0
        %8247 = vmatprep.mubr.f32.mxu0 %v5430
        %8248 = vmatmul.mubr.f32.gmra.mxu0 %v5429
        %v8249 = vpop.f32.mrf.mxu0
        %v8250 = vadd.f32 %v8025, %v8249
        %v8251 = vpop.f32.mrf.mxu0
        %8252 = vmatprep.mubr.f32.mxu0 %v5455
        %8253 = vmatmul.mubr.f32.gmra.mxu0 %v5454
        %v8254 = vpop.f32.mrf.mxu0
        %v8255 = vadd.f32 %v8030, %v8254
        %v8256 = vpop.f32.mrf.mxu0
        %8257 = vmatprep.mubr.f32.mxu0 %v5480
        %8258 = vmatmul.mubr.f32.gmra.mxu0 %v5479
        %v8259 = vpop.f32.mrf.mxu0
        %v8260 = vadd.f32 %v8035, %v8259
        %v8261 = vpop.f32.mrf.mxu0
        %8262 = vmatprep.mubr.f32.mxu0 %v5505
        %8263 = vmatmul.mubr.f32.gmra.mxu0 %v5504
        %v8264 = vpop.f32.mrf.mxu0
        %v8265 = vadd.f32 %v8040, %v8264
        %v8266 = vpop.f32.mrf.mxu0
        %8267 = vmatprep.mubr.f32.mxu0 %v5530
        %8268 = vmatmul.mubr.f32.gmra.mxu0 %v5529
        %v8269 = vpop.f32.mrf.mxu0
        %v8270 = vadd.f32 %v8045, %v8269
        %v8271 = vpop.f32.mrf.mxu0
        %8272 = vmatprep.mubr.f32.mxu0 %v5555
        %8273 = vmatmul.mubr.f32.gmra.mxu0 %v5554
        %v8274 = vpop.f32.mrf.mxu0
        %v8275 = vadd.f32 %v8050, %v8274
        %v8276 = vpop.f32.mrf.mxu0
        %8277 = vmatprep.mubr.f32.mxu0 %v5580
        %8278 = vmatmul.mubr.f32.gmra.mxu0 %v5579
        %v8279 = vpop.f32.mrf.mxu0
        %v8280 = vadd.f32 %v8055, %v8279
        %v8281 = vpop.f32.mrf.mxu0
        %8282 = vmatprep.mubr.f32.mxu0 %v5605
        %8283 = vmatmul.mubr.f32.gmra.mxu0 %v5604
        %v8284 = vpop.f32.mrf.mxu0
        %v8285 = vadd.f32 %v8060, %v8284
        %v8286 = vpop.f32.mrf.mxu0
        %8287 = vmatprep.mubr.f32.mxu0 %v5630
        %8288 = vmatmul.mubr.f32.gmra.mxu0 %v5629
        %v8289 = vpop.f32.mrf.mxu0
        %v8290 = vadd.f32 %v8065, %v8289
        %v8291 = vpop.f32.mrf.mxu0
        %8292 = vdwg.mxu0
        %8293 = vmatprep.subr.mxu0 0.0
        %8294 = vmatpush1.msra.mxu0 %v5971
        %8295 = vmatprep.subr.mxu0 0.0
        %8296 = vmatpush1.msra.mxu0 %v5970
        %8297 = vmatprep.subr.mxu0 0.0
        %8298 = vmatpush1.msra.mxu0 %v5969
        %8299 = vmatprep.subr.mxu0 0.0
        %8300 = vmatpush1.msra.mxu0 %v5968
        %8301 = vmatprep.subr.mxu0 0.0
        %8302 = vmatpush1.msra.mxu0 %v5967
        %8303 = vmatprep.subr.mxu0 0.0
        %8304 = vmatpush1.msra.mxu0 %v5966
        %8305 = vmatprep.subr.mxu0 0.0
        %8306 = vmatpush1.msra.mxu0 %v5965
        %8307 = vmatprep.subr.mxu0 0.0
        %8308 = vmatpush1.msra.mxu0 %v5964
        %8309 = vmatprep.subr.mxu0 0.0
        %8310 = vmatpush1.msra.mxu0 %v5963
        %8311 = vmatprep.subr.mxu0 0.0
        %8312 = vmatpush1.msra.mxu0 %v5962
        %8313 = vmatprep.subr.mxu0 0.0
        %8314 = vmatpush1.msra.mxu0 %v5961
        %8315 = vmatprep.subr.mxu0 0.0
        %8316 = vmatpush1.msra.mxu0 %v5960
        %8317 = vmatprep.subr.mxu0 0.0
        %8318 = vmatpush1.msra.mxu0 %v5959
        %8319 = vmatprep.subr.mxu0 0.0
        %8320 = vmatpush1.msra.mxu0 %v5958
        %8321 = vmatprep.subr.mxu0 0.0
        %8322 = vmatpush1.msra.mxu0 %v5957
        %8323 = vmatprep.subr.mxu0 0.0
        %8324 = vmatpush1.msra.mxu0 %v5956
        %8325 = vmatprep.subr.mxu0 0.0
        %8326 = vmatpush2.msra.mxu0 %v5987
        %8327 = vmatprep.subr.mxu0 0.0
        %8328 = vmatpush2.msra.mxu0 %v5986
        %8329 = vmatprep.subr.mxu0 0.0
        %8330 = vmatpush2.msra.mxu0 %v5985
        %8331 = vmatprep.subr.mxu0 0.0
        %8332 = vmatpush2.msra.mxu0 %v5984
        %8333 = vmatprep.subr.mxu0 0.0
        %8334 = vmatpush2.msra.mxu0 %v5983
        %8335 = vmatprep.subr.mxu0 0.0
        %8336 = vmatpush2.msra.mxu0 %v5982
        %8337 = vmatprep.subr.mxu0 0.0
        %8338 = vmatpush2.msra.mxu0 %v5981
        %8339 = vmatprep.subr.mxu0 0.0
        %8340 = vmatpush2.msra.mxu0 %v5980
        %8341 = vmatprep.subr.mxu0 0.0
        %8342 = vmatpush2.msra.mxu0 %v5979
        %8343 = vmatprep.subr.mxu0 0.0
        %8344 = vmatpush2.msra.mxu0 %v5978
        %8345 = vmatprep.subr.mxu0 0.0
        %8346 = vmatpush2.msra.mxu0 %v5977
        %8347 = vmatprep.subr.mxu0 0.0
        %8348 = vmatpush2.msra.mxu0 %v5976
        %8349 = vmatprep.subr.mxu0 0.0
        %8350 = vmatpush2.msra.mxu0 %v5975
        %8351 = vmatprep.subr.mxu0 0.0
        %8352 = vmatpush2.msra.mxu0 %v5974
        %8353 = vmatprep.subr.mxu0 0.0
        %8354 = vmatpush2.msra.mxu0 %v5973
        %8355 = vmatprep.subr.mxu0 0.0
        %8356 = vmatpush2.msra.mxu0 %v5972
        %8357 = vmatprep.mubr.f32.mxu0 %v4857
        %8358 = vmatmul.mubr.f32.gmra.mxu0 %v4856
        %v8359 = vpop.f32.mrf.mxu0
        %v8360 = vadd.f32 %v8135, %v8359
        %v8361 = vpop.f32.mrf.mxu0
        %8362 = vmatprep.mubr.f32.mxu0 %v4882
        %8363 = vmatmul.mubr.f32.gmra.mxu0 %v4881
        %v8364 = vpop.f32.mrf.mxu0
        %v8365 = vadd.f32 %v8140, %v8364
        %v8366 = vpop.f32.mrf.mxu0
        %8367 = vmatprep.mubr.f32.mxu0 %v4907
        %8368 = vmatmul.mubr.f32.gmra.mxu0 %v4906
        %v8369 = vpop.f32.mrf.mxu0
        %v8370 = vadd.f32 %v8145, %v8369
        %v8371 = vpop.f32.mrf.mxu0
        %8372 = vmatprep.mubr.f32.mxu0 %v4932
        %8373 = vmatmul.mubr.f32.gmra.mxu0 %v4931
        %v8374 = vpop.f32.mrf.mxu0
        %v8375 = vadd.f32 %v8150, %v8374
        %v8376 = vpop.f32.mrf.mxu0
        %8377 = vmatprep.mubr.f32.mxu0 %v4957
        %8378 = vmatmul.mubr.f32.gmra.mxu0 %v4956
        %v8379 = vpop.f32.mrf.mxu0
        %v8380 = vadd.f32 %v8155, %v8379
        %v8381 = vpop.f32.mrf.mxu0
        %8382 = vmatprep.mubr.f32.mxu0 %v4982
        %8383 = vmatmul.mubr.f32.gmra.mxu0 %v4981
        %v8384 = vpop.f32.mrf.mxu0
        %v8385 = vadd.f32 %v8160, %v8384
        %v8386 = vpop.f32.mrf.mxu0
        %8387 = vmatprep.mubr.f32.mxu0 %v5007
        %8388 = vmatmul.mubr.f32.gmra.mxu0 %v5006
        %v8389 = vpop.f32.mrf.mxu0
        %v8390 = vadd.f32 %v8165, %v8389
        %v8391 = vpop.f32.mrf.mxu0
        %8392 = vmatprep.mubr.f32.mxu0 %v5032
        %8393 = vmatmul.mubr.f32.gmra.mxu0 %v5031
        %v8394 = vpop.f32.mrf.mxu0
        %v8395 = vadd.f32 %v8170, %v8394
        %v8396 = vpop.f32.mrf.mxu0
        %8397 = vmatprep.mubr.f32.mxu0 %v5057
        %8398 = vmatmul.mubr.f32.gmra.mxu0 %v5056
        %v8399 = vpop.f32.mrf.mxu0
        %v8400 = vadd.f32 %v8175, %v8399
        %v8401 = vpop.f32.mrf.mxu0
        %8402 = vmatprep.mubr.f32.mxu0 %v5082
        %8403 = vmatmul.mubr.f32.gmra.mxu0 %v5081
        %v8404 = vpop.f32.mrf.mxu0
        %v8405 = vadd.f32 %v8180, %v8404
        %v8406 = vpop.f32.mrf.mxu0
        %8407 = vmatprep.mubr.f32.mxu0 %v5107
        %8408 = vmatmul.mubr.f32.gmra.mxu0 %v5106
        %v8409 = vpop.f32.mrf.mxu0
        %v8410 = vadd.f32 %v8185, %v8409
        %v8411 = vpop.f32.mrf.mxu0
        %8412 = vmatprep.mubr.f32.mxu0 %v5132
        %8413 = vmatmul.mubr.f32.gmra.mxu0 %v5131
        %v8414 = vpop.f32.mrf.mxu0
        %v8415 = vadd.f32 %v8190, %v8414
        %v8416 = vpop.f32.mrf.mxu0
        %8417 = vmatprep.mubr.f32.mxu0 %v5157
        %8418 = vmatmul.mubr.f32.gmra.mxu0 %v5156
        %v8419 = vpop.f32.mrf.mxu0
        %v8420 = vadd.f32 %v8195, %v8419
        %v8421 = vpop.f32.mrf.mxu0
        %8422 = vmatprep.mubr.f32.mxu0 %v5182
        %8423 = vmatmul.mubr.f32.gmra.mxu0 %v5181
        %v8424 = vpop.f32.mrf.mxu0
        %v8425 = vadd.f32 %v8200, %v8424
        %v8426 = vpop.f32.mrf.mxu0
        %8427 = vmatprep.mubr.f32.mxu0 %v5207
        %8428 = vmatmul.mubr.f32.gmra.mxu0 %v5206
        %v8429 = vpop.f32.mrf.mxu0
        %v8430 = vadd.f32 %v8205, %v8429
        %v8431 = vpop.f32.mrf.mxu0
        %8432 = vmatprep.mubr.f32.mxu0 %v5232
        %8433 = vmatmul.mubr.f32.gmra.mxu0 %v5231
        %v8434 = vpop.f32.mrf.mxu0
        %v8435 = vadd.f32 %v8210, %v8434
        %v8436 = vpop.f32.mrf.mxu0
        %8437 = vmatprep.mubr.f32.mxu0 %v5257
        %8438 = vmatmul.mubr.f32.gmra.mxu0 %v5256
        %v8439 = vpop.f32.mrf.mxu0
        %v8440 = vadd.f32 %v8215, %v8439
        %v8441 = vpop.f32.mrf.mxu0
        %8442 = vmatprep.mubr.f32.mxu0 %v5282
        %8443 = vmatmul.mubr.f32.gmra.mxu0 %v5281
        %v8444 = vpop.f32.mrf.mxu0
        %v8445 = vadd.f32 %v8220, %v8444
        %v8446 = vpop.f32.mrf.mxu0
        %8447 = vmatprep.mubr.f32.mxu0 %v5307
        %8448 = vmatmul.mubr.f32.gmra.mxu0 %v5306
        %v8449 = vpop.f32.mrf.mxu0
        %v8450 = vadd.f32 %v8225, %v8449
        %v8451 = vpop.f32.mrf.mxu0
        %8452 = vmatprep.mubr.f32.mxu0 %v5332
        %8453 = vmatmul.mubr.f32.gmra.mxu0 %v5331
        %v8454 = vpop.f32.mrf.mxu0
        %v8455 = vadd.f32 %v8230, %v8454
        %v8456 = vpop.f32.mrf.mxu0
        %8457 = vmatprep.mubr.f32.mxu0 %v5357
        %8458 = vmatmul.mubr.f32.gmra.mxu0 %v5356
        %v8459 = vpop.f32.mrf.mxu0
        %v8460 = vadd.f32 %v8235, %v8459
        %v8461 = vpop.f32.mrf.mxu0
        %8462 = vmatprep.mubr.f32.mxu0 %v5382
        %8463 = vmatmul.mubr.f32.gmra.mxu0 %v5381
        %v8464 = vpop.f32.mrf.mxu0
        %v8465 = vadd.f32 %v8240, %v8464
        %v8466 = vpop.f32.mrf.mxu0
        %8467 = vmatprep.mubr.f32.mxu0 %v5407
        %8468 = vmatmul.mubr.f32.gmra.mxu0 %v5406
        %v8469 = vpop.f32.mrf.mxu0
        %v8470 = vadd.f32 %v8245, %v8469
        %v8471 = vpop.f32.mrf.mxu0
        %8472 = vmatprep.mubr.f32.mxu0 %v5432
        %8473 = vmatmul.mubr.f32.gmra.mxu0 %v5431
        %v8474 = vpop.f32.mrf.mxu0
        %v8475 = vadd.f32 %v8250, %v8474
        %v8476 = vpop.f32.mrf.mxu0
        %8477 = vmatprep.mubr.f32.mxu0 %v5457
        %8478 = vmatmul.mubr.f32.gmra.mxu0 %v5456
        %v8479 = vpop.f32.mrf.mxu0
        %v8480 = vadd.f32 %v8255, %v8479
        %v8481 = vpop.f32.mrf.mxu0
        %8482 = vmatprep.mubr.f32.mxu0 %v5482
        %8483 = vmatmul.mubr.f32.gmra.mxu0 %v5481
        %v8484 = vpop.f32.mrf.mxu0
        %v8485 = vadd.f32 %v8260, %v8484
        %v8486 = vpop.f32.mrf.mxu0
        %8487 = vmatprep.mubr.f32.mxu0 %v5507
        %8488 = vmatmul.mubr.f32.gmra.mxu0 %v5506
        %v8489 = vpop.f32.mrf.mxu0
        %v8490 = vadd.f32 %v8265, %v8489
        %v8491 = vpop.f32.mrf.mxu0
        %8492 = vmatprep.mubr.f32.mxu0 %v5532
        %8493 = vmatmul.mubr.f32.gmra.mxu0 %v5531
        %v8494 = vpop.f32.mrf.mxu0
        %v8495 = vadd.f32 %v8270, %v8494
        %v8496 = vpop.f32.mrf.mxu0
        %8497 = vmatprep.mubr.f32.mxu0 %v5557
        %8498 = vmatmul.mubr.f32.gmra.mxu0 %v5556
        %v8499 = vpop.f32.mrf.mxu0
        %v8500 = vadd.f32 %v8275, %v8499
        %v8501 = vpop.f32.mrf.mxu0
        %8502 = vmatprep.mubr.f32.mxu0 %v5582
        %8503 = vmatmul.mubr.f32.gmra.mxu0 %v5581
        %v8504 = vpop.f32.mrf.mxu0
        %v8505 = vadd.f32 %v8280, %v8504
        %v8506 = vpop.f32.mrf.mxu0
        %8507 = vmatprep.mubr.f32.mxu0 %v5607
        %8508 = vmatmul.mubr.f32.gmra.mxu0 %v5606
        %v8509 = vpop.f32.mrf.mxu0
        %v8510 = vadd.f32 %v8285, %v8509
        %v8511 = vpop.f32.mrf.mxu0
        %8512 = vmatprep.mubr.f32.mxu0 %v5632
        %8513 = vmatmul.mubr.f32.gmra.mxu0 %v5631
        %v8514 = vpop.f32.mrf.mxu0
        %v8515 = vadd.f32 %v8290, %v8514
        %v8516 = vpop.f32.mrf.mxu0
        %8517 = vdwg.mxu0
        %8518 = vmatprep.subr.mxu0 0.0
        %8519 = vmatpush1.msra.mxu0 %v6003
        %8520 = vmatprep.subr.mxu0 0.0
        %8521 = vmatpush1.msra.mxu0 %v6002
        %8522 = vmatprep.subr.mxu0 0.0
        %8523 = vmatpush1.msra.mxu0 %v6001
        %8524 = vmatprep.subr.mxu0 0.0
        %8525 = vmatpush1.msra.mxu0 %v6000
        %8526 = vmatprep.subr.mxu0 0.0
        %8527 = vmatpush1.msra.mxu0 %v5999
        %8528 = vmatprep.subr.mxu0 0.0
        %8529 = vmatpush1.msra.mxu0 %v5998
        %8530 = vmatprep.subr.mxu0 0.0
        %8531 = vmatpush1.msra.mxu0 %v5997
        %8532 = vmatprep.subr.mxu0 0.0
        %8533 = vmatpush1.msra.mxu0 %v5996
        %8534 = vmatprep.subr.mxu0 0.0
        %8535 = vmatpush1.msra.mxu0 %v5995
        %8536 = vmatprep.subr.mxu0 0.0
        %8537 = vmatpush1.msra.mxu0 %v5994
        %8538 = vmatprep.subr.mxu0 0.0
        %8539 = vmatpush1.msra.mxu0 %v5993
        %8540 = vmatprep.subr.mxu0 0.0
        %8541 = vmatpush1.msra.mxu0 %v5992
        %8542 = vmatprep.subr.mxu0 0.0
        %8543 = vmatpush1.msra.mxu0 %v5991
        %8544 = vmatprep.subr.mxu0 0.0
        %8545 = vmatpush1.msra.mxu0 %v5990
        %8546 = vmatprep.subr.mxu0 0.0
        %8547 = vmatpush1.msra.mxu0 %v5989
        %8548 = vmatprep.subr.mxu0 0.0
        %8549 = vmatpush1.msra.mxu0 %v5988
        %8550 = vmatprep.subr.mxu0 0.0
        %8551 = vmatpush2.msra.mxu0 %v6019
        %8552 = vmatprep.subr.mxu0 0.0
        %8553 = vmatpush2.msra.mxu0 %v6018
        %8554 = vmatprep.subr.mxu0 0.0
        %8555 = vmatpush2.msra.mxu0 %v6017
        %8556 = vmatprep.subr.mxu0 0.0
        %8557 = vmatpush2.msra.mxu0 %v6016
        %8558 = vmatprep.subr.mxu0 0.0
        %8559 = vmatpush2.msra.mxu0 %v6015
        %8560 = vmatprep.subr.mxu0 0.0
        %8561 = vmatpush2.msra.mxu0 %v6014
        %8562 = vmatprep.subr.mxu0 0.0
        %8563 = vmatpush2.msra.mxu0 %v6013
        %8564 = vmatprep.subr.mxu0 0.0
        %8565 = vmatpush2.msra.mxu0 %v6012
        %8566 = vmatprep.subr.mxu0 0.0
        %8567 = vmatpush2.msra.mxu0 %v6011
        %8568 = vmatprep.subr.mxu0 0.0
        %8569 = vmatpush2.msra.mxu0 %v6010
        %8570 = vmatprep.subr.mxu0 0.0
        %8571 = vmatpush2.msra.mxu0 %v6009
        %8572 = vmatprep.subr.mxu0 0.0
        %8573 = vmatpush2.msra.mxu0 %v6008
        %8574 = vmatprep.subr.mxu0 0.0
        %8575 = vmatpush2.msra.mxu0 %v6007
        %8576 = vmatprep.subr.mxu0 0.0
        %8577 = vmatpush2.msra.mxu0 %v6006
        %8578 = vmatprep.subr.mxu0 0.0
        %8579 = vmatpush2.msra.mxu0 %v6005
        %8580 = vmatprep.subr.mxu0 0.0
        %8581 = vmatpush2.msra.mxu0 %v6004
        %8582 = vmatprep.mubr.f32.mxu0 %v4859
        %8583 = vmatmul.mubr.f32.gmra.mxu0 %v4858
        %v8584 = vpop.f32.mrf.mxu0
        %v8585 = vadd.f32 %v8360, %v8584
        %v8586 = vpop.f32.mrf.mxu0
        %8587 = vmatprep.mubr.f32.mxu0 %v4884
        %8588 = vmatmul.mubr.f32.gmra.mxu0 %v4883
        %v8589 = vpop.f32.mrf.mxu0
        %v8590 = vadd.f32 %v8365, %v8589
        %v8591 = vpop.f32.mrf.mxu0
        %8592 = vmatprep.mubr.f32.mxu0 %v4909
        %8593 = vmatmul.mubr.f32.gmra.mxu0 %v4908
        %v8594 = vpop.f32.mrf.mxu0
        %v8595 = vadd.f32 %v8370, %v8594
        %v8596 = vpop.f32.mrf.mxu0
        %8597 = vmatprep.mubr.f32.mxu0 %v4934
        %8598 = vmatmul.mubr.f32.gmra.mxu0 %v4933
        %v8599 = vpop.f32.mrf.mxu0
        %v8600 = vadd.f32 %v8375, %v8599
        %v8601 = vpop.f32.mrf.mxu0
        %8602 = vmatprep.mubr.f32.mxu0 %v4959
        %8603 = vmatmul.mubr.f32.gmra.mxu0 %v4958
        %v8604 = vpop.f32.mrf.mxu0
        %v8605 = vadd.f32 %v8380, %v8604
        %v8606 = vpop.f32.mrf.mxu0
        %8607 = vmatprep.mubr.f32.mxu0 %v4984
        %8608 = vmatmul.mubr.f32.gmra.mxu0 %v4983
        %v8609 = vpop.f32.mrf.mxu0
        %v8610 = vadd.f32 %v8385, %v8609
        %v8611 = vpop.f32.mrf.mxu0
        %8612 = vmatprep.mubr.f32.mxu0 %v5009
        %8613 = vmatmul.mubr.f32.gmra.mxu0 %v5008
        %v8614 = vpop.f32.mrf.mxu0
        %v8615 = vadd.f32 %v8390, %v8614
        %v8616 = vpop.f32.mrf.mxu0
        %8617 = vmatprep.mubr.f32.mxu0 %v5034
        %8618 = vmatmul.mubr.f32.gmra.mxu0 %v5033
        %v8619 = vpop.f32.mrf.mxu0
        %v8620 = vadd.f32 %v8395, %v8619
        %v8621 = vpop.f32.mrf.mxu0
        %8622 = vmatprep.mubr.f32.mxu0 %v5059
        %8623 = vmatmul.mubr.f32.gmra.mxu0 %v5058
        %v8624 = vpop.f32.mrf.mxu0
        %v8625 = vadd.f32 %v8400, %v8624
        %v8626 = vpop.f32.mrf.mxu0
        %8627 = vmatprep.mubr.f32.mxu0 %v5084
        %8628 = vmatmul.mubr.f32.gmra.mxu0 %v5083
        %v8629 = vpop.f32.mrf.mxu0
        %v8630 = vadd.f32 %v8405, %v8629
        %v8631 = vpop.f32.mrf.mxu0
        %8632 = vmatprep.mubr.f32.mxu0 %v5109
        %8633 = vmatmul.mubr.f32.gmra.mxu0 %v5108
        %v8634 = vpop.f32.mrf.mxu0
        %v8635 = vadd.f32 %v8410, %v8634
        %v8636 = vpop.f32.mrf.mxu0
        %8637 = vmatprep.mubr.f32.mxu0 %v5134
        %8638 = vmatmul.mubr.f32.gmra.mxu0 %v5133
        %v8639 = vpop.f32.mrf.mxu0
        %v8640 = vadd.f32 %v8415, %v8639
        %v8641 = vpop.f32.mrf.mxu0
        %8642 = vmatprep.mubr.f32.mxu0 %v5159
        %8643 = vmatmul.mubr.f32.gmra.mxu0 %v5158
        %v8644 = vpop.f32.mrf.mxu0
        %v8645 = vadd.f32 %v8420, %v8644
        %v8646 = vpop.f32.mrf.mxu0
        %8647 = vmatprep.mubr.f32.mxu0 %v5184
        %8648 = vmatmul.mubr.f32.gmra.mxu0 %v5183
        %v8649 = vpop.f32.mrf.mxu0
        %v8650 = vadd.f32 %v8425, %v8649
        %v8651 = vpop.f32.mrf.mxu0
        %8652 = vmatprep.mubr.f32.mxu0 %v5209
        %8653 = vmatmul.mubr.f32.gmra.mxu0 %v5208
        %v8654 = vpop.f32.mrf.mxu0
        %v8655 = vadd.f32 %v8430, %v8654
        %v8656 = vpop.f32.mrf.mxu0
        %8657 = vmatprep.mubr.f32.mxu0 %v5234
        %8658 = vmatmul.mubr.f32.gmra.mxu0 %v5233
        %v8659 = vpop.f32.mrf.mxu0
        %v8660 = vadd.f32 %v8435, %v8659
        %v8661 = vpop.f32.mrf.mxu0
        %8662 = vmatprep.mubr.f32.mxu0 %v5259
        %8663 = vmatmul.mubr.f32.gmra.mxu0 %v5258
        %v8664 = vpop.f32.mrf.mxu0
        %v8665 = vadd.f32 %v8440, %v8664
        %v8666 = vpop.f32.mrf.mxu0
        %8667 = vmatprep.mubr.f32.mxu0 %v5284
        %8668 = vmatmul.mubr.f32.gmra.mxu0 %v5283
        %v8669 = vpop.f32.mrf.mxu0
        %v8670 = vadd.f32 %v8445, %v8669
        %v8671 = vpop.f32.mrf.mxu0
        %8672 = vmatprep.mubr.f32.mxu0 %v5309
        %8673 = vmatmul.mubr.f32.gmra.mxu0 %v5308
        %v8674 = vpop.f32.mrf.mxu0
        %v8675 = vadd.f32 %v8450, %v8674
        %v8676 = vpop.f32.mrf.mxu0
        %8677 = vmatprep.mubr.f32.mxu0 %v5334
        %8678 = vmatmul.mubr.f32.gmra.mxu0 %v5333
        %v8679 = vpop.f32.mrf.mxu0
        %v8680 = vadd.f32 %v8455, %v8679
        %v8681 = vpop.f32.mrf.mxu0
        %8682 = vmatprep.mubr.f32.mxu0 %v5359
        %8683 = vmatmul.mubr.f32.gmra.mxu0 %v5358
        %v8684 = vpop.f32.mrf.mxu0
        %v8685 = vadd.f32 %v8460, %v8684
        %v8686 = vpop.f32.mrf.mxu0
        %8687 = vmatprep.mubr.f32.mxu0 %v5384
        %8688 = vmatmul.mubr.f32.gmra.mxu0 %v5383
        %v8689 = vpop.f32.mrf.mxu0
        %v8690 = vadd.f32 %v8465, %v8689
        %v8691 = vpop.f32.mrf.mxu0
        %8692 = vmatprep.mubr.f32.mxu0 %v5409
        %8693 = vmatmul.mubr.f32.gmra.mxu0 %v5408
        %v8694 = vpop.f32.mrf.mxu0
        %v8695 = vadd.f32 %v8470, %v8694
        %v8696 = vpop.f32.mrf.mxu0
        %8697 = vmatprep.mubr.f32.mxu0 %v5434
        %8698 = vmatmul.mubr.f32.gmra.mxu0 %v5433
        %v8699 = vpop.f32.mrf.mxu0
        %v8700 = vadd.f32 %v8475, %v8699
        %v8701 = vpop.f32.mrf.mxu0
        %8702 = vmatprep.mubr.f32.mxu0 %v5459
        %8703 = vmatmul.mubr.f32.gmra.mxu0 %v5458
        %v8704 = vpop.f32.mrf.mxu0
        %v8705 = vadd.f32 %v8480, %v8704
        %v8706 = vpop.f32.mrf.mxu0
        %8707 = vmatprep.mubr.f32.mxu0 %v5484
        %8708 = vmatmul.mubr.f32.gmra.mxu0 %v5483
        %v8709 = vpop.f32.mrf.mxu0
        %v8710 = vadd.f32 %v8485, %v8709
        %v8711 = vpop.f32.mrf.mxu0
        %8712 = vmatprep.mubr.f32.mxu0 %v5509
        %8713 = vmatmul.mubr.f32.gmra.mxu0 %v5508
        %v8714 = vpop.f32.mrf.mxu0
        %v8715 = vadd.f32 %v8490, %v8714
        %v8716 = vpop.f32.mrf.mxu0
        %8717 = vmatprep.mubr.f32.mxu0 %v5534
        %8718 = vmatmul.mubr.f32.gmra.mxu0 %v5533
        %v8719 = vpop.f32.mrf.mxu0
        %v8720 = vadd.f32 %v8495, %v8719
        %v8721 = vpop.f32.mrf.mxu0
        %8722 = vmatprep.mubr.f32.mxu0 %v5559
        %8723 = vmatmul.mubr.f32.gmra.mxu0 %v5558
        %v8724 = vpop.f32.mrf.mxu0
        %v8725 = vadd.f32 %v8500, %v8724
        %v8726 = vpop.f32.mrf.mxu0
        %8727 = vmatprep.mubr.f32.mxu0 %v5584
        %8728 = vmatmul.mubr.f32.gmra.mxu0 %v5583
        %v8729 = vpop.f32.mrf.mxu0
        %v8730 = vadd.f32 %v8505, %v8729
        %v8731 = vpop.f32.mrf.mxu0
        %8732 = vmatprep.mubr.f32.mxu0 %v5609
        %8733 = vmatmul.mubr.f32.gmra.mxu0 %v5608
        %v8734 = vpop.f32.mrf.mxu0
        %v8735 = vadd.f32 %v8510, %v8734
        %v8736 = vpop.f32.mrf.mxu0
        %8737 = vmatprep.mubr.f32.mxu0 %v5634
        %8738 = vmatmul.mubr.f32.gmra.mxu0 %v5633
        %v8739 = vpop.f32.mrf.mxu0
        %v8740 = vadd.f32 %v8515, %v8739
        %v8741 = vpop.f32.mrf.mxu0
        %8742 = vdwg.mxu0
        %8743 = vmatprep.subr.mxu0 0.0
        %8744 = vmatpush1.msra.mxu0 %v6035
        %8745 = vmatprep.subr.mxu0 0.0
        %8746 = vmatpush1.msra.mxu0 %v6034
        %8747 = vmatprep.subr.mxu0 0.0
        %8748 = vmatpush1.msra.mxu0 %v6033
        %8749 = vmatprep.subr.mxu0 0.0
        %8750 = vmatpush1.msra.mxu0 %v6032
        %8751 = vmatprep.subr.mxu0 0.0
        %8752 = vmatpush1.msra.mxu0 %v6031
        %8753 = vmatprep.subr.mxu0 0.0
        %8754 = vmatpush1.msra.mxu0 %v6030
        %8755 = vmatprep.subr.mxu0 0.0
        %8756 = vmatpush1.msra.mxu0 %v6029
        %8757 = vmatprep.subr.mxu0 0.0
        %8758 = vmatpush1.msra.mxu0 %v6028
        %8759 = vmatprep.subr.mxu0 0.0
        %8760 = vmatpush1.msra.mxu0 %v6027
        %8761 = vmatprep.subr.mxu0 0.0
        %8762 = vmatpush1.msra.mxu0 %v6026
        %8763 = vmatprep.subr.mxu0 0.0
        %8764 = vmatpush1.msra.mxu0 %v6025
        %8765 = vmatprep.subr.mxu0 0.0
        %8766 = vmatpush1.msra.mxu0 %v6024
        %8767 = vmatprep.subr.mxu0 0.0
        %8768 = vmatpush1.msra.mxu0 %v6023
        %8769 = vmatprep.subr.mxu0 0.0
        %8770 = vmatpush1.msra.mxu0 %v6022
        %8771 = vmatprep.subr.mxu0 0.0
        %8772 = vmatpush1.msra.mxu0 %v6021
        %8773 = vmatprep.subr.mxu0 0.0
        %8774 = vmatpush1.msra.mxu0 %v6020
        %8775 = vmatprep.subr.mxu0 0.0
        %8776 = vmatpush2.msra.mxu0 0.0
        %8777 = vmatprep.subr.mxu0 0.0
        %8778 = vmatpush2.msra.mxu0 0.0
        %8779 = vmatprep.subr.mxu0 0.0
        %8780 = vmatpush2.msra.mxu0 0.0
        %8781 = vmatprep.subr.mxu0 0.0
        %8782 = vmatpush2.msra.mxu0 0.0
        %8783 = vmatprep.subr.mxu0 0.0
        %8784 = vmatpush2.msra.mxu0 0.0
        %8785 = vmatprep.subr.mxu0 0.0
        %8786 = vmatpush2.msra.mxu0 0.0
        %8787 = vmatprep.subr.mxu0 0.0
        %8788 = vmatpush2.msra.mxu0 0.0
        %8789 = vmatprep.subr.mxu0 0.0
        %8790 = vmatpush2.msra.mxu0 0.0
        %8791 = vmatprep.subr.mxu0 0.0
        %8792 = vmatpush2.msra.mxu0 0.0
        %8793 = vmatprep.subr.mxu0 0.0
        %8794 = vmatpush2.msra.mxu0 0.0
        %8795 = vmatprep.subr.mxu0 0.0
        %8796 = vmatpush2.msra.mxu0 0.0
        %8797 = vmatprep.subr.mxu0 0.0
        %8798 = vmatpush2.msra.mxu0 0.0
        %8799 = vmatprep.subr.mxu0 0.0
        %8800 = vmatpush2.msra.mxu0 0.0
        %8801 = vmatprep.subr.mxu0 0.0
        %8802 = vmatpush2.msra.mxu0 0.0
        %8803 = vmatprep.subr.mxu0 0.0
        %8804 = vmatpush2.msra.mxu0 0.0
        %8805 = vmatprep.subr.mxu0 0.0
        %8806 = vmatpush2.msra.mxu0 0.0
        %8807 = vmatprep.mubr.f32.mxu0 0.0
        %8808 = vmatmul.mubr.f32.gmra.mxu0 %v4860
        %v8809 = vpop.f32.mrf.mxu0
        %v8810 = vadd.f32 %v8585, %v8809
        %v8811 = vpop.f32.mrf.mxu0
        %8812 = vmatprep.mubr.f32.mxu0 0.0
        %8813 = vmatmul.mubr.f32.gmra.mxu0 %v4885
        %v8814 = vpop.f32.mrf.mxu0
        %v8815 = vadd.f32 %v8590, %v8814
        %v8816 = vpop.f32.mrf.mxu0
        %8817 = vmatprep.mubr.f32.mxu0 0.0
        %8818 = vmatmul.mubr.f32.gmra.mxu0 %v4910
        %v8819 = vpop.f32.mrf.mxu0
        %v8820 = vadd.f32 %v8595, %v8819
        %v8821 = vpop.f32.mrf.mxu0
        %8822 = vmatprep.mubr.f32.mxu0 0.0
        %8823 = vmatmul.mubr.f32.gmra.mxu0 %v4935
        %v8824 = vpop.f32.mrf.mxu0
        %v8825 = vadd.f32 %v8600, %v8824
        %v8826 = vpop.f32.mrf.mxu0
        %8827 = vmatprep.mubr.f32.mxu0 0.0
        %8828 = vmatmul.mubr.f32.gmra.mxu0 %v4960
        %v8829 = vpop.f32.mrf.mxu0
        %v8830 = vadd.f32 %v8605, %v8829
        %v8831 = vpop.f32.mrf.mxu0
        %8832 = vmatprep.mubr.f32.mxu0 0.0
        %8833 = vmatmul.mubr.f32.gmra.mxu0 %v4985
        %v8834 = vpop.f32.mrf.mxu0
        %v8835 = vadd.f32 %v8610, %v8834
        %v8836 = vpop.f32.mrf.mxu0
        %8837 = vmatprep.mubr.f32.mxu0 0.0
        %8838 = vmatmul.mubr.f32.gmra.mxu0 %v5010
        %v8839 = vpop.f32.mrf.mxu0
        %v8840 = vadd.f32 %v8615, %v8839
        %v8841 = vpop.f32.mrf.mxu0
        %8842 = vmatprep.mubr.f32.mxu0 0.0
        %8843 = vmatmul.mubr.f32.gmra.mxu0 %v5035
        %v8844 = vpop.f32.mrf.mxu0
        %v8845 = vadd.f32 %v8620, %v8844
        %v8846 = vpop.f32.mrf.mxu0
        %8847 = vmatprep.mubr.f32.mxu0 0.0
        %8848 = vmatmul.mubr.f32.gmra.mxu0 %v5060
        %v8849 = vpop.f32.mrf.mxu0
        %v8850 = vadd.f32 %v8625, %v8849
        %v8851 = vpop.f32.mrf.mxu0
        %8852 = vmatprep.mubr.f32.mxu0 0.0
        %8853 = vmatmul.mubr.f32.gmra.mxu0 %v5085
        %v8854 = vpop.f32.mrf.mxu0
        %v8855 = vadd.f32 %v8630, %v8854
        %v8856 = vpop.f32.mrf.mxu0
        %8857 = vmatprep.mubr.f32.mxu0 0.0
        %8858 = vmatmul.mubr.f32.gmra.mxu0 %v5110
        %v8859 = vpop.f32.mrf.mxu0
        %v8860 = vadd.f32 %v8635, %v8859
        %v8861 = vpop.f32.mrf.mxu0
        %8862 = vmatprep.mubr.f32.mxu0 0.0
        %8863 = vmatmul.mubr.f32.gmra.mxu0 %v5135
        %v8864 = vpop.f32.mrf.mxu0
        %v8865 = vadd.f32 %v8640, %v8864
        %v8866 = vpop.f32.mrf.mxu0
        %8867 = vmatprep.mubr.f32.mxu0 0.0
        %8868 = vmatmul.mubr.f32.gmra.mxu0 %v5160
        %v8869 = vpop.f32.mrf.mxu0
        %v8870 = vadd.f32 %v8645, %v8869
        %v8871 = vpop.f32.mrf.mxu0
        %8872 = vmatprep.mubr.f32.mxu0 0.0
        %8873 = vmatmul.mubr.f32.gmra.mxu0 %v5185
        %v8874 = vpop.f32.mrf.mxu0
        %v8875 = vadd.f32 %v8650, %v8874
        %v8876 = vpop.f32.mrf.mxu0
        %8877 = vmatprep.mubr.f32.mxu0 0.0
        %8878 = vmatmul.mubr.f32.gmra.mxu0 %v5210
        %v8879 = vpop.f32.mrf.mxu0
        %v8880 = vadd.f32 %v8655, %v8879
        %v8881 = vpop.f32.mrf.mxu0
        %8882 = vmatprep.mubr.f32.mxu0 0.0
        %8883 = vmatmul.mubr.f32.gmra.mxu0 %v5235
        %v8884 = vpop.f32.mrf.mxu0
        %v8885 = vadd.f32 %v8660, %v8884
        %v8886 = vpop.f32.mrf.mxu0
        %8887 = vmatprep.mubr.f32.mxu0 0.0
        %8888 = vmatmul.mubr.f32.gmra.mxu0 %v5260
        %v8889 = vpop.f32.mrf.mxu0
        %v8890 = vadd.f32 %v8665, %v8889
        %v8891 = vpop.f32.mrf.mxu0
        %8892 = vmatprep.mubr.f32.mxu0 0.0
        %8893 = vmatmul.mubr.f32.gmra.mxu0 %v5285
        %v8894 = vpop.f32.mrf.mxu0
        %v8895 = vadd.f32 %v8670, %v8894
        %v8896 = vpop.f32.mrf.mxu0
        %8897 = vmatprep.mubr.f32.mxu0 0.0
        %8898 = vmatmul.mubr.f32.gmra.mxu0 %v5310
        %v8899 = vpop.f32.mrf.mxu0
        %v8900 = vadd.f32 %v8675, %v8899
        %v8901 = vpop.f32.mrf.mxu0
        %8902 = vmatprep.mubr.f32.mxu0 0.0
        %8903 = vmatmul.mubr.f32.gmra.mxu0 %v5335
        %v8904 = vpop.f32.mrf.mxu0
        %v8905 = vadd.f32 %v8680, %v8904
        %v8906 = vpop.f32.mrf.mxu0
        %8907 = vmatprep.mubr.f32.mxu0 0.0
        %8908 = vmatmul.mubr.f32.gmra.mxu0 %v5360
        %v8909 = vpop.f32.mrf.mxu0
        %v8910 = vadd.f32 %v8685, %v8909
        %v8911 = vpop.f32.mrf.mxu0
        %8912 = vmatprep.mubr.f32.mxu0 0.0
        %8913 = vmatmul.mubr.f32.gmra.mxu0 %v5385
        %v8914 = vpop.f32.mrf.mxu0
        %v8915 = vadd.f32 %v8690, %v8914
        %v8916 = vpop.f32.mrf.mxu0
        %8917 = vmatprep.mubr.f32.mxu0 0.0
        %8918 = vmatmul.mubr.f32.gmra.mxu0 %v5410
        %v8919 = vpop.f32.mrf.mxu0
        %v8920 = vadd.f32 %v8695, %v8919
        %v8921 = vpop.f32.mrf.mxu0
        %8922 = vmatprep.mubr.f32.mxu0 0.0
        %8923 = vmatmul.mubr.f32.gmra.mxu0 %v5435
        %v8924 = vpop.f32.mrf.mxu0
        %v8925 = vadd.f32 %v8700, %v8924
        %v8926 = vpop.f32.mrf.mxu0
        %8927 = vmatprep.mubr.f32.mxu0 0.0
        %8928 = vmatmul.mubr.f32.gmra.mxu0 %v5460
        %v8929 = vpop.f32.mrf.mxu0
        %v8930 = vadd.f32 %v8705, %v8929
        %v8931 = vpop.f32.mrf.mxu0
        %8932 = vmatprep.mubr.f32.mxu0 0.0
        %8933 = vmatmul.mubr.f32.gmra.mxu0 %v5485
        %v8934 = vpop.f32.mrf.mxu0
        %v8935 = vadd.f32 %v8710, %v8934
        %v8936 = vpop.f32.mrf.mxu0
        %8937 = vmatprep.mubr.f32.mxu0 0.0
        %8938 = vmatmul.mubr.f32.gmra.mxu0 %v5510
        %v8939 = vpop.f32.mrf.mxu0
        %v8940 = vadd.f32 %v8715, %v8939
        %v8941 = vpop.f32.mrf.mxu0
        %8942 = vmatprep.mubr.f32.mxu0 0.0
        %8943 = vmatmul.mubr.f32.gmra.mxu0 %v5535
        %v8944 = vpop.f32.mrf.mxu0
        %v8945 = vadd.f32 %v8720, %v8944
        %v8946 = vpop.f32.mrf.mxu0
        %8947 = vmatprep.mubr.f32.mxu0 0.0
        %8948 = vmatmul.mubr.f32.gmra.mxu0 %v5560
        %v8949 = vpop.f32.mrf.mxu0
        %v8950 = vadd.f32 %v8725, %v8949
        %v8951 = vpop.f32.mrf.mxu0
        %8952 = vmatprep.mubr.f32.mxu0 0.0
        %8953 = vmatmul.mubr.f32.gmra.mxu0 %v5585
        %v8954 = vpop.f32.mrf.mxu0
        %v8955 = vadd.f32 %v8730, %v8954
        %v8956 = vpop.f32.mrf.mxu0
        %8957 = vmatprep.mubr.f32.mxu0 0.0
        %8958 = vmatmul.mubr.f32.gmra.mxu0 %v5610
        %v8959 = vpop.f32.mrf.mxu0
        %v8960 = vadd.f32 %v8735, %v8959
        %v8961 = vpop.f32.mrf.mxu0
        %8962 = vmatprep.mubr.f32.mxu0 0.0
        %8963 = vmatmul.mubr.f32.gmra.mxu0 %v5635
        %v8964 = vpop.f32.mrf.mxu0
        %v8965 = vadd.f32 %v8740, %v8964
        %v8966 = vpop.f32.mrf.mxu0
        %8967 = vdwg.mxu0
        %8968 = vst [vmem:[%s336] sm:$0xff] %v8810
        %8969 = vst [vmem:[%s336 + $0x8] sm:$0xff] %v8815
        %8970 = vst [vmem:[%s336 + $0x10] sm:$0xff] %v8820
        %8971 = vst [vmem:[%s336 + $0x18] sm:$0xff] %v8825
        %8972 = vst [vmem:[%s336 + $0x20] sm:$0xff] %v8830
        %8973 = vst [vmem:[%s336 + $0x28] sm:$0xff] %v8835
        %8974 = vst [vmem:[%s336 + $0x30] sm:$0xff] %v8840
        %8975 = vst [vmem:[%s336 + $0x38] sm:$0xff] %v8845
        %8976 = vst [vmem:[%s336 + $0x40] sm:$0xff] %v8850
        %8977 = vst [vmem:[%s336 + $0x48] sm:$0xff] %v8855
        %8978 = vst [vmem:[%s336 + $0x50] sm:$0xff] %v8860
        %8979 = vst [vmem:[%s336 + $0x58] sm:$0xff] %v8865
        %8980 = vst [vmem:[%s336 + $0x60] sm:$0xff] %v8870
        %8981 = vst [vmem:[%s336 + $0x68] sm:$0xff] %v8875
        %8982 = vst [vmem:[%s336 + $0x70] sm:$0xff] %v8880
        %8983 = vst [vmem:[%s336 + $0x78] sm:$0xff] %v8885
        %8984 = vst [vmem:[%s336 + $0x80] sm:$0xff] %v8890
        %8985 = vst [vmem:[%s336 + $0x88] sm:$0xff] %v8895
        %8986 = vst [vmem:[%s336 + $0x90] sm:$0xff] %v8900
        %8987 = vst [vmem:[%s336 + $0x98] sm:$0xff] %v8905
        %8988 = vst [vmem:[%s336 + $0xa0] sm:$0xff] %v8910
        %8989 = vst [vmem:[%s336 + $0xa8] sm:$0xff] %v8915
        %8990 = vst [vmem:[%s336 + $0xb0] sm:$0xff] %v8920
        %8991 = vst [vmem:[%s336 + $0xb8] sm:$0xff] %v8925
        %8992 = vst [vmem:[%s336 + $0xc0] sm:$0xff] %v8930
        %8993 = vst [vmem:[%s336 + $0xc8] sm:$0xff] %v8935
        %8994 = vst [vmem:[%s336 + $0xd0] sm:$0xff] %v8940
        %8995 = vst [vmem:[%s336 + $0xd8] sm:$0xff] %v8945
        %8996 = vst [vmem:[%s336 + $0xe0] sm:$0xff] %v8950
        %8997 = vst [vmem:[%s336 + $0xe8] sm:$0xff] %v8955
        %8998 = vst [vmem:[%s336 + $0xf0] sm:$0xff] %v8960
        %8999 = vst [vmem:[%s336 + $0xf8] sm:$0xff] %v8965
        %s9000 = sand.u32 %s184, 1
        %s9001 = scalar_lea.sflag [#allocation6], %s9000
        %s9002 = sand.u32 %s184, 1
        %s9003 = smul.addr %s9002, 256
        %s9004 = scalar_lea.vmem [#allocation13], %s9003
        // Predicated region
        $region69: #{tpu_custom_call.1} parent=47 // pred_check
          %p9005 = pneg %p194
        $region70: #{tpu_custom_call.1} parent=47 // pred_check_branch
          %9007 = sbr.rel (%p9005) target = $region72
        $region71: #{tpu_custom_call.1} parent=47 // pred_region
          %s9008 = smul.u32 32, %s24
          %s9010 = ssub.s32 4096, 4096
          %9011 = vsyncadd %s9001, %s9010
          %s9012 = smul.addr %s9008, 128
          %s9013 = scalar_lea.hbm %s7, %s9012
          %s9014 = sshll.u32 %s9004, 4
          %s9015 = int_to_ptr.vmem [resolvable:$true] %s9014
          %9020 = dma.vmem_to_hbm [thread:$0]  %s9015, 4096, %s9013, %s9001, 128, 128, 8
        $region72: #{tpu_custom_call.1} parent=47 // pred_fallthru
          _
      $region48: #{tpu_custom_call.1} parent=5 // pred_fallthru
        _
      %p9021 = scmp.le.s32.totalorder 2, %s19
      // Predicated region
      $region73: #{tpu_custom_call.1} parent=5 // pred_check
        %p9022 = pneg %p9021
      $region74: #{tpu_custom_call.1} parent=5 // pred_check_branch
        %9024 = sbr.rel (%p9022) target = $region76
      $region75: #{tpu_custom_call.1} parent=5 // pred_region
        %s9025 = ssub.s32 %s19, 2
        // Predicated region
        $region77: #{tpu_custom_call.1} parent=75 // pred_check
          %p9026 = pneg %p200
        $region78: #{tpu_custom_call.1} parent=75 // pred_check_branch
          %9028 = sbr.rel (%p9026) target = $region80
        $region79: #{tpu_custom_call.1} parent=75 // pred_region
          %s9029 = sand.u32 %s185, 1
          %s9030 = scalar_lea.sflag [#allocation6], %s9029
          %s9031 = sand.u32 %s185, 1
          %s9032 = smul.addr %s9031, 256
          %s9033 = scalar_lea.vmem [#allocation13], %s9032
          %9034 = dma.done %s9030, 4096
        $region80: #{tpu_custom_call.1} parent=75 // pred_fallthru
          _
      $region76: #{tpu_custom_call.1} parent=5 // pred_fallthru
        _
    $region6: #{tpu_custom_call.1} parent=1 // loop_footer
      %s23 = sadd.s32 1, %s19
    $region7: #{tpu_custom_call.1} parent=1 // loop_footer_branch
      %18 = sbr.rel target = $region3
    $region8: #{tpu_custom_call.1} parent=1 // loop_exit
      _
    %9035 = vsyncpa [#allocation5], 1
    %s9036 = scalar_lea.sflag [#allocation5], 1
    %9037 = vsyncpa %s9036, 1
    %9038 = vsyncpa [#allocation8], 1
    %9039 = vsyncpa [#allocation11], 1
    %9040 = vsyncpa [#allocation6], 1
    %s9041 = scalar_lea.sflag [#allocation6], 1
    %9042 = vsyncpa %s9041, 1

</llo_original>
